<compile_context>
chip_gen: v6e
topology: v6e:2x2x1
jax: 0.10.0
libtpu: 0.0.40
codegen_flags: <defaults>
</compile_context>

<pallas_src>
import functools

import jax
import jax.numpy as jnp
from jax.experimental import pallas as pl
from jax.experimental.pallas import tpu as pltpu


# ------------------------------ Pallas kernel -------------------------------


def _conv3x3_flat(xflat, w_ref, col_ok_left, col_ok_right, *, W, pad):
    """3x3 SAME conv (stride 1) on a spatially flattened activation.

    xflat:        (H*W, Cin) float32, rows = pixels in row-major (i*W + j).
    w_ref:        (9, Cin, Cout) bf16 ref, tap index = kh*3 + kw.
    col_ok_left:  (H*W, 1) f32 {0,1}; 0 on image column j==0   (kills dw=-1 wrap).
    col_ok_right: (H*W, 1) f32 {0,1}; 0 on image column j==W-1 (kills dw=+1 wrap).
    Returns (H*W, Cout) float32.
    """
    HW, Cin = xflat.shape
    Cout = w_ref.shape[-1]

    # In-VMEM zero padding along the flattened axis. `pad` is a multiple of 8
    # (sublane-aligned concat segments) and >= W + 1, so every shifted window
    # below stays in bounds and rows that fall outside the image read zeros.
    zeros = jnp.zeros((pad, Cin), jnp.float32)
    xp = jnp.concatenate([zeros, xflat, zeros], axis=0)   # (H*W + 2*pad, Cin)

    acc = jnp.zeros((HW, Cout), jnp.float32)
    for kh in range(3):
        for kw in range(3):
            dh, dw = kh - 1, kw - 1
            start = pad + dh * W + dw                     # static python int
            s = xp[start:start + HW, :]                   # shifted window
            # A +-1 shift along the flattened axis wraps across image rows;
            # zero the wrapped column with the precomputed boundary mask.
            if dw == -1:
                s = s * col_ok_left
            elif dw == 1:
                s = s * col_ok_right
            wk = w_ref[kh * 3 + kw]                       # (Cin, Cout) bf16
            acc = acc + jnp.dot(s.astype(jnp.bfloat16), wk,
                                preferred_element_type=jnp.float32)
    return acc


def _basic_block_kernel(x_ref, ml_ref, mr_ref, w1_ref, s1_ref, b1_ref,
                        w2_ref, s2_ref, b2_ref, o_ref, *, W, pad):
    """Whole BasicBlock for one batch element, entirely in VMEM."""
    xf = x_ref[0].astype(jnp.float32)         # (H*W, C); also the residual
    ml = ml_ref[...]                          # (H*W, 1)
    mr = mr_ref[...]                          # (H*W, 1)

    # conv1 -> bn1 -> relu
    h = _conv3x3_flat(xf, w1_ref, ml, mr, W=W, pad=pad)
    h = jnp.maximum(h * s1_ref[...] + b1_ref[...], 0.0)

    # conv2 -> bn2 -> +residual -> relu
    y = _conv3x3_flat(h, w2_ref, ml, mr, W=W, pad=pad)
    y = jnp.maximum(y * s2_ref[...] + b2_ref[...] + xf, 0.0)

    o_ref[0] = y.astype(o_ref.dtype)


# ------------------------------ pallas_call glue ----------------------------


def _fold_bn(gamma, beta, mean, var, eps=1e-5):
    scale = gamma / jnp.sqrt(var + eps)
    bias = beta - mean * scale
    return scale, bias


def basic_block_forward_nhwc(x_nhwc, params):
    """Fused BasicBlock forward on NHWC input (layout to use when stacking)."""
    N, H, W, C = x_nhwc.shape
    HW = H * W
    pad = ((W + 1 + 7) // 8) * 8          # sublane-aligned halo (>= W + 1)

    # Conv weights arrive in HWIO (3,3,Cin,Cout); reshape to (9, Cin, Cout)
    # with tap = kh*3 + kw and ship to the MXU in bf16.
    w1 = params["w1"].reshape(9, C, C).astype(jnp.bfloat16)
    w2 = params["w2"].reshape(9, C, C).astype(jnp.bfloat16)

    s1, b1 = _fold_bn(*params["bn1"])
    s2, b2 = _fold_bn(*params["bn2"])
    s1 = s1.reshape(1, C).astype(jnp.float32)
    b1 = b1.reshape(1, C).astype(jnp.float32)
    s2 = s2.reshape(1, C).astype(jnp.float32)
    b2 = b2.reshape(1, C).astype(jnp.float32)

    # Column-boundary masks for the flattened-shift trick (built once, tiny).
    j = jnp.arange(HW, dtype=jnp.int32) % W
    mask_l = (j != 0).astype(jnp.float32).reshape(HW, 1)       # for dw = -1
    mask_r = (j != W - 1).astype(jnp.float32).reshape(HW, 1)   # for dw = +1

    xflat = x_nhwc.reshape(N, HW, C)      # free metadata reshape

    kernel = functools.partial(_basic_block_kernel, W=W, pad=pad)
    full2 = lambda n: (0, 0)
    full3 = lambda n: (0, 0, 0)

    out = pl.pallas_call(
        kernel,
        out_shape=jax.ShapeDtypeStruct((N, HW, C), x_nhwc.dtype),
        grid=(N,),
        in_specs=[
            pl.BlockSpec((1, HW, C), lambda n: (n, 0, 0)),   # x (flat NHWC)
            pl.BlockSpec((HW, 1), full2),                    # mask_l
            pl.BlockSpec((HW, 1), full2),                    # mask_r
            pl.BlockSpec((9, C, C), full3),                  # w1 (bf16)
            pl.BlockSpec((1, C), full2),                     # bn1 scale
            pl.BlockSpec((1, C), full2),                     # bn1 bias
            pl.BlockSpec((9, C, C), full3),                  # w2 (bf16)
            pl.BlockSpec((1, C), full2),                     # bn2 scale
            pl.BlockSpec((1, C), full2),                     # bn2 bias
        ],
        out_specs=pl.BlockSpec((1, HW, C), lambda n: (n, 0, 0)),
        compiler_params=pltpu.CompilerParams(
            dimension_semantics=("parallel",)),
    )(xflat, mask_l, mask_r, w1, s1, b1, w2, s2, b2)

    return out.reshape(N, H, W, C)


def basic_block_forward(x_nchw, params):
    """BasicBlock forward with PyTorch NCHW convention at the boundary.

    When stacking many BasicBlocks (as HRNet does), call
    basic_block_forward_nhwc directly and keep activations NHWC across blocks;
    the transposes here are module-boundary-only.
    """
    x = jnp.transpose(x_nchw, (0, 2, 3, 1))          # -> NHWC
    out = basic_block_forward_nhwc(x, params)
    return jnp.transpose(out, (0, 3, 1, 2))          # -> NCHW


# --------------------------------- reference ---------------------------------


def _reference_forward(x_nchw, params):
    x = jnp.transpose(x_nchw, (0, 2, 3, 1)).astype(jnp.float32)
    dn = ("NHWC", "HWIO", "NHWC")

    def conv(inp, w):
        return jax.lax.conv_general_dilated(
            inp, w.astype(jnp.float32), window_strides=(1, 1),
            padding="SAME", dimension_numbers=dn)

    s1, b1 = _fold_bn(*params["bn1"])
    s2, b2 = _fold_bn(*params["bn2"])
    out = jnp.maximum(conv(x, params["w1"]) * s1 + b1, 0.0)
    out = jnp.maximum(conv(out, params["w2"]) * s2 + b2 + x, 0.0)
    return jnp.transpose(out, (0, 3, 1, 2))


# ----------------------------------- main ------------------------------------


if __name__ == "__main__":
    N, C, H, W = 2, 4, 16, 16   # inplanes = planes = 4, stride = 1
    key = jax.random.PRNGKey(0)
    k_x, k_w1, k_w2, k_g1, k_b1, k_m1, k_v1, k_g2, k_b2, k_m2, k_v2 = (
        jax.random.split(key, 11))

    x = jax.random.normal(k_x, (N, C, H, W), dtype=jnp.float32)

    params = {
        # conv weights in HWIO (PyTorch stores OIHW; synthetic init, same math)
        "w1": jax.random.normal(k_w1, (3, 3, C, C), jnp.float32) * 0.1,
        "w2": jax.random.normal(k_w2, (3, 3, C, C), jnp.float32) * 0.1,
        # BatchNorm (gamma, beta, running_mean, running_var), eval semantics
        "bn1": (
            1.0 + 0.1 * jax.random.normal(k_g1, (C,), jnp.float32),
            0.1 * jax.random.normal(k_b1, (C,), jnp.float32),
            0.1 * jax.random.normal(k_m1, (C,), jnp.float32),
            jnp.abs(1.0 + 0.1 * jax.random.normal(k_v1, (C,), jnp.float32)),
        ),
        "bn2": (
            1.0 + 0.1 * jax.random.normal(k_g2, (C,), jnp.float32),
            0.1 * jax.random.normal(k_b2, (C,), jnp.float32),
            0.1 * jax.random.normal(k_m2, (C,), jnp.float32),
            jnp.abs(1.0 + 0.1 * jax.random.normal(k_v2, (C,), jnp.float32)),
        ),
    }

    out = jax.jit(basic_block_forward)(x, params)
    out = jax.block_until_ready(out)

    ref = jax.block_until_ready(_reference_forward(x, params))
    assert out.shape == (N, C, H, W), out.shape
    # bf16 MXU operands with f32 accumulation: tolerance loosened accordingly.
    max_err = float(jnp.max(jnp.abs(out - ref)))
    assert jnp.allclose(out, ref, atol=5e-2, rtol=5e-2), max_err

    print("KERNEL_OK")
</pallas_src>

<mosaic_0001>
module attributes {stable_mosaic.version = 11 : i64} {
  func.func @_basic_block_kernel(%arg0: i32, %arg1: memref<1x256x4xf32, #tpu.memory_space<vmem>>, %arg2: memref<256x1xf32, #tpu.memory_space<vmem>>, %arg3: memref<256x1xf32, #tpu.memory_space<vmem>>, %arg4: memref<9x4x4xbf16, #tpu.memory_space<vmem>>, %arg5: memref<1x4xf32, #tpu.memory_space<vmem>>, %arg6: memref<1x4xf32, #tpu.memory_space<vmem>>, %arg7: memref<9x4x4xbf16, #tpu.memory_space<vmem>>, %arg8: memref<1x4xf32, #tpu.memory_space<vmem>>, %arg9: memref<1x4xf32, #tpu.memory_space<vmem>>, %arg10: memref<1x256x4xf32, #tpu.memory_space<vmem>>) attributes {dimension_semantics = [#tpu.dimension_semantics<parallel>], iteration_bounds = array<i64: 2>, scalar_prefetch = 0 : i64, scratch_operands = 0 : i64, tpu.core_type = #tpu.core_type<tc>, window_params = [{transform_indices = @transform_0, window_bounds = array<i64: 1, 256, 4>}, {pipeline_mode = #tpu.pipeline_mode<synchronous>, transform_indices = @transform_1, window_bounds = array<i64: 256, 1>}, {pipeline_mode = #tpu.pipeline_mode<synchronous>, transform_indices = @transform_2, window_bounds = array<i64: 256, 1>}, {pipeline_mode = #tpu.pipeline_mode<synchronous>, transform_indices = @transform_3, window_bounds = array<i64: 9, 4, 4>}, {pipeline_mode = #tpu.pipeline_mode<synchronous>, transform_indices = @transform_4, window_bounds = array<i64: 1, 4>}, {pipeline_mode = #tpu.pipeline_mode<synchronous>, transform_indices = @transform_5, window_bounds = array<i64: 1, 4>}, {pipeline_mode = #tpu.pipeline_mode<synchronous>, transform_indices = @transform_6, window_bounds = array<i64: 9, 4, 4>}, {pipeline_mode = #tpu.pipeline_mode<synchronous>, transform_indices = @transform_7, window_bounds = array<i64: 1, 4>}, {pipeline_mode = #tpu.pipeline_mode<synchronous>, transform_indices = @transform_8, window_bounds = array<i64: 1, 4>}, {transform_indices = @transform_9, window_bounds = array<i64: 1, 256, 4>}]} {
    %c0 = arith.constant 0 : index
    %c0_0 = arith.constant 0 : index
    %c0_1 = arith.constant 0 : index
    %0 = vector.load %arg1[%c0, %c0_0, %c0_1] : memref<1x256x4xf32, #tpu.memory_space<vmem>>, vector<1x256x4xf32>
    %1 = vector.shape_cast %0 : vector<1x256x4xf32> to vector<256x4xf32>
    %c0_2 = arith.constant 0 : index
    %c0_3 = arith.constant 0 : index
    %2 = vector.load %arg2[%c0_2, %c0_3] : memref<256x1xf32, #tpu.memory_space<vmem>>, vector<256x1xf32>
    %c0_4 = arith.constant 0 : index
    %c0_5 = arith.constant 0 : index
    %3 = vector.load %arg3[%c0_4, %c0_5] : memref<256x1xf32, #tpu.memory_space<vmem>>, vector<256x1xf32>
    %cst = arith.constant 0.000000e+00 : f32
    %4 = vector.broadcast %cst : f32 to vector<24x4xf32>
    %5 = tpu.concatenate %4, %1, %4 in 0 : vector<24x4xf32>, vector<256x4xf32>, vector<24x4xf32> -> vector<304x4xf32>
    %cst_6 = arith.constant 0.000000e+00 : f32
    %6 = vector.broadcast %cst_6 : f32 to vector<256x4xf32>
    %7 = vector.extract_strided_slice %5 {offsets = [7, 0], sizes = [256, 4], strides = [1, 1]} : vector<304x4xf32> to vector<256x4xf32>
    %8 = vector.broadcast %2 : vector<256x1xf32> to vector<256x4xf32>
    %9 = arith.mulf %7, %8 : vector<256x4xf32>
    %c0_7 = arith.constant 0 : index
    %c0_8 = arith.constant 0 : index
    %c0_9 = arith.constant 0 : index
    %10 = vector.load %arg4[%c0_7, %c0_8, %c0_9] : memref<9x4x4xbf16, #tpu.memory_space<vmem>>, vector<1x4x4xbf16>
    %11 = vector.shape_cast %10 : vector<1x4x4xbf16> to vector<4x4xbf16>
    %12 = arith.truncf %9 : vector<256x4xf32> to vector<256x4xbf16>
    %cst_10 = arith.constant dense<0.000000e+00> : vector<256x4xf32>
    %13 = tpu.matmul %12, %11, %cst_10 {dimension_numbers = #tpu.dot_dimension_numbers<[1], [0], [0], [1], [0, 0, 1, 1], [], []>} : vector<256x4xbf16>, vector<4x4xbf16>, vector<256x4xf32> -> vector<256x4xf32>
    %14 = arith.addf %6, %13 : vector<256x4xf32>
    %15 = vector.extract_strided_slice %5 {offsets = [8, 0], sizes = [256, 4], strides = [1, 1]} : vector<304x4xf32> to vector<256x4xf32>
    %c1 = arith.constant 1 : index
    %c0_11 = arith.constant 0 : index
    %c0_12 = arith.constant 0 : index
    %16 = vector.load %arg4[%c1, %c0_11, %c0_12] : memref<9x4x4xbf16, #tpu.memory_space<vmem>>, vector<1x4x4xbf16>
    %17 = vector.shape_cast %16 : vector<1x4x4xbf16> to vector<4x4xbf16>
    %18 = arith.truncf %15 : vector<256x4xf32> to vector<256x4xbf16>
    %cst_13 = arith.constant dense<0.000000e+00> : vector<256x4xf32>
    %19 = tpu.matmul %18, %17, %cst_13 {dimension_numbers = #tpu.dot_dimension_numbers<[1], [0], [0], [1], [0, 0, 1, 1], [], []>} : vector<256x4xbf16>, vector<4x4xbf16>, vector<256x4xf32> -> vector<256x4xf32>
    %20 = arith.addf %14, %19 : vector<256x4xf32>
    %21 = vector.extract_strided_slice %5 {offsets = [9, 0], sizes = [256, 4], strides = [1, 1]} : vector<304x4xf32> to vector<256x4xf32>
    %22 = vector.broadcast %3 : vector<256x1xf32> to vector<256x4xf32>
    %23 = arith.mulf %21, %22 : vector<256x4xf32>
    %c2 = arith.constant 2 : index
    %c0_14 = arith.constant 0 : index
    %c0_15 = arith.constant 0 : index
    %24 = vector.load %arg4[%c2, %c0_14, %c0_15] : memref<9x4x4xbf16, #tpu.memory_space<vmem>>, vector<1x4x4xbf16>
    %25 = vector.shape_cast %24 : vector<1x4x4xbf16> to vector<4x4xbf16>
    %26 = arith.truncf %23 : vector<256x4xf32> to vector<256x4xbf16>
    %cst_16 = arith.constant dense<0.000000e+00> : vector<256x4xf32>
    %27 = tpu.matmul %26, %25, %cst_16 {dimension_numbers = #tpu.dot_dimension_numbers<[1], [0], [0], [1], [0, 0, 1, 1], [], []>} : vector<256x4xbf16>, vector<4x4xbf16>, vector<256x4xf32> -> vector<256x4xf32>
    %28 = arith.addf %20, %27 : vector<256x4xf32>
    %29 = vector.extract_strided_slice %5 {offsets = [23, 0], sizes = [256, 4], strides = [1, 1]} : vector<304x4xf32> to vector<256x4xf32>
    %30 = vector.broadcast %2 : vector<256x1xf32> to vector<256x4xf32>
    %31 = arith.mulf %29, %30 : vector<256x4xf32>
    %c3 = arith.constant 3 : index
    %c0_17 = arith.constant 0 : index
    %c0_18 = arith.constant 0 : index
    %32 = vector.load %arg4[%c3, %c0_17, %c0_18] : memref<9x4x4xbf16, #tpu.memory_space<vmem>>, vector<1x4x4xbf16>
    %33 = vector.shape_cast %32 : vector<1x4x4xbf16> to vector<4x4xbf16>
    %34 = arith.truncf %31 : vector<256x4xf32> to vector<256x4xbf16>
    %cst_19 = arith.constant dense<0.000000e+00> : vector<256x4xf32>
    %35 = tpu.matmul %34, %33, %cst_19 {dimension_numbers = #tpu.dot_dimension_numbers<[1], [0], [0], [1], [0, 0, 1, 1], [], []>} : vector<256x4xbf16>, vector<4x4xbf16>, vector<256x4xf32> -> vector<256x4xf32>
    %36 = arith.addf %28, %35 : vector<256x4xf32>
    %37 = vector.extract_strided_slice %5 {offsets = [24, 0], sizes = [256, 4], strides = [1, 1]} : vector<304x4xf32> to vector<256x4xf32>
    %c4 = arith.constant 4 : index
    %c0_20 = arith.constant 0 : index
    %c0_21 = arith.constant 0 : index
    %38 = vector.load %arg4[%c4, %c0_20, %c0_21] : memref<9x4x4xbf16, #tpu.memory_space<vmem>>, vector<1x4x4xbf16>
    %39 = vector.shape_cast %38 : vector<1x4x4xbf16> to vector<4x4xbf16>
    %40 = arith.truncf %37 : vector<256x4xf32> to vector<256x4xbf16>
    %cst_22 = arith.constant dense<0.000000e+00> : vector<256x4xf32>
    %41 = tpu.matmul %40, %39, %cst_22 {dimension_numbers = #tpu.dot_dimension_numbers<[1], [0], [0], [1], [0, 0, 1, 1], [], []>} : vector<256x4xbf16>, vector<4x4xbf16>, vector<256x4xf32> -> vector<256x4xf32>
    %42 = arith.addf %36, %41 : vector<256x4xf32>
    %43 = vector.extract_strided_slice %5 {offsets = [25, 0], sizes = [256, 4], strides = [1, 1]} : vector<304x4xf32> to vector<256x4xf32>
    %44 = vector.broadcast %3 : vector<256x1xf32> to vector<256x4xf32>
    %45 = arith.mulf %43, %44 : vector<256x4xf32>
    %c5 = arith.constant 5 : index
    %c0_23 = arith.constant 0 : index
    %c0_24 = arith.constant 0 : index
    %46 = vector.load %arg4[%c5, %c0_23, %c0_24] : memref<9x4x4xbf16, #tpu.memory_space<vmem>>, vector<1x4x4xbf16>
    %47 = vector.shape_cast %46 : vector<1x4x4xbf16> to vector<4x4xbf16>
    %48 = arith.truncf %45 : vector<256x4xf32> to vector<256x4xbf16>
    %cst_25 = arith.constant dense<0.000000e+00> : vector<256x4xf32>
    %49 = tpu.matmul %48, %47, %cst_25 {dimension_numbers = #tpu.dot_dimension_numbers<[1], [0], [0], [1], [0, 0, 1, 1], [], []>} : vector<256x4xbf16>, vector<4x4xbf16>, vector<256x4xf32> -> vector<256x4xf32>
    %50 = arith.addf %42, %49 : vector<256x4xf32>
    %51 = vector.extract_strided_slice %5 {offsets = [39, 0], sizes = [256, 4], strides = [1, 1]} : vector<304x4xf32> to vector<256x4xf32>
    %52 = vector.broadcast %2 : vector<256x1xf32> to vector<256x4xf32>
    %53 = arith.mulf %51, %52 : vector<256x4xf32>
    %c6 = arith.constant 6 : index
    %c0_26 = arith.constant 0 : index
    %c0_27 = arith.constant 0 : index
    %54 = vector.load %arg4[%c6, %c0_26, %c0_27] : memref<9x4x4xbf16, #tpu.memory_space<vmem>>, vector<1x4x4xbf16>
    %55 = vector.shape_cast %54 : vector<1x4x4xbf16> to vector<4x4xbf16>
    %56 = arith.truncf %53 : vector<256x4xf32> to vector<256x4xbf16>
    %cst_28 = arith.constant dense<0.000000e+00> : vector<256x4xf32>
    %57 = tpu.matmul %56, %55, %cst_28 {dimension_numbers = #tpu.dot_dimension_numbers<[1], [0], [0], [1], [0, 0, 1, 1], [], []>} : vector<256x4xbf16>, vector<4x4xbf16>, vector<256x4xf32> -> vector<256x4xf32>
    %58 = arith.addf %50, %57 : vector<256x4xf32>
    %59 = vector.extract_strided_slice %5 {offsets = [40, 0], sizes = [256, 4], strides = [1, 1]} : vector<304x4xf32> to vector<256x4xf32>
    %c7 = arith.constant 7 : index
    %c0_29 = arith.constant 0 : index
    %c0_30 = arith.constant 0 : index
    %60 = vector.load %arg4[%c7, %c0_29, %c0_30] : memref<9x4x4xbf16, #tpu.memory_space<vmem>>, vector<1x4x4xbf16>
    %61 = vector.shape_cast %60 : vector<1x4x4xbf16> to vector<4x4xbf16>
    %62 = arith.truncf %59 : vector<256x4xf32> to vector<256x4xbf16>
    %cst_31 = arith.constant dense<0.000000e+00> : vector<256x4xf32>
    %63 = tpu.matmul %62, %61, %cst_31 {dimension_numbers = #tpu.dot_dimension_numbers<[1], [0], [0], [1], [0, 0, 1, 1], [], []>} : vector<256x4xbf16>, vector<4x4xbf16>, vector<256x4xf32> -> vector<256x4xf32>
    %64 = arith.addf %58, %63 : vector<256x4xf32>
    %65 = vector.extract_strided_slice %5 {offsets = [41, 0], sizes = [256, 4], strides = [1, 1]} : vector<304x4xf32> to vector<256x4xf32>
    %66 = vector.broadcast %3 : vector<256x1xf32> to vector<256x4xf32>
    %67 = arith.mulf %65, %66 : vector<256x4xf32>
    %c8 = arith.constant 8 : index
    %c0_32 = arith.constant 0 : index
    %c0_33 = arith.constant 0 : index
    %68 = vector.load %arg4[%c8, %c0_32, %c0_33] : memref<9x4x4xbf16, #tpu.memory_space<vmem>>, vector<1x4x4xbf16>
    %69 = vector.shape_cast %68 : vector<1x4x4xbf16> to vector<4x4xbf16>
    %70 = arith.truncf %67 : vector<256x4xf32> to vector<256x4xbf16>
    %cst_34 = arith.constant dense<0.000000e+00> : vector<256x4xf32>
    %71 = tpu.matmul %70, %69, %cst_34 {dimension_numbers = #tpu.dot_dimension_numbers<[1], [0], [0], [1], [0, 0, 1, 1], [], []>} : vector<256x4xbf16>, vector<4x4xbf16>, vector<256x4xf32> -> vector<256x4xf32>
    %72 = arith.addf %64, %71 : vector<256x4xf32>
    %c0_35 = arith.constant 0 : index
    %c0_36 = arith.constant 0 : index
    %73 = vector.load %arg5[%c0_35, %c0_36] : memref<1x4xf32, #tpu.memory_space<vmem>>, vector<1x4xf32>
    %74 = vector.broadcast %73 : vector<1x4xf32> to vector<256x4xf32>
    %75 = arith.mulf %72, %74 : vector<256x4xf32>
    %c0_37 = arith.constant 0 : index
    %c0_38 = arith.constant 0 : index
    %76 = vector.load %arg6[%c0_37, %c0_38] : memref<1x4xf32, #tpu.memory_space<vmem>>, vector<1x4xf32>
    %77 = vector.broadcast %76 : vector<1x4xf32> to vector<256x4xf32>
    %78 = arith.addf %75, %77 : vector<256x4xf32>
    %cst_39 = arith.constant 0.000000e+00 : f32
    %79 = vector.broadcast %cst_39 : f32 to vector<256x4xf32>
    %80 = arith.maximumf %78, %79 : vector<256x4xf32>
    %cst_40 = arith.constant 0.000000e+00 : f32
    %81 = vector.broadcast %cst_40 : f32 to vector<24x4xf32>
    %82 = tpu.concatenate %81, %80, %81 in 0 : vector<24x4xf32>, vector<256x4xf32>, vector<24x4xf32> -> vector<304x4xf32>
    %cst_41 = arith.constant 0.000000e+00 : f32
    %83 = vector.broadcast %cst_41 : f32 to vector<256x4xf32>
    %84 = vector.extract_strided_slice %82 {offsets = [7, 0], sizes = [256, 4], strides = [1, 1]} : vector<304x4xf32> to vector<256x4xf32>
    %85 = vector.broadcast %2 : vector<256x1xf32> to vector<256x4xf32>
    %86 = arith.mulf %84, %85 : vector<256x4xf32>
    %c0_42 = arith.constant 0 : index
    %c0_43 = arith.constant 0 : index
    %c0_44 = arith.constant 0 : index
    %87 = vector.load %arg7[%c0_42, %c0_43, %c0_44] : memref<9x4x4xbf16, #tpu.memory_space<vmem>>, vector<1x4x4xbf16>
    %88 = vector.shape_cast %87 : vector<1x4x4xbf16> to vector<4x4xbf16>
    %89 = arith.truncf %86 : vector<256x4xf32> to vector<256x4xbf16>
    %cst_45 = arith.constant dense<0.000000e+00> : vector<256x4xf32>
    %90 = tpu.matmul %89, %88, %cst_45 {dimension_numbers = #tpu.dot_dimension_numbers<[1], [0], [0], [1], [0, 0, 1, 1], [], []>} : vector<256x4xbf16>, vector<4x4xbf16>, vector<256x4xf32> -> vector<256x4xf32>
    %91 = arith.addf %83, %90 : vector<256x4xf32>
    %92 = vector.extract_strided_slice %82 {offsets = [8, 0], sizes = [256, 4], strides = [1, 1]} : vector<304x4xf32> to vector<256x4xf32>
    %c1_46 = arith.constant 1 : index
    %c0_47 = arith.constant 0 : index
    %c0_48 = arith.constant 0 : index
    %93 = vector.load %arg7[%c1_46, %c0_47, %c0_48] : memref<9x4x4xbf16, #tpu.memory_space<vmem>>, vector<1x4x4xbf16>
    %94 = vector.shape_cast %93 : vector<1x4x4xbf16> to vector<4x4xbf16>
    %95 = arith.truncf %92 : vector<256x4xf32> to vector<256x4xbf16>
    %cst_49 = arith.constant dense<0.000000e+00> : vector<256x4xf32>
    %96 = tpu.matmul %95, %94, %cst_49 {dimension_numbers = #tpu.dot_dimension_numbers<[1], [0], [0], [1], [0, 0, 1, 1], [], []>} : vector<256x4xbf16>, vector<4x4xbf16>, vector<256x4xf32> -> vector<256x4xf32>
    %97 = arith.addf %91, %96 : vector<256x4xf32>
    %98 = vector.extract_strided_slice %82 {offsets = [9, 0], sizes = [256, 4], strides = [1, 1]} : vector<304x4xf32> to vector<256x4xf32>
    %99 = vector.broadcast %3 : vector<256x1xf32> to vector<256x4xf32>
    %100 = arith.mulf %98, %99 : vector<256x4xf32>
    %c2_50 = arith.constant 2 : index
    %c0_51 = arith.constant 0 : index
    %c0_52 = arith.constant 0 : index
    %101 = vector.load %arg7[%c2_50, %c0_51, %c0_52] : memref<9x4x4xbf16, #tpu.memory_space<vmem>>, vector<1x4x4xbf16>
    %102 = vector.shape_cast %101 : vector<1x4x4xbf16> to vector<4x4xbf16>
    %103 = arith.truncf %100 : vector<256x4xf32> to vector<256x4xbf16>
    %cst_53 = arith.constant dense<0.000000e+00> : vector<256x4xf32>
    %104 = tpu.matmul %103, %102, %cst_53 {dimension_numbers = #tpu.dot_dimension_numbers<[1], [0], [0], [1], [0, 0, 1, 1], [], []>} : vector<256x4xbf16>, vector<4x4xbf16>, vector<256x4xf32> -> vector<256x4xf32>
    %105 = arith.addf %97, %104 : vector<256x4xf32>
    %106 = vector.extract_strided_slice %82 {offsets = [23, 0], sizes = [256, 4], strides = [1, 1]} : vector<304x4xf32> to vector<256x4xf32>
    %107 = vector.broadcast %2 : vector<256x1xf32> to vector<256x4xf32>
    %108 = arith.mulf %106, %107 : vector<256x4xf32>
    %c3_54 = arith.constant 3 : index
    %c0_55 = arith.constant 0 : index
    %c0_56 = arith.constant 0 : index
    %109 = vector.load %arg7[%c3_54, %c0_55, %c0_56] : memref<9x4x4xbf16, #tpu.memory_space<vmem>>, vector<1x4x4xbf16>
    %110 = vector.shape_cast %109 : vector<1x4x4xbf16> to vector<4x4xbf16>
    %111 = arith.truncf %108 : vector<256x4xf32> to vector<256x4xbf16>
    %cst_57 = arith.constant dense<0.000000e+00> : vector<256x4xf32>
    %112 = tpu.matmul %111, %110, %cst_57 {dimension_numbers = #tpu.dot_dimension_numbers<[1], [0], [0], [1], [0, 0, 1, 1], [], []>} : vector<256x4xbf16>, vector<4x4xbf16>, vector<256x4xf32> -> vector<256x4xf32>
    %113 = arith.addf %105, %112 : vector<256x4xf32>
    %114 = vector.extract_strided_slice %82 {offsets = [24, 0], sizes = [256, 4], strides = [1, 1]} : vector<304x4xf32> to vector<256x4xf32>
    %c4_58 = arith.constant 4 : index
    %c0_59 = arith.constant 0 : index
    %c0_60 = arith.constant 0 : index
    %115 = vector.load %arg7[%c4_58, %c0_59, %c0_60] : memref<9x4x4xbf16, #tpu.memory_space<vmem>>, vector<1x4x4xbf16>
    %116 = vector.shape_cast %115 : vector<1x4x4xbf16> to vector<4x4xbf16>
    %117 = arith.truncf %114 : vector<256x4xf32> to vector<256x4xbf16>
    %cst_61 = arith.constant dense<0.000000e+00> : vector<256x4xf32>
    %118 = tpu.matmul %117, %116, %cst_61 {dimension_numbers = #tpu.dot_dimension_numbers<[1], [0], [0], [1], [0, 0, 1, 1], [], []>} : vector<256x4xbf16>, vector<4x4xbf16>, vector<256x4xf32> -> vector<256x4xf32>
    %119 = arith.addf %113, %118 : vector<256x4xf32>
    %120 = vector.extract_strided_slice %82 {offsets = [25, 0], sizes = [256, 4], strides = [1, 1]} : vector<304x4xf32> to vector<256x4xf32>
    %121 = vector.broadcast %3 : vector<256x1xf32> to vector<256x4xf32>
    %122 = arith.mulf %120, %121 : vector<256x4xf32>
    %c5_62 = arith.constant 5 : index
    %c0_63 = arith.constant 0 : index
    %c0_64 = arith.constant 0 : index
    %123 = vector.load %arg7[%c5_62, %c0_63, %c0_64] : memref<9x4x4xbf16, #tpu.memory_space<vmem>>, vector<1x4x4xbf16>
    %124 = vector.shape_cast %123 : vector<1x4x4xbf16> to vector<4x4xbf16>
    %125 = arith.truncf %122 : vector<256x4xf32> to vector<256x4xbf16>
    %cst_65 = arith.constant dense<0.000000e+00> : vector<256x4xf32>
    %126 = tpu.matmul %125, %124, %cst_65 {dimension_numbers = #tpu.dot_dimension_numbers<[1], [0], [0], [1], [0, 0, 1, 1], [], []>} : vector<256x4xbf16>, vector<4x4xbf16>, vector<256x4xf32> -> vector<256x4xf32>
    %127 = arith.addf %119, %126 : vector<256x4xf32>
    %128 = vector.extract_strided_slice %82 {offsets = [39, 0], sizes = [256, 4], strides = [1, 1]} : vector<304x4xf32> to vector<256x4xf32>
    %129 = vector.broadcast %2 : vector<256x1xf32> to vector<256x4xf32>
    %130 = arith.mulf %128, %129 : vector<256x4xf32>
    %c6_66 = arith.constant 6 : index
    %c0_67 = arith.constant 0 : index
    %c0_68 = arith.constant 0 : index
    %131 = vector.load %arg7[%c6_66, %c0_67, %c0_68] : memref<9x4x4xbf16, #tpu.memory_space<vmem>>, vector<1x4x4xbf16>
    %132 = vector.shape_cast %131 : vector<1x4x4xbf16> to vector<4x4xbf16>
    %133 = arith.truncf %130 : vector<256x4xf32> to vector<256x4xbf16>
    %cst_69 = arith.constant dense<0.000000e+00> : vector<256x4xf32>
    %134 = tpu.matmul %133, %132, %cst_69 {dimension_numbers = #tpu.dot_dimension_numbers<[1], [0], [0], [1], [0, 0, 1, 1], [], []>} : vector<256x4xbf16>, vector<4x4xbf16>, vector<256x4xf32> -> vector<256x4xf32>
    %135 = arith.addf %127, %134 : vector<256x4xf32>
    %136 = vector.extract_strided_slice %82 {offsets = [40, 0], sizes = [256, 4], strides = [1, 1]} : vector<304x4xf32> to vector<256x4xf32>
    %c7_70 = arith.constant 7 : index
    %c0_71 = arith.constant 0 : index
    %c0_72 = arith.constant 0 : index
    %137 = vector.load %arg7[%c7_70, %c0_71, %c0_72] : memref<9x4x4xbf16, #tpu.memory_space<vmem>>, vector<1x4x4xbf16>
    %138 = vector.shape_cast %137 : vector<1x4x4xbf16> to vector<4x4xbf16>
    %139 = arith.truncf %136 : vector<256x4xf32> to vector<256x4xbf16>
    %cst_73 = arith.constant dense<0.000000e+00> : vector<256x4xf32>
    %140 = tpu.matmul %139, %138, %cst_73 {dimension_numbers = #tpu.dot_dimension_numbers<[1], [0], [0], [1], [0, 0, 1, 1], [], []>} : vector<256x4xbf16>, vector<4x4xbf16>, vector<256x4xf32> -> vector<256x4xf32>
    %141 = arith.addf %135, %140 : vector<256x4xf32>
    %142 = vector.extract_strided_slice %82 {offsets = [41, 0], sizes = [256, 4], strides = [1, 1]} : vector<304x4xf32> to vector<256x4xf32>
    %143 = vector.broadcast %3 : vector<256x1xf32> to vector<256x4xf32>
    %144 = arith.mulf %142, %143 : vector<256x4xf32>
    %c8_74 = arith.constant 8 : index
    %c0_75 = arith.constant 0 : index
    %c0_76 = arith.constant 0 : index
    %145 = vector.load %arg7[%c8_74, %c0_75, %c0_76] : memref<9x4x4xbf16, #tpu.memory_space<vmem>>, vector<1x4x4xbf16>
    %146 = vector.shape_cast %145 : vector<1x4x4xbf16> to vector<4x4xbf16>
    %147 = arith.truncf %144 : vector<256x4xf32> to vector<256x4xbf16>
    %cst_77 = arith.constant dense<0.000000e+00> : vector<256x4xf32>
    %148 = tpu.matmul %147, %146, %cst_77 {dimension_numbers = #tpu.dot_dimension_numbers<[1], [0], [0], [1], [0, 0, 1, 1], [], []>} : vector<256x4xbf16>, vector<4x4xbf16>, vector<256x4xf32> -> vector<256x4xf32>
    %149 = arith.addf %141, %148 : vector<256x4xf32>
    %c0_78 = arith.constant 0 : index
    %c0_79 = arith.constant 0 : index
    %150 = vector.load %arg8[%c0_78, %c0_79] : memref<1x4xf32, #tpu.memory_space<vmem>>, vector<1x4xf32>
    %151 = vector.broadcast %150 : vector<1x4xf32> to vector<256x4xf32>
    %152 = arith.mulf %149, %151 : vector<256x4xf32>
    %c0_80 = arith.constant 0 : index
    %c0_81 = arith.constant 0 : index
    %153 = vector.load %arg9[%c0_80, %c0_81] : memref<1x4xf32, #tpu.memory_space<vmem>>, vector<1x4xf32>
    %154 = vector.broadcast %153 : vector<1x4xf32> to vector<256x4xf32>
    %155 = arith.addf %152, %154 : vector<256x4xf32>
    %156 = arith.addf %155, %1 : vector<256x4xf32>
    %cst_82 = arith.constant 0.000000e+00 : f32
    %157 = vector.broadcast %cst_82 : f32 to vector<256x4xf32>
    %158 = arith.maximumf %156, %157 : vector<256x4xf32>
    %c0_83 = arith.constant 0 : index
    %c0_84 = arith.constant 0 : index
    %c0_85 = arith.constant 0 : index
    %159 = vector.load %arg10[%c0_83, %c0_84, %c0_85] : memref<1x256x4xf32, #tpu.memory_space<vmem>>, vector<1x256x4xf32>
    %160 = vector.shape_cast %159 : vector<1x256x4xf32> to vector<256x4xf32>
    %161 = vector.shape_cast %158 : vector<256x4xf32> to vector<1x256x4xf32>
    tpu.vector_store %arg10[%c0_83, %c0_84, %c0_85], %161 {strides = array<i32>} : memref<1x256x4xf32, #tpu.memory_space<vmem>>, vector<1x256x4xf32>,
    return
  }
  func.func @transform_0(%arg0: i32) -> (i32, i32, i32) {
    %c0_i32 = arith.constant 0 : i32
    %c0_i32_0 = arith.constant 0 : i32
    %c0_i32_1 = arith.constant 0 : i32
    return %arg0, %c0_i32, %c0_i32_0 : i32, i32, i32
  }
  func.func @transform_1(%arg0: i32) -> (i32, i32) {
    %c0_i32 = arith.constant 0 : i32
    %c0_i32_0 = arith.constant 0 : i32
    %c0_i32_1 = arith.constant 0 : i32
    return %c0_i32, %c0_i32_0 : i32, i32
  }
  func.func @transform_2(%arg0: i32) -> (i32, i32) {
    %c0_i32 = arith.constant 0 : i32
    %c0_i32_0 = arith.constant 0 : i32
    %c0_i32_1 = arith.constant 0 : i32
    return %c0_i32, %c0_i32_0 : i32, i32
  }
  func.func @transform_3(%arg0: i32) -> (i32, i32, i32) {
    %c0_i32 = arith.constant 0 : i32
    %c0_i32_0 = arith.constant 0 : i32
    %c0_i32_1 = arith.constant 0 : i32
    %c0_i32_2 = arith.constant 0 : i32
    return %c0_i32, %c0_i32_0, %c0_i32_1 : i32, i32, i32
  }
  func.func @transform_4(%arg0: i32) -> (i32, i32) {
    %c0_i32 = arith.constant 0 : i32
    %c0_i32_0 = arith.constant 0 : i32
    %c0_i32_1 = arith.constant 0 : i32
    return %c0_i32, %c0_i32_0 : i32, i32
  }
  func.func @transform_5(%arg0: i32) -> (i32, i32) {
    %c0_i32 = arith.constant 0 : i32
    %c0_i32_0 = arith.constant 0 : i32
    %c0_i32_1 = arith.constant 0 : i32
    return %c0_i32, %c0_i32_0 : i32, i32
  }
  func.func @transform_6(%arg0: i32) -> (i32, i32, i32) {
    %c0_i32 = arith.constant 0 : i32
    %c0_i32_0 = arith.constant 0 : i32
    %c0_i32_1 = arith.constant 0 : i32
    %c0_i32_2 = arith.constant 0 : i32
    return %c0_i32, %c0_i32_0, %c0_i32_1 : i32, i32, i32
  }
  func.func @transform_7(%arg0: i32) -> (i32, i32) {
    %c0_i32 = arith.constant 0 : i32
    %c0_i32_0 = arith.constant 0 : i32
    %c0_i32_1 = arith.constant 0 : i32
    return %c0_i32, %c0_i32_0 : i32, i32
  }
  func.func @transform_8(%arg0: i32) -> (i32, i32) {
    %c0_i32 = arith.constant 0 : i32
    %c0_i32_0 = arith.constant 0 : i32
    %c0_i32_1 = arith.constant 0 : i32
    return %c0_i32, %c0_i32_0 : i32, i32
  }
  func.func @transform_9(%arg0: i32) -> (i32, i32, i32) {
    %c0_i32 = arith.constant 0 : i32
    %c0_i32_0 = arith.constant 0 : i32
    %c0_i32_1 = arith.constant 0 : i32
    return %arg0, %c0_i32, %c0_i32_0 : i32, i32, i32
  }
}

</mosaic_0001>

<llo_original>
// kernel: basic_block_forward.1
$region0: #{basic_block_forward.1}
  #allocation0 [shape = 'u32[]', space=smem, size = 0x4, offset = 0x4, fixed_abs, tag = 'smem constant byte address 0x4 - core index']
  #allocation1 [shape = 'u32[144,128]{1,0:T(1,128)}', space=vmem, size = 0x12000, scoped, tag = 'internal scratch']
  %s0 = inlined_call_operand.vmem [shape: f32[2,256,4], index: 0, kind: input, shape index: {}]
  %s1 = inlined_call_operand.vmem [shape: f32[256,1], index: 1, kind: input, shape index: {}]
  %s2 = inlined_call_operand.vmem [shape: f32[256,1], index: 2, kind: input, shape index: {}]
  %s3 = inlined_call_operand.vmem [shape: bf16[9,4,4], index: 3, kind: input, shape index: {}]
  %s4 = inlined_call_operand.vmem [shape: f32[1,4], index: 4, kind: input, shape index: {}]
  %s5 = inlined_call_operand.vmem [shape: f32[1,4], index: 5, kind: input, shape index: {}]
  %s6 = inlined_call_operand.vmem [shape: bf16[9,4,4], index: 6, kind: input, shape index: {}]
  %s7 = inlined_call_operand.vmem [shape: f32[1,4], index: 7, kind: input, shape index: {}]
  %s8 = inlined_call_operand.vmem [shape: f32[1,4], index: 8, kind: input, shape index: {}]
  %s9 = inlined_call_operand.vmem [shape: f32[2,256,4], index: 9, kind: output, shape index: {}]
  %s10 = sld [smem:[#allocation0]]
  $region69: #{basic_block_forward.1} parent=0
    _
  %s12 = ssub.s32 1, %s10
  %s13 = scalar_select 0, %s12, %s10
  loop: start=0, step=1, limit=4
  $region2: #{basic_block_forward.1} parent=0 // loop_pre_header
    _
  $region3: #{basic_block_forward.1} parent=0 // loop_header
    %s15 = sphi 0, %s19
    %p16 = scmp.ge.s32.totalorder %s15, 4
    %s25 = sphi 0, %s27
    %s28 = sphi 0, %s25
    %s29 = sphi 0, %s28
    %s45 = sphi 0, %s29
    %s49 = sphi 0, %s49
    %s51 = sphi 0, %s49
    %s52 = sphi 0, %s51
    %s66 = sphi 0, %s52
    %s70 = sphi 0, %s70
    %s72 = sphi 0, %s70
    %s73 = sphi 0, %s72
    %s87 = sphi 0, %s73
    %s91 = sphi 0, %s91
    %s93 = sphi 0, %s91
    %s94 = sphi 0, %s93
    %s108 = sphi 0, %s94
    %s112 = sphi 0, %s112
    %s114 = sphi 0, %s112
    %s115 = sphi 0, %s114
    %s129 = sphi 0, %s115
    %s133 = sphi 0, %s133
    %s135 = sphi 0, %s133
    %s136 = sphi 0, %s135
    %s150 = sphi 0, %s136
    %s154 = sphi 0, %s154
    %s156 = sphi 0, %s154
    %s157 = sphi 0, %s156
    %s171 = sphi 0, %s157
    %s175 = sphi 0, %s175
    %s177 = sphi 0, %s175
    %s178 = sphi 0, %s177
    %s192 = sphi 0, %s178
    %s196 = sphi 0, %s196
    %s198 = sphi 0, %s196
    %s199 = sphi 0, %s198
    %s213 = sphi 0, %s199
    %s219 = sphi 0, %s221
    %s222 = sphi 0, %s219
    %s223 = sphi 0, %s222
    %s239 = sphi 0, %s223
  $region4: #{basic_block_forward.1} parent=0 // loop_header_branch
    %18 = sbr.rel (%p16) target = $region8
  $region5: #{basic_block_forward.1} parent=0 // loop_body
    %s20 = ssub.s32 %s15, 1
    %s21 = ssub.s32 %s15, 2
    %s22 = sadd.s32 %s15, 1
    %s23 = ssub.s32 %s15, %s22
    %p24 = scmp.eq.s32.totalorder %s23, 0
    %s26 = sadd.s32 %s25, 1
    %s27 = scalar_select %p24, %s25, %s26
    %p30 = pneg %p24
    %p31 = scmp.eq.s32.totalorder %s15, 1
    %p32 = por %p30, %p31
    %p33 = scmp.ne.s32.totalorder %s25, %s28
    %p34 = scmp.eq.s32.totalorder %s15, 0
    %p35 = por %p33, %p34
    %p36 = scmp.ne.s32.totalorder %s25, %s28
    %p37 = scmp.eq.s32.totalorder %s20, 1
    %p38 = por %p36, %p37
    %p39 = scmp.ne.s32.totalorder %s28, %s29
    %p40 = scmp.eq.s32.totalorder %s20, 0
    %p41 = por %p39, %p40
    %p42 = scmp.ne.s32.totalorder %s28, %s29
    %p43 = scmp.eq.s32.totalorder %s21, 1
    %p44 = por %p42, %p43
    %p46 = scmp.ne.s32.totalorder %s29, %s45
    %p47 = scmp.eq.s32.totalorder %s21, 0
    %p48 = por %p46, %p47
    %s50 = sadd.s32 %s49, 1
    %p53 = scmp.eq.s32.totalorder %s15, 1
    %p54 = scmp.ne.s32.totalorder %s49, %s51
    %p55 = scmp.eq.s32.totalorder %s15, 0
    %p56 = por %p54, %p55
    %p57 = scmp.ne.s32.totalorder %s49, %s51
    %p58 = scmp.eq.s32.totalorder %s20, 1
    %p59 = por %p57, %p58
    %p60 = scmp.ne.s32.totalorder %s51, %s52
    %p61 = scmp.eq.s32.totalorder %s20, 0
    %p62 = por %p60, %p61
    %p63 = scmp.ne.s32.totalorder %s51, %s52
    %p64 = scmp.eq.s32.totalorder %s21, 1
    %p65 = por %p63, %p64
    %p67 = scmp.ne.s32.totalorder %s52, %s66
    %p68 = scmp.eq.s32.totalorder %s21, 0
    %p69 = por %p67, %p68
    %s71 = sadd.s32 %s70, 1
    %p74 = scmp.eq.s32.totalorder %s15, 1
    %p75 = scmp.ne.s32.totalorder %s70, %s72
    %p76 = scmp.eq.s32.totalorder %s15, 0
    %p77 = por %p75, %p76
    %p78 = scmp.ne.s32.totalorder %s70, %s72
    %p79 = scmp.eq.s32.totalorder %s20, 1
    %p80 = por %p78, %p79
    %p81 = scmp.ne.s32.totalorder %s72, %s73
    %p82 = scmp.eq.s32.totalorder %s20, 0
    %p83 = por %p81, %p82
    %p84 = scmp.ne.s32.totalorder %s72, %s73
    %p85 = scmp.eq.s32.totalorder %s21, 1
    %p86 = por %p84, %p85
    %p88 = scmp.ne.s32.totalorder %s73, %s87
    %p89 = scmp.eq.s32.totalorder %s21, 0
    %p90 = por %p88, %p89
    %s92 = sadd.s32 %s91, 1
    %p95 = scmp.eq.s32.totalorder %s15, 1
    %p96 = scmp.ne.s32.totalorder %s91, %s93
    %p97 = scmp.eq.s32.totalorder %s15, 0
    %p98 = por %p96, %p97
    %p99 = scmp.ne.s32.totalorder %s91, %s93
    %p100 = scmp.eq.s32.totalorder %s20, 1
    %p101 = por %p99, %p100
    %p102 = scmp.ne.s32.totalorder %s93, %s94
    %p103 = scmp.eq.s32.totalorder %s20, 0
    %p104 = por %p102, %p103
    %p105 = scmp.ne.s32.totalorder %s93, %s94
    %p106 = scmp.eq.s32.totalorder %s21, 1
    %p107 = por %p105, %p106
    %p109 = scmp.ne.s32.totalorder %s94, %s108
    %p110 = scmp.eq.s32.totalorder %s21, 0
    %p111 = por %p109, %p110
    %s113 = sadd.s32 %s112, 1
    %p116 = scmp.eq.s32.totalorder %s15, 1
    %p117 = scmp.ne.s32.totalorder %s112, %s114
    %p118 = scmp.eq.s32.totalorder %s15, 0
    %p119 = por %p117, %p118
    %p120 = scmp.ne.s32.totalorder %s112, %s114
    %p121 = scmp.eq.s32.totalorder %s20, 1
    %p122 = por %p120, %p121
    %p123 = scmp.ne.s32.totalorder %s114, %s115
    %p124 = scmp.eq.s32.totalorder %s20, 0
    %p125 = por %p123, %p124
    %p126 = scmp.ne.s32.totalorder %s114, %s115
    %p127 = scmp.eq.s32.totalorder %s21, 1
    %p128 = por %p126, %p127
    %p130 = scmp.ne.s32.totalorder %s115, %s129
    %p131 = scmp.eq.s32.totalorder %s21, 0
    %p132 = por %p130, %p131
    %s134 = sadd.s32 %s133, 1
    %p137 = scmp.eq.s32.totalorder %s15, 1
    %p138 = scmp.ne.s32.totalorder %s133, %s135
    %p139 = scmp.eq.s32.totalorder %s15, 0
    %p140 = por %p138, %p139
    %p141 = scmp.ne.s32.totalorder %s133, %s135
    %p142 = scmp.eq.s32.totalorder %s20, 1
    %p143 = por %p141, %p142
    %p144 = scmp.ne.s32.totalorder %s135, %s136
    %p145 = scmp.eq.s32.totalorder %s20, 0
    %p146 = por %p144, %p145
    %p147 = scmp.ne.s32.totalorder %s135, %s136
    %p148 = scmp.eq.s32.totalorder %s21, 1
    %p149 = por %p147, %p148
    %p151 = scmp.ne.s32.totalorder %s136, %s150
    %p152 = scmp.eq.s32.totalorder %s21, 0
    %p153 = por %p151, %p152
    %s155 = sadd.s32 %s154, 1
    %p158 = scmp.eq.s32.totalorder %s15, 1
    %p159 = scmp.ne.s32.totalorder %s154, %s156
    %p160 = scmp.eq.s32.totalorder %s15, 0
    %p161 = por %p159, %p160
    %p162 = scmp.ne.s32.totalorder %s154, %s156
    %p163 = scmp.eq.s32.totalorder %s20, 1
    %p164 = por %p162, %p163
    %p165 = scmp.ne.s32.totalorder %s156, %s157
    %p166 = scmp.eq.s32.totalorder %s20, 0
    %p167 = por %p165, %p166
    %p168 = scmp.ne.s32.totalorder %s156, %s157
    %p169 = scmp.eq.s32.totalorder %s21, 1
    %p170 = por %p168, %p169
    %p172 = scmp.ne.s32.totalorder %s157, %s171
    %p173 = scmp.eq.s32.totalorder %s21, 0
    %p174 = por %p172, %p173
    %s176 = sadd.s32 %s175, 1
    %p179 = scmp.eq.s32.totalorder %s15, 1
    %p180 = scmp.ne.s32.totalorder %s175, %s177
    %p181 = scmp.eq.s32.totalorder %s15, 0
    %p182 = por %p180, %p181
    %p183 = scmp.ne.s32.totalorder %s175, %s177
    %p184 = scmp.eq.s32.totalorder %s20, 1
    %p185 = por %p183, %p184
    %p186 = scmp.ne.s32.totalorder %s177, %s178
    %p187 = scmp.eq.s32.totalorder %s20, 0
    %p188 = por %p186, %p187
    %p189 = scmp.ne.s32.totalorder %s177, %s178
    %p190 = scmp.eq.s32.totalorder %s21, 1
    %p191 = por %p189, %p190
    %p193 = scmp.ne.s32.totalorder %s178, %s192
    %p194 = scmp.eq.s32.totalorder %s21, 0
    %p195 = por %p193, %p194
    %s197 = sadd.s32 %s196, 1
    %p200 = scmp.eq.s32.totalorder %s15, 1
    %p201 = scmp.ne.s32.totalorder %s196, %s198
    %p202 = scmp.eq.s32.totalorder %s15, 0
    %p203 = por %p201, %p202
    %p204 = scmp.ne.s32.totalorder %s196, %s198
    %p205 = scmp.eq.s32.totalorder %s20, 1
    %p206 = por %p204, %p205
    %p207 = scmp.ne.s32.totalorder %s198, %s199
    %p208 = scmp.eq.s32.totalorder %s20, 0
    %p209 = por %p207, %p208
    %p210 = scmp.ne.s32.totalorder %s198, %s199
    %p211 = scmp.eq.s32.totalorder %s21, 1
    %p212 = por %p210, %p211
    %p214 = scmp.ne.s32.totalorder %s199, %s213
    %p215 = scmp.eq.s32.totalorder %s21, 0
    %p216 = por %p214, %p215
    %s217 = ssub.s32 %s15, %s22
    %p218 = scmp.eq.s32.totalorder %s217, 0
    %s220 = sadd.s32 %s219, 1
    %s221 = scalar_select %p218, %s219, %s220
    %p224 = pneg %p218
    %p225 = scmp.eq.s32.totalorder %s15, 1
    %p226 = por %p224, %p225
    %p227 = scmp.ne.s32.totalorder %s219, %s222
    %p228 = scmp.eq.s32.totalorder %s15, 0
    %p229 = por %p227, %p228
    %p230 = scmp.ne.s32.totalorder %s219, %s222
    %p231 = scmp.eq.s32.totalorder %s20, 1
    %p232 = por %p230, %p231
    %p233 = scmp.ne.s32.totalorder %s222, %s223
    %p234 = scmp.eq.s32.totalorder %s20, 0
    %p235 = por %p233, %p234
    %p236 = scmp.ne.s32.totalorder %s222, %s223
    %p237 = scmp.eq.s32.totalorder %s21, 1
    %p238 = por %p236, %p237
    %p240 = scmp.ne.s32.totalorder %s223, %s239
    %p241 = scmp.eq.s32.totalorder %s21, 0
    %p242 = por %p240, %p241
    %p243 = scmp.le.s32.totalorder 1, %s15
    %p244 = scmp.lt.s32.totalorder %s15, 3
    %p245 = pnand %p243, %p244
    %p246 = pneg %p245
    // Predicated region
    $region9: #{basic_block_forward.1} parent=5 // pred_check
      _
    $region10: #{basic_block_forward.1} parent=5 // pred_check_branch
      %248 = sbr.rel (%p245) target = $region12
    $region11: #{basic_block_forward.1} parent=5 // pred_region
      %s249 = ssub.s32 %s15, 1
      // Predicated region
      $region13: #{basic_block_forward.1} parent=11 // pred_check
        %p250 = pneg %p62
      $region14: #{basic_block_forward.1} parent=11 // pred_check_branch
        %252 = sbr.rel (%p250) target = $region16
      $region15: #{basic_block_forward.1} parent=11 // pred_region
        _
      $region16: #{basic_block_forward.1} parent=11 // pred_fallthru
        _
      // Predicated region
      $region17: #{basic_block_forward.1} parent=11 // pred_check
        %p253 = pneg %p83
      $region18: #{basic_block_forward.1} parent=11 // pred_check_branch
        %255 = sbr.rel (%p253) target = $region20
      $region19: #{basic_block_forward.1} parent=11 // pred_region
        _
      $region20: #{basic_block_forward.1} parent=11 // pred_fallthru
        _
      // Predicated region
      $region21: #{basic_block_forward.1} parent=11 // pred_check
        %p256 = pneg %p104
      $region22: #{basic_block_forward.1} parent=11 // pred_check_branch
        %258 = sbr.rel (%p256) target = $region24
      $region23: #{basic_block_forward.1} parent=11 // pred_region
        _
      $region24: #{basic_block_forward.1} parent=11 // pred_fallthru
        _
      // Predicated region
      $region25: #{basic_block_forward.1} parent=11 // pred_check
        %p259 = pneg %p125
      $region26: #{basic_block_forward.1} parent=11 // pred_check_branch
        %261 = sbr.rel (%p259) target = $region28
      $region27: #{basic_block_forward.1} parent=11 // pred_region
        _
      $region28: #{basic_block_forward.1} parent=11 // pred_fallthru
        _
      // Predicated region
      $region29: #{basic_block_forward.1} parent=11 // pred_check
        %p262 = pneg %p146
      $region30: #{basic_block_forward.1} parent=11 // pred_check_branch
        %264 = sbr.rel (%p262) target = $region32
      $region31: #{basic_block_forward.1} parent=11 // pred_region
        _
      $region32: #{basic_block_forward.1} parent=11 // pred_fallthru
        _
      // Predicated region
      $region33: #{basic_block_forward.1} parent=11 // pred_check
        %p265 = pneg %p167
      $region34: #{basic_block_forward.1} parent=11 // pred_check_branch
        %267 = sbr.rel (%p265) target = $region36
      $region35: #{basic_block_forward.1} parent=11 // pred_region
        _
      $region36: #{basic_block_forward.1} parent=11 // pred_fallthru
        _
      // Predicated region
      $region37: #{basic_block_forward.1} parent=11 // pred_check
        %p268 = pneg %p188
      $region38: #{basic_block_forward.1} parent=11 // pred_check_branch
        %270 = sbr.rel (%p268) target = $region40
      $region39: #{basic_block_forward.1} parent=11 // pred_region
        _
      $region40: #{basic_block_forward.1} parent=11 // pred_fallthru
        _
      // Predicated region
      $region41: #{basic_block_forward.1} parent=11 // pred_check
        %p271 = pneg %p209
      $region42: #{basic_block_forward.1} parent=11 // pred_check_branch
        %273 = sbr.rel (%p271) target = $region44
      $region43: #{basic_block_forward.1} parent=11 // pred_region
        _
      $region44: #{basic_block_forward.1} parent=11 // pred_fallthru
        _
    $region12: #{basic_block_forward.1} parent=5 // pred_fallthru
      _
    %p274 = scmp.lt.s32.totalorder %s15, 2
    // Predicated region
    $region45: #{basic_block_forward.1} parent=5 // pred_check
      %p275 = pneg %p274
    $region46: #{basic_block_forward.1} parent=5 // pred_check_branch
      %277 = sbr.rel (%p275) target = $region48
    $region47: #{basic_block_forward.1} parent=5 // pred_region
      // Predicated region
      $region49: #{basic_block_forward.1} parent=47 // pred_check
        %p278 = pneg %p35
      $region50: #{basic_block_forward.1} parent=47 // pred_check_branch
        %280 = sbr.rel (%p278) target = $region52
      $region51: #{basic_block_forward.1} parent=47 // pred_region
        %p281 = scmp.lt.s32.totalorder %s15, 1
        %s282 = scalar_select %p281, %s15, 1
        %s283 = smul.addr %s282, 32
        %s284 = smul.addr %s283, 8
        %s285 = scalar_lea.vmem %s0, %s284
      $region52: #{basic_block_forward.1} parent=47 // pred_fallthru
        _
    $region48: #{basic_block_forward.1} parent=5 // pred_fallthru
      _
    %p286 = scmp.le.s32.totalorder 1, %s15
    %p287 = scmp.lt.s32.totalorder %s15, 3
    %p288 = pnand %p286, %p287
    %p289 = pneg %p288
    // Predicated region
    $region53: #{basic_block_forward.1} parent=5 // pred_check
      _
    $region54: #{basic_block_forward.1} parent=5 // pred_check_branch
      %291 = sbr.rel (%p288) target = $region56
    $region55: #{basic_block_forward.1} parent=5 // pred_region
      %s292 = ssub.s32 %s15, 1
      %p293 = scmp.lt.s32.totalorder %s20, 1
      %s294 = scalar_select %p293, %s20, 1
      %s295 = smul.addr %s294, 32
      %s296 = smul.addr %s295, 8
      %s297 = scalar_lea.vmem %s0, %s296
      %p298 = pneg %p41
      %p299 = pneg %p38
      %p300 = pneg %p62
      %p301 = pneg %p59
      %p302 = pneg %p83
      %p303 = pneg %p80
      %p304 = pneg %p104
      %p305 = pneg %p101
      %p306 = pneg %p125
      %p307 = pneg %p122
      %p308 = pneg %p146
      %p309 = pneg %p143
      %p310 = pneg %p167
      %p311 = pneg %p164
      %p312 = pneg %p188
      %p313 = pneg %p185
      %p314 = pneg %p209
      %p315 = pneg %p206
      %p316 = pneg %p235
      %p317 = pneg %p232
      %p318 = scmp.lt.s32.totalorder %s20, 1
      %s319 = scalar_select %p318, %s20, 1
      %s320 = smul.addr %s319, 32
      %s321 = smul.addr %s320, 8
      %s322 = scalar_lea.vmem %s9, %s321
      %p323 = scmp.lt.s32.totalorder %s20, 1
      %s324 = scalar_select %p323, %s20, 1
      %s325 = smul.addr %s324, 32
      %s326 = smul.addr %s325, 8
      %s327 = scalar_lea.vmem %s0, %s326
      %p328 = scmp.lt.s32.totalorder %s20, 1
      %s329 = scalar_select %p328, %s20, 1
      %s330 = smul.addr %s329, 32
      %s331 = smul.addr %s330, 8
      %s332 = scalar_lea.vmem %s9, %s331
      %v334 = vld [vmem:[%s327] sm:$0xff]
      %v335 = vld [vmem:[%s327 + $0x8] sm:$0xff]
      %v336 = vld [vmem:[%s327 + $0x10] sm:$0xff]
      %v337 = vld [vmem:[%s327 + $0x18] sm:$0xff]
      %v338 = vld [vmem:[%s327 + $0x20] sm:$0xff]
      %v339 = vld [vmem:[%s327 + $0x28] sm:$0xff]
      %v340 = vld [vmem:[%s327 + $0x30] sm:$0xff]
      %v341 = vld [vmem:[%s327 + $0x38] sm:$0xff]
      %v342 = vld [vmem:[%s327 + $0x40] sm:$0xff]
      %v343 = vld [vmem:[%s327 + $0x48] sm:$0xff]
      %v344 = vld [vmem:[%s327 + $0x50] sm:$0xff]
      %v345 = vld [vmem:[%s327 + $0x58] sm:$0xff]
      %v346 = vld [vmem:[%s327 + $0x60] sm:$0xff]
      %v347 = vld [vmem:[%s327 + $0x68] sm:$0xff]
      %v348 = vld [vmem:[%s327 + $0x70] sm:$0xff]
      %v349 = vld [vmem:[%s327 + $0x78] sm:$0xff]
      %v350 = vld [vmem:[%s327 + $0x80] sm:$0xff]
      %v351 = vld [vmem:[%s327 + $0x88] sm:$0xff]
      %v352 = vld [vmem:[%s327 + $0x90] sm:$0xff]
      %v353 = vld [vmem:[%s327 + $0x98] sm:$0xff]
      %v354 = vld [vmem:[%s327 + $0xa0] sm:$0xff]
      %v355 = vld [vmem:[%s327 + $0xa8] sm:$0xff]
      %v356 = vld [vmem:[%s327 + $0xb0] sm:$0xff]
      %v357 = vld [vmem:[%s327 + $0xb8] sm:$0xff]
      %v358 = vld [vmem:[%s327 + $0xc0] sm:$0xff]
      %v359 = vld [vmem:[%s327 + $0xc8] sm:$0xff]
      %v360 = vld [vmem:[%s327 + $0xd0] sm:$0xff]
      %v361 = vld [vmem:[%s327 + $0xd8] sm:$0xff]
      %v362 = vld [vmem:[%s327 + $0xe0] sm:$0xff]
      %v363 = vld [vmem:[%s327 + $0xe8] sm:$0xff]
      %v364 = vld [vmem:[%s327 + $0xf0] sm:$0xff]
      %v365 = vld [vmem:[%s327 + $0xf8] sm:$0xff]
      %v366 = vld [vmem:[%s1] sm:$0xff]
      %v367 = vld [vmem:[%s1 + $0x8] sm:$0xff]
      %v368 = vld [vmem:[%s1 + $0x10] sm:$0xff]
      %v369 = vld [vmem:[%s1 + $0x18] sm:$0xff]
      %v370 = vld [vmem:[%s1 + $0x20] sm:$0xff]
      %v371 = vld [vmem:[%s1 + $0x28] sm:$0xff]
      %v372 = vld [vmem:[%s1 + $0x30] sm:$0xff]
      %v373 = vld [vmem:[%s1 + $0x38] sm:$0xff]
      %v374 = vld [vmem:[%s1 + $0x40] sm:$0xff]
      %v375 = vld [vmem:[%s1 + $0x48] sm:$0xff]
      %v376 = vld [vmem:[%s1 + $0x50] sm:$0xff]
      %v377 = vld [vmem:[%s1 + $0x58] sm:$0xff]
      %v378 = vld [vmem:[%s1 + $0x60] sm:$0xff]
      %v379 = vld [vmem:[%s1 + $0x68] sm:$0xff]
      %v380 = vld [vmem:[%s1 + $0x70] sm:$0xff]
      %v381 = vld [vmem:[%s1 + $0x78] sm:$0xff]
      %v382 = vld [vmem:[%s1 + $0x80] sm:$0xff]
      %v383 = vld [vmem:[%s1 + $0x88] sm:$0xff]
      %v384 = vld [vmem:[%s1 + $0x90] sm:$0xff]
      %v385 = vld [vmem:[%s1 + $0x98] sm:$0xff]
      %v386 = vld [vmem:[%s1 + $0xa0] sm:$0xff]
      %v387 = vld [vmem:[%s1 + $0xa8] sm:$0xff]
      %v388 = vld [vmem:[%s1 + $0xb0] sm:$0xff]
      %v389 = vld [vmem:[%s1 + $0xb8] sm:$0xff]
      %v390 = vld [vmem:[%s1 + $0xc0] sm:$0xff]
      %v391 = vld [vmem:[%s1 + $0xc8] sm:$0xff]
      %v392 = vld [vmem:[%s1 + $0xd0] sm:$0xff]
      %v393 = vld [vmem:[%s1 + $0xd8] sm:$0xff]
      %v394 = vld [vmem:[%s1 + $0xe0] sm:$0xff]
      %v395 = vld [vmem:[%s1 + $0xe8] sm:$0xff]
      %v396 = vld [vmem:[%s1 + $0xf0] sm:$0xff]
      %v397 = vld [vmem:[%s1 + $0xf8] sm:$0xff]
      %v398 = vld [vmem:[%s2] sm:$0xff]
      %v399 = vld [vmem:[%s2 + $0x8] sm:$0xff]
      %v400 = vld [vmem:[%s2 + $0x10] sm:$0xff]
      %v401 = vld [vmem:[%s2 + $0x18] sm:$0xff]
      %v402 = vld [vmem:[%s2 + $0x20] sm:$0xff]
      %v403 = vld [vmem:[%s2 + $0x28] sm:$0xff]
      %v404 = vld [vmem:[%s2 + $0x30] sm:$0xff]
      %v405 = vld [vmem:[%s2 + $0x38] sm:$0xff]
      %v406 = vld [vmem:[%s2 + $0x40] sm:$0xff]
      %v407 = vld [vmem:[%s2 + $0x48] sm:$0xff]
      %v408 = vld [vmem:[%s2 + $0x50] sm:$0xff]
      %v409 = vld [vmem:[%s2 + $0x58] sm:$0xff]
      %v410 = vld [vmem:[%s2 + $0x60] sm:$0xff]
      %v411 = vld [vmem:[%s2 + $0x68] sm:$0xff]
      %v412 = vld [vmem:[%s2 + $0x70] sm:$0xff]
      %v413 = vld [vmem:[%s2 + $0x78] sm:$0xff]
      %v414 = vld [vmem:[%s2 + $0x80] sm:$0xff]
      %v415 = vld [vmem:[%s2 + $0x88] sm:$0xff]
      %v416 = vld [vmem:[%s2 + $0x90] sm:$0xff]
      %v417 = vld [vmem:[%s2 + $0x98] sm:$0xff]
      %v418 = vld [vmem:[%s2 + $0xa0] sm:$0xff]
      %v419 = vld [vmem:[%s2 + $0xa8] sm:$0xff]
      %v420 = vld [vmem:[%s2 + $0xb0] sm:$0xff]
      %v421 = vld [vmem:[%s2 + $0xb8] sm:$0xff]
      %v422 = vld [vmem:[%s2 + $0xc0] sm:$0xff]
      %v423 = vld [vmem:[%s2 + $0xc8] sm:$0xff]
      %v424 = vld [vmem:[%s2 + $0xd0] sm:$0xff]
      %v425 = vld [vmem:[%s2 + $0xd8] sm:$0xff]
      %v426 = vld [vmem:[%s2 + $0xe0] sm:$0xff]
      %v427 = vld [vmem:[%s2 + $0xe8] sm:$0xff]
      %v428 = vld [vmem:[%s2 + $0xf0] sm:$0xff]
      %v429 = vld [vmem:[%s2 + $0xf8] sm:$0xff]
      %431 = vset.pattern.permute.xlu0 0
      %432 = vperm.xlu0 %431, %v366
      %v433 = vpop.permute.xlu0 %432
      %435 = vset.pattern.permute.xlu0 0
      %436 = vperm.xlu0 %435, %v367
      %v437 = vpop.permute.xlu0 %436
      %439 = vset.pattern.permute.xlu0 0
      %440 = vperm.xlu0 %439, %v368
      %v441 = vpop.permute.xlu0 %440
      %443 = vset.pattern.permute.xlu0 0
      %444 = vperm.xlu0 %443, %v369
      %v445 = vpop.permute.xlu0 %444
      %447 = vset.pattern.permute.xlu0 0
      %448 = vperm.xlu0 %447, %v370
      %v449 = vpop.permute.xlu0 %448
      %451 = vset.pattern.permute.xlu0 0
      %452 = vperm.xlu0 %451, %v371
      %v453 = vpop.permute.xlu0 %452
      %455 = vset.pattern.permute.xlu0 0
      %456 = vperm.xlu0 %455, %v372
      %v457 = vpop.permute.xlu0 %456
      %459 = vset.pattern.permute.xlu0 0
      %460 = vperm.xlu0 %459, %v373
      %v461 = vpop.permute.xlu0 %460
      %463 = vset.pattern.permute.xlu0 0
      %464 = vperm.xlu0 %463, %v374
      %v465 = vpop.permute.xlu0 %464
      %467 = vset.pattern.permute.xlu0 0
      %468 = vperm.xlu0 %467, %v375
      %v469 = vpop.permute.xlu0 %468
      %471 = vset.pattern.permute.xlu0 0
      %472 = vperm.xlu0 %471, %v376
      %v473 = vpop.permute.xlu0 %472
      %475 = vset.pattern.permute.xlu0 0
      %476 = vperm.xlu0 %475, %v377
      %v477 = vpop.permute.xlu0 %476
      %479 = vset.pattern.permute.xlu0 0
      %480 = vperm.xlu0 %479, %v378
      %v481 = vpop.permute.xlu0 %480
      %483 = vset.pattern.permute.xlu0 0
      %484 = vperm.xlu0 %483, %v379
      %v485 = vpop.permute.xlu0 %484
      %487 = vset.pattern.permute.xlu0 0
      %488 = vperm.xlu0 %487, %v380
      %v489 = vpop.permute.xlu0 %488
      %491 = vset.pattern.permute.xlu0 0
      %492 = vperm.xlu0 %491, %v381
      %v493 = vpop.permute.xlu0 %492
      %495 = vset.pattern.permute.xlu0 0
      %496 = vperm.xlu0 %495, %v382
      %v497 = vpop.permute.xlu0 %496
      %499 = vset.pattern.permute.xlu0 0
      %500 = vperm.xlu0 %499, %v383
      %v501 = vpop.permute.xlu0 %500
      %503 = vset.pattern.permute.xlu0 0
      %504 = vperm.xlu0 %503, %v384
      %v505 = vpop.permute.xlu0 %504
      %507 = vset.pattern.permute.xlu0 0
      %508 = vperm.xlu0 %507, %v385
      %v509 = vpop.permute.xlu0 %508
      %511 = vset.pattern.permute.xlu0 0
      %512 = vperm.xlu0 %511, %v386
      %v513 = vpop.permute.xlu0 %512
      %515 = vset.pattern.permute.xlu0 0
      %516 = vperm.xlu0 %515, %v387
      %v517 = vpop.permute.xlu0 %516
      %519 = vset.pattern.permute.xlu0 0
      %520 = vperm.xlu0 %519, %v388
      %v521 = vpop.permute.xlu0 %520
      %523 = vset.pattern.permute.xlu0 0
      %524 = vperm.xlu0 %523, %v389
      %v525 = vpop.permute.xlu0 %524
      %527 = vset.pattern.permute.xlu0 0
      %528 = vperm.xlu0 %527, %v390
      %v529 = vpop.permute.xlu0 %528
      %531 = vset.pattern.permute.xlu0 0
      %532 = vperm.xlu0 %531, %v391
      %v533 = vpop.permute.xlu0 %532
      %535 = vset.pattern.permute.xlu0 0
      %536 = vperm.xlu0 %535, %v392
      %v537 = vpop.permute.xlu0 %536
      %539 = vset.pattern.permute.xlu0 0
      %540 = vperm.xlu0 %539, %v393
      %v541 = vpop.permute.xlu0 %540
      %543 = vset.pattern.permute.xlu0 0
      %544 = vperm.xlu0 %543, %v394
      %v545 = vpop.permute.xlu0 %544
      %547 = vset.pattern.permute.xlu0 0
      %548 = vperm.xlu0 %547, %v395
      %v549 = vpop.permute.xlu0 %548
      %551 = vset.pattern.permute.xlu0 0
      %552 = vperm.xlu0 %551, %v396
      %v553 = vpop.permute.xlu0 %552
      %555 = vset.pattern.permute.xlu0 0
      %556 = vperm.xlu0 %555, %v397
      %v557 = vpop.permute.xlu0 %556
      %vm558 = vcmask 1046528
      %v559 = vrot.slane %v433, 1
      %v560 = vrot.slane %v437, 1
      %v561 = vsel %vm558, %v559, %v560
      %v562 = vrot.slane %v441, 1
      %v563 = vsel %vm558, %v560, %v562
      %v564 = vrot.slane %v445, 1
      %v565 = vsel %vm558, %v562, %v564
      %v566 = vrot.slane %v449, 1
      %v567 = vsel %vm558, %v564, %v566
      %v568 = vrot.slane %v453, 1
      %v569 = vsel %vm558, %v566, %v568
      %v570 = vrot.slane %v457, 1
      %v571 = vsel %vm558, %v568, %v570
      %v572 = vrot.slane %v461, 1
      %v573 = vsel %vm558, %v570, %v572
      %v574 = vrot.slane %v465, 1
      %v575 = vsel %vm558, %v572, %v574
      %v576 = vrot.slane %v469, 1
      %v577 = vsel %vm558, %v574, %v576
      %v578 = vrot.slane %v473, 1
      %v579 = vsel %vm558, %v576, %v578
      %v580 = vrot.slane %v477, 1
      %v581 = vsel %vm558, %v578, %v580
      %v582 = vrot.slane %v481, 1
      %v583 = vsel %vm558, %v580, %v582
      %v584 = vrot.slane %v485, 1
      %v585 = vsel %vm558, %v582, %v584
      %v586 = vrot.slane %v489, 1
      %v587 = vsel %vm558, %v584, %v586
      %v588 = vrot.slane %v493, 1
      %v589 = vsel %vm558, %v586, %v588
      %v590 = vrot.slane %v497, 1
      %v591 = vsel %vm558, %v588, %v590
      %v592 = vrot.slane %v501, 1
      %v593 = vsel %vm558, %v590, %v592
      %v594 = vrot.slane %v505, 1
      %v595 = vsel %vm558, %v592, %v594
      %v596 = vrot.slane %v509, 1
      %v597 = vsel %vm558, %v594, %v596
      %v598 = vrot.slane %v513, 1
      %v599 = vsel %vm558, %v596, %v598
      %v600 = vrot.slane %v517, 1
      %v601 = vsel %vm558, %v598, %v600
      %v602 = vrot.slane %v521, 1
      %v603 = vsel %vm558, %v600, %v602
      %v604 = vrot.slane %v525, 1
      %v605 = vsel %vm558, %v602, %v604
      %v606 = vrot.slane %v529, 1
      %v607 = vsel %vm558, %v604, %v606
      %v608 = vrot.slane %v533, 1
      %v609 = vsel %vm558, %v606, %v608
      %v610 = vrot.slane %v537, 1
      %v611 = vsel %vm558, %v608, %v610
      %v612 = vrot.slane %v541, 1
      %v613 = vsel %vm558, %v610, %v612
      %v614 = vrot.slane %v545, 1
      %v615 = vsel %vm558, %v612, %v614
      %v616 = vrot.slane %v549, 1
      %v617 = vsel %vm558, %v614, %v616
      %v618 = vrot.slane %v553, 1
      %v619 = vsel %vm558, %v616, %v618
      %v620 = vrot.slane %v557, 1
      %v621 = vsel %vm558, %v618, %v620
      %v655 = vmul.f32 %v559, 0.0
      %v656 = vmul.f32 %v561, 0.0
      %v657 = vmul.f32 %v563, 0.0
      %v658 = vmul.f32 %v334, %v565
      %v659 = vmul.f32 %v335, %v567
      %v660 = vmul.f32 %v336, %v569
      %v661 = vmul.f32 %v337, %v571
      %v662 = vmul.f32 %v338, %v573
      %v663 = vmul.f32 %v339, %v575
      %v664 = vmul.f32 %v340, %v577
      %v665 = vmul.f32 %v341, %v579
      %v666 = vmul.f32 %v342, %v581
      %v667 = vmul.f32 %v343, %v583
      %v668 = vmul.f32 %v344, %v585
      %v669 = vmul.f32 %v345, %v587
      %v670 = vmul.f32 %v346, %v589
      %v671 = vmul.f32 %v347, %v591
      %v672 = vmul.f32 %v348, %v593
      %v673 = vmul.f32 %v349, %v595
      %v674 = vmul.f32 %v350, %v597
      %v675 = vmul.f32 %v351, %v599
      %v676 = vmul.f32 %v352, %v601
      %v677 = vmul.f32 %v353, %v603
      %v678 = vmul.f32 %v354, %v605
      %v679 = vmul.f32 %v355, %v607
      %v680 = vmul.f32 %v356, %v609
      %v681 = vmul.f32 %v357, %v611
      %v682 = vmul.f32 %v358, %v613
      %v683 = vmul.f32 %v359, %v615
      %v684 = vmul.f32 %v360, %v617
      %v685 = vmul.f32 %v361, %v619
      %v686 = vmul.f32 %v362, %v621
      %v687 = vmul.f32 %v363, %v620
      %v688 = vld [vmem:[%s3] sm:$0x3]
      %v689 = vpack.c.bf16 %v656, %v655
      %v690 = vpack.c.bf16 %v658, %v657
      %v691 = vpack.c.bf16 %v660, %v659
      %v692 = vpack.c.bf16 %v662, %v661
      %v693 = vpack.c.bf16 %v664, %v663
      %v694 = vpack.c.bf16 %v666, %v665
      %v695 = vpack.c.bf16 %v668, %v667
      %v696 = vpack.c.bf16 %v670, %v669
      %v697 = vpack.c.bf16 %v672, %v671
      %v698 = vpack.c.bf16 %v674, %v673
      %v699 = vpack.c.bf16 %v676, %v675
      %v700 = vpack.c.bf16 %v678, %v677
      %v701 = vpack.c.bf16 %v680, %v679
      %v702 = vpack.c.bf16 %v682, %v681
      %v703 = vpack.c.bf16 %v684, %v683
      %v704 = vpack.c.bf16 %v686, %v685
      %v705 = vpack.c.bf16 %v687, %v687
      %s706 = scalar_lea.vmem %s3, 2
      %v707 = vld [vmem:[%s706] sm:$0x3]
      %v708 = vpack.c.bf16 0.0, 0.0
      %v709 = vpack.c.bf16 %v335, %v334
      %v710 = vpack.c.bf16 %v337, %v336
      %v711 = vpack.c.bf16 %v339, %v338
      %v712 = vpack.c.bf16 %v341, %v340
      %v713 = vpack.c.bf16 %v343, %v342
      %v714 = vpack.c.bf16 %v345, %v344
      %v715 = vpack.c.bf16 %v347, %v346
      %v716 = vpack.c.bf16 %v349, %v348
      %v717 = vpack.c.bf16 %v351, %v350
      %v718 = vpack.c.bf16 %v353, %v352
      %v719 = vpack.c.bf16 %v355, %v354
      %v720 = vpack.c.bf16 %v357, %v356
      %v721 = vpack.c.bf16 %v359, %v358
      %v722 = vpack.c.bf16 %v361, %v360
      %v723 = vpack.c.bf16 %v363, %v362
      %vm724 = vcmask 31744
      %v726 = vsel %vm724, %v708, 0
      %v729 = vsel %vm724, %v709, 0
      %v732 = vsel %vm724, %v710, 0
      %v735 = vsel %vm724, %v711, 0
      %v738 = vsel %vm724, %v712, 0
      %v741 = vsel %vm724, %v713, 0
      %v744 = vsel %vm724, %v714, 0
      %v747 = vsel %vm724, %v715, 0
      %v750 = vsel %vm724, %v716, 0
      %v753 = vsel %vm724, %v717, 0
      %v756 = vsel %vm724, %v718, 0
      %v759 = vsel %vm724, %v719, 0
      %v762 = vsel %vm724, %v720, 0
      %v765 = vsel %vm724, %v721, 0
      %v768 = vsel %vm724, %v722, 0
      %v771 = vsel %vm724, %v723, 0
      %vm773 = vcmask 1041408
      %v775 = vsel %vm773, %v707, 0
      %777 = vmatprep.subr.bf16.mxu0 0
      %778 = vmatpush1.bf16.msra.mxu0 0
      %779 = vmatprep.subr.bf16.mxu0 0
      %780 = vmatpush1.bf16.msra.mxu0 0
      %781 = vmatprep.subr.bf16.mxu0 0
      %782 = vmatpush1.bf16.msra.mxu0 0
      %783 = vmatprep.subr.bf16.mxu0 0
      %784 = vmatpush1.bf16.msra.mxu0 0
      %785 = vmatprep.subr.bf16.mxu0 0
      %786 = vmatpush1.bf16.msra.mxu0 0
      %787 = vmatprep.subr.bf16.mxu0 0
      %788 = vmatpush1.bf16.msra.mxu0 0
      %789 = vmatprep.subr.bf16.mxu0 0
      %790 = vmatpush1.bf16.msra.mxu0 0
      %791 = vmatprep.subr.bf16.mxu0 0
      %792 = vmatpush1.bf16.msra.mxu0 %v775
      %793 = vmatprep.subr.bf16.mxu0 0
      %794 = vmatpush2.bf16.msra.mxu0 0
      %795 = vmatprep.subr.bf16.mxu0 0
      %796 = vmatpush2.bf16.msra.mxu0 0
      %797 = vmatprep.subr.bf16.mxu0 0
      %798 = vmatpush2.bf16.msra.mxu0 0
      %799 = vmatprep.subr.bf16.mxu0 0
      %800 = vmatpush2.bf16.msra.mxu0 0
      %801 = vmatprep.subr.bf16.mxu0 0
      %802 = vmatpush2.bf16.msra.mxu0 0
      %803 = vmatprep.subr.bf16.mxu0 0
      %804 = vmatpush2.bf16.msra.mxu0 0
      %805 = vmatprep.subr.bf16.mxu0 0
      %806 = vmatpush2.bf16.msra.mxu0 0
      %807 = vmatprep.subr.bf16.mxu0 0
      %808 = vmatpush2.bf16.msra.mxu0 0
      %809 = vmatprep.mubr.bf16.mxu0 0
      %810 = vmatmul.mubr.bf16.gmra.mxu0 %v726
      %v811 = vpop.f32.mrf.mxu0
      %v812 = vadd.f32 0.0, %v811
      %v813 = vpop.f32.mrf.mxu0
      %v814 = vpop.f32.mrf.mxu0
      %v815 = vadd.f32 0.0, %v814
      %v816 = vpop.f32.mrf.mxu0
      %817 = vmatprep.mubr.bf16.mxu0 0
      %818 = vmatmul.mubr.bf16.gmra.mxu0 %v729
      %v819 = vpop.f32.mrf.mxu0
      %v820 = vadd.f32 0.0, %v819
      %v821 = vpop.f32.mrf.mxu0
      %v822 = vpop.f32.mrf.mxu0
      %v823 = vadd.f32 0.0, %v822
      %v824 = vpop.f32.mrf.mxu0
      %825 = vmatprep.mubr.bf16.mxu0 0
      %826 = vmatmul.mubr.bf16.gmra.mxu0 %v732
      %v827 = vpop.f32.mrf.mxu0
      %v828 = vadd.f32 0.0, %v827
      %v829 = vpop.f32.mrf.mxu0
      %v830 = vpop.f32.mrf.mxu0
      %v831 = vadd.f32 0.0, %v830
      %v832 = vpop.f32.mrf.mxu0
      %833 = vmatprep.mubr.bf16.mxu0 0
      %834 = vmatmul.mubr.bf16.gmra.mxu0 %v735
      %v835 = vpop.f32.mrf.mxu0
      %v836 = vadd.f32 0.0, %v835
      %v837 = vpop.f32.mrf.mxu0
      %v838 = vpop.f32.mrf.mxu0
      %v839 = vadd.f32 0.0, %v838
      %v840 = vpop.f32.mrf.mxu0
      %841 = vmatprep.mubr.bf16.mxu0 0
      %842 = vmatmul.mubr.bf16.gmra.mxu0 %v738
      %v843 = vpop.f32.mrf.mxu0
      %v844 = vadd.f32 0.0, %v843
      %v845 = vpop.f32.mrf.mxu0
      %v846 = vpop.f32.mrf.mxu0
      %v847 = vadd.f32 0.0, %v846
      %v848 = vpop.f32.mrf.mxu0
      %849 = vmatprep.mubr.bf16.mxu0 0
      %850 = vmatmul.mubr.bf16.gmra.mxu0 %v741
      %v851 = vpop.f32.mrf.mxu0
      %v852 = vadd.f32 0.0, %v851
      %v853 = vpop.f32.mrf.mxu0
      %v854 = vpop.f32.mrf.mxu0
      %v855 = vadd.f32 0.0, %v854
      %v856 = vpop.f32.mrf.mxu0
      %857 = vmatprep.mubr.bf16.mxu0 0
      %858 = vmatmul.mubr.bf16.gmra.mxu0 %v744
      %v859 = vpop.f32.mrf.mxu0
      %v860 = vadd.f32 0.0, %v859
      %v861 = vpop.f32.mrf.mxu0
      %v862 = vpop.f32.mrf.mxu0
      %v863 = vadd.f32 0.0, %v862
      %v864 = vpop.f32.mrf.mxu0
      %865 = vmatprep.mubr.bf16.mxu0 0
      %866 = vmatmul.mubr.bf16.gmra.mxu0 %v747
      %v867 = vpop.f32.mrf.mxu0
      %v868 = vadd.f32 0.0, %v867
      %v869 = vpop.f32.mrf.mxu0
      %v870 = vpop.f32.mrf.mxu0
      %v871 = vadd.f32 0.0, %v870
      %v872 = vpop.f32.mrf.mxu0
      %873 = vmatprep.mubr.bf16.mxu0 0
      %874 = vmatmul.mubr.bf16.gmra.mxu0 %v750
      %v875 = vpop.f32.mrf.mxu0
      %v876 = vadd.f32 0.0, %v875
      %v877 = vpop.f32.mrf.mxu0
      %v878 = vpop.f32.mrf.mxu0
      %v879 = vadd.f32 0.0, %v878
      %v880 = vpop.f32.mrf.mxu0
      %881 = vmatprep.mubr.bf16.mxu0 0
      %882 = vmatmul.mubr.bf16.gmra.mxu0 %v753
      %v883 = vpop.f32.mrf.mxu0
      %v884 = vadd.f32 0.0, %v883
      %v885 = vpop.f32.mrf.mxu0
      %v886 = vpop.f32.mrf.mxu0
      %v887 = vadd.f32 0.0, %v886
      %v888 = vpop.f32.mrf.mxu0
      %889 = vmatprep.mubr.bf16.mxu0 0
      %890 = vmatmul.mubr.bf16.gmra.mxu0 %v756
      %v891 = vpop.f32.mrf.mxu0
      %v892 = vadd.f32 0.0, %v891
      %v893 = vpop.f32.mrf.mxu0
      %v894 = vpop.f32.mrf.mxu0
      %v895 = vadd.f32 0.0, %v894
      %v896 = vpop.f32.mrf.mxu0
      %897 = vmatprep.mubr.bf16.mxu0 0
      %898 = vmatmul.mubr.bf16.gmra.mxu0 %v759
      %v899 = vpop.f32.mrf.mxu0
      %v900 = vadd.f32 0.0, %v899
      %v901 = vpop.f32.mrf.mxu0
      %v902 = vpop.f32.mrf.mxu0
      %v903 = vadd.f32 0.0, %v902
      %v904 = vpop.f32.mrf.mxu0
      %905 = vmatprep.mubr.bf16.mxu0 0
      %906 = vmatmul.mubr.bf16.gmra.mxu0 %v762
      %v907 = vpop.f32.mrf.mxu0
      %v908 = vadd.f32 0.0, %v907
      %v909 = vpop.f32.mrf.mxu0
      %v910 = vpop.f32.mrf.mxu0
      %v911 = vadd.f32 0.0, %v910
      %v912 = vpop.f32.mrf.mxu0
      %913 = vmatprep.mubr.bf16.mxu0 0
      %914 = vmatmul.mubr.bf16.gmra.mxu0 %v765
      %v915 = vpop.f32.mrf.mxu0
      %v916 = vadd.f32 0.0, %v915
      %v917 = vpop.f32.mrf.mxu0
      %v918 = vpop.f32.mrf.mxu0
      %v919 = vadd.f32 0.0, %v918
      %v920 = vpop.f32.mrf.mxu0
      %921 = vmatprep.mubr.bf16.mxu0 0
      %922 = vmatmul.mubr.bf16.gmra.mxu0 %v768
      %v923 = vpop.f32.mrf.mxu0
      %v924 = vadd.f32 0.0, %v923
      %v925 = vpop.f32.mrf.mxu0
      %v926 = vpop.f32.mrf.mxu0
      %v927 = vadd.f32 0.0, %v926
      %v928 = vpop.f32.mrf.mxu0
      %929 = vmatprep.mubr.bf16.mxu0 0
      %930 = vmatmul.mubr.bf16.gmra.mxu0 %v771
      %v931 = vpop.f32.mrf.mxu0
      %v932 = vadd.f32 0.0, %v931
      %v933 = vpop.f32.mrf.mxu0
      %v934 = vpop.f32.mrf.mxu0
      %v935 = vadd.f32 0.0, %v934
      %v936 = vpop.f32.mrf.mxu0
      %937 = vdwg.mxu0
      %vm938 = vsmask.f32 4352
      %v940 = vshrl.u32 %v689, 16
      %v942 = vrot.slane %v940, 3
      %v943 = vshll.u32 %v689, 16
      %v945 = vrot.slane %v943, 4
      %v946 = vor.u32 %v942, %v945
      %v948 = vshrl.u32 %v690, 16
      %v950 = vrot.slane %v948, 3
      %v951 = vshll.u32 %v690, 16
      %v953 = vrot.slane %v951, 4
      %v954 = vor.u32 %v950, %v953
      %v955 = vsel %vm938, %v946, %v954
      %v957 = vshrl.u32 %v691, 16
      %v959 = vrot.slane %v957, 3
      %v960 = vshll.u32 %v691, 16
      %v962 = vrot.slane %v960, 4
      %v963 = vor.u32 %v959, %v962
      %v964 = vsel %vm938, %v954, %v963
      %v966 = vshrl.u32 %v692, 16
      %v968 = vrot.slane %v966, 3
      %v969 = vshll.u32 %v692, 16
      %v971 = vrot.slane %v969, 4
      %v972 = vor.u32 %v968, %v971
      %v973 = vsel %vm938, %v963, %v972
      %v975 = vshrl.u32 %v693, 16
      %v977 = vrot.slane %v975, 3
      %v978 = vshll.u32 %v693, 16
      %v980 = vrot.slane %v978, 4
      %v981 = vor.u32 %v977, %v980
      %v982 = vsel %vm938, %v972, %v981
      %v984 = vshrl.u32 %v694, 16
      %v986 = vrot.slane %v984, 3
      %v987 = vshll.u32 %v694, 16
      %v989 = vrot.slane %v987, 4
      %v990 = vor.u32 %v986, %v989
      %v991 = vsel %vm938, %v981, %v990
      %v993 = vshrl.u32 %v695, 16
      %v995 = vrot.slane %v993, 3
      %v996 = vshll.u32 %v695, 16
      %v998 = vrot.slane %v996, 4
      %v999 = vor.u32 %v995, %v998
      %v1000 = vsel %vm938, %v990, %v999
      %v1002 = vshrl.u32 %v696, 16
      %v1004 = vrot.slane %v1002, 3
      %v1005 = vshll.u32 %v696, 16
      %v1007 = vrot.slane %v1005, 4
      %v1008 = vor.u32 %v1004, %v1007
      %v1009 = vsel %vm938, %v999, %v1008
      %v1011 = vshrl.u32 %v697, 16
      %v1013 = vrot.slane %v1011, 3
      %v1014 = vshll.u32 %v697, 16
      %v1016 = vrot.slane %v1014, 4
      %v1017 = vor.u32 %v1013, %v1016
      %v1018 = vsel %vm938, %v1008, %v1017
      %v1020 = vshrl.u32 %v698, 16
      %v1022 = vrot.slane %v1020, 3
      %v1023 = vshll.u32 %v698, 16
      %v1025 = vrot.slane %v1023, 4
      %v1026 = vor.u32 %v1022, %v1025
      %v1027 = vsel %vm938, %v1017, %v1026
      %v1029 = vshrl.u32 %v699, 16
      %v1031 = vrot.slane %v1029, 3
      %v1032 = vshll.u32 %v699, 16
      %v1034 = vrot.slane %v1032, 4
      %v1035 = vor.u32 %v1031, %v1034
      %v1036 = vsel %vm938, %v1026, %v1035
      %v1038 = vshrl.u32 %v700, 16
      %v1040 = vrot.slane %v1038, 3
      %v1041 = vshll.u32 %v700, 16
      %v1043 = vrot.slane %v1041, 4
      %v1044 = vor.u32 %v1040, %v1043
      %v1045 = vsel %vm938, %v1035, %v1044
      %v1047 = vshrl.u32 %v701, 16
      %v1049 = vrot.slane %v1047, 3
      %v1050 = vshll.u32 %v701, 16
      %v1052 = vrot.slane %v1050, 4
      %v1053 = vor.u32 %v1049, %v1052
      %v1054 = vsel %vm938, %v1044, %v1053
      %v1056 = vshrl.u32 %v702, 16
      %v1058 = vrot.slane %v1056, 3
      %v1059 = vshll.u32 %v702, 16
      %v1061 = vrot.slane %v1059, 4
      %v1062 = vor.u32 %v1058, %v1061
      %v1063 = vsel %vm938, %v1053, %v1062
      %v1065 = vshrl.u32 %v703, 16
      %v1067 = vrot.slane %v1065, 3
      %v1068 = vshll.u32 %v703, 16
      %v1070 = vrot.slane %v1068, 4
      %v1071 = vor.u32 %v1067, %v1070
      %v1072 = vsel %vm938, %v1062, %v1071
      %v1074 = vshrl.u32 %v704, 16
      %v1076 = vrot.slane %v1074, 3
      %v1077 = vshll.u32 %v704, 16
      %v1079 = vrot.slane %v1077, 4
      %v1080 = vor.u32 %v1076, %v1079
      %v1081 = vsel %vm938, %v1071, %v1080
      %v1083 = vshrl.u32 %v705, 16
      %v1085 = vrot.slane %v1083, 3
      %v1086 = vshll.u32 %v705, 16
      %v1088 = vrot.slane %v1086, 4
      %v1089 = vor.u32 %v1085, %v1088
      %v1090 = vsel %vm938, %v1080, %v1089
      %v1092 = vsel %vm724, %v955, 0
      %v1095 = vsel %vm724, %v964, 0
      %v1098 = vsel %vm724, %v973, 0
      %v1101 = vsel %vm724, %v982, 0
      %v1104 = vsel %vm724, %v991, 0
      %v1107 = vsel %vm724, %v1000, 0
      %v1110 = vsel %vm724, %v1009, 0
      %v1113 = vsel %vm724, %v1018, 0
      %v1116 = vsel %vm724, %v1027, 0
      %v1119 = vsel %vm724, %v1036, 0
      %v1122 = vsel %vm724, %v1045, 0
      %v1125 = vsel %vm724, %v1054, 0
      %v1128 = vsel %vm724, %v1063, 0
      %v1131 = vsel %vm724, %v1072, 0
      %v1134 = vsel %vm724, %v1081, 0
      %v1137 = vsel %vm724, %v1090, 0
      %v1140 = vsel %vm773, %v688, 0
      %1142 = vmatprep.subr.bf16.mxu0 0
      %1143 = vmatpush1.bf16.msra.mxu0 0
      %1144 = vmatprep.subr.bf16.mxu0 0
      %1145 = vmatpush1.bf16.msra.mxu0 0
      %1146 = vmatprep.subr.bf16.mxu0 0
      %1147 = vmatpush1.bf16.msra.mxu0 0
      %1148 = vmatprep.subr.bf16.mxu0 0
      %1149 = vmatpush1.bf16.msra.mxu0 0
      %1150 = vmatprep.subr.bf16.mxu0 0
      %1151 = vmatpush1.bf16.msra.mxu0 0
      %1152 = vmatprep.subr.bf16.mxu0 0
      %1153 = vmatpush1.bf16.msra.mxu0 0
      %1154 = vmatprep.subr.bf16.mxu0 0
      %1155 = vmatpush1.bf16.msra.mxu0 0
      %1156 = vmatprep.subr.bf16.mxu0 0
      %1157 = vmatpush1.bf16.msra.mxu0 %v1140
      %1158 = vmatprep.subr.bf16.mxu0 0
      %1159 = vmatpush2.bf16.msra.mxu0 0
      %1160 = vmatprep.subr.bf16.mxu0 0
      %1161 = vmatpush2.bf16.msra.mxu0 0
      %1162 = vmatprep.subr.bf16.mxu0 0
      %1163 = vmatpush2.bf16.msra.mxu0 0
      %1164 = vmatprep.subr.bf16.mxu0 0
      %1165 = vmatpush2.bf16.msra.mxu0 0
      %1166 = vmatprep.subr.bf16.mxu0 0
      %1167 = vmatpush2.bf16.msra.mxu0 0
      %1168 = vmatprep.subr.bf16.mxu0 0
      %1169 = vmatpush2.bf16.msra.mxu0 0
      %1170 = vmatprep.subr.bf16.mxu0 0
      %1171 = vmatpush2.bf16.msra.mxu0 0
      %1172 = vmatprep.subr.bf16.mxu0 0
      %1173 = vmatpush2.bf16.msra.mxu0 0
      %1174 = vmatprep.mubr.bf16.mxu0 0
      %1175 = vmatmul.mubr.bf16.gmra.mxu0 %v1092
      %v1176 = vpop.f32.mrf.mxu0
      %v1177 = vadd.f32 %v812, %v1176
      %v1178 = vpop.f32.mrf.mxu0
      %v1179 = vpop.f32.mrf.mxu0
      %v1180 = vadd.f32 %v815, %v1179
      %v1181 = vpop.f32.mrf.mxu0
      %1182 = vmatprep.mubr.bf16.mxu0 0
      %1183 = vmatmul.mubr.bf16.gmra.mxu0 %v1095
      %v1184 = vpop.f32.mrf.mxu0
      %v1185 = vadd.f32 %v820, %v1184
      %v1186 = vpop.f32.mrf.mxu0
      %v1187 = vpop.f32.mrf.mxu0
      %v1188 = vadd.f32 %v823, %v1187
      %v1189 = vpop.f32.mrf.mxu0
      %1190 = vmatprep.mubr.bf16.mxu0 0
      %1191 = vmatmul.mubr.bf16.gmra.mxu0 %v1098
      %v1192 = vpop.f32.mrf.mxu0
      %v1193 = vadd.f32 %v828, %v1192
      %v1194 = vpop.f32.mrf.mxu0
      %v1195 = vpop.f32.mrf.mxu0
      %v1196 = vadd.f32 %v831, %v1195
      %v1197 = vpop.f32.mrf.mxu0
      %1198 = vmatprep.mubr.bf16.mxu0 0
      %1199 = vmatmul.mubr.bf16.gmra.mxu0 %v1101
      %v1200 = vpop.f32.mrf.mxu0
      %v1201 = vadd.f32 %v836, %v1200
      %v1202 = vpop.f32.mrf.mxu0
      %v1203 = vpop.f32.mrf.mxu0
      %v1204 = vadd.f32 %v839, %v1203
      %v1205 = vpop.f32.mrf.mxu0
      %1206 = vmatprep.mubr.bf16.mxu0 0
      %1207 = vmatmul.mubr.bf16.gmra.mxu0 %v1104
      %v1208 = vpop.f32.mrf.mxu0
      %v1209 = vadd.f32 %v844, %v1208
      %v1210 = vpop.f32.mrf.mxu0
      %v1211 = vpop.f32.mrf.mxu0
      %v1212 = vadd.f32 %v847, %v1211
      %v1213 = vpop.f32.mrf.mxu0
      %1214 = vmatprep.mubr.bf16.mxu0 0
      %1215 = vmatmul.mubr.bf16.gmra.mxu0 %v1107
      %v1216 = vpop.f32.mrf.mxu0
      %v1217 = vadd.f32 %v852, %v1216
      %v1218 = vpop.f32.mrf.mxu0
      %v1219 = vpop.f32.mrf.mxu0
      %v1220 = vadd.f32 %v855, %v1219
      %v1221 = vpop.f32.mrf.mxu0
      %1222 = vmatprep.mubr.bf16.mxu0 0
      %1223 = vmatmul.mubr.bf16.gmra.mxu0 %v1110
      %v1224 = vpop.f32.mrf.mxu0
      %v1225 = vadd.f32 %v860, %v1224
      %v1226 = vpop.f32.mrf.mxu0
      %v1227 = vpop.f32.mrf.mxu0
      %v1228 = vadd.f32 %v863, %v1227
      %v1229 = vpop.f32.mrf.mxu0
      %1230 = vmatprep.mubr.bf16.mxu0 0
      %1231 = vmatmul.mubr.bf16.gmra.mxu0 %v1113
      %v1232 = vpop.f32.mrf.mxu0
      %v1233 = vadd.f32 %v868, %v1232
      %v1234 = vpop.f32.mrf.mxu0
      %v1235 = vpop.f32.mrf.mxu0
      %v1236 = vadd.f32 %v871, %v1235
      %v1237 = vpop.f32.mrf.mxu0
      %1238 = vmatprep.mubr.bf16.mxu0 0
      %1239 = vmatmul.mubr.bf16.gmra.mxu0 %v1116
      %v1240 = vpop.f32.mrf.mxu0
      %v1241 = vadd.f32 %v876, %v1240
      %v1242 = vpop.f32.mrf.mxu0
      %v1243 = vpop.f32.mrf.mxu0
      %v1244 = vadd.f32 %v879, %v1243
      %v1245 = vpop.f32.mrf.mxu0
      %1246 = vmatprep.mubr.bf16.mxu0 0
      %1247 = vmatmul.mubr.bf16.gmra.mxu0 %v1119
      %v1248 = vpop.f32.mrf.mxu0
      %v1249 = vadd.f32 %v884, %v1248
      %v1250 = vpop.f32.mrf.mxu0
      %v1251 = vpop.f32.mrf.mxu0
      %v1252 = vadd.f32 %v887, %v1251
      %v1253 = vpop.f32.mrf.mxu0
      %1254 = vmatprep.mubr.bf16.mxu0 0
      %1255 = vmatmul.mubr.bf16.gmra.mxu0 %v1122
      %v1256 = vpop.f32.mrf.mxu0
      %v1257 = vadd.f32 %v892, %v1256
      %v1258 = vpop.f32.mrf.mxu0
      %v1259 = vpop.f32.mrf.mxu0
      %v1260 = vadd.f32 %v895, %v1259
      %v1261 = vpop.f32.mrf.mxu0
      %1262 = vmatprep.mubr.bf16.mxu0 0
      %1263 = vmatmul.mubr.bf16.gmra.mxu0 %v1125
      %v1264 = vpop.f32.mrf.mxu0
      %v1265 = vadd.f32 %v900, %v1264
      %v1266 = vpop.f32.mrf.mxu0
      %v1267 = vpop.f32.mrf.mxu0
      %v1268 = vadd.f32 %v903, %v1267
      %v1269 = vpop.f32.mrf.mxu0
      %1270 = vmatprep.mubr.bf16.mxu0 0
      %1271 = vmatmul.mubr.bf16.gmra.mxu0 %v1128
      %v1272 = vpop.f32.mrf.mxu0
      %v1273 = vadd.f32 %v908, %v1272
      %v1274 = vpop.f32.mrf.mxu0
      %v1275 = vpop.f32.mrf.mxu0
      %v1276 = vadd.f32 %v911, %v1275
      %v1277 = vpop.f32.mrf.mxu0
      %1278 = vmatprep.mubr.bf16.mxu0 0
      %1279 = vmatmul.mubr.bf16.gmra.mxu0 %v1131
      %v1280 = vpop.f32.mrf.mxu0
      %v1281 = vadd.f32 %v916, %v1280
      %v1282 = vpop.f32.mrf.mxu0
      %v1283 = vpop.f32.mrf.mxu0
      %v1284 = vadd.f32 %v919, %v1283
      %v1285 = vpop.f32.mrf.mxu0
      %1286 = vmatprep.mubr.bf16.mxu0 0
      %1287 = vmatmul.mubr.bf16.gmra.mxu0 %v1134
      %v1288 = vpop.f32.mrf.mxu0
      %v1289 = vadd.f32 %v924, %v1288
      %v1290 = vpop.f32.mrf.mxu0
      %v1291 = vpop.f32.mrf.mxu0
      %v1292 = vadd.f32 %v927, %v1291
      %v1293 = vpop.f32.mrf.mxu0
      %1294 = vmatprep.mubr.bf16.mxu0 0
      %1295 = vmatmul.mubr.bf16.gmra.mxu0 %v1137
      %v1296 = vpop.f32.mrf.mxu0
      %v1297 = vadd.f32 %v932, %v1296
      %v1298 = vpop.f32.mrf.mxu0
      %v1299 = vpop.f32.mrf.mxu0
      %v1300 = vadd.f32 %v935, %v1299
      %v1301 = vpop.f32.mrf.mxu0
      %1302 = vdwg.mxu0
      %1304 = vset.pattern.permute.xlu0 0
      %1305 = vperm.xlu0 %1304, %v398
      %v1306 = vpop.permute.xlu0 %1305
      %1308 = vset.pattern.permute.xlu0 0
      %1309 = vperm.xlu0 %1308, %v399
      %v1310 = vpop.permute.xlu0 %1309
      %1312 = vset.pattern.permute.xlu0 0
      %1313 = vperm.xlu0 %1312, %v400
      %v1314 = vpop.permute.xlu0 %1313
      %1316 = vset.pattern.permute.xlu0 0
      %1317 = vperm.xlu0 %1316, %v401
      %v1318 = vpop.permute.xlu0 %1317
      %1320 = vset.pattern.permute.xlu0 0
      %1321 = vperm.xlu0 %1320, %v402
      %v1322 = vpop.permute.xlu0 %1321
      %1324 = vset.pattern.permute.xlu0 0
      %1325 = vperm.xlu0 %1324, %v403
      %v1326 = vpop.permute.xlu0 %1325
      %1328 = vset.pattern.permute.xlu0 0
      %1329 = vperm.xlu0 %1328, %v404
      %v1330 = vpop.permute.xlu0 %1329
      %1332 = vset.pattern.permute.xlu0 0
      %1333 = vperm.xlu0 %1332, %v405
      %v1334 = vpop.permute.xlu0 %1333
      %1336 = vset.pattern.permute.xlu0 0
      %1337 = vperm.xlu0 %1336, %v406
      %v1338 = vpop.permute.xlu0 %1337
      %1340 = vset.pattern.permute.xlu0 0
      %1341 = vperm.xlu0 %1340, %v407
      %v1342 = vpop.permute.xlu0 %1341
      %1344 = vset.pattern.permute.xlu0 0
      %1345 = vperm.xlu0 %1344, %v408
      %v1346 = vpop.permute.xlu0 %1345
      %1348 = vset.pattern.permute.xlu0 0
      %1349 = vperm.xlu0 %1348, %v409
      %v1350 = vpop.permute.xlu0 %1349
      %1352 = vset.pattern.permute.xlu0 0
      %1353 = vperm.xlu0 %1352, %v410
      %v1354 = vpop.permute.xlu0 %1353
      %1356 = vset.pattern.permute.xlu0 0
      %1357 = vperm.xlu0 %1356, %v411
      %v1358 = vpop.permute.xlu0 %1357
      %1360 = vset.pattern.permute.xlu0 0
      %1361 = vperm.xlu0 %1360, %v412
      %v1362 = vpop.permute.xlu0 %1361
      %1364 = vset.pattern.permute.xlu0 0
      %1365 = vperm.xlu0 %1364, %v413
      %v1366 = vpop.permute.xlu0 %1365
      %1368 = vset.pattern.permute.xlu0 0
      %1369 = vperm.xlu0 %1368, %v414
      %v1370 = vpop.permute.xlu0 %1369
      %1372 = vset.pattern.permute.xlu0 0
      %1373 = vperm.xlu0 %1372, %v415
      %v1374 = vpop.permute.xlu0 %1373
      %1376 = vset.pattern.permute.xlu0 0
      %1377 = vperm.xlu0 %1376, %v416
      %v1378 = vpop.permute.xlu0 %1377
      %1380 = vset.pattern.permute.xlu0 0
      %1381 = vperm.xlu0 %1380, %v417
      %v1382 = vpop.permute.xlu0 %1381
      %1384 = vset.pattern.permute.xlu0 0
      %1385 = vperm.xlu0 %1384, %v418
      %v1386 = vpop.permute.xlu0 %1385
      %1388 = vset.pattern.permute.xlu0 0
      %1389 = vperm.xlu0 %1388, %v419
      %v1390 = vpop.permute.xlu0 %1389
      %1392 = vset.pattern.permute.xlu0 0
      %1393 = vperm.xlu0 %1392, %v420
      %v1394 = vpop.permute.xlu0 %1393
      %1396 = vset.pattern.permute.xlu0 0
      %1397 = vperm.xlu0 %1396, %v421
      %v1398 = vpop.permute.xlu0 %1397
      %1400 = vset.pattern.permute.xlu0 0
      %1401 = vperm.xlu0 %1400, %v422
      %v1402 = vpop.permute.xlu0 %1401
      %1404 = vset.pattern.permute.xlu0 0
      %1405 = vperm.xlu0 %1404, %v423
      %v1406 = vpop.permute.xlu0 %1405
      %1408 = vset.pattern.permute.xlu0 0
      %1409 = vperm.xlu0 %1408, %v424
      %v1410 = vpop.permute.xlu0 %1409
      %1412 = vset.pattern.permute.xlu0 0
      %1413 = vperm.xlu0 %1412, %v425
      %v1414 = vpop.permute.xlu0 %1413
      %1416 = vset.pattern.permute.xlu0 0
      %1417 = vperm.xlu0 %1416, %v426
      %v1418 = vpop.permute.xlu0 %1417
      %1420 = vset.pattern.permute.xlu0 0
      %1421 = vperm.xlu0 %1420, %v427
      %v1422 = vpop.permute.xlu0 %1421
      %1424 = vset.pattern.permute.xlu0 0
      %1425 = vperm.xlu0 %1424, %v428
      %v1426 = vpop.permute.xlu0 %1425
      %1428 = vset.pattern.permute.xlu0 0
      %1429 = vperm.xlu0 %1428, %v429
      %v1430 = vpop.permute.xlu0 %1429
      %vm1431 = vcmask 1040384
      %v1432 = vrot.slane %v1306, 7
      %v1433 = vrot.slane %v1310, 7
      %v1434 = vsel %vm1431, %v1432, %v1433
      %v1435 = vrot.slane %v1314, 7
      %v1436 = vsel %vm1431, %v1433, %v1435
      %v1437 = vrot.slane %v1318, 7
      %v1438 = vsel %vm1431, %v1435, %v1437
      %v1439 = vrot.slane %v1322, 7
      %v1440 = vsel %vm1431, %v1437, %v1439
      %v1441 = vrot.slane %v1326, 7
      %v1442 = vsel %vm1431, %v1439, %v1441
      %v1443 = vrot.slane %v1330, 7
      %v1444 = vsel %vm1431, %v1441, %v1443
      %v1445 = vrot.slane %v1334, 7
      %v1446 = vsel %vm1431, %v1443, %v1445
      %v1447 = vrot.slane %v1338, 7
      %v1448 = vsel %vm1431, %v1445, %v1447
      %v1449 = vrot.slane %v1342, 7
      %v1450 = vsel %vm1431, %v1447, %v1449
      %v1451 = vrot.slane %v1346, 7
      %v1452 = vsel %vm1431, %v1449, %v1451
      %v1453 = vrot.slane %v1350, 7
      %v1454 = vsel %vm1431, %v1451, %v1453
      %v1455 = vrot.slane %v1354, 7
      %v1456 = vsel %vm1431, %v1453, %v1455
      %v1457 = vrot.slane %v1358, 7
      %v1458 = vsel %vm1431, %v1455, %v1457
      %v1459 = vrot.slane %v1362, 7
      %v1460 = vsel %vm1431, %v1457, %v1459
      %v1461 = vrot.slane %v1366, 7
      %v1462 = vsel %vm1431, %v1459, %v1461
      %v1463 = vrot.slane %v1370, 7
      %v1464 = vsel %vm1431, %v1461, %v1463
      %v1465 = vrot.slane %v1374, 7
      %v1466 = vsel %vm1431, %v1463, %v1465
      %v1467 = vrot.slane %v1378, 7
      %v1468 = vsel %vm1431, %v1465, %v1467
      %v1469 = vrot.slane %v1382, 7
      %v1470 = vsel %vm1431, %v1467, %v1469
      %v1471 = vrot.slane %v1386, 7
      %v1472 = vsel %vm1431, %v1469, %v1471
      %v1473 = vrot.slane %v1390, 7
      %v1474 = vsel %vm1431, %v1471, %v1473
      %v1475 = vrot.slane %v1394, 7
      %v1476 = vsel %vm1431, %v1473, %v1475
      %v1477 = vrot.slane %v1398, 7
      %v1478 = vsel %vm1431, %v1475, %v1477
      %v1479 = vrot.slane %v1402, 7
      %v1480 = vsel %vm1431, %v1477, %v1479
      %v1481 = vrot.slane %v1406, 7
      %v1482 = vsel %vm1431, %v1479, %v1481
      %v1483 = vrot.slane %v1410, 7
      %v1484 = vsel %vm1431, %v1481, %v1483
      %v1485 = vrot.slane %v1414, 7
      %v1486 = vsel %vm1431, %v1483, %v1485
      %v1487 = vrot.slane %v1418, 7
      %v1488 = vsel %vm1431, %v1485, %v1487
      %v1489 = vrot.slane %v1422, 7
      %v1490 = vsel %vm1431, %v1487, %v1489
      %v1491 = vrot.slane %v1426, 7
      %v1492 = vsel %vm1431, %v1489, %v1491
      %v1493 = vrot.slane %v1430, 7
      %v1494 = vsel %vm1431, %v1491, %v1493
      %v1528 = vmul.f32 %v1432, 0.0
      %v1529 = vmul.f32 %v1434, 0.0
      %v1530 = vmul.f32 %v334, %v1436
      %v1531 = vmul.f32 %v335, %v1438
      %v1532 = vmul.f32 %v336, %v1440
      %v1533 = vmul.f32 %v337, %v1442
      %v1534 = vmul.f32 %v338, %v1444
      %v1535 = vmul.f32 %v339, %v1446
      %v1536 = vmul.f32 %v340, %v1448
      %v1537 = vmul.f32 %v341, %v1450
      %v1538 = vmul.f32 %v342, %v1452
      %v1539 = vmul.f32 %v343, %v1454
      %v1540 = vmul.f32 %v344, %v1456
      %v1541 = vmul.f32 %v345, %v1458
      %v1542 = vmul.f32 %v346, %v1460
      %v1543 = vmul.f32 %v347, %v1462
      %v1544 = vmul.f32 %v348, %v1464
      %v1545 = vmul.f32 %v349, %v1466
      %v1546 = vmul.f32 %v350, %v1468
      %v1547 = vmul.f32 %v351, %v1470
      %v1548 = vmul.f32 %v352, %v1472
      %v1549 = vmul.f32 %v353, %v1474
      %v1550 = vmul.f32 %v354, %v1476
      %v1551 = vmul.f32 %v355, %v1478
      %v1552 = vmul.f32 %v356, %v1480
      %v1553 = vmul.f32 %v357, %v1482
      %v1554 = vmul.f32 %v358, %v1484
      %v1555 = vmul.f32 %v359, %v1486
      %v1556 = vmul.f32 %v360, %v1488
      %v1557 = vmul.f32 %v361, %v1490
      %v1558 = vmul.f32 %v362, %v1492
      %v1559 = vmul.f32 %v363, %v1494
      %v1560 = vmul.f32 %v364, %v1493
      %s1561 = scalar_lea.vmem %s3, 4
      %v1562 = vld [vmem:[%s1561] sm:$0x3]
      %v1563 = vpack.c.bf16 %v1529, %v1528
      %v1564 = vpack.c.bf16 %v1531, %v1530
      %v1565 = vpack.c.bf16 %v1533, %v1532
      %v1566 = vpack.c.bf16 %v1535, %v1534
      %v1567 = vpack.c.bf16 %v1537, %v1536
      %v1568 = vpack.c.bf16 %v1539, %v1538
      %v1569 = vpack.c.bf16 %v1541, %v1540
      %v1570 = vpack.c.bf16 %v1543, %v1542
      %v1571 = vpack.c.bf16 %v1545, %v1544
      %v1572 = vpack.c.bf16 %v1547, %v1546
      %v1573 = vpack.c.bf16 %v1549, %v1548
      %v1574 = vpack.c.bf16 %v1551, %v1550
      %v1575 = vpack.c.bf16 %v1553, %v1552
      %v1576 = vpack.c.bf16 %v1555, %v1554
      %v1577 = vpack.c.bf16 %v1557, %v1556
      %v1578 = vpack.c.bf16 %v1559, %v1558
      %v1579 = vpack.c.bf16 %v1560, %v1560
      %vm1580 = vsmask.f32 7424
      %v1582 = vshrl.u32 %v1563, 16
      %v1584 = vshll.u32 %v1563, 16
      %v1586 = vrot.slane %v1584, 1
      %v1587 = vor.u32 %v1582, %v1586
      %v1589 = vshll.u32 %v1564, 16
      %v1591 = vrot.slane %v1589, 1
      %v1592 = vsel %vm1580, %v1587, %v1591
      %v1593 = vshrl.u32 %v1564, 16
      %v1595 = vor.u32 %v1593, %v1591
      %v1597 = vshll.u32 %v1565, 16
      %v1599 = vrot.slane %v1597, 1
      %v1600 = vsel %vm1580, %v1595, %v1599
      %v1601 = vshrl.u32 %v1565, 16
      %v1603 = vor.u32 %v1601, %v1599
      %v1605 = vshll.u32 %v1566, 16
      %v1607 = vrot.slane %v1605, 1
      %v1608 = vsel %vm1580, %v1603, %v1607
      %v1609 = vshrl.u32 %v1566, 16
      %v1611 = vor.u32 %v1609, %v1607
      %v1613 = vshll.u32 %v1567, 16
      %v1615 = vrot.slane %v1613, 1
      %v1616 = vsel %vm1580, %v1611, %v1615
      %v1617 = vshrl.u32 %v1567, 16
      %v1619 = vor.u32 %v1617, %v1615
      %v1621 = vshll.u32 %v1568, 16
      %v1623 = vrot.slane %v1621, 1
      %v1624 = vsel %vm1580, %v1619, %v1623
      %v1625 = vshrl.u32 %v1568, 16
      %v1627 = vor.u32 %v1625, %v1623
      %v1629 = vshll.u32 %v1569, 16
      %v1631 = vrot.slane %v1629, 1
      %v1632 = vsel %vm1580, %v1627, %v1631
      %v1633 = vshrl.u32 %v1569, 16
      %v1635 = vor.u32 %v1633, %v1631
      %v1637 = vshll.u32 %v1570, 16
      %v1639 = vrot.slane %v1637, 1
      %v1640 = vsel %vm1580, %v1635, %v1639
      %v1641 = vshrl.u32 %v1570, 16
      %v1643 = vor.u32 %v1641, %v1639
      %v1645 = vshll.u32 %v1571, 16
      %v1647 = vrot.slane %v1645, 1
      %v1648 = vsel %vm1580, %v1643, %v1647
      %v1649 = vshrl.u32 %v1571, 16
      %v1651 = vor.u32 %v1649, %v1647
      %v1653 = vshll.u32 %v1572, 16
      %v1655 = vrot.slane %v1653, 1
      %v1656 = vsel %vm1580, %v1651, %v1655
      %v1657 = vshrl.u32 %v1572, 16
      %v1659 = vor.u32 %v1657, %v1655
      %v1661 = vshll.u32 %v1573, 16
      %v1663 = vrot.slane %v1661, 1
      %v1664 = vsel %vm1580, %v1659, %v1663
      %v1665 = vshrl.u32 %v1573, 16
      %v1667 = vor.u32 %v1665, %v1663
      %v1669 = vshll.u32 %v1574, 16
      %v1671 = vrot.slane %v1669, 1
      %v1672 = vsel %vm1580, %v1667, %v1671
      %v1673 = vshrl.u32 %v1574, 16
      %v1675 = vor.u32 %v1673, %v1671
      %v1677 = vshll.u32 %v1575, 16
      %v1679 = vrot.slane %v1677, 1
      %v1680 = vsel %vm1580, %v1675, %v1679
      %v1681 = vshrl.u32 %v1575, 16
      %v1683 = vor.u32 %v1681, %v1679
      %v1685 = vshll.u32 %v1576, 16
      %v1687 = vrot.slane %v1685, 1
      %v1688 = vsel %vm1580, %v1683, %v1687
      %v1689 = vshrl.u32 %v1576, 16
      %v1691 = vor.u32 %v1689, %v1687
      %v1693 = vshll.u32 %v1577, 16
      %v1695 = vrot.slane %v1693, 1
      %v1696 = vsel %vm1580, %v1691, %v1695
      %v1697 = vshrl.u32 %v1577, 16
      %v1699 = vor.u32 %v1697, %v1695
      %v1701 = vshll.u32 %v1578, 16
      %v1703 = vrot.slane %v1701, 1
      %v1704 = vsel %vm1580, %v1699, %v1703
      %v1705 = vshrl.u32 %v1578, 16
      %v1707 = vor.u32 %v1705, %v1703
      %v1709 = vshll.u32 %v1579, 16
      %v1711 = vrot.slane %v1709, 1
      %v1712 = vsel %vm1580, %v1707, %v1711
      %v1714 = vsel %vm724, %v1592, 0
      %v1717 = vsel %vm724, %v1600, 0
      %v1720 = vsel %vm724, %v1608, 0
      %v1723 = vsel %vm724, %v1616, 0
      %v1726 = vsel %vm724, %v1624, 0
      %v1729 = vsel %vm724, %v1632, 0
      %v1732 = vsel %vm724, %v1640, 0
      %v1735 = vsel %vm724, %v1648, 0
      %v1738 = vsel %vm724, %v1656, 0
      %v1741 = vsel %vm724, %v1664, 0
      %v1744 = vsel %vm724, %v1672, 0
      %v1747 = vsel %vm724, %v1680, 0
      %v1750 = vsel %vm724, %v1688, 0
      %v1753 = vsel %vm724, %v1696, 0
      %v1756 = vsel %vm724, %v1704, 0
      %v1759 = vsel %vm724, %v1712, 0
      %v1762 = vsel %vm773, %v1562, 0
      %1764 = vmatprep.subr.bf16.mxu0 0
      %1765 = vmatpush1.bf16.msra.mxu0 0
      %1766 = vmatprep.subr.bf16.mxu0 0
      %1767 = vmatpush1.bf16.msra.mxu0 0
      %1768 = vmatprep.subr.bf16.mxu0 0
      %1769 = vmatpush1.bf16.msra.mxu0 0
      %1770 = vmatprep.subr.bf16.mxu0 0
      %1771 = vmatpush1.bf16.msra.mxu0 0
      %1772 = vmatprep.subr.bf16.mxu0 0
      %1773 = vmatpush1.bf16.msra.mxu0 0
      %1774 = vmatprep.subr.bf16.mxu0 0
      %1775 = vmatpush1.bf16.msra.mxu0 0
      %1776 = vmatprep.subr.bf16.mxu0 0
      %1777 = vmatpush1.bf16.msra.mxu0 0
      %1778 = vmatprep.subr.bf16.mxu0 0
      %1779 = vmatpush1.bf16.msra.mxu0 %v1762
      %1780 = vmatprep.subr.bf16.mxu0 0
      %1781 = vmatpush2.bf16.msra.mxu0 0
      %1782 = vmatprep.subr.bf16.mxu0 0
      %1783 = vmatpush2.bf16.msra.mxu0 0
      %1784 = vmatprep.subr.bf16.mxu0 0
      %1785 = vmatpush2.bf16.msra.mxu0 0
      %1786 = vmatprep.subr.bf16.mxu0 0
      %1787 = vmatpush2.bf16.msra.mxu0 0
      %1788 = vmatprep.subr.bf16.mxu0 0
      %1789 = vmatpush2.bf16.msra.mxu0 0
      %1790 = vmatprep.subr.bf16.mxu0 0
      %1791 = vmatpush2.bf16.msra.mxu0 0
      %1792 = vmatprep.subr.bf16.mxu0 0
      %1793 = vmatpush2.bf16.msra.mxu0 0
      %1794 = vmatprep.subr.bf16.mxu0 0
      %1795 = vmatpush2.bf16.msra.mxu0 0
      %1796 = vmatprep.mubr.bf16.mxu0 0
      %1797 = vmatmul.mubr.bf16.gmra.mxu0 %v1714
      %v1798 = vpop.f32.mrf.mxu0
      %v1799 = vadd.f32 0.0, %v1798
      %v1800 = vpop.f32.mrf.mxu0
      %v1801 = vpop.f32.mrf.mxu0
      %v1802 = vadd.f32 0.0, %v1801
      %v1803 = vpop.f32.mrf.mxu0
      %1804 = vmatprep.mubr.bf16.mxu0 0
      %1805 = vmatmul.mubr.bf16.gmra.mxu0 %v1717
      %v1806 = vpop.f32.mrf.mxu0
      %v1807 = vadd.f32 0.0, %v1806
      %v1808 = vpop.f32.mrf.mxu0
      %v1809 = vpop.f32.mrf.mxu0
      %v1810 = vadd.f32 0.0, %v1809
      %v1811 = vpop.f32.mrf.mxu0
      %1812 = vmatprep.mubr.bf16.mxu0 0
      %1813 = vmatmul.mubr.bf16.gmra.mxu0 %v1720
      %v1814 = vpop.f32.mrf.mxu0
      %v1815 = vadd.f32 0.0, %v1814
      %v1816 = vpop.f32.mrf.mxu0
      %v1817 = vpop.f32.mrf.mxu0
      %v1818 = vadd.f32 0.0, %v1817
      %v1819 = vpop.f32.mrf.mxu0
      %1820 = vmatprep.mubr.bf16.mxu0 0
      %1821 = vmatmul.mubr.bf16.gmra.mxu0 %v1723
      %v1822 = vpop.f32.mrf.mxu0
      %v1823 = vadd.f32 0.0, %v1822
      %v1824 = vpop.f32.mrf.mxu0
      %v1825 = vpop.f32.mrf.mxu0
      %v1826 = vadd.f32 0.0, %v1825
      %v1827 = vpop.f32.mrf.mxu0
      %1828 = vmatprep.mubr.bf16.mxu0 0
      %1829 = vmatmul.mubr.bf16.gmra.mxu0 %v1726
      %v1830 = vpop.f32.mrf.mxu0
      %v1831 = vadd.f32 0.0, %v1830
      %v1832 = vpop.f32.mrf.mxu0
      %v1833 = vpop.f32.mrf.mxu0
      %v1834 = vadd.f32 0.0, %v1833
      %v1835 = vpop.f32.mrf.mxu0
      %1836 = vmatprep.mubr.bf16.mxu0 0
      %1837 = vmatmul.mubr.bf16.gmra.mxu0 %v1729
      %v1838 = vpop.f32.mrf.mxu0
      %v1839 = vadd.f32 0.0, %v1838
      %v1840 = vpop.f32.mrf.mxu0
      %v1841 = vpop.f32.mrf.mxu0
      %v1842 = vadd.f32 0.0, %v1841
      %v1843 = vpop.f32.mrf.mxu0
      %1844 = vmatprep.mubr.bf16.mxu0 0
      %1845 = vmatmul.mubr.bf16.gmra.mxu0 %v1732
      %v1846 = vpop.f32.mrf.mxu0
      %v1847 = vadd.f32 0.0, %v1846
      %v1848 = vpop.f32.mrf.mxu0
      %v1849 = vpop.f32.mrf.mxu0
      %v1850 = vadd.f32 0.0, %v1849
      %v1851 = vpop.f32.mrf.mxu0
      %1852 = vmatprep.mubr.bf16.mxu0 0
      %1853 = vmatmul.mubr.bf16.gmra.mxu0 %v1735
      %v1854 = vpop.f32.mrf.mxu0
      %v1855 = vadd.f32 0.0, %v1854
      %v1856 = vpop.f32.mrf.mxu0
      %v1857 = vpop.f32.mrf.mxu0
      %v1858 = vadd.f32 0.0, %v1857
      %v1859 = vpop.f32.mrf.mxu0
      %1860 = vmatprep.mubr.bf16.mxu0 0
      %1861 = vmatmul.mubr.bf16.gmra.mxu0 %v1738
      %v1862 = vpop.f32.mrf.mxu0
      %v1863 = vadd.f32 0.0, %v1862
      %v1864 = vpop.f32.mrf.mxu0
      %v1865 = vpop.f32.mrf.mxu0
      %v1866 = vadd.f32 0.0, %v1865
      %v1867 = vpop.f32.mrf.mxu0
      %1868 = vmatprep.mubr.bf16.mxu0 0
      %1869 = vmatmul.mubr.bf16.gmra.mxu0 %v1741
      %v1870 = vpop.f32.mrf.mxu0
      %v1871 = vadd.f32 0.0, %v1870
      %v1872 = vpop.f32.mrf.mxu0
      %v1873 = vpop.f32.mrf.mxu0
      %v1874 = vadd.f32 0.0, %v1873
      %v1875 = vpop.f32.mrf.mxu0
      %1876 = vmatprep.mubr.bf16.mxu0 0
      %1877 = vmatmul.mubr.bf16.gmra.mxu0 %v1744
      %v1878 = vpop.f32.mrf.mxu0
      %v1879 = vadd.f32 0.0, %v1878
      %v1880 = vpop.f32.mrf.mxu0
      %v1881 = vpop.f32.mrf.mxu0
      %v1882 = vadd.f32 0.0, %v1881
      %v1883 = vpop.f32.mrf.mxu0
      %1884 = vmatprep.mubr.bf16.mxu0 0
      %1885 = vmatmul.mubr.bf16.gmra.mxu0 %v1747
      %v1886 = vpop.f32.mrf.mxu0
      %v1887 = vadd.f32 0.0, %v1886
      %v1888 = vpop.f32.mrf.mxu0
      %v1889 = vpop.f32.mrf.mxu0
      %v1890 = vadd.f32 0.0, %v1889
      %v1891 = vpop.f32.mrf.mxu0
      %1892 = vmatprep.mubr.bf16.mxu0 0
      %1893 = vmatmul.mubr.bf16.gmra.mxu0 %v1750
      %v1894 = vpop.f32.mrf.mxu0
      %v1895 = vadd.f32 0.0, %v1894
      %v1896 = vpop.f32.mrf.mxu0
      %v1897 = vpop.f32.mrf.mxu0
      %v1898 = vadd.f32 0.0, %v1897
      %v1899 = vpop.f32.mrf.mxu0
      %1900 = vmatprep.mubr.bf16.mxu0 0
      %1901 = vmatmul.mubr.bf16.gmra.mxu0 %v1753
      %v1902 = vpop.f32.mrf.mxu0
      %v1903 = vadd.f32 0.0, %v1902
      %v1904 = vpop.f32.mrf.mxu0
      %v1905 = vpop.f32.mrf.mxu0
      %v1906 = vadd.f32 0.0, %v1905
      %v1907 = vpop.f32.mrf.mxu0
      %1908 = vmatprep.mubr.bf16.mxu0 0
      %1909 = vmatmul.mubr.bf16.gmra.mxu0 %v1756
      %v1910 = vpop.f32.mrf.mxu0
      %v1911 = vadd.f32 0.0, %v1910
      %v1912 = vpop.f32.mrf.mxu0
      %v1913 = vpop.f32.mrf.mxu0
      %v1914 = vadd.f32 0.0, %v1913
      %v1915 = vpop.f32.mrf.mxu0
      %1916 = vmatprep.mubr.bf16.mxu0 0
      %1917 = vmatmul.mubr.bf16.gmra.mxu0 %v1759
      %v1918 = vpop.f32.mrf.mxu0
      %v1919 = vadd.f32 0.0, %v1918
      %v1920 = vpop.f32.mrf.mxu0
      %v1921 = vpop.f32.mrf.mxu0
      %v1922 = vadd.f32 0.0, %v1921
      %v1923 = vpop.f32.mrf.mxu0
      %1924 = vdwg.mxu0
      %v1925 = vadd.f32 %v1177, %v1799
      %v1926 = vadd.f32 %v1180, %v1802
      %v1927 = vadd.f32 %v1185, %v1807
      %v1928 = vadd.f32 %v1188, %v1810
      %v1929 = vadd.f32 %v1193, %v1815
      %v1930 = vadd.f32 %v1196, %v1818
      %v1931 = vadd.f32 %v1201, %v1823
      %v1932 = vadd.f32 %v1204, %v1826
      %v1933 = vadd.f32 %v1209, %v1831
      %v1934 = vadd.f32 %v1212, %v1834
      %v1935 = vadd.f32 %v1217, %v1839
      %v1936 = vadd.f32 %v1220, %v1842
      %v1937 = vadd.f32 %v1225, %v1847
      %v1938 = vadd.f32 %v1228, %v1850
      %v1939 = vadd.f32 %v1233, %v1855
      %v1940 = vadd.f32 %v1236, %v1858
      %v1941 = vadd.f32 %v1241, %v1863
      %v1942 = vadd.f32 %v1244, %v1866
      %v1943 = vadd.f32 %v1249, %v1871
      %v1944 = vadd.f32 %v1252, %v1874
      %v1945 = vadd.f32 %v1257, %v1879
      %v1946 = vadd.f32 %v1260, %v1882
      %v1947 = vadd.f32 %v1265, %v1887
      %v1948 = vadd.f32 %v1268, %v1890
      %v1949 = vadd.f32 %v1273, %v1895
      %v1950 = vadd.f32 %v1276, %v1898
      %v1951 = vadd.f32 %v1281, %v1903
      %v1952 = vadd.f32 %v1284, %v1906
      %v1953 = vadd.f32 %v1289, %v1911
      %v1954 = vadd.f32 %v1292, %v1914
      %v1955 = vadd.f32 %v1297, %v1919
      %v1956 = vadd.f32 %v1300, %v1922
      %v1957 = vmul.f32 %v334, %v561
      %v1958 = vmul.f32 %v335, %v563
      %v1959 = vmul.f32 %v336, %v565
      %v1960 = vmul.f32 %v337, %v567
      %v1961 = vmul.f32 %v338, %v569
      %v1962 = vmul.f32 %v339, %v571
      %v1963 = vmul.f32 %v340, %v573
      %v1964 = vmul.f32 %v341, %v575
      %v1965 = vmul.f32 %v342, %v577
      %v1966 = vmul.f32 %v343, %v579
      %v1967 = vmul.f32 %v344, %v581
      %v1968 = vmul.f32 %v345, %v583
      %v1969 = vmul.f32 %v346, %v585
      %v1970 = vmul.f32 %v347, %v587
      %v1971 = vmul.f32 %v348, %v589
      %v1972 = vmul.f32 %v349, %v591
      %v1973 = vmul.f32 %v350, %v593
      %v1974 = vmul.f32 %v351, %v595
      %v1975 = vmul.f32 %v352, %v597
      %v1976 = vmul.f32 %v353, %v599
      %v1977 = vmul.f32 %v354, %v601
      %v1978 = vmul.f32 %v355, %v603
      %v1979 = vmul.f32 %v356, %v605
      %v1980 = vmul.f32 %v357, %v607
      %v1981 = vmul.f32 %v358, %v609
      %v1982 = vmul.f32 %v359, %v611
      %v1983 = vmul.f32 %v360, %v613
      %v1984 = vmul.f32 %v361, %v615
      %v1985 = vmul.f32 %v362, %v617
      %v1986 = vmul.f32 %v363, %v619
      %v1987 = vmul.f32 %v364, %v621
      %v1988 = vmul.f32 %v365, %v620
      %s1989 = scalar_lea.vmem %s3, 6
      %v1990 = vld [vmem:[%s1989] sm:$0x3]
      %v1991 = vpack.c.bf16 %v1957, %v655
      %v1992 = vpack.c.bf16 %v1959, %v1958
      %v1993 = vpack.c.bf16 %v1961, %v1960
      %v1994 = vpack.c.bf16 %v1963, %v1962
      %v1995 = vpack.c.bf16 %v1965, %v1964
      %v1996 = vpack.c.bf16 %v1967, %v1966
      %v1997 = vpack.c.bf16 %v1969, %v1968
      %v1998 = vpack.c.bf16 %v1971, %v1970
      %v1999 = vpack.c.bf16 %v1973, %v1972
      %v2000 = vpack.c.bf16 %v1975, %v1974
      %v2001 = vpack.c.bf16 %v1977, %v1976
      %v2002 = vpack.c.bf16 %v1979, %v1978
      %v2003 = vpack.c.bf16 %v1981, %v1980
      %v2004 = vpack.c.bf16 %v1983, %v1982
      %v2005 = vpack.c.bf16 %v1985, %v1984
      %v2006 = vpack.c.bf16 %v1987, %v1986
      %v2007 = vpack.c.bf16 %v1988, %v1988
      %v2009 = vshrl.u32 %v1991, 16
      %v2011 = vrot.slane %v2009, 3
      %v2012 = vshll.u32 %v1991, 16
      %v2014 = vrot.slane %v2012, 4
      %v2015 = vor.u32 %v2011, %v2014
      %v2017 = vshrl.u32 %v1992, 16
      %v2019 = vrot.slane %v2017, 3
      %v2020 = vshll.u32 %v1992, 16
      %v2022 = vrot.slane %v2020, 4
      %v2023 = vor.u32 %v2019, %v2022
      %v2024 = vsel %vm938, %v2015, %v2023
      %v2026 = vshrl.u32 %v1993, 16
      %v2028 = vrot.slane %v2026, 3
      %v2029 = vshll.u32 %v1993, 16
      %v2031 = vrot.slane %v2029, 4
      %v2032 = vor.u32 %v2028, %v2031
      %v2033 = vsel %vm938, %v2023, %v2032
      %v2035 = vshrl.u32 %v1994, 16
      %v2037 = vrot.slane %v2035, 3
      %v2038 = vshll.u32 %v1994, 16
      %v2040 = vrot.slane %v2038, 4
      %v2041 = vor.u32 %v2037, %v2040
      %v2042 = vsel %vm938, %v2032, %v2041
      %v2044 = vshrl.u32 %v1995, 16
      %v2046 = vrot.slane %v2044, 3
      %v2047 = vshll.u32 %v1995, 16
      %v2049 = vrot.slane %v2047, 4
      %v2050 = vor.u32 %v2046, %v2049
      %v2051 = vsel %vm938, %v2041, %v2050
      %v2053 = vshrl.u32 %v1996, 16
      %v2055 = vrot.slane %v2053, 3
      %v2056 = vshll.u32 %v1996, 16
      %v2058 = vrot.slane %v2056, 4
      %v2059 = vor.u32 %v2055, %v2058
      %v2060 = vsel %vm938, %v2050, %v2059
      %v2062 = vshrl.u32 %v1997, 16
      %v2064 = vrot.slane %v2062, 3
      %v2065 = vshll.u32 %v1997, 16
      %v2067 = vrot.slane %v2065, 4
      %v2068 = vor.u32 %v2064, %v2067
      %v2069 = vsel %vm938, %v2059, %v2068
      %v2071 = vshrl.u32 %v1998, 16
      %v2073 = vrot.slane %v2071, 3
      %v2074 = vshll.u32 %v1998, 16
      %v2076 = vrot.slane %v2074, 4
      %v2077 = vor.u32 %v2073, %v2076
      %v2078 = vsel %vm938, %v2068, %v2077
      %v2080 = vshrl.u32 %v1999, 16
      %v2082 = vrot.slane %v2080, 3
      %v2083 = vshll.u32 %v1999, 16
      %v2085 = vrot.slane %v2083, 4
      %v2086 = vor.u32 %v2082, %v2085
      %v2087 = vsel %vm938, %v2077, %v2086
      %v2089 = vshrl.u32 %v2000, 16
      %v2091 = vrot.slane %v2089, 3
      %v2092 = vshll.u32 %v2000, 16
      %v2094 = vrot.slane %v2092, 4
      %v2095 = vor.u32 %v2091, %v2094
      %v2096 = vsel %vm938, %v2086, %v2095
      %v2098 = vshrl.u32 %v2001, 16
      %v2100 = vrot.slane %v2098, 3
      %v2101 = vshll.u32 %v2001, 16
      %v2103 = vrot.slane %v2101, 4
      %v2104 = vor.u32 %v2100, %v2103
      %v2105 = vsel %vm938, %v2095, %v2104
      %v2107 = vshrl.u32 %v2002, 16
      %v2109 = vrot.slane %v2107, 3
      %v2110 = vshll.u32 %v2002, 16
      %v2112 = vrot.slane %v2110, 4
      %v2113 = vor.u32 %v2109, %v2112
      %v2114 = vsel %vm938, %v2104, %v2113
      %v2116 = vshrl.u32 %v2003, 16
      %v2118 = vrot.slane %v2116, 3
      %v2119 = vshll.u32 %v2003, 16
      %v2121 = vrot.slane %v2119, 4
      %v2122 = vor.u32 %v2118, %v2121
      %v2123 = vsel %vm938, %v2113, %v2122
      %v2125 = vshrl.u32 %v2004, 16
      %v2127 = vrot.slane %v2125, 3
      %v2128 = vshll.u32 %v2004, 16
      %v2130 = vrot.slane %v2128, 4
      %v2131 = vor.u32 %v2127, %v2130
      %v2132 = vsel %vm938, %v2122, %v2131
      %v2134 = vshrl.u32 %v2005, 16
      %v2136 = vrot.slane %v2134, 3
      %v2137 = vshll.u32 %v2005, 16
      %v2139 = vrot.slane %v2137, 4
      %v2140 = vor.u32 %v2136, %v2139
      %v2141 = vsel %vm938, %v2131, %v2140
      %v2143 = vshrl.u32 %v2006, 16
      %v2145 = vrot.slane %v2143, 3
      %v2146 = vshll.u32 %v2006, 16
      %v2148 = vrot.slane %v2146, 4
      %v2149 = vor.u32 %v2145, %v2148
      %v2150 = vsel %vm938, %v2140, %v2149
      %v2152 = vshrl.u32 %v2007, 16
      %v2154 = vrot.slane %v2152, 3
      %v2155 = vshll.u32 %v2007, 16
      %v2157 = vrot.slane %v2155, 4
      %v2158 = vor.u32 %v2154, %v2157
      %v2159 = vsel %vm938, %v2149, %v2158
      %v2161 = vsel %vm724, %v2024, 0
      %v2164 = vsel %vm724, %v2033, 0
      %v2167 = vsel %vm724, %v2042, 0
      %v2170 = vsel %vm724, %v2051, 0
      %v2173 = vsel %vm724, %v2060, 0
      %v2176 = vsel %vm724, %v2069, 0
      %v2179 = vsel %vm724, %v2078, 0
      %v2182 = vsel %vm724, %v2087, 0
      %v2185 = vsel %vm724, %v2096, 0
      %v2188 = vsel %vm724, %v2105, 0
      %v2191 = vsel %vm724, %v2114, 0
      %v2194 = vsel %vm724, %v2123, 0
      %v2197 = vsel %vm724, %v2132, 0
      %v2200 = vsel %vm724, %v2141, 0
      %v2203 = vsel %vm724, %v2150, 0
      %v2206 = vsel %vm724, %v2159, 0
      %v2209 = vsel %vm773, %v1990, 0
      %2211 = vmatprep.subr.bf16.mxu0 0
      %2212 = vmatpush1.bf16.msra.mxu0 0
      %2213 = vmatprep.subr.bf16.mxu0 0
      %2214 = vmatpush1.bf16.msra.mxu0 0
      %2215 = vmatprep.subr.bf16.mxu0 0
      %2216 = vmatpush1.bf16.msra.mxu0 0
      %2217 = vmatprep.subr.bf16.mxu0 0
      %2218 = vmatpush1.bf16.msra.mxu0 0
      %2219 = vmatprep.subr.bf16.mxu0 0
      %2220 = vmatpush1.bf16.msra.mxu0 0
      %2221 = vmatprep.subr.bf16.mxu0 0
      %2222 = vmatpush1.bf16.msra.mxu0 0
      %2223 = vmatprep.subr.bf16.mxu0 0
      %2224 = vmatpush1.bf16.msra.mxu0 0
      %2225 = vmatprep.subr.bf16.mxu0 0
      %2226 = vmatpush1.bf16.msra.mxu0 %v2209
      %2227 = vmatprep.subr.bf16.mxu0 0
      %2228 = vmatpush2.bf16.msra.mxu0 0
      %2229 = vmatprep.subr.bf16.mxu0 0
      %2230 = vmatpush2.bf16.msra.mxu0 0
      %2231 = vmatprep.subr.bf16.mxu0 0
      %2232 = vmatpush2.bf16.msra.mxu0 0
      %2233 = vmatprep.subr.bf16.mxu0 0
      %2234 = vmatpush2.bf16.msra.mxu0 0
      %2235 = vmatprep.subr.bf16.mxu0 0
      %2236 = vmatpush2.bf16.msra.mxu0 0
      %2237 = vmatprep.subr.bf16.mxu0 0
      %2238 = vmatpush2.bf16.msra.mxu0 0
      %2239 = vmatprep.subr.bf16.mxu0 0
      %2240 = vmatpush2.bf16.msra.mxu0 0
      %2241 = vmatprep.subr.bf16.mxu0 0
      %2242 = vmatpush2.bf16.msra.mxu0 0
      %2243 = vmatprep.mubr.bf16.mxu0 0
      %2244 = vmatmul.mubr.bf16.gmra.mxu0 %v2161
      %v2245 = vpop.f32.mrf.mxu0
      %v2246 = vadd.f32 0.0, %v2245
      %v2247 = vpop.f32.mrf.mxu0
      %v2248 = vpop.f32.mrf.mxu0
      %v2249 = vadd.f32 0.0, %v2248
      %v2250 = vpop.f32.mrf.mxu0
      %2251 = vmatprep.mubr.bf16.mxu0 0
      %2252 = vmatmul.mubr.bf16.gmra.mxu0 %v2164
      %v2253 = vpop.f32.mrf.mxu0
      %v2254 = vadd.f32 0.0, %v2253
      %v2255 = vpop.f32.mrf.mxu0
      %v2256 = vpop.f32.mrf.mxu0
      %v2257 = vadd.f32 0.0, %v2256
      %v2258 = vpop.f32.mrf.mxu0
      %2259 = vmatprep.mubr.bf16.mxu0 0
      %2260 = vmatmul.mubr.bf16.gmra.mxu0 %v2167
      %v2261 = vpop.f32.mrf.mxu0
      %v2262 = vadd.f32 0.0, %v2261
      %v2263 = vpop.f32.mrf.mxu0
      %v2264 = vpop.f32.mrf.mxu0
      %v2265 = vadd.f32 0.0, %v2264
      %v2266 = vpop.f32.mrf.mxu0
      %2267 = vmatprep.mubr.bf16.mxu0 0
      %2268 = vmatmul.mubr.bf16.gmra.mxu0 %v2170
      %v2269 = vpop.f32.mrf.mxu0
      %v2270 = vadd.f32 0.0, %v2269
      %v2271 = vpop.f32.mrf.mxu0
      %v2272 = vpop.f32.mrf.mxu0
      %v2273 = vadd.f32 0.0, %v2272
      %v2274 = vpop.f32.mrf.mxu0
      %2275 = vmatprep.mubr.bf16.mxu0 0
      %2276 = vmatmul.mubr.bf16.gmra.mxu0 %v2173
      %v2277 = vpop.f32.mrf.mxu0
      %v2278 = vadd.f32 0.0, %v2277
      %v2279 = vpop.f32.mrf.mxu0
      %v2280 = vpop.f32.mrf.mxu0
      %v2281 = vadd.f32 0.0, %v2280
      %v2282 = vpop.f32.mrf.mxu0
      %2283 = vmatprep.mubr.bf16.mxu0 0
      %2284 = vmatmul.mubr.bf16.gmra.mxu0 %v2176
      %v2285 = vpop.f32.mrf.mxu0
      %v2286 = vadd.f32 0.0, %v2285
      %v2287 = vpop.f32.mrf.mxu0
      %v2288 = vpop.f32.mrf.mxu0
      %v2289 = vadd.f32 0.0, %v2288
      %v2290 = vpop.f32.mrf.mxu0
      %2291 = vmatprep.mubr.bf16.mxu0 0
      %2292 = vmatmul.mubr.bf16.gmra.mxu0 %v2179
      %v2293 = vpop.f32.mrf.mxu0
      %v2294 = vadd.f32 0.0, %v2293
      %v2295 = vpop.f32.mrf.mxu0
      %v2296 = vpop.f32.mrf.mxu0
      %v2297 = vadd.f32 0.0, %v2296
      %v2298 = vpop.f32.mrf.mxu0
      %2299 = vmatprep.mubr.bf16.mxu0 0
      %2300 = vmatmul.mubr.bf16.gmra.mxu0 %v2182
      %v2301 = vpop.f32.mrf.mxu0
      %v2302 = vadd.f32 0.0, %v2301
      %v2303 = vpop.f32.mrf.mxu0
      %v2304 = vpop.f32.mrf.mxu0
      %v2305 = vadd.f32 0.0, %v2304
      %v2306 = vpop.f32.mrf.mxu0
      %2307 = vmatprep.mubr.bf16.mxu0 0
      %2308 = vmatmul.mubr.bf16.gmra.mxu0 %v2185
      %v2309 = vpop.f32.mrf.mxu0
      %v2310 = vadd.f32 0.0, %v2309
      %v2311 = vpop.f32.mrf.mxu0
      %v2312 = vpop.f32.mrf.mxu0
      %v2313 = vadd.f32 0.0, %v2312
      %v2314 = vpop.f32.mrf.mxu0
      %2315 = vmatprep.mubr.bf16.mxu0 0
      %2316 = vmatmul.mubr.bf16.gmra.mxu0 %v2188
      %v2317 = vpop.f32.mrf.mxu0
      %v2318 = vadd.f32 0.0, %v2317
      %v2319 = vpop.f32.mrf.mxu0
      %v2320 = vpop.f32.mrf.mxu0
      %v2321 = vadd.f32 0.0, %v2320
      %v2322 = vpop.f32.mrf.mxu0
      %2323 = vmatprep.mubr.bf16.mxu0 0
      %2324 = vmatmul.mubr.bf16.gmra.mxu0 %v2191
      %v2325 = vpop.f32.mrf.mxu0
      %v2326 = vadd.f32 0.0, %v2325
      %v2327 = vpop.f32.mrf.mxu0
      %v2328 = vpop.f32.mrf.mxu0
      %v2329 = vadd.f32 0.0, %v2328
      %v2330 = vpop.f32.mrf.mxu0
      %2331 = vmatprep.mubr.bf16.mxu0 0
      %2332 = vmatmul.mubr.bf16.gmra.mxu0 %v2194
      %v2333 = vpop.f32.mrf.mxu0
      %v2334 = vadd.f32 0.0, %v2333
      %v2335 = vpop.f32.mrf.mxu0
      %v2336 = vpop.f32.mrf.mxu0
      %v2337 = vadd.f32 0.0, %v2336
      %v2338 = vpop.f32.mrf.mxu0
      %2339 = vmatprep.mubr.bf16.mxu0 0
      %2340 = vmatmul.mubr.bf16.gmra.mxu0 %v2197
      %v2341 = vpop.f32.mrf.mxu0
      %v2342 = vadd.f32 0.0, %v2341
      %v2343 = vpop.f32.mrf.mxu0
      %v2344 = vpop.f32.mrf.mxu0
      %v2345 = vadd.f32 0.0, %v2344
      %v2346 = vpop.f32.mrf.mxu0
      %2347 = vmatprep.mubr.bf16.mxu0 0
      %2348 = vmatmul.mubr.bf16.gmra.mxu0 %v2200
      %v2349 = vpop.f32.mrf.mxu0
      %v2350 = vadd.f32 0.0, %v2349
      %v2351 = vpop.f32.mrf.mxu0
      %v2352 = vpop.f32.mrf.mxu0
      %v2353 = vadd.f32 0.0, %v2352
      %v2354 = vpop.f32.mrf.mxu0
      %2355 = vmatprep.mubr.bf16.mxu0 0
      %2356 = vmatmul.mubr.bf16.gmra.mxu0 %v2203
      %v2357 = vpop.f32.mrf.mxu0
      %v2358 = vadd.f32 0.0, %v2357
      %v2359 = vpop.f32.mrf.mxu0
      %v2360 = vpop.f32.mrf.mxu0
      %v2361 = vadd.f32 0.0, %v2360
      %v2362 = vpop.f32.mrf.mxu0
      %2363 = vmatprep.mubr.bf16.mxu0 0
      %2364 = vmatmul.mubr.bf16.gmra.mxu0 %v2206
      %v2365 = vpop.f32.mrf.mxu0
      %v2366 = vadd.f32 0.0, %v2365
      %v2367 = vpop.f32.mrf.mxu0
      %v2368 = vpop.f32.mrf.mxu0
      %v2369 = vadd.f32 0.0, %v2368
      %v2370 = vpop.f32.mrf.mxu0
      %2371 = vdwg.mxu0
      %v2372 = vadd.f32 %v1925, %v2246
      %v2373 = vadd.f32 %v1926, %v2249
      %v2374 = vadd.f32 %v1927, %v2254
      %v2375 = vadd.f32 %v1928, %v2257
      %v2376 = vadd.f32 %v1929, %v2262
      %v2377 = vadd.f32 %v1930, %v2265
      %v2378 = vadd.f32 %v1931, %v2270
      %v2379 = vadd.f32 %v1932, %v2273
      %v2380 = vadd.f32 %v1933, %v2278
      %v2381 = vadd.f32 %v1934, %v2281
      %v2382 = vadd.f32 %v1935, %v2286
      %v2383 = vadd.f32 %v1936, %v2289
      %v2384 = vadd.f32 %v1937, %v2294
      %v2385 = vadd.f32 %v1938, %v2297
      %v2386 = vadd.f32 %v1939, %v2302
      %v2387 = vadd.f32 %v1940, %v2305
      %v2388 = vadd.f32 %v1941, %v2310
      %v2389 = vadd.f32 %v1942, %v2313
      %v2390 = vadd.f32 %v1943, %v2318
      %v2391 = vadd.f32 %v1944, %v2321
      %v2392 = vadd.f32 %v1945, %v2326
      %v2393 = vadd.f32 %v1946, %v2329
      %v2394 = vadd.f32 %v1947, %v2334
      %v2395 = vadd.f32 %v1948, %v2337
      %v2396 = vadd.f32 %v1949, %v2342
      %v2397 = vadd.f32 %v1950, %v2345
      %v2398 = vadd.f32 %v1951, %v2350
      %v2399 = vadd.f32 %v1952, %v2353
      %v2400 = vadd.f32 %v1953, %v2358
      %v2401 = vadd.f32 %v1954, %v2361
      %v2402 = vadd.f32 %v1955, %v2366
      %v2403 = vadd.f32 %v1956, %v2369
      %s2404 = scalar_lea.vmem %s3, 8
      %v2405 = vld [vmem:[%s2404] sm:$0x3]
      %v2406 = vpack.c.bf16 %v365, %v364
      %v2408 = vsel %vm724, %v2406, 0
      %v2411 = vsel %vm773, %v2405, 0
      %2413 = vmatprep.subr.bf16.mxu0 0
      %2414 = vmatpush1.bf16.msra.mxu0 0
      %2415 = vmatprep.subr.bf16.mxu0 0
      %2416 = vmatpush1.bf16.msra.mxu0 0
      %2417 = vmatprep.subr.bf16.mxu0 0
      %2418 = vmatpush1.bf16.msra.mxu0 0
      %2419 = vmatprep.subr.bf16.mxu0 0
      %2420 = vmatpush1.bf16.msra.mxu0 0
      %2421 = vmatprep.subr.bf16.mxu0 0
      %2422 = vmatpush1.bf16.msra.mxu0 0
      %2423 = vmatprep.subr.bf16.mxu0 0
      %2424 = vmatpush1.bf16.msra.mxu0 0
      %2425 = vmatprep.subr.bf16.mxu0 0
      %2426 = vmatpush1.bf16.msra.mxu0 0
      %2427 = vmatprep.subr.bf16.mxu0 0
      %2428 = vmatpush1.bf16.msra.mxu0 %v2411
      %2429 = vmatprep.subr.bf16.mxu0 0
      %2430 = vmatpush2.bf16.msra.mxu0 0
      %2431 = vmatprep.subr.bf16.mxu0 0
      %2432 = vmatpush2.bf16.msra.mxu0 0
      %2433 = vmatprep.subr.bf16.mxu0 0
      %2434 = vmatpush2.bf16.msra.mxu0 0
      %2435 = vmatprep.subr.bf16.mxu0 0
      %2436 = vmatpush2.bf16.msra.mxu0 0
      %2437 = vmatprep.subr.bf16.mxu0 0
      %2438 = vmatpush2.bf16.msra.mxu0 0
      %2439 = vmatprep.subr.bf16.mxu0 0
      %2440 = vmatpush2.bf16.msra.mxu0 0
      %2441 = vmatprep.subr.bf16.mxu0 0
      %2442 = vmatpush2.bf16.msra.mxu0 0
      %2443 = vmatprep.subr.bf16.mxu0 0
      %2444 = vmatpush2.bf16.msra.mxu0 0
      %2445 = vmatprep.mubr.bf16.mxu0 0
      %2446 = vmatmul.mubr.bf16.gmra.mxu0 %v729
      %v2447 = vpop.f32.mrf.mxu0
      %v2448 = vadd.f32 0.0, %v2447
      %v2449 = vpop.f32.mrf.mxu0
      %v2450 = vpop.f32.mrf.mxu0
      %v2451 = vadd.f32 0.0, %v2450
      %v2452 = vpop.f32.mrf.mxu0
      %2453 = vmatprep.mubr.bf16.mxu0 0
      %2454 = vmatmul.mubr.bf16.gmra.mxu0 %v732
      %v2455 = vpop.f32.mrf.mxu0
      %v2456 = vadd.f32 0.0, %v2455
      %v2457 = vpop.f32.mrf.mxu0
      %v2458 = vpop.f32.mrf.mxu0
      %v2459 = vadd.f32 0.0, %v2458
      %v2460 = vpop.f32.mrf.mxu0
      %2461 = vmatprep.mubr.bf16.mxu0 0
      %2462 = vmatmul.mubr.bf16.gmra.mxu0 %v735
      %v2463 = vpop.f32.mrf.mxu0
      %v2464 = vadd.f32 0.0, %v2463
      %v2465 = vpop.f32.mrf.mxu0
      %v2466 = vpop.f32.mrf.mxu0
      %v2467 = vadd.f32 0.0, %v2466
      %v2468 = vpop.f32.mrf.mxu0
      %2469 = vmatprep.mubr.bf16.mxu0 0
      %2470 = vmatmul.mubr.bf16.gmra.mxu0 %v738
      %v2471 = vpop.f32.mrf.mxu0
      %v2472 = vadd.f32 0.0, %v2471
      %v2473 = vpop.f32.mrf.mxu0
      %v2474 = vpop.f32.mrf.mxu0
      %v2475 = vadd.f32 0.0, %v2474
      %v2476 = vpop.f32.mrf.mxu0
      %2477 = vmatprep.mubr.bf16.mxu0 0
      %2478 = vmatmul.mubr.bf16.gmra.mxu0 %v741
      %v2479 = vpop.f32.mrf.mxu0
      %v2480 = vadd.f32 0.0, %v2479
      %v2481 = vpop.f32.mrf.mxu0
      %v2482 = vpop.f32.mrf.mxu0
      %v2483 = vadd.f32 0.0, %v2482
      %v2484 = vpop.f32.mrf.mxu0
      %2485 = vmatprep.mubr.bf16.mxu0 0
      %2486 = vmatmul.mubr.bf16.gmra.mxu0 %v744
      %v2487 = vpop.f32.mrf.mxu0
      %v2488 = vadd.f32 0.0, %v2487
      %v2489 = vpop.f32.mrf.mxu0
      %v2490 = vpop.f32.mrf.mxu0
      %v2491 = vadd.f32 0.0, %v2490
      %v2492 = vpop.f32.mrf.mxu0
      %2493 = vmatprep.mubr.bf16.mxu0 0
      %2494 = vmatmul.mubr.bf16.gmra.mxu0 %v747
      %v2495 = vpop.f32.mrf.mxu0
      %v2496 = vadd.f32 0.0, %v2495
      %v2497 = vpop.f32.mrf.mxu0
      %v2498 = vpop.f32.mrf.mxu0
      %v2499 = vadd.f32 0.0, %v2498
      %v2500 = vpop.f32.mrf.mxu0
      %2501 = vmatprep.mubr.bf16.mxu0 0
      %2502 = vmatmul.mubr.bf16.gmra.mxu0 %v750
      %v2503 = vpop.f32.mrf.mxu0
      %v2504 = vadd.f32 0.0, %v2503
      %v2505 = vpop.f32.mrf.mxu0
      %v2506 = vpop.f32.mrf.mxu0
      %v2507 = vadd.f32 0.0, %v2506
      %v2508 = vpop.f32.mrf.mxu0
      %2509 = vmatprep.mubr.bf16.mxu0 0
      %2510 = vmatmul.mubr.bf16.gmra.mxu0 %v753
      %v2511 = vpop.f32.mrf.mxu0
      %v2512 = vadd.f32 0.0, %v2511
      %v2513 = vpop.f32.mrf.mxu0
      %v2514 = vpop.f32.mrf.mxu0
      %v2515 = vadd.f32 0.0, %v2514
      %v2516 = vpop.f32.mrf.mxu0
      %2517 = vmatprep.mubr.bf16.mxu0 0
      %2518 = vmatmul.mubr.bf16.gmra.mxu0 %v756
      %v2519 = vpop.f32.mrf.mxu0
      %v2520 = vadd.f32 0.0, %v2519
      %v2521 = vpop.f32.mrf.mxu0
      %v2522 = vpop.f32.mrf.mxu0
      %v2523 = vadd.f32 0.0, %v2522
      %v2524 = vpop.f32.mrf.mxu0
      %2525 = vmatprep.mubr.bf16.mxu0 0
      %2526 = vmatmul.mubr.bf16.gmra.mxu0 %v759
      %v2527 = vpop.f32.mrf.mxu0
      %v2528 = vadd.f32 0.0, %v2527
      %v2529 = vpop.f32.mrf.mxu0
      %v2530 = vpop.f32.mrf.mxu0
      %v2531 = vadd.f32 0.0, %v2530
      %v2532 = vpop.f32.mrf.mxu0
      %2533 = vmatprep.mubr.bf16.mxu0 0
      %2534 = vmatmul.mubr.bf16.gmra.mxu0 %v762
      %v2535 = vpop.f32.mrf.mxu0
      %v2536 = vadd.f32 0.0, %v2535
      %v2537 = vpop.f32.mrf.mxu0
      %v2538 = vpop.f32.mrf.mxu0
      %v2539 = vadd.f32 0.0, %v2538
      %v2540 = vpop.f32.mrf.mxu0
      %2541 = vmatprep.mubr.bf16.mxu0 0
      %2542 = vmatmul.mubr.bf16.gmra.mxu0 %v765
      %v2543 = vpop.f32.mrf.mxu0
      %v2544 = vadd.f32 0.0, %v2543
      %v2545 = vpop.f32.mrf.mxu0
      %v2546 = vpop.f32.mrf.mxu0
      %v2547 = vadd.f32 0.0, %v2546
      %v2548 = vpop.f32.mrf.mxu0
      %2549 = vmatprep.mubr.bf16.mxu0 0
      %2550 = vmatmul.mubr.bf16.gmra.mxu0 %v768
      %v2551 = vpop.f32.mrf.mxu0
      %v2552 = vadd.f32 0.0, %v2551
      %v2553 = vpop.f32.mrf.mxu0
      %v2554 = vpop.f32.mrf.mxu0
      %v2555 = vadd.f32 0.0, %v2554
      %v2556 = vpop.f32.mrf.mxu0
      %2557 = vmatprep.mubr.bf16.mxu0 0
      %2558 = vmatmul.mubr.bf16.gmra.mxu0 %v771
      %v2559 = vpop.f32.mrf.mxu0
      %v2560 = vadd.f32 0.0, %v2559
      %v2561 = vpop.f32.mrf.mxu0
      %v2562 = vpop.f32.mrf.mxu0
      %v2563 = vadd.f32 0.0, %v2562
      %v2564 = vpop.f32.mrf.mxu0
      %2565 = vmatprep.mubr.bf16.mxu0 0
      %2566 = vmatmul.mubr.bf16.gmra.mxu0 %v2408
      %v2567 = vpop.f32.mrf.mxu0
      %v2568 = vadd.f32 0.0, %v2567
      %v2569 = vpop.f32.mrf.mxu0
      %v2570 = vpop.f32.mrf.mxu0
      %v2571 = vadd.f32 0.0, %v2570
      %v2572 = vpop.f32.mrf.mxu0
      %2573 = vdwg.mxu0
      %v2574 = vadd.f32 %v2372, %v2448
      %v2575 = vadd.f32 %v2373, %v2451
      %v2576 = vadd.f32 %v2374, %v2456
      %v2577 = vadd.f32 %v2375, %v2459
      %v2578 = vadd.f32 %v2376, %v2464
      %v2579 = vadd.f32 %v2377, %v2467
      %v2580 = vadd.f32 %v2378, %v2472
      %v2581 = vadd.f32 %v2379, %v2475
      %v2582 = vadd.f32 %v2380, %v2480
      %v2583 = vadd.f32 %v2381, %v2483
      %v2584 = vadd.f32 %v2382, %v2488
      %v2585 = vadd.f32 %v2383, %v2491
      %v2586 = vadd.f32 %v2384, %v2496
      %v2587 = vadd.f32 %v2385, %v2499
      %v2588 = vadd.f32 %v2386, %v2504
      %v2589 = vadd.f32 %v2387, %v2507
      %v2590 = vadd.f32 %v2388, %v2512
      %v2591 = vadd.f32 %v2389, %v2515
      %v2592 = vadd.f32 %v2390, %v2520
      %v2593 = vadd.f32 %v2391, %v2523
      %v2594 = vadd.f32 %v2392, %v2528
      %v2595 = vadd.f32 %v2393, %v2531
      %v2596 = vadd.f32 %v2394, %v2536
      %v2597 = vadd.f32 %v2395, %v2539
      %v2598 = vadd.f32 %v2396, %v2544
      %v2599 = vadd.f32 %v2397, %v2547
      %v2600 = vadd.f32 %v2398, %v2552
      %v2601 = vadd.f32 %v2399, %v2555
      %v2602 = vadd.f32 %v2400, %v2560
      %v2603 = vadd.f32 %v2401, %v2563
      %v2604 = vadd.f32 %v2402, %v2568
      %v2605 = vadd.f32 %v2403, %v2571
      %v2606 = vmul.f32 %v334, %v1432
      %v2607 = vmul.f32 %v335, %v1434
      %v2608 = vmul.f32 %v336, %v1436
      %v2609 = vmul.f32 %v337, %v1438
      %v2610 = vmul.f32 %v338, %v1440
      %v2611 = vmul.f32 %v339, %v1442
      %v2612 = vmul.f32 %v340, %v1444
      %v2613 = vmul.f32 %v341, %v1446
      %v2614 = vmul.f32 %v342, %v1448
      %v2615 = vmul.f32 %v343, %v1450
      %v2616 = vmul.f32 %v344, %v1452
      %v2617 = vmul.f32 %v345, %v1454
      %v2618 = vmul.f32 %v346, %v1456
      %v2619 = vmul.f32 %v347, %v1458
      %v2620 = vmul.f32 %v348, %v1460
      %v2621 = vmul.f32 %v349, %v1462
      %v2622 = vmul.f32 %v350, %v1464
      %v2623 = vmul.f32 %v351, %v1466
      %v2624 = vmul.f32 %v352, %v1468
      %v2625 = vmul.f32 %v353, %v1470
      %v2626 = vmul.f32 %v354, %v1472
      %v2627 = vmul.f32 %v355, %v1474
      %v2628 = vmul.f32 %v356, %v1476
      %v2629 = vmul.f32 %v357, %v1478
      %v2630 = vmul.f32 %v358, %v1480
      %v2631 = vmul.f32 %v359, %v1482
      %v2632 = vmul.f32 %v360, %v1484
      %v2633 = vmul.f32 %v361, %v1486
      %v2634 = vmul.f32 %v362, %v1488
      %v2635 = vmul.f32 %v363, %v1490
      %v2636 = vmul.f32 %v364, %v1492
      %v2637 = vmul.f32 %v365, %v1494
      %v2638 = vmul.f32 %v1493, 0.0
      %s2639 = scalar_lea.vmem %s3, 10
      %v2640 = vld [vmem:[%s2639] sm:$0x3]
      %v2641 = vpack.c.bf16 %v2607, %v2606
      %v2642 = vpack.c.bf16 %v2609, %v2608
      %v2643 = vpack.c.bf16 %v2611, %v2610
      %v2644 = vpack.c.bf16 %v2613, %v2612
      %v2645 = vpack.c.bf16 %v2615, %v2614
      %v2646 = vpack.c.bf16 %v2617, %v2616
      %v2647 = vpack.c.bf16 %v2619, %v2618
      %v2648 = vpack.c.bf16 %v2621, %v2620
      %v2649 = vpack.c.bf16 %v2623, %v2622
      %v2650 = vpack.c.bf16 %v2625, %v2624
      %v2651 = vpack.c.bf16 %v2627, %v2626
      %v2652 = vpack.c.bf16 %v2629, %v2628
      %v2653 = vpack.c.bf16 %v2631, %v2630
      %v2654 = vpack.c.bf16 %v2633, %v2632
      %v2655 = vpack.c.bf16 %v2635, %v2634
      %v2656 = vpack.c.bf16 %v2637, %v2636
      %v2657 = vpack.c.bf16 %v2638, %v2638
      %v2659 = vshrl.u32 %v2641, 16
      %v2661 = vshll.u32 %v2641, 16
      %v2663 = vrot.slane %v2661, 1
      %v2664 = vor.u32 %v2659, %v2663
      %v2666 = vshll.u32 %v2642, 16
      %v2668 = vrot.slane %v2666, 1
      %v2669 = vsel %vm1580, %v2664, %v2668
      %v2670 = vshrl.u32 %v2642, 16
      %v2672 = vor.u32 %v2670, %v2668
      %v2674 = vshll.u32 %v2643, 16
      %v2676 = vrot.slane %v2674, 1
      %v2677 = vsel %vm1580, %v2672, %v2676
      %v2678 = vshrl.u32 %v2643, 16
      %v2680 = vor.u32 %v2678, %v2676
      %v2682 = vshll.u32 %v2644, 16
      %v2684 = vrot.slane %v2682, 1
      %v2685 = vsel %vm1580, %v2680, %v2684
      %v2686 = vshrl.u32 %v2644, 16
      %v2688 = vor.u32 %v2686, %v2684
      %v2690 = vshll.u32 %v2645, 16
      %v2692 = vrot.slane %v2690, 1
      %v2693 = vsel %vm1580, %v2688, %v2692
      %v2694 = vshrl.u32 %v2645, 16
      %v2696 = vor.u32 %v2694, %v2692
      %v2698 = vshll.u32 %v2646, 16
      %v2700 = vrot.slane %v2698, 1
      %v2701 = vsel %vm1580, %v2696, %v2700
      %v2702 = vshrl.u32 %v2646, 16
      %v2704 = vor.u32 %v2702, %v2700
      %v2706 = vshll.u32 %v2647, 16
      %v2708 = vrot.slane %v2706, 1
      %v2709 = vsel %vm1580, %v2704, %v2708
      %v2710 = vshrl.u32 %v2647, 16
      %v2712 = vor.u32 %v2710, %v2708
      %v2714 = vshll.u32 %v2648, 16
      %v2716 = vrot.slane %v2714, 1
      %v2717 = vsel %vm1580, %v2712, %v2716
      %v2718 = vshrl.u32 %v2648, 16
      %v2720 = vor.u32 %v2718, %v2716
      %v2722 = vshll.u32 %v2649, 16
      %v2724 = vrot.slane %v2722, 1
      %v2725 = vsel %vm1580, %v2720, %v2724
      %v2726 = vshrl.u32 %v2649, 16
      %v2728 = vor.u32 %v2726, %v2724
      %v2730 = vshll.u32 %v2650, 16
      %v2732 = vrot.slane %v2730, 1
      %v2733 = vsel %vm1580, %v2728, %v2732
      %v2734 = vshrl.u32 %v2650, 16
      %v2736 = vor.u32 %v2734, %v2732
      %v2738 = vshll.u32 %v2651, 16
      %v2740 = vrot.slane %v2738, 1
      %v2741 = vsel %vm1580, %v2736, %v2740
      %v2742 = vshrl.u32 %v2651, 16
      %v2744 = vor.u32 %v2742, %v2740
      %v2746 = vshll.u32 %v2652, 16
      %v2748 = vrot.slane %v2746, 1
      %v2749 = vsel %vm1580, %v2744, %v2748
      %v2750 = vshrl.u32 %v2652, 16
      %v2752 = vor.u32 %v2750, %v2748
      %v2754 = vshll.u32 %v2653, 16
      %v2756 = vrot.slane %v2754, 1
      %v2757 = vsel %vm1580, %v2752, %v2756
      %v2758 = vshrl.u32 %v2653, 16
      %v2760 = vor.u32 %v2758, %v2756
      %v2762 = vshll.u32 %v2654, 16
      %v2764 = vrot.slane %v2762, 1
      %v2765 = vsel %vm1580, %v2760, %v2764
      %v2766 = vshrl.u32 %v2654, 16
      %v2768 = vor.u32 %v2766, %v2764
      %v2770 = vshll.u32 %v2655, 16
      %v2772 = vrot.slane %v2770, 1
      %v2773 = vsel %vm1580, %v2768, %v2772
      %v2774 = vshrl.u32 %v2655, 16
      %v2776 = vor.u32 %v2774, %v2772
      %v2778 = vshll.u32 %v2656, 16
      %v2780 = vrot.slane %v2778, 1
      %v2781 = vsel %vm1580, %v2776, %v2780
      %v2782 = vshrl.u32 %v2656, 16
      %v2784 = vor.u32 %v2782, %v2780
      %v2786 = vshll.u32 %v2657, 16
      %v2788 = vrot.slane %v2786, 1
      %v2789 = vsel %vm1580, %v2784, %v2788
      %v2791 = vsel %vm724, %v2669, 0
      %v2794 = vsel %vm724, %v2677, 0
      %v2797 = vsel %vm724, %v2685, 0
      %v2800 = vsel %vm724, %v2693, 0
      %v2803 = vsel %vm724, %v2701, 0
      %v2806 = vsel %vm724, %v2709, 0
      %v2809 = vsel %vm724, %v2717, 0
      %v2812 = vsel %vm724, %v2725, 0
      %v2815 = vsel %vm724, %v2733, 0
      %v2818 = vsel %vm724, %v2741, 0
      %v2821 = vsel %vm724, %v2749, 0
      %v2824 = vsel %vm724, %v2757, 0
      %v2827 = vsel %vm724, %v2765, 0
      %v2830 = vsel %vm724, %v2773, 0
      %v2833 = vsel %vm724, %v2781, 0
      %v2836 = vsel %vm724, %v2789, 0
      %v2839 = vsel %vm773, %v2640, 0
      %2841 = vmatprep.subr.bf16.mxu0 0
      %2842 = vmatpush1.bf16.msra.mxu0 0
      %2843 = vmatprep.subr.bf16.mxu0 0
      %2844 = vmatpush1.bf16.msra.mxu0 0
      %2845 = vmatprep.subr.bf16.mxu0 0
      %2846 = vmatpush1.bf16.msra.mxu0 0
      %2847 = vmatprep.subr.bf16.mxu0 0
      %2848 = vmatpush1.bf16.msra.mxu0 0
      %2849 = vmatprep.subr.bf16.mxu0 0
      %2850 = vmatpush1.bf16.msra.mxu0 0
      %2851 = vmatprep.subr.bf16.mxu0 0
      %2852 = vmatpush1.bf16.msra.mxu0 0
      %2853 = vmatprep.subr.bf16.mxu0 0
      %2854 = vmatpush1.bf16.msra.mxu0 0
      %2855 = vmatprep.subr.bf16.mxu0 0
      %2856 = vmatpush1.bf16.msra.mxu0 %v2839
      %2857 = vmatprep.subr.bf16.mxu0 0
      %2858 = vmatpush2.bf16.msra.mxu0 0
      %2859 = vmatprep.subr.bf16.mxu0 0
      %2860 = vmatpush2.bf16.msra.mxu0 0
      %2861 = vmatprep.subr.bf16.mxu0 0
      %2862 = vmatpush2.bf16.msra.mxu0 0
      %2863 = vmatprep.subr.bf16.mxu0 0
      %2864 = vmatpush2.bf16.msra.mxu0 0
      %2865 = vmatprep.subr.bf16.mxu0 0
      %2866 = vmatpush2.bf16.msra.mxu0 0
      %2867 = vmatprep.subr.bf16.mxu0 0
      %2868 = vmatpush2.bf16.msra.mxu0 0
      %2869 = vmatprep.subr.bf16.mxu0 0
      %2870 = vmatpush2.bf16.msra.mxu0 0
      %2871 = vmatprep.subr.bf16.mxu0 0
      %2872 = vmatpush2.bf16.msra.mxu0 0
      %2873 = vmatprep.mubr.bf16.mxu0 0
      %2874 = vmatmul.mubr.bf16.gmra.mxu0 %v2791
      %v2875 = vpop.f32.mrf.mxu0
      %v2876 = vadd.f32 0.0, %v2875
      %v2877 = vpop.f32.mrf.mxu0
      %v2878 = vpop.f32.mrf.mxu0
      %v2879 = vadd.f32 0.0, %v2878
      %v2880 = vpop.f32.mrf.mxu0
      %2881 = vmatprep.mubr.bf16.mxu0 0
      %2882 = vmatmul.mubr.bf16.gmra.mxu0 %v2794
      %v2883 = vpop.f32.mrf.mxu0
      %v2884 = vadd.f32 0.0, %v2883
      %v2885 = vpop.f32.mrf.mxu0
      %v2886 = vpop.f32.mrf.mxu0
      %v2887 = vadd.f32 0.0, %v2886
      %v2888 = vpop.f32.mrf.mxu0
      %2889 = vmatprep.mubr.bf16.mxu0 0
      %2890 = vmatmul.mubr.bf16.gmra.mxu0 %v2797
      %v2891 = vpop.f32.mrf.mxu0
      %v2892 = vadd.f32 0.0, %v2891
      %v2893 = vpop.f32.mrf.mxu0
      %v2894 = vpop.f32.mrf.mxu0
      %v2895 = vadd.f32 0.0, %v2894
      %v2896 = vpop.f32.mrf.mxu0
      %2897 = vmatprep.mubr.bf16.mxu0 0
      %2898 = vmatmul.mubr.bf16.gmra.mxu0 %v2800
      %v2899 = vpop.f32.mrf.mxu0
      %v2900 = vadd.f32 0.0, %v2899
      %v2901 = vpop.f32.mrf.mxu0
      %v2902 = vpop.f32.mrf.mxu0
      %v2903 = vadd.f32 0.0, %v2902
      %v2904 = vpop.f32.mrf.mxu0
      %2905 = vmatprep.mubr.bf16.mxu0 0
      %2906 = vmatmul.mubr.bf16.gmra.mxu0 %v2803
      %v2907 = vpop.f32.mrf.mxu0
      %v2908 = vadd.f32 0.0, %v2907
      %v2909 = vpop.f32.mrf.mxu0
      %v2910 = vpop.f32.mrf.mxu0
      %v2911 = vadd.f32 0.0, %v2910
      %v2912 = vpop.f32.mrf.mxu0
      %2913 = vmatprep.mubr.bf16.mxu0 0
      %2914 = vmatmul.mubr.bf16.gmra.mxu0 %v2806
      %v2915 = vpop.f32.mrf.mxu0
      %v2916 = vadd.f32 0.0, %v2915
      %v2917 = vpop.f32.mrf.mxu0
      %v2918 = vpop.f32.mrf.mxu0
      %v2919 = vadd.f32 0.0, %v2918
      %v2920 = vpop.f32.mrf.mxu0
      %2921 = vmatprep.mubr.bf16.mxu0 0
      %2922 = vmatmul.mubr.bf16.gmra.mxu0 %v2809
      %v2923 = vpop.f32.mrf.mxu0
      %v2924 = vadd.f32 0.0, %v2923
      %v2925 = vpop.f32.mrf.mxu0
      %v2926 = vpop.f32.mrf.mxu0
      %v2927 = vadd.f32 0.0, %v2926
      %v2928 = vpop.f32.mrf.mxu0
      %2929 = vmatprep.mubr.bf16.mxu0 0
      %2930 = vmatmul.mubr.bf16.gmra.mxu0 %v2812
      %v2931 = vpop.f32.mrf.mxu0
      %v2932 = vadd.f32 0.0, %v2931
      %v2933 = vpop.f32.mrf.mxu0
      %v2934 = vpop.f32.mrf.mxu0
      %v2935 = vadd.f32 0.0, %v2934
      %v2936 = vpop.f32.mrf.mxu0
      %2937 = vmatprep.mubr.bf16.mxu0 0
      %2938 = vmatmul.mubr.bf16.gmra.mxu0 %v2815
      %v2939 = vpop.f32.mrf.mxu0
      %v2940 = vadd.f32 0.0, %v2939
      %v2941 = vpop.f32.mrf.mxu0
      %v2942 = vpop.f32.mrf.mxu0
      %v2943 = vadd.f32 0.0, %v2942
      %v2944 = vpop.f32.mrf.mxu0
      %2945 = vmatprep.mubr.bf16.mxu0 0
      %2946 = vmatmul.mubr.bf16.gmra.mxu0 %v2818
      %v2947 = vpop.f32.mrf.mxu0
      %v2948 = vadd.f32 0.0, %v2947
      %v2949 = vpop.f32.mrf.mxu0
      %v2950 = vpop.f32.mrf.mxu0
      %v2951 = vadd.f32 0.0, %v2950
      %v2952 = vpop.f32.mrf.mxu0
      %2953 = vmatprep.mubr.bf16.mxu0 0
      %2954 = vmatmul.mubr.bf16.gmra.mxu0 %v2821
      %v2955 = vpop.f32.mrf.mxu0
      %v2956 = vadd.f32 0.0, %v2955
      %v2957 = vpop.f32.mrf.mxu0
      %v2958 = vpop.f32.mrf.mxu0
      %v2959 = vadd.f32 0.0, %v2958
      %v2960 = vpop.f32.mrf.mxu0
      %2961 = vmatprep.mubr.bf16.mxu0 0
      %2962 = vmatmul.mubr.bf16.gmra.mxu0 %v2824
      %v2963 = vpop.f32.mrf.mxu0
      %v2964 = vadd.f32 0.0, %v2963
      %v2965 = vpop.f32.mrf.mxu0
      %v2966 = vpop.f32.mrf.mxu0
      %v2967 = vadd.f32 0.0, %v2966
      %v2968 = vpop.f32.mrf.mxu0
      %2969 = vmatprep.mubr.bf16.mxu0 0
      %2970 = vmatmul.mubr.bf16.gmra.mxu0 %v2827
      %v2971 = vpop.f32.mrf.mxu0
      %v2972 = vadd.f32 0.0, %v2971
      %v2973 = vpop.f32.mrf.mxu0
      %v2974 = vpop.f32.mrf.mxu0
      %v2975 = vadd.f32 0.0, %v2974
      %v2976 = vpop.f32.mrf.mxu0
      %2977 = vmatprep.mubr.bf16.mxu0 0
      %2978 = vmatmul.mubr.bf16.gmra.mxu0 %v2830
      %v2979 = vpop.f32.mrf.mxu0
      %v2980 = vadd.f32 0.0, %v2979
      %v2981 = vpop.f32.mrf.mxu0
      %v2982 = vpop.f32.mrf.mxu0
      %v2983 = vadd.f32 0.0, %v2982
      %v2984 = vpop.f32.mrf.mxu0
      %2985 = vmatprep.mubr.bf16.mxu0 0
      %2986 = vmatmul.mubr.bf16.gmra.mxu0 %v2833
      %v2987 = vpop.f32.mrf.mxu0
      %v2988 = vadd.f32 0.0, %v2987
      %v2989 = vpop.f32.mrf.mxu0
      %v2990 = vpop.f32.mrf.mxu0
      %v2991 = vadd.f32 0.0, %v2990
      %v2992 = vpop.f32.mrf.mxu0
      %2993 = vmatprep.mubr.bf16.mxu0 0
      %2994 = vmatmul.mubr.bf16.gmra.mxu0 %v2836
      %v2995 = vpop.f32.mrf.mxu0
      %v2996 = vadd.f32 0.0, %v2995
      %v2997 = vpop.f32.mrf.mxu0
      %v2998 = vpop.f32.mrf.mxu0
      %v2999 = vadd.f32 0.0, %v2998
      %v3000 = vpop.f32.mrf.mxu0
      %3001 = vdwg.mxu0
      %v3002 = vadd.f32 %v2574, %v2876
      %v3003 = vadd.f32 %v2575, %v2879
      %v3004 = vadd.f32 %v2576, %v2884
      %v3005 = vadd.f32 %v2577, %v2887
      %v3006 = vadd.f32 %v2578, %v2892
      %v3007 = vadd.f32 %v2579, %v2895
      %v3008 = vadd.f32 %v2580, %v2900
      %v3009 = vadd.f32 %v2581, %v2903
      %v3010 = vadd.f32 %v2582, %v2908
      %v3011 = vadd.f32 %v2583, %v2911
      %v3012 = vadd.f32 %v2584, %v2916
      %v3013 = vadd.f32 %v2585, %v2919
      %v3014 = vadd.f32 %v2586, %v2924
      %v3015 = vadd.f32 %v2587, %v2927
      %v3016 = vadd.f32 %v2588, %v2932
      %v3017 = vadd.f32 %v2589, %v2935
      %v3018 = vadd.f32 %v2590, %v2940
      %v3019 = vadd.f32 %v2591, %v2943
      %v3020 = vadd.f32 %v2592, %v2948
      %v3021 = vadd.f32 %v2593, %v2951
      %v3022 = vadd.f32 %v2594, %v2956
      %v3023 = vadd.f32 %v2595, %v2959
      %v3024 = vadd.f32 %v2596, %v2964
      %v3025 = vadd.f32 %v2597, %v2967
      %v3026 = vadd.f32 %v2598, %v2972
      %v3027 = vadd.f32 %v2599, %v2975
      %v3028 = vadd.f32 %v2600, %v2980
      %v3029 = vadd.f32 %v2601, %v2983
      %v3030 = vadd.f32 %v2602, %v2988
      %v3031 = vadd.f32 %v2603, %v2991
      %v3032 = vadd.f32 %v2604, %v2996
      %v3033 = vadd.f32 %v2605, %v2999
      %v3034 = vmul.f32 %v335, %v559
      %v3035 = vmul.f32 %v336, %v561
      %v3036 = vmul.f32 %v337, %v563
      %v3037 = vmul.f32 %v338, %v565
      %v3038 = vmul.f32 %v339, %v567
      %v3039 = vmul.f32 %v340, %v569
      %v3040 = vmul.f32 %v341, %v571
      %v3041 = vmul.f32 %v342, %v573
      %v3042 = vmul.f32 %v343, %v575
      %v3043 = vmul.f32 %v344, %v577
      %v3044 = vmul.f32 %v345, %v579
      %v3045 = vmul.f32 %v346, %v581
      %v3046 = vmul.f32 %v347, %v583
      %v3047 = vmul.f32 %v348, %v585
      %v3048 = vmul.f32 %v349, %v587
      %v3049 = vmul.f32 %v350, %v589
      %v3050 = vmul.f32 %v351, %v591
      %v3051 = vmul.f32 %v352, %v593
      %v3052 = vmul.f32 %v353, %v595
      %v3053 = vmul.f32 %v354, %v597
      %v3054 = vmul.f32 %v355, %v599
      %v3055 = vmul.f32 %v356, %v601
      %v3056 = vmul.f32 %v357, %v603
      %v3057 = vmul.f32 %v358, %v605
      %v3058 = vmul.f32 %v359, %v607
      %v3059 = vmul.f32 %v360, %v609
      %v3060 = vmul.f32 %v361, %v611
      %v3061 = vmul.f32 %v362, %v613
      %v3062 = vmul.f32 %v363, %v615
      %v3063 = vmul.f32 %v364, %v617
      %v3064 = vmul.f32 %v365, %v619
      %v3065 = vmul.f32 %v621, 0.0
      %v3066 = vmul.f32 %v620, 0.0
      %s3067 = scalar_lea.vmem %s3, 12
      %v3068 = vld [vmem:[%s3067] sm:$0x3]
      %v3069 = vpack.c.bf16 %v3035, %v3034
      %v3070 = vpack.c.bf16 %v3037, %v3036
      %v3071 = vpack.c.bf16 %v3039, %v3038
      %v3072 = vpack.c.bf16 %v3041, %v3040
      %v3073 = vpack.c.bf16 %v3043, %v3042
      %v3074 = vpack.c.bf16 %v3045, %v3044
      %v3075 = vpack.c.bf16 %v3047, %v3046
      %v3076 = vpack.c.bf16 %v3049, %v3048
      %v3077 = vpack.c.bf16 %v3051, %v3050
      %v3078 = vpack.c.bf16 %v3053, %v3052
      %v3079 = vpack.c.bf16 %v3055, %v3054
      %v3080 = vpack.c.bf16 %v3057, %v3056
      %v3081 = vpack.c.bf16 %v3059, %v3058
      %v3082 = vpack.c.bf16 %v3061, %v3060
      %v3083 = vpack.c.bf16 %v3063, %v3062
      %v3084 = vpack.c.bf16 %v3065, %v3064
      %v3085 = vpack.c.bf16 %v3066, %v3066
      %v3087 = vshrl.u32 %v3069, 16
      %v3089 = vrot.slane %v3087, 3
      %v3090 = vshll.u32 %v3069, 16
      %v3092 = vrot.slane %v3090, 4
      %v3093 = vor.u32 %v3089, %v3092
      %v3095 = vshrl.u32 %v3070, 16
      %v3097 = vrot.slane %v3095, 3
      %v3098 = vshll.u32 %v3070, 16
      %v3100 = vrot.slane %v3098, 4
      %v3101 = vor.u32 %v3097, %v3100
      %v3102 = vsel %vm938, %v3093, %v3101
      %v3104 = vshrl.u32 %v3071, 16
      %v3106 = vrot.slane %v3104, 3
      %v3107 = vshll.u32 %v3071, 16
      %v3109 = vrot.slane %v3107, 4
      %v3110 = vor.u32 %v3106, %v3109
      %v3111 = vsel %vm938, %v3101, %v3110
      %v3113 = vshrl.u32 %v3072, 16
      %v3115 = vrot.slane %v3113, 3
      %v3116 = vshll.u32 %v3072, 16
      %v3118 = vrot.slane %v3116, 4
      %v3119 = vor.u32 %v3115, %v3118
      %v3120 = vsel %vm938, %v3110, %v3119
      %v3122 = vshrl.u32 %v3073, 16
      %v3124 = vrot.slane %v3122, 3
      %v3125 = vshll.u32 %v3073, 16
      %v3127 = vrot.slane %v3125, 4
      %v3128 = vor.u32 %v3124, %v3127
      %v3129 = vsel %vm938, %v3119, %v3128
      %v3131 = vshrl.u32 %v3074, 16
      %v3133 = vrot.slane %v3131, 3
      %v3134 = vshll.u32 %v3074, 16
      %v3136 = vrot.slane %v3134, 4
      %v3137 = vor.u32 %v3133, %v3136
      %v3138 = vsel %vm938, %v3128, %v3137
      %v3140 = vshrl.u32 %v3075, 16
      %v3142 = vrot.slane %v3140, 3
      %v3143 = vshll.u32 %v3075, 16
      %v3145 = vrot.slane %v3143, 4
      %v3146 = vor.u32 %v3142, %v3145
      %v3147 = vsel %vm938, %v3137, %v3146
      %v3149 = vshrl.u32 %v3076, 16
      %v3151 = vrot.slane %v3149, 3
      %v3152 = vshll.u32 %v3076, 16
      %v3154 = vrot.slane %v3152, 4
      %v3155 = vor.u32 %v3151, %v3154
      %v3156 = vsel %vm938, %v3146, %v3155
      %v3158 = vshrl.u32 %v3077, 16
      %v3160 = vrot.slane %v3158, 3
      %v3161 = vshll.u32 %v3077, 16
      %v3163 = vrot.slane %v3161, 4
      %v3164 = vor.u32 %v3160, %v3163
      %v3165 = vsel %vm938, %v3155, %v3164
      %v3167 = vshrl.u32 %v3078, 16
      %v3169 = vrot.slane %v3167, 3
      %v3170 = vshll.u32 %v3078, 16
      %v3172 = vrot.slane %v3170, 4
      %v3173 = vor.u32 %v3169, %v3172
      %v3174 = vsel %vm938, %v3164, %v3173
      %v3176 = vshrl.u32 %v3079, 16
      %v3178 = vrot.slane %v3176, 3
      %v3179 = vshll.u32 %v3079, 16
      %v3181 = vrot.slane %v3179, 4
      %v3182 = vor.u32 %v3178, %v3181
      %v3183 = vsel %vm938, %v3173, %v3182
      %v3185 = vshrl.u32 %v3080, 16
      %v3187 = vrot.slane %v3185, 3
      %v3188 = vshll.u32 %v3080, 16
      %v3190 = vrot.slane %v3188, 4
      %v3191 = vor.u32 %v3187, %v3190
      %v3192 = vsel %vm938, %v3182, %v3191
      %v3194 = vshrl.u32 %v3081, 16
      %v3196 = vrot.slane %v3194, 3
      %v3197 = vshll.u32 %v3081, 16
      %v3199 = vrot.slane %v3197, 4
      %v3200 = vor.u32 %v3196, %v3199
      %v3201 = vsel %vm938, %v3191, %v3200
      %v3203 = vshrl.u32 %v3082, 16
      %v3205 = vrot.slane %v3203, 3
      %v3206 = vshll.u32 %v3082, 16
      %v3208 = vrot.slane %v3206, 4
      %v3209 = vor.u32 %v3205, %v3208
      %v3210 = vsel %vm938, %v3200, %v3209
      %v3212 = vshrl.u32 %v3083, 16
      %v3214 = vrot.slane %v3212, 3
      %v3215 = vshll.u32 %v3083, 16
      %v3217 = vrot.slane %v3215, 4
      %v3218 = vor.u32 %v3214, %v3217
      %v3219 = vsel %vm938, %v3209, %v3218
      %v3221 = vshrl.u32 %v3084, 16
      %v3223 = vrot.slane %v3221, 3
      %v3224 = vshll.u32 %v3084, 16
      %v3226 = vrot.slane %v3224, 4
      %v3227 = vor.u32 %v3223, %v3226
      %v3228 = vsel %vm938, %v3218, %v3227
      %v3230 = vshrl.u32 %v3085, 16
      %v3232 = vrot.slane %v3230, 3
      %v3233 = vshll.u32 %v3085, 16
      %v3235 = vrot.slane %v3233, 4
      %v3236 = vor.u32 %v3232, %v3235
      %v3237 = vsel %vm938, %v3227, %v3236
      %v3239 = vsel %vm724, %v3102, 0
      %v3242 = vsel %vm724, %v3111, 0
      %v3245 = vsel %vm724, %v3120, 0
      %v3248 = vsel %vm724, %v3129, 0
      %v3251 = vsel %vm724, %v3138, 0
      %v3254 = vsel %vm724, %v3147, 0
      %v3257 = vsel %vm724, %v3156, 0
      %v3260 = vsel %vm724, %v3165, 0
      %v3263 = vsel %vm724, %v3174, 0
      %v3266 = vsel %vm724, %v3183, 0
      %v3269 = vsel %vm724, %v3192, 0
      %v3272 = vsel %vm724, %v3201, 0
      %v3275 = vsel %vm724, %v3210, 0
      %v3278 = vsel %vm724, %v3219, 0
      %v3281 = vsel %vm724, %v3228, 0
      %v3284 = vsel %vm724, %v3237, 0
      %v3287 = vsel %vm773, %v3068, 0
      %3289 = vmatprep.subr.bf16.mxu0 0
      %3290 = vmatpush1.bf16.msra.mxu0 0
      %3291 = vmatprep.subr.bf16.mxu0 0
      %3292 = vmatpush1.bf16.msra.mxu0 0
      %3293 = vmatprep.subr.bf16.mxu0 0
      %3294 = vmatpush1.bf16.msra.mxu0 0
      %3295 = vmatprep.subr.bf16.mxu0 0
      %3296 = vmatpush1.bf16.msra.mxu0 0
      %3297 = vmatprep.subr.bf16.mxu0 0
      %3298 = vmatpush1.bf16.msra.mxu0 0
      %3299 = vmatprep.subr.bf16.mxu0 0
      %3300 = vmatpush1.bf16.msra.mxu0 0
      %3301 = vmatprep.subr.bf16.mxu0 0
      %3302 = vmatpush1.bf16.msra.mxu0 0
      %3303 = vmatprep.subr.bf16.mxu0 0
      %3304 = vmatpush1.bf16.msra.mxu0 %v3287
      %3305 = vmatprep.subr.bf16.mxu0 0
      %3306 = vmatpush2.bf16.msra.mxu0 0
      %3307 = vmatprep.subr.bf16.mxu0 0
      %3308 = vmatpush2.bf16.msra.mxu0 0
      %3309 = vmatprep.subr.bf16.mxu0 0
      %3310 = vmatpush2.bf16.msra.mxu0 0
      %3311 = vmatprep.subr.bf16.mxu0 0
      %3312 = vmatpush2.bf16.msra.mxu0 0
      %3313 = vmatprep.subr.bf16.mxu0 0
      %3314 = vmatpush2.bf16.msra.mxu0 0
      %3315 = vmatprep.subr.bf16.mxu0 0
      %3316 = vmatpush2.bf16.msra.mxu0 0
      %3317 = vmatprep.subr.bf16.mxu0 0
      %3318 = vmatpush2.bf16.msra.mxu0 0
      %3319 = vmatprep.subr.bf16.mxu0 0
      %3320 = vmatpush2.bf16.msra.mxu0 0
      %3321 = vmatprep.mubr.bf16.mxu0 0
      %3322 = vmatmul.mubr.bf16.gmra.mxu0 %v3239
      %v3323 = vpop.f32.mrf.mxu0
      %v3324 = vadd.f32 0.0, %v3323
      %v3325 = vpop.f32.mrf.mxu0
      %v3326 = vpop.f32.mrf.mxu0
      %v3327 = vadd.f32 0.0, %v3326
      %v3328 = vpop.f32.mrf.mxu0
      %3329 = vmatprep.mubr.bf16.mxu0 0
      %3330 = vmatmul.mubr.bf16.gmra.mxu0 %v3242
      %v3331 = vpop.f32.mrf.mxu0
      %v3332 = vadd.f32 0.0, %v3331
      %v3333 = vpop.f32.mrf.mxu0
      %v3334 = vpop.f32.mrf.mxu0
      %v3335 = vadd.f32 0.0, %v3334
      %v3336 = vpop.f32.mrf.mxu0
      %3337 = vmatprep.mubr.bf16.mxu0 0
      %3338 = vmatmul.mubr.bf16.gmra.mxu0 %v3245
      %v3339 = vpop.f32.mrf.mxu0
      %v3340 = vadd.f32 0.0, %v3339
      %v3341 = vpop.f32.mrf.mxu0
      %v3342 = vpop.f32.mrf.mxu0
      %v3343 = vadd.f32 0.0, %v3342
      %v3344 = vpop.f32.mrf.mxu0
      %3345 = vmatprep.mubr.bf16.mxu0 0
      %3346 = vmatmul.mubr.bf16.gmra.mxu0 %v3248
      %v3347 = vpop.f32.mrf.mxu0
      %v3348 = vadd.f32 0.0, %v3347
      %v3349 = vpop.f32.mrf.mxu0
      %v3350 = vpop.f32.mrf.mxu0
      %v3351 = vadd.f32 0.0, %v3350
      %v3352 = vpop.f32.mrf.mxu0
      %3353 = vmatprep.mubr.bf16.mxu0 0
      %3354 = vmatmul.mubr.bf16.gmra.mxu0 %v3251
      %v3355 = vpop.f32.mrf.mxu0
      %v3356 = vadd.f32 0.0, %v3355
      %v3357 = vpop.f32.mrf.mxu0
      %v3358 = vpop.f32.mrf.mxu0
      %v3359 = vadd.f32 0.0, %v3358
      %v3360 = vpop.f32.mrf.mxu0
      %3361 = vmatprep.mubr.bf16.mxu0 0
      %3362 = vmatmul.mubr.bf16.gmra.mxu0 %v3254
      %v3363 = vpop.f32.mrf.mxu0
      %v3364 = vadd.f32 0.0, %v3363
      %v3365 = vpop.f32.mrf.mxu0
      %v3366 = vpop.f32.mrf.mxu0
      %v3367 = vadd.f32 0.0, %v3366
      %v3368 = vpop.f32.mrf.mxu0
      %3369 = vmatprep.mubr.bf16.mxu0 0
      %3370 = vmatmul.mubr.bf16.gmra.mxu0 %v3257
      %v3371 = vpop.f32.mrf.mxu0
      %v3372 = vadd.f32 0.0, %v3371
      %v3373 = vpop.f32.mrf.mxu0
      %v3374 = vpop.f32.mrf.mxu0
      %v3375 = vadd.f32 0.0, %v3374
      %v3376 = vpop.f32.mrf.mxu0
      %3377 = vmatprep.mubr.bf16.mxu0 0
      %3378 = vmatmul.mubr.bf16.gmra.mxu0 %v3260
      %v3379 = vpop.f32.mrf.mxu0
      %v3380 = vadd.f32 0.0, %v3379
      %v3381 = vpop.f32.mrf.mxu0
      %v3382 = vpop.f32.mrf.mxu0
      %v3383 = vadd.f32 0.0, %v3382
      %v3384 = vpop.f32.mrf.mxu0
      %3385 = vmatprep.mubr.bf16.mxu0 0
      %3386 = vmatmul.mubr.bf16.gmra.mxu0 %v3263
      %v3387 = vpop.f32.mrf.mxu0
      %v3388 = vadd.f32 0.0, %v3387
      %v3389 = vpop.f32.mrf.mxu0
      %v3390 = vpop.f32.mrf.mxu0
      %v3391 = vadd.f32 0.0, %v3390
      %v3392 = vpop.f32.mrf.mxu0
      %3393 = vmatprep.mubr.bf16.mxu0 0
      %3394 = vmatmul.mubr.bf16.gmra.mxu0 %v3266
      %v3395 = vpop.f32.mrf.mxu0
      %v3396 = vadd.f32 0.0, %v3395
      %v3397 = vpop.f32.mrf.mxu0
      %v3398 = vpop.f32.mrf.mxu0
      %v3399 = vadd.f32 0.0, %v3398
      %v3400 = vpop.f32.mrf.mxu0
      %3401 = vmatprep.mubr.bf16.mxu0 0
      %3402 = vmatmul.mubr.bf16.gmra.mxu0 %v3269
      %v3403 = vpop.f32.mrf.mxu0
      %v3404 = vadd.f32 0.0, %v3403
      %v3405 = vpop.f32.mrf.mxu0
      %v3406 = vpop.f32.mrf.mxu0
      %v3407 = vadd.f32 0.0, %v3406
      %v3408 = vpop.f32.mrf.mxu0
      %3409 = vmatprep.mubr.bf16.mxu0 0
      %3410 = vmatmul.mubr.bf16.gmra.mxu0 %v3272
      %v3411 = vpop.f32.mrf.mxu0
      %v3412 = vadd.f32 0.0, %v3411
      %v3413 = vpop.f32.mrf.mxu0
      %v3414 = vpop.f32.mrf.mxu0
      %v3415 = vadd.f32 0.0, %v3414
      %v3416 = vpop.f32.mrf.mxu0
      %3417 = vmatprep.mubr.bf16.mxu0 0
      %3418 = vmatmul.mubr.bf16.gmra.mxu0 %v3275
      %v3419 = vpop.f32.mrf.mxu0
      %v3420 = vadd.f32 0.0, %v3419
      %v3421 = vpop.f32.mrf.mxu0
      %v3422 = vpop.f32.mrf.mxu0
      %v3423 = vadd.f32 0.0, %v3422
      %v3424 = vpop.f32.mrf.mxu0
      %3425 = vmatprep.mubr.bf16.mxu0 0
      %3426 = vmatmul.mubr.bf16.gmra.mxu0 %v3278
      %v3427 = vpop.f32.mrf.mxu0
      %v3428 = vadd.f32 0.0, %v3427
      %v3429 = vpop.f32.mrf.mxu0
      %v3430 = vpop.f32.mrf.mxu0
      %v3431 = vadd.f32 0.0, %v3430
      %v3432 = vpop.f32.mrf.mxu0
      %3433 = vmatprep.mubr.bf16.mxu0 0
      %3434 = vmatmul.mubr.bf16.gmra.mxu0 %v3281
      %v3435 = vpop.f32.mrf.mxu0
      %v3436 = vadd.f32 0.0, %v3435
      %v3437 = vpop.f32.mrf.mxu0
      %v3438 = vpop.f32.mrf.mxu0
      %v3439 = vadd.f32 0.0, %v3438
      %v3440 = vpop.f32.mrf.mxu0
      %3441 = vmatprep.mubr.bf16.mxu0 0
      %3442 = vmatmul.mubr.bf16.gmra.mxu0 %v3284
      %v3443 = vpop.f32.mrf.mxu0
      %v3444 = vadd.f32 0.0, %v3443
      %v3445 = vpop.f32.mrf.mxu0
      %v3446 = vpop.f32.mrf.mxu0
      %v3447 = vadd.f32 0.0, %v3446
      %v3448 = vpop.f32.mrf.mxu0
      %3449 = vdwg.mxu0
      %v3450 = vadd.f32 %v3002, %v3324
      %v3451 = vadd.f32 %v3003, %v3327
      %v3452 = vadd.f32 %v3004, %v3332
      %v3453 = vadd.f32 %v3005, %v3335
      %v3454 = vadd.f32 %v3006, %v3340
      %v3455 = vadd.f32 %v3007, %v3343
      %v3456 = vadd.f32 %v3008, %v3348
      %v3457 = vadd.f32 %v3009, %v3351
      %v3458 = vadd.f32 %v3010, %v3356
      %v3459 = vadd.f32 %v3011, %v3359
      %v3460 = vadd.f32 %v3012, %v3364
      %v3461 = vadd.f32 %v3013, %v3367
      %v3462 = vadd.f32 %v3014, %v3372
      %v3463 = vadd.f32 %v3015, %v3375
      %v3464 = vadd.f32 %v3016, %v3380
      %v3465 = vadd.f32 %v3017, %v3383
      %v3466 = vadd.f32 %v3018, %v3388
      %v3467 = vadd.f32 %v3019, %v3391
      %v3468 = vadd.f32 %v3020, %v3396
      %v3469 = vadd.f32 %v3021, %v3399
      %v3470 = vadd.f32 %v3022, %v3404
      %v3471 = vadd.f32 %v3023, %v3407
      %v3472 = vadd.f32 %v3024, %v3412
      %v3473 = vadd.f32 %v3025, %v3415
      %v3474 = vadd.f32 %v3026, %v3420
      %v3475 = vadd.f32 %v3027, %v3423
      %v3476 = vadd.f32 %v3028, %v3428
      %v3477 = vadd.f32 %v3029, %v3431
      %v3478 = vadd.f32 %v3030, %v3436
      %v3479 = vadd.f32 %v3031, %v3439
      %v3480 = vadd.f32 %v3032, %v3444
      %v3481 = vadd.f32 %v3033, %v3447
      %s3482 = scalar_lea.vmem %s3, 14
      %v3483 = vld [vmem:[%s3482] sm:$0x3]
      %v3485 = vsel %vm773, %v3483, 0
      %3487 = vmatprep.subr.bf16.mxu0 0
      %3488 = vmatpush1.bf16.msra.mxu0 0
      %3489 = vmatprep.subr.bf16.mxu0 0
      %3490 = vmatpush1.bf16.msra.mxu0 0
      %3491 = vmatprep.subr.bf16.mxu0 0
      %3492 = vmatpush1.bf16.msra.mxu0 0
      %3493 = vmatprep.subr.bf16.mxu0 0
      %3494 = vmatpush1.bf16.msra.mxu0 0
      %3495 = vmatprep.subr.bf16.mxu0 0
      %3496 = vmatpush1.bf16.msra.mxu0 0
      %3497 = vmatprep.subr.bf16.mxu0 0
      %3498 = vmatpush1.bf16.msra.mxu0 0
      %3499 = vmatprep.subr.bf16.mxu0 0
      %3500 = vmatpush1.bf16.msra.mxu0 0
      %3501 = vmatprep.subr.bf16.mxu0 0
      %3502 = vmatpush1.bf16.msra.mxu0 %v3485
      %3503 = vmatprep.subr.bf16.mxu0 0
      %3504 = vmatpush2.bf16.msra.mxu0 0
      %3505 = vmatprep.subr.bf16.mxu0 0
      %3506 = vmatpush2.bf16.msra.mxu0 0
      %3507 = vmatprep.subr.bf16.mxu0 0
      %3508 = vmatpush2.bf16.msra.mxu0 0
      %3509 = vmatprep.subr.bf16.mxu0 0
      %3510 = vmatpush2.bf16.msra.mxu0 0
      %3511 = vmatprep.subr.bf16.mxu0 0
      %3512 = vmatpush2.bf16.msra.mxu0 0
      %3513 = vmatprep.subr.bf16.mxu0 0
      %3514 = vmatpush2.bf16.msra.mxu0 0
      %3515 = vmatprep.subr.bf16.mxu0 0
      %3516 = vmatpush2.bf16.msra.mxu0 0
      %3517 = vmatprep.subr.bf16.mxu0 0
      %3518 = vmatpush2.bf16.msra.mxu0 0
      %3519 = vmatprep.mubr.bf16.mxu0 0
      %3520 = vmatmul.mubr.bf16.gmra.mxu0 %v732
      %v3521 = vpop.f32.mrf.mxu0
      %v3522 = vadd.f32 0.0, %v3521
      %v3523 = vpop.f32.mrf.mxu0
      %v3524 = vpop.f32.mrf.mxu0
      %v3525 = vadd.f32 0.0, %v3524
      %v3526 = vpop.f32.mrf.mxu0
      %3527 = vmatprep.mubr.bf16.mxu0 0
      %3528 = vmatmul.mubr.bf16.gmra.mxu0 %v735
      %v3529 = vpop.f32.mrf.mxu0
      %v3530 = vadd.f32 0.0, %v3529
      %v3531 = vpop.f32.mrf.mxu0
      %v3532 = vpop.f32.mrf.mxu0
      %v3533 = vadd.f32 0.0, %v3532
      %v3534 = vpop.f32.mrf.mxu0
      %3535 = vmatprep.mubr.bf16.mxu0 0
      %3536 = vmatmul.mubr.bf16.gmra.mxu0 %v738
      %v3537 = vpop.f32.mrf.mxu0
      %v3538 = vadd.f32 0.0, %v3537
      %v3539 = vpop.f32.mrf.mxu0
      %v3540 = vpop.f32.mrf.mxu0
      %v3541 = vadd.f32 0.0, %v3540
      %v3542 = vpop.f32.mrf.mxu0
      %3543 = vmatprep.mubr.bf16.mxu0 0
      %3544 = vmatmul.mubr.bf16.gmra.mxu0 %v741
      %v3545 = vpop.f32.mrf.mxu0
      %v3546 = vadd.f32 0.0, %v3545
      %v3547 = vpop.f32.mrf.mxu0
      %v3548 = vpop.f32.mrf.mxu0
      %v3549 = vadd.f32 0.0, %v3548
      %v3550 = vpop.f32.mrf.mxu0
      %3551 = vmatprep.mubr.bf16.mxu0 0
      %3552 = vmatmul.mubr.bf16.gmra.mxu0 %v744
      %v3553 = vpop.f32.mrf.mxu0
      %v3554 = vadd.f32 0.0, %v3553
      %v3555 = vpop.f32.mrf.mxu0
      %v3556 = vpop.f32.mrf.mxu0
      %v3557 = vadd.f32 0.0, %v3556
      %v3558 = vpop.f32.mrf.mxu0
      %3559 = vmatprep.mubr.bf16.mxu0 0
      %3560 = vmatmul.mubr.bf16.gmra.mxu0 %v747
      %v3561 = vpop.f32.mrf.mxu0
      %v3562 = vadd.f32 0.0, %v3561
      %v3563 = vpop.f32.mrf.mxu0
      %v3564 = vpop.f32.mrf.mxu0
      %v3565 = vadd.f32 0.0, %v3564
      %v3566 = vpop.f32.mrf.mxu0
      %3567 = vmatprep.mubr.bf16.mxu0 0
      %3568 = vmatmul.mubr.bf16.gmra.mxu0 %v750
      %v3569 = vpop.f32.mrf.mxu0
      %v3570 = vadd.f32 0.0, %v3569
      %v3571 = vpop.f32.mrf.mxu0
      %v3572 = vpop.f32.mrf.mxu0
      %v3573 = vadd.f32 0.0, %v3572
      %v3574 = vpop.f32.mrf.mxu0
      %3575 = vmatprep.mubr.bf16.mxu0 0
      %3576 = vmatmul.mubr.bf16.gmra.mxu0 %v753
      %v3577 = vpop.f32.mrf.mxu0
      %v3578 = vadd.f32 0.0, %v3577
      %v3579 = vpop.f32.mrf.mxu0
      %v3580 = vpop.f32.mrf.mxu0
      %v3581 = vadd.f32 0.0, %v3580
      %v3582 = vpop.f32.mrf.mxu0
      %3583 = vmatprep.mubr.bf16.mxu0 0
      %3584 = vmatmul.mubr.bf16.gmra.mxu0 %v756
      %v3585 = vpop.f32.mrf.mxu0
      %v3586 = vadd.f32 0.0, %v3585
      %v3587 = vpop.f32.mrf.mxu0
      %v3588 = vpop.f32.mrf.mxu0
      %v3589 = vadd.f32 0.0, %v3588
      %v3590 = vpop.f32.mrf.mxu0
      %3591 = vmatprep.mubr.bf16.mxu0 0
      %3592 = vmatmul.mubr.bf16.gmra.mxu0 %v759
      %v3593 = vpop.f32.mrf.mxu0
      %v3594 = vadd.f32 0.0, %v3593
      %v3595 = vpop.f32.mrf.mxu0
      %v3596 = vpop.f32.mrf.mxu0
      %v3597 = vadd.f32 0.0, %v3596
      %v3598 = vpop.f32.mrf.mxu0
      %3599 = vmatprep.mubr.bf16.mxu0 0
      %3600 = vmatmul.mubr.bf16.gmra.mxu0 %v762
      %v3601 = vpop.f32.mrf.mxu0
      %v3602 = vadd.f32 0.0, %v3601
      %v3603 = vpop.f32.mrf.mxu0
      %v3604 = vpop.f32.mrf.mxu0
      %v3605 = vadd.f32 0.0, %v3604
      %v3606 = vpop.f32.mrf.mxu0
      %3607 = vmatprep.mubr.bf16.mxu0 0
      %3608 = vmatmul.mubr.bf16.gmra.mxu0 %v765
      %v3609 = vpop.f32.mrf.mxu0
      %v3610 = vadd.f32 0.0, %v3609
      %v3611 = vpop.f32.mrf.mxu0
      %v3612 = vpop.f32.mrf.mxu0
      %v3613 = vadd.f32 0.0, %v3612
      %v3614 = vpop.f32.mrf.mxu0
      %3615 = vmatprep.mubr.bf16.mxu0 0
      %3616 = vmatmul.mubr.bf16.gmra.mxu0 %v768
      %v3617 = vpop.f32.mrf.mxu0
      %v3618 = vadd.f32 0.0, %v3617
      %v3619 = vpop.f32.mrf.mxu0
      %v3620 = vpop.f32.mrf.mxu0
      %v3621 = vadd.f32 0.0, %v3620
      %v3622 = vpop.f32.mrf.mxu0
      %3623 = vmatprep.mubr.bf16.mxu0 0
      %3624 = vmatmul.mubr.bf16.gmra.mxu0 %v771
      %v3625 = vpop.f32.mrf.mxu0
      %v3626 = vadd.f32 0.0, %v3625
      %v3627 = vpop.f32.mrf.mxu0
      %v3628 = vpop.f32.mrf.mxu0
      %v3629 = vadd.f32 0.0, %v3628
      %v3630 = vpop.f32.mrf.mxu0
      %3631 = vmatprep.mubr.bf16.mxu0 0
      %3632 = vmatmul.mubr.bf16.gmra.mxu0 %v2408
      %v3633 = vpop.f32.mrf.mxu0
      %v3634 = vadd.f32 0.0, %v3633
      %v3635 = vpop.f32.mrf.mxu0
      %v3636 = vpop.f32.mrf.mxu0
      %v3637 = vadd.f32 0.0, %v3636
      %v3638 = vpop.f32.mrf.mxu0
      %3639 = vmatprep.mubr.bf16.mxu0 0
      %3640 = vmatmul.mubr.bf16.gmra.mxu0 %v726
      %v3641 = vpop.f32.mrf.mxu0
      %v3642 = vadd.f32 0.0, %v3641
      %v3643 = vpop.f32.mrf.mxu0
      %v3644 = vpop.f32.mrf.mxu0
      %v3645 = vadd.f32 0.0, %v3644
      %v3646 = vpop.f32.mrf.mxu0
      %3647 = vdwg.mxu0
      %v3648 = vadd.f32 %v3450, %v3522
      %v3649 = vadd.f32 %v3451, %v3525
      %v3650 = vadd.f32 %v3452, %v3530
      %v3651 = vadd.f32 %v3453, %v3533
      %v3652 = vadd.f32 %v3454, %v3538
      %v3653 = vadd.f32 %v3455, %v3541
      %v3654 = vadd.f32 %v3456, %v3546
      %v3655 = vadd.f32 %v3457, %v3549
      %v3656 = vadd.f32 %v3458, %v3554
      %v3657 = vadd.f32 %v3459, %v3557
      %v3658 = vadd.f32 %v3460, %v3562
      %v3659 = vadd.f32 %v3461, %v3565
      %v3660 = vadd.f32 %v3462, %v3570
      %v3661 = vadd.f32 %v3463, %v3573
      %v3662 = vadd.f32 %v3464, %v3578
      %v3663 = vadd.f32 %v3465, %v3581
      %v3664 = vadd.f32 %v3466, %v3586
      %v3665 = vadd.f32 %v3467, %v3589
      %v3666 = vadd.f32 %v3468, %v3594
      %v3667 = vadd.f32 %v3469, %v3597
      %v3668 = vadd.f32 %v3470, %v3602
      %v3669 = vadd.f32 %v3471, %v3605
      %v3670 = vadd.f32 %v3472, %v3610
      %v3671 = vadd.f32 %v3473, %v3613
      %v3672 = vadd.f32 %v3474, %v3618
      %v3673 = vadd.f32 %v3475, %v3621
      %v3674 = vadd.f32 %v3476, %v3626
      %v3675 = vadd.f32 %v3477, %v3629
      %v3676 = vadd.f32 %v3478, %v3634
      %v3677 = vadd.f32 %v3479, %v3637
      %v3678 = vadd.f32 %v3480, %v3642
      %v3679 = vadd.f32 %v3481, %v3645
      %v3680 = vmul.f32 %v336, %v1432
      %v3681 = vmul.f32 %v337, %v1434
      %v3682 = vmul.f32 %v338, %v1436
      %v3683 = vmul.f32 %v339, %v1438
      %v3684 = vmul.f32 %v340, %v1440
      %v3685 = vmul.f32 %v341, %v1442
      %v3686 = vmul.f32 %v342, %v1444
      %v3687 = vmul.f32 %v343, %v1446
      %v3688 = vmul.f32 %v344, %v1448
      %v3689 = vmul.f32 %v345, %v1450
      %v3690 = vmul.f32 %v346, %v1452
      %v3691 = vmul.f32 %v347, %v1454
      %v3692 = vmul.f32 %v348, %v1456
      %v3693 = vmul.f32 %v349, %v1458
      %v3694 = vmul.f32 %v350, %v1460
      %v3695 = vmul.f32 %v351, %v1462
      %v3696 = vmul.f32 %v352, %v1464
      %v3697 = vmul.f32 %v353, %v1466
      %v3698 = vmul.f32 %v354, %v1468
      %v3699 = vmul.f32 %v355, %v1470
      %v3700 = vmul.f32 %v356, %v1472
      %v3701 = vmul.f32 %v357, %v1474
      %v3702 = vmul.f32 %v358, %v1476
      %v3703 = vmul.f32 %v359, %v1478
      %v3704 = vmul.f32 %v360, %v1480
      %v3705 = vmul.f32 %v361, %v1482
      %v3706 = vmul.f32 %v362, %v1484
      %v3707 = vmul.f32 %v363, %v1486
      %v3708 = vmul.f32 %v364, %v1488
      %v3709 = vmul.f32 %v365, %v1490
      %v3710 = vmul.f32 %v1492, 0.0
      %v3711 = vmul.f32 %v1494, 0.0
      %s3712 = scalar_lea.vmem %s3, 16
      %v3713 = vld [vmem:[%s3712] sm:$0x3]
      %v3714 = vpack.c.bf16 %v3681, %v3680
      %v3715 = vpack.c.bf16 %v3683, %v3682
      %v3716 = vpack.c.bf16 %v3685, %v3684
      %v3717 = vpack.c.bf16 %v3687, %v3686
      %v3718 = vpack.c.bf16 %v3689, %v3688
      %v3719 = vpack.c.bf16 %v3691, %v3690
      %v3720 = vpack.c.bf16 %v3693, %v3692
      %v3721 = vpack.c.bf16 %v3695, %v3694
      %v3722 = vpack.c.bf16 %v3697, %v3696
      %v3723 = vpack.c.bf16 %v3699, %v3698
      %v3724 = vpack.c.bf16 %v3701, %v3700
      %v3725 = vpack.c.bf16 %v3703, %v3702
      %v3726 = vpack.c.bf16 %v3705, %v3704
      %v3727 = vpack.c.bf16 %v3707, %v3706
      %v3728 = vpack.c.bf16 %v3709, %v3708
      %v3729 = vpack.c.bf16 %v3711, %v3710
      %v3731 = vshrl.u32 %v3714, 16
      %v3733 = vshll.u32 %v3714, 16
      %v3735 = vrot.slane %v3733, 1
      %v3736 = vor.u32 %v3731, %v3735
      %v3738 = vshll.u32 %v3715, 16
      %v3740 = vrot.slane %v3738, 1
      %v3741 = vsel %vm1580, %v3736, %v3740
      %v3742 = vshrl.u32 %v3715, 16
      %v3744 = vor.u32 %v3742, %v3740
      %v3746 = vshll.u32 %v3716, 16
      %v3748 = vrot.slane %v3746, 1
      %v3749 = vsel %vm1580, %v3744, %v3748
      %v3750 = vshrl.u32 %v3716, 16
      %v3752 = vor.u32 %v3750, %v3748
      %v3754 = vshll.u32 %v3717, 16
      %v3756 = vrot.slane %v3754, 1
      %v3757 = vsel %vm1580, %v3752, %v3756
      %v3758 = vshrl.u32 %v3717, 16
      %v3760 = vor.u32 %v3758, %v3756
      %v3762 = vshll.u32 %v3718, 16
      %v3764 = vrot.slane %v3762, 1
      %v3765 = vsel %vm1580, %v3760, %v3764
      %v3766 = vshrl.u32 %v3718, 16
      %v3768 = vor.u32 %v3766, %v3764
      %v3770 = vshll.u32 %v3719, 16
      %v3772 = vrot.slane %v3770, 1
      %v3773 = vsel %vm1580, %v3768, %v3772
      %v3774 = vshrl.u32 %v3719, 16
      %v3776 = vor.u32 %v3774, %v3772
      %v3778 = vshll.u32 %v3720, 16
      %v3780 = vrot.slane %v3778, 1
      %v3781 = vsel %vm1580, %v3776, %v3780
      %v3782 = vshrl.u32 %v3720, 16
      %v3784 = vor.u32 %v3782, %v3780
      %v3786 = vshll.u32 %v3721, 16
      %v3788 = vrot.slane %v3786, 1
      %v3789 = vsel %vm1580, %v3784, %v3788
      %v3790 = vshrl.u32 %v3721, 16
      %v3792 = vor.u32 %v3790, %v3788
      %v3794 = vshll.u32 %v3722, 16
      %v3796 = vrot.slane %v3794, 1
      %v3797 = vsel %vm1580, %v3792, %v3796
      %v3798 = vshrl.u32 %v3722, 16
      %v3800 = vor.u32 %v3798, %v3796
      %v3802 = vshll.u32 %v3723, 16
      %v3804 = vrot.slane %v3802, 1
      %v3805 = vsel %vm1580, %v3800, %v3804
      %v3806 = vshrl.u32 %v3723, 16
      %v3808 = vor.u32 %v3806, %v3804
      %v3810 = vshll.u32 %v3724, 16
      %v3812 = vrot.slane %v3810, 1
      %v3813 = vsel %vm1580, %v3808, %v3812
      %v3814 = vshrl.u32 %v3724, 16
      %v3816 = vor.u32 %v3814, %v3812
      %v3818 = vshll.u32 %v3725, 16
      %v3820 = vrot.slane %v3818, 1
      %v3821 = vsel %vm1580, %v3816, %v3820
      %v3822 = vshrl.u32 %v3725, 16
      %v3824 = vor.u32 %v3822, %v3820
      %v3826 = vshll.u32 %v3726, 16
      %v3828 = vrot.slane %v3826, 1
      %v3829 = vsel %vm1580, %v3824, %v3828
      %v3830 = vshrl.u32 %v3726, 16
      %v3832 = vor.u32 %v3830, %v3828
      %v3834 = vshll.u32 %v3727, 16
      %v3836 = vrot.slane %v3834, 1
      %v3837 = vsel %vm1580, %v3832, %v3836
      %v3838 = vshrl.u32 %v3727, 16
      %v3840 = vor.u32 %v3838, %v3836
      %v3842 = vshll.u32 %v3728, 16
      %v3844 = vrot.slane %v3842, 1
      %v3845 = vsel %vm1580, %v3840, %v3844
      %v3846 = vshrl.u32 %v3728, 16
      %v3848 = vor.u32 %v3846, %v3844
      %v3850 = vshll.u32 %v3729, 16
      %v3852 = vrot.slane %v3850, 1
      %v3853 = vsel %vm1580, %v3848, %v3852
      %v3854 = vshrl.u32 %v3729, 16
      %v3856 = vor.u32 %v3854, %v3852
      %v3857 = vsel %vm1580, %v3856, %v2788
      %v3859 = vsel %vm724, %v3741, 0
      %v3862 = vsel %vm724, %v3749, 0
      %v3865 = vsel %vm724, %v3757, 0
      %v3868 = vsel %vm724, %v3765, 0
      %v3871 = vsel %vm724, %v3773, 0
      %v3874 = vsel %vm724, %v3781, 0
      %v3877 = vsel %vm724, %v3789, 0
      %v3880 = vsel %vm724, %v3797, 0
      %v3883 = vsel %vm724, %v3805, 0
      %v3886 = vsel %vm724, %v3813, 0
      %v3889 = vsel %vm724, %v3821, 0
      %v3892 = vsel %vm724, %v3829, 0
      %v3895 = vsel %vm724, %v3837, 0
      %v3898 = vsel %vm724, %v3845, 0
      %v3901 = vsel %vm724, %v3853, 0
      %v3904 = vsel %vm724, %v3857, 0
      %v3907 = vsel %vm773, %v3713, 0
      %3909 = vmatprep.subr.bf16.mxu0 0
      %3910 = vmatpush1.bf16.msra.mxu0 0
      %3911 = vmatprep.subr.bf16.mxu0 0
      %3912 = vmatpush1.bf16.msra.mxu0 0
      %3913 = vmatprep.subr.bf16.mxu0 0
      %3914 = vmatpush1.bf16.msra.mxu0 0
      %3915 = vmatprep.subr.bf16.mxu0 0
      %3916 = vmatpush1.bf16.msra.mxu0 0
      %3917 = vmatprep.subr.bf16.mxu0 0
      %3918 = vmatpush1.bf16.msra.mxu0 0
      %3919 = vmatprep.subr.bf16.mxu0 0
      %3920 = vmatpush1.bf16.msra.mxu0 0
      %3921 = vmatprep.subr.bf16.mxu0 0
      %3922 = vmatpush1.bf16.msra.mxu0 0
      %3923 = vmatprep.subr.bf16.mxu0 0
      %3924 = vmatpush1.bf16.msra.mxu0 %v3907
      %3925 = vmatprep.subr.bf16.mxu0 0
      %3926 = vmatpush2.bf16.msra.mxu0 0
      %3927 = vmatprep.subr.bf16.mxu0 0
      %3928 = vmatpush2.bf16.msra.mxu0 0
      %3929 = vmatprep.subr.bf16.mxu0 0
      %3930 = vmatpush2.bf16.msra.mxu0 0
      %3931 = vmatprep.subr.bf16.mxu0 0
      %3932 = vmatpush2.bf16.msra.mxu0 0
      %3933 = vmatprep.subr.bf16.mxu0 0
      %3934 = vmatpush2.bf16.msra.mxu0 0
      %3935 = vmatprep.subr.bf16.mxu0 0
      %3936 = vmatpush2.bf16.msra.mxu0 0
      %3937 = vmatprep.subr.bf16.mxu0 0
      %3938 = vmatpush2.bf16.msra.mxu0 0
      %3939 = vmatprep.subr.bf16.mxu0 0
      %3940 = vmatpush2.bf16.msra.mxu0 0
      %3941 = vmatprep.mubr.bf16.mxu0 0
      %3942 = vmatmul.mubr.bf16.gmra.mxu0 %v3859
      %v3943 = vpop.f32.mrf.mxu0
      %v3944 = vadd.f32 0.0, %v3943
      %v3945 = vpop.f32.mrf.mxu0
      %v3946 = vpop.f32.mrf.mxu0
      %v3947 = vadd.f32 0.0, %v3946
      %v3948 = vpop.f32.mrf.mxu0
      %3949 = vmatprep.mubr.bf16.mxu0 0
      %3950 = vmatmul.mubr.bf16.gmra.mxu0 %v3862
      %v3951 = vpop.f32.mrf.mxu0
      %v3952 = vadd.f32 0.0, %v3951
      %v3953 = vpop.f32.mrf.mxu0
      %v3954 = vpop.f32.mrf.mxu0
      %v3955 = vadd.f32 0.0, %v3954
      %v3956 = vpop.f32.mrf.mxu0
      %3957 = vmatprep.mubr.bf16.mxu0 0
      %3958 = vmatmul.mubr.bf16.gmra.mxu0 %v3865
      %v3959 = vpop.f32.mrf.mxu0
      %v3960 = vadd.f32 0.0, %v3959
      %v3961 = vpop.f32.mrf.mxu0
      %v3962 = vpop.f32.mrf.mxu0
      %v3963 = vadd.f32 0.0, %v3962
      %v3964 = vpop.f32.mrf.mxu0
      %3965 = vmatprep.mubr.bf16.mxu0 0
      %3966 = vmatmul.mubr.bf16.gmra.mxu0 %v3868
      %v3967 = vpop.f32.mrf.mxu0
      %v3968 = vadd.f32 0.0, %v3967
      %v3969 = vpop.f32.mrf.mxu0
      %v3970 = vpop.f32.mrf.mxu0
      %v3971 = vadd.f32 0.0, %v3970
      %v3972 = vpop.f32.mrf.mxu0
      %3973 = vmatprep.mubr.bf16.mxu0 0
      %3974 = vmatmul.mubr.bf16.gmra.mxu0 %v3871
      %v3975 = vpop.f32.mrf.mxu0
      %v3976 = vadd.f32 0.0, %v3975
      %v3977 = vpop.f32.mrf.mxu0
      %v3978 = vpop.f32.mrf.mxu0
      %v3979 = vadd.f32 0.0, %v3978
      %v3980 = vpop.f32.mrf.mxu0
      %3981 = vmatprep.mubr.bf16.mxu0 0
      %3982 = vmatmul.mubr.bf16.gmra.mxu0 %v3874
      %v3983 = vpop.f32.mrf.mxu0
      %v3984 = vadd.f32 0.0, %v3983
      %v3985 = vpop.f32.mrf.mxu0
      %v3986 = vpop.f32.mrf.mxu0
      %v3987 = vadd.f32 0.0, %v3986
      %v3988 = vpop.f32.mrf.mxu0
      %3989 = vmatprep.mubr.bf16.mxu0 0
      %3990 = vmatmul.mubr.bf16.gmra.mxu0 %v3877
      %v3991 = vpop.f32.mrf.mxu0
      %v3992 = vadd.f32 0.0, %v3991
      %v3993 = vpop.f32.mrf.mxu0
      %v3994 = vpop.f32.mrf.mxu0
      %v3995 = vadd.f32 0.0, %v3994
      %v3996 = vpop.f32.mrf.mxu0
      %3997 = vmatprep.mubr.bf16.mxu0 0
      %3998 = vmatmul.mubr.bf16.gmra.mxu0 %v3880
      %v3999 = vpop.f32.mrf.mxu0
      %v4000 = vadd.f32 0.0, %v3999
      %v4001 = vpop.f32.mrf.mxu0
      %v4002 = vpop.f32.mrf.mxu0
      %v4003 = vadd.f32 0.0, %v4002
      %v4004 = vpop.f32.mrf.mxu0
      %4005 = vmatprep.mubr.bf16.mxu0 0
      %4006 = vmatmul.mubr.bf16.gmra.mxu0 %v3883
      %v4007 = vpop.f32.mrf.mxu0
      %v4008 = vadd.f32 0.0, %v4007
      %v4009 = vpop.f32.mrf.mxu0
      %v4010 = vpop.f32.mrf.mxu0
      %v4011 = vadd.f32 0.0, %v4010
      %v4012 = vpop.f32.mrf.mxu0
      %4013 = vmatprep.mubr.bf16.mxu0 0
      %4014 = vmatmul.mubr.bf16.gmra.mxu0 %v3886
      %v4015 = vpop.f32.mrf.mxu0
      %v4016 = vadd.f32 0.0, %v4015
      %v4017 = vpop.f32.mrf.mxu0
      %v4018 = vpop.f32.mrf.mxu0
      %v4019 = vadd.f32 0.0, %v4018
      %v4020 = vpop.f32.mrf.mxu0
      %4021 = vmatprep.mubr.bf16.mxu0 0
      %4022 = vmatmul.mubr.bf16.gmra.mxu0 %v3889
      %v4023 = vpop.f32.mrf.mxu0
      %v4024 = vadd.f32 0.0, %v4023
      %v4025 = vpop.f32.mrf.mxu0
      %v4026 = vpop.f32.mrf.mxu0
      %v4027 = vadd.f32 0.0, %v4026
      %v4028 = vpop.f32.mrf.mxu0
      %4029 = vmatprep.mubr.bf16.mxu0 0
      %4030 = vmatmul.mubr.bf16.gmra.mxu0 %v3892
      %v4031 = vpop.f32.mrf.mxu0
      %v4032 = vadd.f32 0.0, %v4031
      %v4033 = vpop.f32.mrf.mxu0
      %v4034 = vpop.f32.mrf.mxu0
      %v4035 = vadd.f32 0.0, %v4034
      %v4036 = vpop.f32.mrf.mxu0
      %4037 = vmatprep.mubr.bf16.mxu0 0
      %4038 = vmatmul.mubr.bf16.gmra.mxu0 %v3895
      %v4039 = vpop.f32.mrf.mxu0
      %v4040 = vadd.f32 0.0, %v4039
      %v4041 = vpop.f32.mrf.mxu0
      %v4042 = vpop.f32.mrf.mxu0
      %v4043 = vadd.f32 0.0, %v4042
      %v4044 = vpop.f32.mrf.mxu0
      %4045 = vmatprep.mubr.bf16.mxu0 0
      %4046 = vmatmul.mubr.bf16.gmra.mxu0 %v3898
      %v4047 = vpop.f32.mrf.mxu0
      %v4048 = vadd.f32 0.0, %v4047
      %v4049 = vpop.f32.mrf.mxu0
      %v4050 = vpop.f32.mrf.mxu0
      %v4051 = vadd.f32 0.0, %v4050
      %v4052 = vpop.f32.mrf.mxu0
      %4053 = vmatprep.mubr.bf16.mxu0 0
      %4054 = vmatmul.mubr.bf16.gmra.mxu0 %v3901
      %v4055 = vpop.f32.mrf.mxu0
      %v4056 = vadd.f32 0.0, %v4055
      %v4057 = vpop.f32.mrf.mxu0
      %v4058 = vpop.f32.mrf.mxu0
      %v4059 = vadd.f32 0.0, %v4058
      %v4060 = vpop.f32.mrf.mxu0
      %4061 = vmatprep.mubr.bf16.mxu0 0
      %4062 = vmatmul.mubr.bf16.gmra.mxu0 %v3904
      %v4063 = vpop.f32.mrf.mxu0
      %v4064 = vadd.f32 0.0, %v4063
      %v4065 = vpop.f32.mrf.mxu0
      %v4066 = vpop.f32.mrf.mxu0
      %v4067 = vadd.f32 0.0, %v4066
      %v4068 = vpop.f32.mrf.mxu0
      %4069 = vdwg.mxu0
      %v4070 = vadd.f32 %v3648, %v3944
      %v4071 = vadd.f32 %v3649, %v3947
      %v4072 = vadd.f32 %v3650, %v3952
      %v4073 = vadd.f32 %v3651, %v3955
      %v4074 = vadd.f32 %v3652, %v3960
      %v4075 = vadd.f32 %v3653, %v3963
      %v4076 = vadd.f32 %v3654, %v3968
      %v4077 = vadd.f32 %v3655, %v3971
      %v4078 = vadd.f32 %v3656, %v3976
      %v4079 = vadd.f32 %v3657, %v3979
      %v4080 = vadd.f32 %v3658, %v3984
      %v4081 = vadd.f32 %v3659, %v3987
      %v4082 = vadd.f32 %v3660, %v3992
      %v4083 = vadd.f32 %v3661, %v3995
      %v4084 = vadd.f32 %v3662, %v4000
      %v4085 = vadd.f32 %v3663, %v4003
      %v4086 = vadd.f32 %v3664, %v4008
      %v4087 = vadd.f32 %v3665, %v4011
      %v4088 = vadd.f32 %v3666, %v4016
      %v4089 = vadd.f32 %v3667, %v4019
      %v4090 = vadd.f32 %v3668, %v4024
      %v4091 = vadd.f32 %v3669, %v4027
      %v4092 = vadd.f32 %v3670, %v4032
      %v4093 = vadd.f32 %v3671, %v4035
      %v4094 = vadd.f32 %v3672, %v4040
      %v4095 = vadd.f32 %v3673, %v4043
      %v4096 = vadd.f32 %v3674, %v4048
      %v4097 = vadd.f32 %v3675, %v4051
      %v4098 = vadd.f32 %v3676, %v4056
      %v4099 = vadd.f32 %v3677, %v4059
      %v4100 = vadd.f32 %v3678, %v4064
      %v4101 = vadd.f32 %v3679, %v4067
      %v4102 = vld [vmem:[%s4] sm:$0x1]
      %v4104 = vlaneseq
      %v4105 = vshrl.u32 %v4104, 7
      %v4106 = vsub.s32 0, %v4105
      %v4107 = vrot.slane %v4102, %v4106
      %v4109 = vmul.f32 %v4070, %v4107
      %v4110 = vmul.f32 %v4071, %v4107
      %v4111 = vmul.f32 %v4072, %v4107
      %v4112 = vmul.f32 %v4073, %v4107
      %v4113 = vmul.f32 %v4074, %v4107
      %v4114 = vmul.f32 %v4075, %v4107
      %v4115 = vmul.f32 %v4076, %v4107
      %v4116 = vmul.f32 %v4077, %v4107
      %v4117 = vmul.f32 %v4078, %v4107
      %v4118 = vmul.f32 %v4079, %v4107
      %v4119 = vmul.f32 %v4080, %v4107
      %v4120 = vmul.f32 %v4081, %v4107
      %v4121 = vmul.f32 %v4082, %v4107
      %v4122 = vmul.f32 %v4083, %v4107
      %v4123 = vmul.f32 %v4084, %v4107
      %v4124 = vmul.f32 %v4085, %v4107
      %v4125 = vmul.f32 %v4086, %v4107
      %v4126 = vmul.f32 %v4087, %v4107
      %v4127 = vmul.f32 %v4088, %v4107
      %v4128 = vmul.f32 %v4089, %v4107
      %v4129 = vmul.f32 %v4090, %v4107
      %v4130 = vmul.f32 %v4091, %v4107
      %v4131 = vmul.f32 %v4092, %v4107
      %v4132 = vmul.f32 %v4093, %v4107
      %v4133 = vmul.f32 %v4094, %v4107
      %v4134 = vmul.f32 %v4095, %v4107
      %v4135 = vmul.f32 %v4096, %v4107
      %v4136 = vmul.f32 %v4097, %v4107
      %v4137 = vmul.f32 %v4098, %v4107
      %v4138 = vmul.f32 %v4099, %v4107
      %v4139 = vmul.f32 %v4100, %v4107
      %v4140 = vmul.f32 %v4101, %v4107
      %v4141 = vld [vmem:[%s5] sm:$0x1]
      %v4143 = vlaneseq
      %v4144 = vshrl.u32 %v4143, 7
      %v4145 = vsub.s32 0, %v4144
      %v4146 = vrot.slane %v4141, %v4145
      %v4148 = vadd.f32 %v4109, %v4146
      %v4149 = vadd.f32 %v4110, %v4146
      %v4150 = vadd.f32 %v4111, %v4146
      %v4151 = vadd.f32 %v4112, %v4146
      %v4152 = vadd.f32 %v4113, %v4146
      %v4153 = vadd.f32 %v4114, %v4146
      %v4154 = vadd.f32 %v4115, %v4146
      %v4155 = vadd.f32 %v4116, %v4146
      %v4156 = vadd.f32 %v4117, %v4146
      %v4157 = vadd.f32 %v4118, %v4146
      %v4158 = vadd.f32 %v4119, %v4146
      %v4159 = vadd.f32 %v4120, %v4146
      %v4160 = vadd.f32 %v4121, %v4146
      %v4161 = vadd.f32 %v4122, %v4146
      %v4162 = vadd.f32 %v4123, %v4146
      %v4163 = vadd.f32 %v4124, %v4146
      %v4164 = vadd.f32 %v4125, %v4146
      %v4165 = vadd.f32 %v4126, %v4146
      %v4166 = vadd.f32 %v4127, %v4146
      %v4167 = vadd.f32 %v4128, %v4146
      %v4168 = vadd.f32 %v4129, %v4146
      %v4169 = vadd.f32 %v4130, %v4146
      %v4170 = vadd.f32 %v4131, %v4146
      %v4171 = vadd.f32 %v4132, %v4146
      %v4172 = vadd.f32 %v4133, %v4146
      %v4173 = vadd.f32 %v4134, %v4146
      %v4174 = vadd.f32 %v4135, %v4146
      %v4175 = vadd.f32 %v4136, %v4146
      %v4176 = vadd.f32 %v4137, %v4146
      %v4177 = vadd.f32 %v4138, %v4146
      %v4178 = vadd.f32 %v4139, %v4146
      %v4179 = vadd.f32 %v4140, %v4146
      %v4180 = vmax.f32 %v4148, 0.0
      %v4181 = vmax.f32 %v4149, 0.0
      %v4182 = vmax.f32 %v4150, 0.0
      %v4183 = vmax.f32 %v4151, 0.0
      %v4184 = vmax.f32 %v4152, 0.0
      %v4185 = vmax.f32 %v4153, 0.0
      %v4186 = vmax.f32 %v4154, 0.0
      %v4187 = vmax.f32 %v4155, 0.0
      %v4188 = vmax.f32 %v4156, 0.0
      %v4189 = vmax.f32 %v4157, 0.0
      %v4190 = vmax.f32 %v4158, 0.0
      %v4191 = vmax.f32 %v4159, 0.0
      %v4192 = vmax.f32 %v4160, 0.0
      %v4193 = vmax.f32 %v4161, 0.0
      %v4194 = vmax.f32 %v4162, 0.0
      %v4195 = vmax.f32 %v4163, 0.0
      %v4196 = vmax.f32 %v4164, 0.0
      %v4197 = vmax.f32 %v4165, 0.0
      %v4198 = vmax.f32 %v4166, 0.0
      %v4199 = vmax.f32 %v4167, 0.0
      %v4200 = vmax.f32 %v4168, 0.0
      %v4201 = vmax.f32 %v4169, 0.0
      %v4202 = vmax.f32 %v4170, 0.0
      %v4203 = vmax.f32 %v4171, 0.0
      %v4204 = vmax.f32 %v4172, 0.0
      %v4205 = vmax.f32 %v4173, 0.0
      %v4206 = vmax.f32 %v4174, 0.0
      %v4207 = vmax.f32 %v4175, 0.0
      %v4208 = vmax.f32 %v4176, 0.0
      %v4209 = vmax.f32 %v4177, 0.0
      %v4210 = vmax.f32 %v4178, 0.0
      %v4211 = vmax.f32 %v4179, 0.0
      %v4212 = vmul.f32 %v4180, %v565
      %v4213 = vmul.f32 %v4181, %v567
      %v4214 = vmul.f32 %v4182, %v569
      %v4215 = vmul.f32 %v4183, %v571
      %v4216 = vmul.f32 %v4184, %v573
      %v4217 = vmul.f32 %v4185, %v575
      %v4218 = vmul.f32 %v4186, %v577
      %v4219 = vmul.f32 %v4187, %v579
      %v4220 = vmul.f32 %v4188, %v581
      %v4221 = vmul.f32 %v4189, %v583
      %v4222 = vmul.f32 %v4190, %v585
      %v4223 = vmul.f32 %v4191, %v587
      %v4224 = vmul.f32 %v4192, %v589
      %v4225 = vmul.f32 %v4193, %v591
      %v4226 = vmul.f32 %v4194, %v593
      %v4227 = vmul.f32 %v4195, %v595
      %v4228 = vmul.f32 %v4196, %v597
      %v4229 = vmul.f32 %v4197, %v599
      %v4230 = vmul.f32 %v4198, %v601
      %v4231 = vmul.f32 %v4199, %v603
      %v4232 = vmul.f32 %v4200, %v605
      %v4233 = vmul.f32 %v4201, %v607
      %v4234 = vmul.f32 %v4202, %v609
      %v4235 = vmul.f32 %v4203, %v611
      %v4236 = vmul.f32 %v4204, %v613
      %v4237 = vmul.f32 %v4205, %v615
      %v4238 = vmul.f32 %v4206, %v617
      %v4239 = vmul.f32 %v4207, %v619
      %v4240 = vmul.f32 %v4208, %v621
      %v4241 = vmul.f32 %v4209, %v620
      %v4242 = vld [vmem:[%s6] sm:$0x3]
      %v4243 = vpack.c.bf16 %v4212, %v657
      %v4244 = vpack.c.bf16 %v4214, %v4213
      %v4245 = vpack.c.bf16 %v4216, %v4215
      %v4246 = vpack.c.bf16 %v4218, %v4217
      %v4247 = vpack.c.bf16 %v4220, %v4219
      %v4248 = vpack.c.bf16 %v4222, %v4221
      %v4249 = vpack.c.bf16 %v4224, %v4223
      %v4250 = vpack.c.bf16 %v4226, %v4225
      %v4251 = vpack.c.bf16 %v4228, %v4227
      %v4252 = vpack.c.bf16 %v4230, %v4229
      %v4253 = vpack.c.bf16 %v4232, %v4231
      %v4254 = vpack.c.bf16 %v4234, %v4233
      %v4255 = vpack.c.bf16 %v4236, %v4235
      %v4256 = vpack.c.bf16 %v4238, %v4237
      %v4257 = vpack.c.bf16 %v4240, %v4239
      %v4258 = vpack.c.bf16 %v4241, %v4241
      %s4259 = scalar_lea.vmem %s6, 2
      %v4260 = vld [vmem:[%s4259] sm:$0x3]
      %v4261 = vpack.c.bf16 %v4181, %v4180
      %v4262 = vpack.c.bf16 %v4183, %v4182
      %v4263 = vpack.c.bf16 %v4185, %v4184
      %v4264 = vpack.c.bf16 %v4187, %v4186
      %v4265 = vpack.c.bf16 %v4189, %v4188
      %v4266 = vpack.c.bf16 %v4191, %v4190
      %v4267 = vpack.c.bf16 %v4193, %v4192
      %v4268 = vpack.c.bf16 %v4195, %v4194
      %v4269 = vpack.c.bf16 %v4197, %v4196
      %v4270 = vpack.c.bf16 %v4199, %v4198
      %v4271 = vpack.c.bf16 %v4201, %v4200
      %v4272 = vpack.c.bf16 %v4203, %v4202
      %v4273 = vpack.c.bf16 %v4205, %v4204
      %v4274 = vpack.c.bf16 %v4207, %v4206
      %v4275 = vpack.c.bf16 %v4209, %v4208
      %v4277 = vsel %vm724, %v4261, 0
      %v4280 = vsel %vm724, %v4262, 0
      %v4283 = vsel %vm724, %v4263, 0
      %v4286 = vsel %vm724, %v4264, 0
      %v4289 = vsel %vm724, %v4265, 0
      %v4292 = vsel %vm724, %v4266, 0
      %v4295 = vsel %vm724, %v4267, 0
      %v4298 = vsel %vm724, %v4268, 0
      %v4301 = vsel %vm724, %v4269, 0
      %v4304 = vsel %vm724, %v4270, 0
      %v4307 = vsel %vm724, %v4271, 0
      %v4310 = vsel %vm724, %v4272, 0
      %v4313 = vsel %vm724, %v4273, 0
      %v4316 = vsel %vm724, %v4274, 0
      %v4319 = vsel %vm724, %v4275, 0
      %v4322 = vsel %vm773, %v4260, 0
      %4324 = vmatprep.subr.bf16.mxu0 0
      %4325 = vmatpush1.bf16.msra.mxu0 0
      %4326 = vmatprep.subr.bf16.mxu0 0
      %4327 = vmatpush1.bf16.msra.mxu0 0
      %4328 = vmatprep.subr.bf16.mxu0 0
      %4329 = vmatpush1.bf16.msra.mxu0 0
      %4330 = vmatprep.subr.bf16.mxu0 0
      %4331 = vmatpush1.bf16.msra.mxu0 0
      %4332 = vmatprep.subr.bf16.mxu0 0
      %4333 = vmatpush1.bf16.msra.mxu0 0
      %4334 = vmatprep.subr.bf16.mxu0 0
      %4335 = vmatpush1.bf16.msra.mxu0 0
      %4336 = vmatprep.subr.bf16.mxu0 0
      %4337 = vmatpush1.bf16.msra.mxu0 0
      %4338 = vmatprep.subr.bf16.mxu0 0
      %4339 = vmatpush1.bf16.msra.mxu0 %v4322
      %4340 = vmatprep.subr.bf16.mxu0 0
      %4341 = vmatpush2.bf16.msra.mxu0 0
      %4342 = vmatprep.subr.bf16.mxu0 0
      %4343 = vmatpush2.bf16.msra.mxu0 0
      %4344 = vmatprep.subr.bf16.mxu0 0
      %4345 = vmatpush2.bf16.msra.mxu0 0
      %4346 = vmatprep.subr.bf16.mxu0 0
      %4347 = vmatpush2.bf16.msra.mxu0 0
      %4348 = vmatprep.subr.bf16.mxu0 0
      %4349 = vmatpush2.bf16.msra.mxu0 0
      %4350 = vmatprep.subr.bf16.mxu0 0
      %4351 = vmatpush2.bf16.msra.mxu0 0
      %4352 = vmatprep.subr.bf16.mxu0 0
      %4353 = vmatpush2.bf16.msra.mxu0 0
      %4354 = vmatprep.subr.bf16.mxu0 0
      %4355 = vmatpush2.bf16.msra.mxu0 0
      %4356 = vmatprep.mubr.bf16.mxu0 0
      %4357 = vmatmul.mubr.bf16.gmra.mxu0 %v726
      %v4358 = vpop.f32.mrf.mxu0
      %v4359 = vadd.f32 0.0, %v4358
      %v4360 = vpop.f32.mrf.mxu0
      %v4361 = vpop.f32.mrf.mxu0
      %v4362 = vadd.f32 0.0, %v4361
      %v4363 = vpop.f32.mrf.mxu0
      %4364 = vmatprep.mubr.bf16.mxu0 0
      %4365 = vmatmul.mubr.bf16.gmra.mxu0 %v4277
      %v4366 = vpop.f32.mrf.mxu0
      %v4367 = vadd.f32 0.0, %v4366
      %v4368 = vpop.f32.mrf.mxu0
      %v4369 = vpop.f32.mrf.mxu0
      %v4370 = vadd.f32 0.0, %v4369
      %v4371 = vpop.f32.mrf.mxu0
      %4372 = vmatprep.mubr.bf16.mxu0 0
      %4373 = vmatmul.mubr.bf16.gmra.mxu0 %v4280
      %v4374 = vpop.f32.mrf.mxu0
      %v4375 = vadd.f32 0.0, %v4374
      %v4376 = vpop.f32.mrf.mxu0
      %v4377 = vpop.f32.mrf.mxu0
      %v4378 = vadd.f32 0.0, %v4377
      %v4379 = vpop.f32.mrf.mxu0
      %4380 = vmatprep.mubr.bf16.mxu0 0
      %4381 = vmatmul.mubr.bf16.gmra.mxu0 %v4283
      %v4382 = vpop.f32.mrf.mxu0
      %v4383 = vadd.f32 0.0, %v4382
      %v4384 = vpop.f32.mrf.mxu0
      %v4385 = vpop.f32.mrf.mxu0
      %v4386 = vadd.f32 0.0, %v4385
      %v4387 = vpop.f32.mrf.mxu0
      %4388 = vmatprep.mubr.bf16.mxu0 0
      %4389 = vmatmul.mubr.bf16.gmra.mxu0 %v4286
      %v4390 = vpop.f32.mrf.mxu0
      %v4391 = vadd.f32 0.0, %v4390
      %v4392 = vpop.f32.mrf.mxu0
      %v4393 = vpop.f32.mrf.mxu0
      %v4394 = vadd.f32 0.0, %v4393
      %v4395 = vpop.f32.mrf.mxu0
      %4396 = vmatprep.mubr.bf16.mxu0 0
      %4397 = vmatmul.mubr.bf16.gmra.mxu0 %v4289
      %v4398 = vpop.f32.mrf.mxu0
      %v4399 = vadd.f32 0.0, %v4398
      %v4400 = vpop.f32.mrf.mxu0
      %v4401 = vpop.f32.mrf.mxu0
      %v4402 = vadd.f32 0.0, %v4401
      %v4403 = vpop.f32.mrf.mxu0
      %4404 = vmatprep.mubr.bf16.mxu0 0
      %4405 = vmatmul.mubr.bf16.gmra.mxu0 %v4292
      %v4406 = vpop.f32.mrf.mxu0
      %v4407 = vadd.f32 0.0, %v4406
      %v4408 = vpop.f32.mrf.mxu0
      %v4409 = vpop.f32.mrf.mxu0
      %v4410 = vadd.f32 0.0, %v4409
      %v4411 = vpop.f32.mrf.mxu0
      %4412 = vmatprep.mubr.bf16.mxu0 0
      %4413 = vmatmul.mubr.bf16.gmra.mxu0 %v4295
      %v4414 = vpop.f32.mrf.mxu0
      %v4415 = vadd.f32 0.0, %v4414
      %v4416 = vpop.f32.mrf.mxu0
      %v4417 = vpop.f32.mrf.mxu0
      %v4418 = vadd.f32 0.0, %v4417
      %v4419 = vpop.f32.mrf.mxu0
      %4420 = vmatprep.mubr.bf16.mxu0 0
      %4421 = vmatmul.mubr.bf16.gmra.mxu0 %v4298
      %v4422 = vpop.f32.mrf.mxu0
      %v4423 = vadd.f32 0.0, %v4422
      %v4424 = vpop.f32.mrf.mxu0
      %v4425 = vpop.f32.mrf.mxu0
      %v4426 = vadd.f32 0.0, %v4425
      %v4427 = vpop.f32.mrf.mxu0
      %4428 = vmatprep.mubr.bf16.mxu0 0
      %4429 = vmatmul.mubr.bf16.gmra.mxu0 %v4301
      %v4430 = vpop.f32.mrf.mxu0
      %v4431 = vadd.f32 0.0, %v4430
      %v4432 = vpop.f32.mrf.mxu0
      %v4433 = vpop.f32.mrf.mxu0
      %v4434 = vadd.f32 0.0, %v4433
      %v4435 = vpop.f32.mrf.mxu0
      %4436 = vmatprep.mubr.bf16.mxu0 0
      %4437 = vmatmul.mubr.bf16.gmra.mxu0 %v4304
      %v4438 = vpop.f32.mrf.mxu0
      %v4439 = vadd.f32 0.0, %v4438
      %v4440 = vpop.f32.mrf.mxu0
      %v4441 = vpop.f32.mrf.mxu0
      %v4442 = vadd.f32 0.0, %v4441
      %v4443 = vpop.f32.mrf.mxu0
      %4444 = vmatprep.mubr.bf16.mxu0 0
      %4445 = vmatmul.mubr.bf16.gmra.mxu0 %v4307
      %v4446 = vpop.f32.mrf.mxu0
      %v4447 = vadd.f32 0.0, %v4446
      %v4448 = vpop.f32.mrf.mxu0
      %v4449 = vpop.f32.mrf.mxu0
      %v4450 = vadd.f32 0.0, %v4449
      %v4451 = vpop.f32.mrf.mxu0
      %4452 = vmatprep.mubr.bf16.mxu0 0
      %4453 = vmatmul.mubr.bf16.gmra.mxu0 %v4310
      %v4454 = vpop.f32.mrf.mxu0
      %v4455 = vadd.f32 0.0, %v4454
      %v4456 = vpop.f32.mrf.mxu0
      %v4457 = vpop.f32.mrf.mxu0
      %v4458 = vadd.f32 0.0, %v4457
      %v4459 = vpop.f32.mrf.mxu0
      %4460 = vmatprep.mubr.bf16.mxu0 0
      %4461 = vmatmul.mubr.bf16.gmra.mxu0 %v4313
      %v4462 = vpop.f32.mrf.mxu0
      %v4463 = vadd.f32 0.0, %v4462
      %v4464 = vpop.f32.mrf.mxu0
      %v4465 = vpop.f32.mrf.mxu0
      %v4466 = vadd.f32 0.0, %v4465
      %v4467 = vpop.f32.mrf.mxu0
      %4468 = vmatprep.mubr.bf16.mxu0 0
      %4469 = vmatmul.mubr.bf16.gmra.mxu0 %v4316
      %v4470 = vpop.f32.mrf.mxu0
      %v4471 = vadd.f32 0.0, %v4470
      %v4472 = vpop.f32.mrf.mxu0
      %v4473 = vpop.f32.mrf.mxu0
      %v4474 = vadd.f32 0.0, %v4473
      %v4475 = vpop.f32.mrf.mxu0
      %4476 = vmatprep.mubr.bf16.mxu0 0
      %4477 = vmatmul.mubr.bf16.gmra.mxu0 %v4319
      %v4478 = vpop.f32.mrf.mxu0
      %v4479 = vadd.f32 0.0, %v4478
      %v4480 = vpop.f32.mrf.mxu0
      %v4481 = vpop.f32.mrf.mxu0
      %v4482 = vadd.f32 0.0, %v4481
      %v4483 = vpop.f32.mrf.mxu0
      %4484 = vdwg.mxu0
      %v4486 = vshrl.u32 %v4243, 16
      %v4488 = vrot.slane %v4486, 3
      %v4489 = vshll.u32 %v4243, 16
      %v4491 = vrot.slane %v4489, 4
      %v4492 = vor.u32 %v4488, %v4491
      %v4493 = vsel %vm938, %v946, %v4492
      %v4495 = vshrl.u32 %v4244, 16
      %v4497 = vrot.slane %v4495, 3
      %v4498 = vshll.u32 %v4244, 16
      %v4500 = vrot.slane %v4498, 4
      %v4501 = vor.u32 %v4497, %v4500
      %v4502 = vsel %vm938, %v4492, %v4501
      %v4504 = vshrl.u32 %v4245, 16
      %v4506 = vrot.slane %v4504, 3
      %v4507 = vshll.u32 %v4245, 16
      %v4509 = vrot.slane %v4507, 4
      %v4510 = vor.u32 %v4506, %v4509
      %v4511 = vsel %vm938, %v4501, %v4510
      %v4513 = vshrl.u32 %v4246, 16
      %v4515 = vrot.slane %v4513, 3
      %v4516 = vshll.u32 %v4246, 16
      %v4518 = vrot.slane %v4516, 4
      %v4519 = vor.u32 %v4515, %v4518
      %v4520 = vsel %vm938, %v4510, %v4519
      %v4522 = vshrl.u32 %v4247, 16
      %v4524 = vrot.slane %v4522, 3
      %v4525 = vshll.u32 %v4247, 16
      %v4527 = vrot.slane %v4525, 4
      %v4528 = vor.u32 %v4524, %v4527
      %v4529 = vsel %vm938, %v4519, %v4528
      %v4531 = vshrl.u32 %v4248, 16
      %v4533 = vrot.slane %v4531, 3
      %v4534 = vshll.u32 %v4248, 16
      %v4536 = vrot.slane %v4534, 4
      %v4537 = vor.u32 %v4533, %v4536
      %v4538 = vsel %vm938, %v4528, %v4537
      %v4540 = vshrl.u32 %v4249, 16
      %v4542 = vrot.slane %v4540, 3
      %v4543 = vshll.u32 %v4249, 16
      %v4545 = vrot.slane %v4543, 4
      %v4546 = vor.u32 %v4542, %v4545
      %v4547 = vsel %vm938, %v4537, %v4546
      %v4549 = vshrl.u32 %v4250, 16
      %v4551 = vrot.slane %v4549, 3
      %v4552 = vshll.u32 %v4250, 16
      %v4554 = vrot.slane %v4552, 4
      %v4555 = vor.u32 %v4551, %v4554
      %v4556 = vsel %vm938, %v4546, %v4555
      %v4558 = vshrl.u32 %v4251, 16
      %v4560 = vrot.slane %v4558, 3
      %v4561 = vshll.u32 %v4251, 16
      %v4563 = vrot.slane %v4561, 4
      %v4564 = vor.u32 %v4560, %v4563
      %v4565 = vsel %vm938, %v4555, %v4564
      %v4567 = vshrl.u32 %v4252, 16
      %v4569 = vrot.slane %v4567, 3
      %v4570 = vshll.u32 %v4252, 16
      %v4572 = vrot.slane %v4570, 4
      %v4573 = vor.u32 %v4569, %v4572
      %v4574 = vsel %vm938, %v4564, %v4573
      %v4576 = vshrl.u32 %v4253, 16
      %v4578 = vrot.slane %v4576, 3
      %v4579 = vshll.u32 %v4253, 16
      %v4581 = vrot.slane %v4579, 4
      %v4582 = vor.u32 %v4578, %v4581
      %v4583 = vsel %vm938, %v4573, %v4582
      %v4585 = vshrl.u32 %v4254, 16
      %v4587 = vrot.slane %v4585, 3
      %v4588 = vshll.u32 %v4254, 16
      %v4590 = vrot.slane %v4588, 4
      %v4591 = vor.u32 %v4587, %v4590
      %v4592 = vsel %vm938, %v4582, %v4591
      %v4594 = vshrl.u32 %v4255, 16
      %v4596 = vrot.slane %v4594, 3
      %v4597 = vshll.u32 %v4255, 16
      %v4599 = vrot.slane %v4597, 4
      %v4600 = vor.u32 %v4596, %v4599
      %v4601 = vsel %vm938, %v4591, %v4600
      %v4603 = vshrl.u32 %v4256, 16
      %v4605 = vrot.slane %v4603, 3
      %v4606 = vshll.u32 %v4256, 16
      %v4608 = vrot.slane %v4606, 4
      %v4609 = vor.u32 %v4605, %v4608
      %v4610 = vsel %vm938, %v4600, %v4609
      %v4612 = vshrl.u32 %v4257, 16
      %v4614 = vrot.slane %v4612, 3
      %v4615 = vshll.u32 %v4257, 16
      %v4617 = vrot.slane %v4615, 4
      %v4618 = vor.u32 %v4614, %v4617
      %v4619 = vsel %vm938, %v4609, %v4618
      %v4621 = vshrl.u32 %v4258, 16
      %v4623 = vrot.slane %v4621, 3
      %v4624 = vshll.u32 %v4258, 16
      %v4626 = vrot.slane %v4624, 4
      %v4627 = vor.u32 %v4623, %v4626
      %v4628 = vsel %vm938, %v4618, %v4627
      %v4630 = vsel %vm724, %v4493, 0
      %v4633 = vsel %vm724, %v4502, 0
      %v4636 = vsel %vm724, %v4511, 0
      %v4639 = vsel %vm724, %v4520, 0
      %v4642 = vsel %vm724, %v4529, 0
      %v4645 = vsel %vm724, %v4538, 0
      %v4648 = vsel %vm724, %v4547, 0
      %v4651 = vsel %vm724, %v4556, 0
      %v4654 = vsel %vm724, %v4565, 0
      %v4657 = vsel %vm724, %v4574, 0
      %v4660 = vsel %vm724, %v4583, 0
      %v4663 = vsel %vm724, %v4592, 0
      %v4666 = vsel %vm724, %v4601, 0
      %v4669 = vsel %vm724, %v4610, 0
      %v4672 = vsel %vm724, %v4619, 0
      %v4675 = vsel %vm724, %v4628, 0
      %v4678 = vsel %vm773, %v4242, 0
      %4680 = vmatprep.subr.bf16.mxu0 0
      %4681 = vmatpush1.bf16.msra.mxu0 0
      %4682 = vmatprep.subr.bf16.mxu0 0
      %4683 = vmatpush1.bf16.msra.mxu0 0
      %4684 = vmatprep.subr.bf16.mxu0 0
      %4685 = vmatpush1.bf16.msra.mxu0 0
      %4686 = vmatprep.subr.bf16.mxu0 0
      %4687 = vmatpush1.bf16.msra.mxu0 0
      %4688 = vmatprep.subr.bf16.mxu0 0
      %4689 = vmatpush1.bf16.msra.mxu0 0
      %4690 = vmatprep.subr.bf16.mxu0 0
      %4691 = vmatpush1.bf16.msra.mxu0 0
      %4692 = vmatprep.subr.bf16.mxu0 0
      %4693 = vmatpush1.bf16.msra.mxu0 0
      %4694 = vmatprep.subr.bf16.mxu0 0
      %4695 = vmatpush1.bf16.msra.mxu0 %v4678
      %4696 = vmatprep.subr.bf16.mxu0 0
      %4697 = vmatpush2.bf16.msra.mxu0 0
      %4698 = vmatprep.subr.bf16.mxu0 0
      %4699 = vmatpush2.bf16.msra.mxu0 0
      %4700 = vmatprep.subr.bf16.mxu0 0
      %4701 = vmatpush2.bf16.msra.mxu0 0
      %4702 = vmatprep.subr.bf16.mxu0 0
      %4703 = vmatpush2.bf16.msra.mxu0 0
      %4704 = vmatprep.subr.bf16.mxu0 0
      %4705 = vmatpush2.bf16.msra.mxu0 0
      %4706 = vmatprep.subr.bf16.mxu0 0
      %4707 = vmatpush2.bf16.msra.mxu0 0
      %4708 = vmatprep.subr.bf16.mxu0 0
      %4709 = vmatpush2.bf16.msra.mxu0 0
      %4710 = vmatprep.subr.bf16.mxu0 0
      %4711 = vmatpush2.bf16.msra.mxu0 0
      %4712 = vmatprep.mubr.bf16.mxu0 0
      %4713 = vmatmul.mubr.bf16.gmra.mxu0 %v4630
      %v4714 = vpop.f32.mrf.mxu0
      %v4715 = vadd.f32 %v4359, %v4714
      %v4716 = vpop.f32.mrf.mxu0
      %v4717 = vpop.f32.mrf.mxu0
      %v4718 = vadd.f32 %v4362, %v4717
      %v4719 = vpop.f32.mrf.mxu0
      %4720 = vmatprep.mubr.bf16.mxu0 0
      %4721 = vmatmul.mubr.bf16.gmra.mxu0 %v4633
      %v4722 = vpop.f32.mrf.mxu0
      %v4723 = vadd.f32 %v4367, %v4722
      %v4724 = vpop.f32.mrf.mxu0
      %v4725 = vpop.f32.mrf.mxu0
      %v4726 = vadd.f32 %v4370, %v4725
      %v4727 = vpop.f32.mrf.mxu0
      %4728 = vmatprep.mubr.bf16.mxu0 0
      %4729 = vmatmul.mubr.bf16.gmra.mxu0 %v4636
      %v4730 = vpop.f32.mrf.mxu0
      %v4731 = vadd.f32 %v4375, %v4730
      %v4732 = vpop.f32.mrf.mxu0
      %v4733 = vpop.f32.mrf.mxu0
      %v4734 = vadd.f32 %v4378, %v4733
      %v4735 = vpop.f32.mrf.mxu0
      %4736 = vmatprep.mubr.bf16.mxu0 0
      %4737 = vmatmul.mubr.bf16.gmra.mxu0 %v4639
      %v4738 = vpop.f32.mrf.mxu0
      %v4739 = vadd.f32 %v4383, %v4738
      %v4740 = vpop.f32.mrf.mxu0
      %v4741 = vpop.f32.mrf.mxu0
      %v4742 = vadd.f32 %v4386, %v4741
      %v4743 = vpop.f32.mrf.mxu0
      %4744 = vmatprep.mubr.bf16.mxu0 0
      %4745 = vmatmul.mubr.bf16.gmra.mxu0 %v4642
      %v4746 = vpop.f32.mrf.mxu0
      %v4747 = vadd.f32 %v4391, %v4746
      %v4748 = vpop.f32.mrf.mxu0
      %v4749 = vpop.f32.mrf.mxu0
      %v4750 = vadd.f32 %v4394, %v4749
      %v4751 = vpop.f32.mrf.mxu0
      %4752 = vmatprep.mubr.bf16.mxu0 0
      %4753 = vmatmul.mubr.bf16.gmra.mxu0 %v4645
      %v4754 = vpop.f32.mrf.mxu0
      %v4755 = vadd.f32 %v4399, %v4754
      %v4756 = vpop.f32.mrf.mxu0
      %v4757 = vpop.f32.mrf.mxu0
      %v4758 = vadd.f32 %v4402, %v4757
      %v4759 = vpop.f32.mrf.mxu0
      %4760 = vmatprep.mubr.bf16.mxu0 0
      %4761 = vmatmul.mubr.bf16.gmra.mxu0 %v4648
      %v4762 = vpop.f32.mrf.mxu0
      %v4763 = vadd.f32 %v4407, %v4762
      %v4764 = vpop.f32.mrf.mxu0
      %v4765 = vpop.f32.mrf.mxu0
      %v4766 = vadd.f32 %v4410, %v4765
      %v4767 = vpop.f32.mrf.mxu0
      %4768 = vmatprep.mubr.bf16.mxu0 0
      %4769 = vmatmul.mubr.bf16.gmra.mxu0 %v4651
      %v4770 = vpop.f32.mrf.mxu0
      %v4771 = vadd.f32 %v4415, %v4770
      %v4772 = vpop.f32.mrf.mxu0
      %v4773 = vpop.f32.mrf.mxu0
      %v4774 = vadd.f32 %v4418, %v4773
      %v4775 = vpop.f32.mrf.mxu0
      %4776 = vmatprep.mubr.bf16.mxu0 0
      %4777 = vmatmul.mubr.bf16.gmra.mxu0 %v4654
      %v4778 = vpop.f32.mrf.mxu0
      %v4779 = vadd.f32 %v4423, %v4778
      %v4780 = vpop.f32.mrf.mxu0
      %v4781 = vpop.f32.mrf.mxu0
      %v4782 = vadd.f32 %v4426, %v4781
      %v4783 = vpop.f32.mrf.mxu0
      %4784 = vmatprep.mubr.bf16.mxu0 0
      %4785 = vmatmul.mubr.bf16.gmra.mxu0 %v4657
      %v4786 = vpop.f32.mrf.mxu0
      %v4787 = vadd.f32 %v4431, %v4786
      %v4788 = vpop.f32.mrf.mxu0
      %v4789 = vpop.f32.mrf.mxu0
      %v4790 = vadd.f32 %v4434, %v4789
      %v4791 = vpop.f32.mrf.mxu0
      %4792 = vmatprep.mubr.bf16.mxu0 0
      %4793 = vmatmul.mubr.bf16.gmra.mxu0 %v4660
      %v4794 = vpop.f32.mrf.mxu0
      %v4795 = vadd.f32 %v4439, %v4794
      %v4796 = vpop.f32.mrf.mxu0
      %v4797 = vpop.f32.mrf.mxu0
      %v4798 = vadd.f32 %v4442, %v4797
      %v4799 = vpop.f32.mrf.mxu0
      %4800 = vmatprep.mubr.bf16.mxu0 0
      %4801 = vmatmul.mubr.bf16.gmra.mxu0 %v4663
      %v4802 = vpop.f32.mrf.mxu0
      %v4803 = vadd.f32 %v4447, %v4802
      %v4804 = vpop.f32.mrf.mxu0
      %v4805 = vpop.f32.mrf.mxu0
      %v4806 = vadd.f32 %v4450, %v4805
      %v4807 = vpop.f32.mrf.mxu0
      %4808 = vmatprep.mubr.bf16.mxu0 0
      %4809 = vmatmul.mubr.bf16.gmra.mxu0 %v4666
      %v4810 = vpop.f32.mrf.mxu0
      %v4811 = vadd.f32 %v4455, %v4810
      %v4812 = vpop.f32.mrf.mxu0
      %v4813 = vpop.f32.mrf.mxu0
      %v4814 = vadd.f32 %v4458, %v4813
      %v4815 = vpop.f32.mrf.mxu0
      %4816 = vmatprep.mubr.bf16.mxu0 0
      %4817 = vmatmul.mubr.bf16.gmra.mxu0 %v4669
      %v4818 = vpop.f32.mrf.mxu0
      %v4819 = vadd.f32 %v4463, %v4818
      %v4820 = vpop.f32.mrf.mxu0
      %v4821 = vpop.f32.mrf.mxu0
      %v4822 = vadd.f32 %v4466, %v4821
      %v4823 = vpop.f32.mrf.mxu0
      %4824 = vmatprep.mubr.bf16.mxu0 0
      %4825 = vmatmul.mubr.bf16.gmra.mxu0 %v4672
      %v4826 = vpop.f32.mrf.mxu0
      %v4827 = vadd.f32 %v4471, %v4826
      %v4828 = vpop.f32.mrf.mxu0
      %v4829 = vpop.f32.mrf.mxu0
      %v4830 = vadd.f32 %v4474, %v4829
      %v4831 = vpop.f32.mrf.mxu0
      %4832 = vmatprep.mubr.bf16.mxu0 0
      %4833 = vmatmul.mubr.bf16.gmra.mxu0 %v4675
      %v4834 = vpop.f32.mrf.mxu0
      %v4835 = vadd.f32 %v4479, %v4834
      %v4836 = vpop.f32.mrf.mxu0
      %v4837 = vpop.f32.mrf.mxu0
      %v4838 = vadd.f32 %v4482, %v4837
      %v4839 = vpop.f32.mrf.mxu0
      %4840 = vdwg.mxu0
      %v4841 = vmul.f32 %v4180, %v1436
      %v4842 = vmul.f32 %v4181, %v1438
      %v4843 = vmul.f32 %v4182, %v1440
      %v4844 = vmul.f32 %v4183, %v1442
      %v4845 = vmul.f32 %v4184, %v1444
      %v4846 = vmul.f32 %v4185, %v1446
      %v4847 = vmul.f32 %v4186, %v1448
      %v4848 = vmul.f32 %v4187, %v1450
      %v4849 = vmul.f32 %v4188, %v1452
      %v4850 = vmul.f32 %v4189, %v1454
      %v4851 = vmul.f32 %v4190, %v1456
      %v4852 = vmul.f32 %v4191, %v1458
      %v4853 = vmul.f32 %v4192, %v1460
      %v4854 = vmul.f32 %v4193, %v1462
      %v4855 = vmul.f32 %v4194, %v1464
      %v4856 = vmul.f32 %v4195, %v1466
      %v4857 = vmul.f32 %v4196, %v1468
      %v4858 = vmul.f32 %v4197, %v1470
      %v4859 = vmul.f32 %v4198, %v1472
      %v4860 = vmul.f32 %v4199, %v1474
      %v4861 = vmul.f32 %v4200, %v1476
      %v4862 = vmul.f32 %v4201, %v1478
      %v4863 = vmul.f32 %v4202, %v1480
      %v4864 = vmul.f32 %v4203, %v1482
      %v4865 = vmul.f32 %v4204, %v1484
      %v4866 = vmul.f32 %v4205, %v1486
      %v4867 = vmul.f32 %v4206, %v1488
      %v4868 = vmul.f32 %v4207, %v1490
      %v4869 = vmul.f32 %v4208, %v1492
      %v4870 = vmul.f32 %v4209, %v1494
      %v4871 = vmul.f32 %v4210, %v1493
      %s4872 = scalar_lea.vmem %s6, 4
      %v4873 = vld [vmem:[%s4872] sm:$0x3]
      %v4874 = vpack.c.bf16 %v4842, %v4841
      %v4875 = vpack.c.bf16 %v4844, %v4843
      %v4876 = vpack.c.bf16 %v4846, %v4845
      %v4877 = vpack.c.bf16 %v4848, %v4847
      %v4878 = vpack.c.bf16 %v4850, %v4849
      %v4879 = vpack.c.bf16 %v4852, %v4851
      %v4880 = vpack.c.bf16 %v4854, %v4853
      %v4881 = vpack.c.bf16 %v4856, %v4855
      %v4882 = vpack.c.bf16 %v4858, %v4857
      %v4883 = vpack.c.bf16 %v4860, %v4859
      %v4884 = vpack.c.bf16 %v4862, %v4861
      %v4885 = vpack.c.bf16 %v4864, %v4863
      %v4886 = vpack.c.bf16 %v4866, %v4865
      %v4887 = vpack.c.bf16 %v4868, %v4867
      %v4888 = vpack.c.bf16 %v4870, %v4869
      %v4889 = vpack.c.bf16 %v4871, %v4871
      %v4891 = vshll.u32 %v4874, 16
      %v4893 = vrot.slane %v4891, 1
      %v4894 = vsel %vm1580, %v1587, %v4893
      %v4895 = vshrl.u32 %v4874, 16
      %v4897 = vor.u32 %v4895, %v4893
      %v4899 = vshll.u32 %v4875, 16
      %v4901 = vrot.slane %v4899, 1
      %v4902 = vsel %vm1580, %v4897, %v4901
      %v4903 = vshrl.u32 %v4875, 16
      %v4905 = vor.u32 %v4903, %v4901
      %v4907 = vshll.u32 %v4876, 16
      %v4909 = vrot.slane %v4907, 1
      %v4910 = vsel %vm1580, %v4905, %v4909
      %v4911 = vshrl.u32 %v4876, 16
      %v4913 = vor.u32 %v4911, %v4909
      %v4915 = vshll.u32 %v4877, 16
      %v4917 = vrot.slane %v4915, 1
      %v4918 = vsel %vm1580, %v4913, %v4917
      %v4919 = vshrl.u32 %v4877, 16
      %v4921 = vor.u32 %v4919, %v4917
      %v4923 = vshll.u32 %v4878, 16
      %v4925 = vrot.slane %v4923, 1
      %v4926 = vsel %vm1580, %v4921, %v4925
      %v4927 = vshrl.u32 %v4878, 16
      %v4929 = vor.u32 %v4927, %v4925
      %v4931 = vshll.u32 %v4879, 16
      %v4933 = vrot.slane %v4931, 1
      %v4934 = vsel %vm1580, %v4929, %v4933
      %v4935 = vshrl.u32 %v4879, 16
      %v4937 = vor.u32 %v4935, %v4933
      %v4939 = vshll.u32 %v4880, 16
      %v4941 = vrot.slane %v4939, 1
      %v4942 = vsel %vm1580, %v4937, %v4941
      %v4943 = vshrl.u32 %v4880, 16
      %v4945 = vor.u32 %v4943, %v4941
      %v4947 = vshll.u32 %v4881, 16
      %v4949 = vrot.slane %v4947, 1
      %v4950 = vsel %vm1580, %v4945, %v4949
      %v4951 = vshrl.u32 %v4881, 16
      %v4953 = vor.u32 %v4951, %v4949
      %v4955 = vshll.u32 %v4882, 16
      %v4957 = vrot.slane %v4955, 1
      %v4958 = vsel %vm1580, %v4953, %v4957
      %v4959 = vshrl.u32 %v4882, 16
      %v4961 = vor.u32 %v4959, %v4957
      %v4963 = vshll.u32 %v4883, 16
      %v4965 = vrot.slane %v4963, 1
      %v4966 = vsel %vm1580, %v4961, %v4965
      %v4967 = vshrl.u32 %v4883, 16
      %v4969 = vor.u32 %v4967, %v4965
      %v4971 = vshll.u32 %v4884, 16
      %v4973 = vrot.slane %v4971, 1
      %v4974 = vsel %vm1580, %v4969, %v4973
      %v4975 = vshrl.u32 %v4884, 16
      %v4977 = vor.u32 %v4975, %v4973
      %v4979 = vshll.u32 %v4885, 16
      %v4981 = vrot.slane %v4979, 1
      %v4982 = vsel %vm1580, %v4977, %v4981
      %v4983 = vshrl.u32 %v4885, 16
      %v4985 = vor.u32 %v4983, %v4981
      %v4987 = vshll.u32 %v4886, 16
      %v4989 = vrot.slane %v4987, 1
      %v4990 = vsel %vm1580, %v4985, %v4989
      %v4991 = vshrl.u32 %v4886, 16
      %v4993 = vor.u32 %v4991, %v4989
      %v4995 = vshll.u32 %v4887, 16
      %v4997 = vrot.slane %v4995, 1
      %v4998 = vsel %vm1580, %v4993, %v4997
      %v4999 = vshrl.u32 %v4887, 16
      %v5001 = vor.u32 %v4999, %v4997
      %v5003 = vshll.u32 %v4888, 16
      %v5005 = vrot.slane %v5003, 1
      %v5006 = vsel %vm1580, %v5001, %v5005
      %v5007 = vshrl.u32 %v4888, 16
      %v5009 = vor.u32 %v5007, %v5005
      %v5011 = vshll.u32 %v4889, 16
      %v5013 = vrot.slane %v5011, 1
      %v5014 = vsel %vm1580, %v5009, %v5013
      %v5016 = vsel %vm724, %v4894, 0
      %v5019 = vsel %vm724, %v4902, 0
      %v5022 = vsel %vm724, %v4910, 0
      %v5025 = vsel %vm724, %v4918, 0
      %v5028 = vsel %vm724, %v4926, 0
      %v5031 = vsel %vm724, %v4934, 0
      %v5034 = vsel %vm724, %v4942, 0
      %v5037 = vsel %vm724, %v4950, 0
      %v5040 = vsel %vm724, %v4958, 0
      %v5043 = vsel %vm724, %v4966, 0
      %v5046 = vsel %vm724, %v4974, 0
      %v5049 = vsel %vm724, %v4982, 0
      %v5052 = vsel %vm724, %v4990, 0
      %v5055 = vsel %vm724, %v4998, 0
      %v5058 = vsel %vm724, %v5006, 0
      %v5061 = vsel %vm724, %v5014, 0
      %v5064 = vsel %vm773, %v4873, 0
      %5066 = vmatprep.subr.bf16.mxu0 0
      %5067 = vmatpush1.bf16.msra.mxu0 0
      %5068 = vmatprep.subr.bf16.mxu0 0
      %5069 = vmatpush1.bf16.msra.mxu0 0
      %5070 = vmatprep.subr.bf16.mxu0 0
      %5071 = vmatpush1.bf16.msra.mxu0 0
      %5072 = vmatprep.subr.bf16.mxu0 0
      %5073 = vmatpush1.bf16.msra.mxu0 0
      %5074 = vmatprep.subr.bf16.mxu0 0
      %5075 = vmatpush1.bf16.msra.mxu0 0
      %5076 = vmatprep.subr.bf16.mxu0 0
      %5077 = vmatpush1.bf16.msra.mxu0 0
      %5078 = vmatprep.subr.bf16.mxu0 0
      %5079 = vmatpush1.bf16.msra.mxu0 0
      %5080 = vmatprep.subr.bf16.mxu0 0
      %5081 = vmatpush1.bf16.msra.mxu0 %v5064
      %5082 = vmatprep.subr.bf16.mxu0 0
      %5083 = vmatpush2.bf16.msra.mxu0 0
      %5084 = vmatprep.subr.bf16.mxu0 0
      %5085 = vmatpush2.bf16.msra.mxu0 0
      %5086 = vmatprep.subr.bf16.mxu0 0
      %5087 = vmatpush2.bf16.msra.mxu0 0
      %5088 = vmatprep.subr.bf16.mxu0 0
      %5089 = vmatpush2.bf16.msra.mxu0 0
      %5090 = vmatprep.subr.bf16.mxu0 0
      %5091 = vmatpush2.bf16.msra.mxu0 0
      %5092 = vmatprep.subr.bf16.mxu0 0
      %5093 = vmatpush2.bf16.msra.mxu0 0
      %5094 = vmatprep.subr.bf16.mxu0 0
      %5095 = vmatpush2.bf16.msra.mxu0 0
      %5096 = vmatprep.subr.bf16.mxu0 0
      %5097 = vmatpush2.bf16.msra.mxu0 0
      %5098 = vmatprep.mubr.bf16.mxu0 0
      %5099 = vmatmul.mubr.bf16.gmra.mxu0 %v5016
      %v5100 = vpop.f32.mrf.mxu0
      %v5101 = vadd.f32 0.0, %v5100
      %v5102 = vpop.f32.mrf.mxu0
      %v5103 = vpop.f32.mrf.mxu0
      %v5104 = vadd.f32 0.0, %v5103
      %v5105 = vpop.f32.mrf.mxu0
      %5106 = vmatprep.mubr.bf16.mxu0 0
      %5107 = vmatmul.mubr.bf16.gmra.mxu0 %v5019
      %v5108 = vpop.f32.mrf.mxu0
      %v5109 = vadd.f32 0.0, %v5108
      %v5110 = vpop.f32.mrf.mxu0
      %v5111 = vpop.f32.mrf.mxu0
      %v5112 = vadd.f32 0.0, %v5111
      %v5113 = vpop.f32.mrf.mxu0
      %5114 = vmatprep.mubr.bf16.mxu0 0
      %5115 = vmatmul.mubr.bf16.gmra.mxu0 %v5022
      %v5116 = vpop.f32.mrf.mxu0
      %v5117 = vadd.f32 0.0, %v5116
      %v5118 = vpop.f32.mrf.mxu0
      %v5119 = vpop.f32.mrf.mxu0
      %v5120 = vadd.f32 0.0, %v5119
      %v5121 = vpop.f32.mrf.mxu0
      %5122 = vmatprep.mubr.bf16.mxu0 0
      %5123 = vmatmul.mubr.bf16.gmra.mxu0 %v5025
      %v5124 = vpop.f32.mrf.mxu0
      %v5125 = vadd.f32 0.0, %v5124
      %v5126 = vpop.f32.mrf.mxu0
      %v5127 = vpop.f32.mrf.mxu0
      %v5128 = vadd.f32 0.0, %v5127
      %v5129 = vpop.f32.mrf.mxu0
      %5130 = vmatprep.mubr.bf16.mxu0 0
      %5131 = vmatmul.mubr.bf16.gmra.mxu0 %v5028
      %v5132 = vpop.f32.mrf.mxu0
      %v5133 = vadd.f32 0.0, %v5132
      %v5134 = vpop.f32.mrf.mxu0
      %v5135 = vpop.f32.mrf.mxu0
      %v5136 = vadd.f32 0.0, %v5135
      %v5137 = vpop.f32.mrf.mxu0
      %5138 = vmatprep.mubr.bf16.mxu0 0
      %5139 = vmatmul.mubr.bf16.gmra.mxu0 %v5031
      %v5140 = vpop.f32.mrf.mxu0
      %v5141 = vadd.f32 0.0, %v5140
      %v5142 = vpop.f32.mrf.mxu0
      %v5143 = vpop.f32.mrf.mxu0
      %v5144 = vadd.f32 0.0, %v5143
      %v5145 = vpop.f32.mrf.mxu0
      %5146 = vmatprep.mubr.bf16.mxu0 0
      %5147 = vmatmul.mubr.bf16.gmra.mxu0 %v5034
      %v5148 = vpop.f32.mrf.mxu0
      %v5149 = vadd.f32 0.0, %v5148
      %v5150 = vpop.f32.mrf.mxu0
      %v5151 = vpop.f32.mrf.mxu0
      %v5152 = vadd.f32 0.0, %v5151
      %v5153 = vpop.f32.mrf.mxu0
      %5154 = vmatprep.mubr.bf16.mxu0 0
      %5155 = vmatmul.mubr.bf16.gmra.mxu0 %v5037
      %v5156 = vpop.f32.mrf.mxu0
      %v5157 = vadd.f32 0.0, %v5156
      %v5158 = vpop.f32.mrf.mxu0
      %v5159 = vpop.f32.mrf.mxu0
      %v5160 = vadd.f32 0.0, %v5159
      %v5161 = vpop.f32.mrf.mxu0
      %5162 = vmatprep.mubr.bf16.mxu0 0
      %5163 = vmatmul.mubr.bf16.gmra.mxu0 %v5040
      %v5164 = vpop.f32.mrf.mxu0
      %v5165 = vadd.f32 0.0, %v5164
      %v5166 = vpop.f32.mrf.mxu0
      %v5167 = vpop.f32.mrf.mxu0
      %v5168 = vadd.f32 0.0, %v5167
      %v5169 = vpop.f32.mrf.mxu0
      %5170 = vmatprep.mubr.bf16.mxu0 0
      %5171 = vmatmul.mubr.bf16.gmra.mxu0 %v5043
      %v5172 = vpop.f32.mrf.mxu0
      %v5173 = vadd.f32 0.0, %v5172
      %v5174 = vpop.f32.mrf.mxu0
      %v5175 = vpop.f32.mrf.mxu0
      %v5176 = vadd.f32 0.0, %v5175
      %v5177 = vpop.f32.mrf.mxu0
      %5178 = vmatprep.mubr.bf16.mxu0 0
      %5179 = vmatmul.mubr.bf16.gmra.mxu0 %v5046
      %v5180 = vpop.f32.mrf.mxu0
      %v5181 = vadd.f32 0.0, %v5180
      %v5182 = vpop.f32.mrf.mxu0
      %v5183 = vpop.f32.mrf.mxu0
      %v5184 = vadd.f32 0.0, %v5183
      %v5185 = vpop.f32.mrf.mxu0
      %5186 = vmatprep.mubr.bf16.mxu0 0
      %5187 = vmatmul.mubr.bf16.gmra.mxu0 %v5049
      %v5188 = vpop.f32.mrf.mxu0
      %v5189 = vadd.f32 0.0, %v5188
      %v5190 = vpop.f32.mrf.mxu0
      %v5191 = vpop.f32.mrf.mxu0
      %v5192 = vadd.f32 0.0, %v5191
      %v5193 = vpop.f32.mrf.mxu0
      %5194 = vmatprep.mubr.bf16.mxu0 0
      %5195 = vmatmul.mubr.bf16.gmra.mxu0 %v5052
      %v5196 = vpop.f32.mrf.mxu0
      %v5197 = vadd.f32 0.0, %v5196
      %v5198 = vpop.f32.mrf.mxu0
      %v5199 = vpop.f32.mrf.mxu0
      %v5200 = vadd.f32 0.0, %v5199
      %v5201 = vpop.f32.mrf.mxu0
      %5202 = vmatprep.mubr.bf16.mxu0 0
      %5203 = vmatmul.mubr.bf16.gmra.mxu0 %v5055
      %v5204 = vpop.f32.mrf.mxu0
      %v5205 = vadd.f32 0.0, %v5204
      %v5206 = vpop.f32.mrf.mxu0
      %v5207 = vpop.f32.mrf.mxu0
      %v5208 = vadd.f32 0.0, %v5207
      %v5209 = vpop.f32.mrf.mxu0
      %5210 = vmatprep.mubr.bf16.mxu0 0
      %5211 = vmatmul.mubr.bf16.gmra.mxu0 %v5058
      %v5212 = vpop.f32.mrf.mxu0
      %v5213 = vadd.f32 0.0, %v5212
      %v5214 = vpop.f32.mrf.mxu0
      %v5215 = vpop.f32.mrf.mxu0
      %v5216 = vadd.f32 0.0, %v5215
      %v5217 = vpop.f32.mrf.mxu0
      %5218 = vmatprep.mubr.bf16.mxu0 0
      %5219 = vmatmul.mubr.bf16.gmra.mxu0 %v5061
      %v5220 = vpop.f32.mrf.mxu0
      %v5221 = vadd.f32 0.0, %v5220
      %v5222 = vpop.f32.mrf.mxu0
      %v5223 = vpop.f32.mrf.mxu0
      %v5224 = vadd.f32 0.0, %v5223
      %v5225 = vpop.f32.mrf.mxu0
      %5226 = vdwg.mxu0
      %v5227 = vadd.f32 %v4715, %v5101
      %v5228 = vadd.f32 %v4718, %v5104
      %v5229 = vadd.f32 %v4723, %v5109
      %v5230 = vadd.f32 %v4726, %v5112
      %v5231 = vadd.f32 %v4731, %v5117
      %v5232 = vadd.f32 %v4734, %v5120
      %v5233 = vadd.f32 %v4739, %v5125
      %v5234 = vadd.f32 %v4742, %v5128
      %v5235 = vadd.f32 %v4747, %v5133
      %v5236 = vadd.f32 %v4750, %v5136
      %v5237 = vadd.f32 %v4755, %v5141
      %v5238 = vadd.f32 %v4758, %v5144
      %v5239 = vadd.f32 %v4763, %v5149
      %v5240 = vadd.f32 %v4766, %v5152
      %v5241 = vadd.f32 %v4771, %v5157
      %v5242 = vadd.f32 %v4774, %v5160
      %v5243 = vadd.f32 %v4779, %v5165
      %v5244 = vadd.f32 %v4782, %v5168
      %v5245 = vadd.f32 %v4787, %v5173
      %v5246 = vadd.f32 %v4790, %v5176
      %v5247 = vadd.f32 %v4795, %v5181
      %v5248 = vadd.f32 %v4798, %v5184
      %v5249 = vadd.f32 %v4803, %v5189
      %v5250 = vadd.f32 %v4806, %v5192
      %v5251 = vadd.f32 %v4811, %v5197
      %v5252 = vadd.f32 %v4814, %v5200
      %v5253 = vadd.f32 %v4819, %v5205
      %v5254 = vadd.f32 %v4822, %v5208
      %v5255 = vadd.f32 %v4827, %v5213
      %v5256 = vadd.f32 %v4830, %v5216
      %v5257 = vadd.f32 %v4835, %v5221
      %v5258 = vadd.f32 %v4838, %v5224
      %v5259 = vmul.f32 %v4180, %v561
      %v5260 = vmul.f32 %v4181, %v563
      %v5261 = vmul.f32 %v4182, %v565
      %v5262 = vmul.f32 %v4183, %v567
      %v5263 = vmul.f32 %v4184, %v569
      %v5264 = vmul.f32 %v4185, %v571
      %v5265 = vmul.f32 %v4186, %v573
      %v5266 = vmul.f32 %v4187, %v575
      %v5267 = vmul.f32 %v4188, %v577
      %v5268 = vmul.f32 %v4189, %v579
      %v5269 = vmul.f32 %v4190, %v581
      %v5270 = vmul.f32 %v4191, %v583
      %v5271 = vmul.f32 %v4192, %v585
      %v5272 = vmul.f32 %v4193, %v587
      %v5273 = vmul.f32 %v4194, %v589
      %v5274 = vmul.f32 %v4195, %v591
      %v5275 = vmul.f32 %v4196, %v593
      %v5276 = vmul.f32 %v4197, %v595
      %v5277 = vmul.f32 %v4198, %v597
      %v5278 = vmul.f32 %v4199, %v599
      %v5279 = vmul.f32 %v4200, %v601
      %v5280 = vmul.f32 %v4201, %v603
      %v5281 = vmul.f32 %v4202, %v605
      %v5282 = vmul.f32 %v4203, %v607
      %v5283 = vmul.f32 %v4204, %v609
      %v5284 = vmul.f32 %v4205, %v611
      %v5285 = vmul.f32 %v4206, %v613
      %v5286 = vmul.f32 %v4207, %v615
      %v5287 = vmul.f32 %v4208, %v617
      %v5288 = vmul.f32 %v4209, %v619
      %v5289 = vmul.f32 %v4210, %v621
      %v5290 = vmul.f32 %v4211, %v620
      %s5291 = scalar_lea.vmem %s6, 6
      %v5292 = vld [vmem:[%s5291] sm:$0x3]
      %v5293 = vpack.c.bf16 %v5259, %v655
      %v5294 = vpack.c.bf16 %v5261, %v5260
      %v5295 = vpack.c.bf16 %v5263, %v5262
      %v5296 = vpack.c.bf16 %v5265, %v5264
      %v5297 = vpack.c.bf16 %v5267, %v5266
      %v5298 = vpack.c.bf16 %v5269, %v5268
      %v5299 = vpack.c.bf16 %v5271, %v5270
      %v5300 = vpack.c.bf16 %v5273, %v5272
      %v5301 = vpack.c.bf16 %v5275, %v5274
      %v5302 = vpack.c.bf16 %v5277, %v5276
      %v5303 = vpack.c.bf16 %v5279, %v5278
      %v5304 = vpack.c.bf16 %v5281, %v5280
      %v5305 = vpack.c.bf16 %v5283, %v5282
      %v5306 = vpack.c.bf16 %v5285, %v5284
      %v5307 = vpack.c.bf16 %v5287, %v5286
      %v5308 = vpack.c.bf16 %v5289, %v5288
      %v5309 = vpack.c.bf16 %v5290, %v5290
      %v5311 = vshrl.u32 %v5293, 16
      %v5313 = vrot.slane %v5311, 3
      %v5314 = vshll.u32 %v5293, 16
      %v5316 = vrot.slane %v5314, 4
      %v5317 = vor.u32 %v5313, %v5316
      %v5319 = vshrl.u32 %v5294, 16
      %v5321 = vrot.slane %v5319, 3
      %v5322 = vshll.u32 %v5294, 16
      %v5324 = vrot.slane %v5322, 4
      %v5325 = vor.u32 %v5321, %v5324
      %v5326 = vsel %vm938, %v5317, %v5325
      %v5328 = vshrl.u32 %v5295, 16
      %v5330 = vrot.slane %v5328, 3
      %v5331 = vshll.u32 %v5295, 16
      %v5333 = vrot.slane %v5331, 4
      %v5334 = vor.u32 %v5330, %v5333
      %v5335 = vsel %vm938, %v5325, %v5334
      %v5337 = vshrl.u32 %v5296, 16
      %v5339 = vrot.slane %v5337, 3
      %v5340 = vshll.u32 %v5296, 16
      %v5342 = vrot.slane %v5340, 4
      %v5343 = vor.u32 %v5339, %v5342
      %v5344 = vsel %vm938, %v5334, %v5343
      %v5346 = vshrl.u32 %v5297, 16
      %v5348 = vrot.slane %v5346, 3
      %v5349 = vshll.u32 %v5297, 16
      %v5351 = vrot.slane %v5349, 4
      %v5352 = vor.u32 %v5348, %v5351
      %v5353 = vsel %vm938, %v5343, %v5352
      %v5355 = vshrl.u32 %v5298, 16
      %v5357 = vrot.slane %v5355, 3
      %v5358 = vshll.u32 %v5298, 16
      %v5360 = vrot.slane %v5358, 4
      %v5361 = vor.u32 %v5357, %v5360
      %v5362 = vsel %vm938, %v5352, %v5361
      %v5364 = vshrl.u32 %v5299, 16
      %v5366 = vrot.slane %v5364, 3
      %v5367 = vshll.u32 %v5299, 16
      %v5369 = vrot.slane %v5367, 4
      %v5370 = vor.u32 %v5366, %v5369
      %v5371 = vsel %vm938, %v5361, %v5370
      %v5373 = vshrl.u32 %v5300, 16
      %v5375 = vrot.slane %v5373, 3
      %v5376 = vshll.u32 %v5300, 16
      %v5378 = vrot.slane %v5376, 4
      %v5379 = vor.u32 %v5375, %v5378
      %v5380 = vsel %vm938, %v5370, %v5379
      %v5382 = vshrl.u32 %v5301, 16
      %v5384 = vrot.slane %v5382, 3
      %v5385 = vshll.u32 %v5301, 16
      %v5387 = vrot.slane %v5385, 4
      %v5388 = vor.u32 %v5384, %v5387
      %v5389 = vsel %vm938, %v5379, %v5388
      %v5391 = vshrl.u32 %v5302, 16
      %v5393 = vrot.slane %v5391, 3
      %v5394 = vshll.u32 %v5302, 16
      %v5396 = vrot.slane %v5394, 4
      %v5397 = vor.u32 %v5393, %v5396
      %v5398 = vsel %vm938, %v5388, %v5397
      %v5400 = vshrl.u32 %v5303, 16
      %v5402 = vrot.slane %v5400, 3
      %v5403 = vshll.u32 %v5303, 16
      %v5405 = vrot.slane %v5403, 4
      %v5406 = vor.u32 %v5402, %v5405
      %v5407 = vsel %vm938, %v5397, %v5406
      %v5409 = vshrl.u32 %v5304, 16
      %v5411 = vrot.slane %v5409, 3
      %v5412 = vshll.u32 %v5304, 16
      %v5414 = vrot.slane %v5412, 4
      %v5415 = vor.u32 %v5411, %v5414
      %v5416 = vsel %vm938, %v5406, %v5415
      %v5418 = vshrl.u32 %v5305, 16
      %v5420 = vrot.slane %v5418, 3
      %v5421 = vshll.u32 %v5305, 16
      %v5423 = vrot.slane %v5421, 4
      %v5424 = vor.u32 %v5420, %v5423
      %v5425 = vsel %vm938, %v5415, %v5424
      %v5427 = vshrl.u32 %v5306, 16
      %v5429 = vrot.slane %v5427, 3
      %v5430 = vshll.u32 %v5306, 16
      %v5432 = vrot.slane %v5430, 4
      %v5433 = vor.u32 %v5429, %v5432
      %v5434 = vsel %vm938, %v5424, %v5433
      %v5436 = vshrl.u32 %v5307, 16
      %v5438 = vrot.slane %v5436, 3
      %v5439 = vshll.u32 %v5307, 16
      %v5441 = vrot.slane %v5439, 4
      %v5442 = vor.u32 %v5438, %v5441
      %v5443 = vsel %vm938, %v5433, %v5442
      %v5445 = vshrl.u32 %v5308, 16
      %v5447 = vrot.slane %v5445, 3
      %v5448 = vshll.u32 %v5308, 16
      %v5450 = vrot.slane %v5448, 4
      %v5451 = vor.u32 %v5447, %v5450
      %v5452 = vsel %vm938, %v5442, %v5451
      %v5454 = vshrl.u32 %v5309, 16
      %v5456 = vrot.slane %v5454, 3
      %v5457 = vshll.u32 %v5309, 16
      %v5459 = vrot.slane %v5457, 4
      %v5460 = vor.u32 %v5456, %v5459
      %v5461 = vsel %vm938, %v5451, %v5460
      %v5463 = vsel %vm724, %v5326, 0
      %v5466 = vsel %vm724, %v5335, 0
      %v5469 = vsel %vm724, %v5344, 0
      %v5472 = vsel %vm724, %v5353, 0
      %v5475 = vsel %vm724, %v5362, 0
      %v5478 = vsel %vm724, %v5371, 0
      %v5481 = vsel %vm724, %v5380, 0
      %v5484 = vsel %vm724, %v5389, 0
      %v5487 = vsel %vm724, %v5398, 0
      %v5490 = vsel %vm724, %v5407, 0
      %v5493 = vsel %vm724, %v5416, 0
      %v5496 = vsel %vm724, %v5425, 0
      %v5499 = vsel %vm724, %v5434, 0
      %v5502 = vsel %vm724, %v5443, 0
      %v5505 = vsel %vm724, %v5452, 0
      %v5508 = vsel %vm724, %v5461, 0
      %v5511 = vsel %vm773, %v5292, 0
      %5513 = vmatprep.subr.bf16.mxu0 0
      %5514 = vmatpush1.bf16.msra.mxu0 0
      %5515 = vmatprep.subr.bf16.mxu0 0
      %5516 = vmatpush1.bf16.msra.mxu0 0
      %5517 = vmatprep.subr.bf16.mxu0 0
      %5518 = vmatpush1.bf16.msra.mxu0 0
      %5519 = vmatprep.subr.bf16.mxu0 0
      %5520 = vmatpush1.bf16.msra.mxu0 0
      %5521 = vmatprep.subr.bf16.mxu0 0
      %5522 = vmatpush1.bf16.msra.mxu0 0
      %5523 = vmatprep.subr.bf16.mxu0 0
      %5524 = vmatpush1.bf16.msra.mxu0 0
      %5525 = vmatprep.subr.bf16.mxu0 0
      %5526 = vmatpush1.bf16.msra.mxu0 0
      %5527 = vmatprep.subr.bf16.mxu0 0
      %5528 = vmatpush1.bf16.msra.mxu0 %v5511
      %5529 = vmatprep.subr.bf16.mxu0 0
      %5530 = vmatpush2.bf16.msra.mxu0 0
      %5531 = vmatprep.subr.bf16.mxu0 0
      %5532 = vmatpush2.bf16.msra.mxu0 0
      %5533 = vmatprep.subr.bf16.mxu0 0
      %5534 = vmatpush2.bf16.msra.mxu0 0
      %5535 = vmatprep.subr.bf16.mxu0 0
      %5536 = vmatpush2.bf16.msra.mxu0 0
      %5537 = vmatprep.subr.bf16.mxu0 0
      %5538 = vmatpush2.bf16.msra.mxu0 0
      %5539 = vmatprep.subr.bf16.mxu0 0
      %5540 = vmatpush2.bf16.msra.mxu0 0
      %5541 = vmatprep.subr.bf16.mxu0 0
      %5542 = vmatpush2.bf16.msra.mxu0 0
      %5543 = vmatprep.subr.bf16.mxu0 0
      %5544 = vmatpush2.bf16.msra.mxu0 0
      %5545 = vmatprep.mubr.bf16.mxu0 0
      %5546 = vmatmul.mubr.bf16.gmra.mxu0 %v5463
      %v5547 = vpop.f32.mrf.mxu0
      %v5548 = vadd.f32 0.0, %v5547
      %v5549 = vpop.f32.mrf.mxu0
      %v5550 = vpop.f32.mrf.mxu0
      %v5551 = vadd.f32 0.0, %v5550
      %v5552 = vpop.f32.mrf.mxu0
      %5553 = vmatprep.mubr.bf16.mxu0 0
      %5554 = vmatmul.mubr.bf16.gmra.mxu0 %v5466
      %v5555 = vpop.f32.mrf.mxu0
      %v5556 = vadd.f32 0.0, %v5555
      %v5557 = vpop.f32.mrf.mxu0
      %v5558 = vpop.f32.mrf.mxu0
      %v5559 = vadd.f32 0.0, %v5558
      %v5560 = vpop.f32.mrf.mxu0
      %5561 = vmatprep.mubr.bf16.mxu0 0
      %5562 = vmatmul.mubr.bf16.gmra.mxu0 %v5469
      %v5563 = vpop.f32.mrf.mxu0
      %v5564 = vadd.f32 0.0, %v5563
      %v5565 = vpop.f32.mrf.mxu0
      %v5566 = vpop.f32.mrf.mxu0
      %v5567 = vadd.f32 0.0, %v5566
      %v5568 = vpop.f32.mrf.mxu0
      %5569 = vmatprep.mubr.bf16.mxu0 0
      %5570 = vmatmul.mubr.bf16.gmra.mxu0 %v5472
      %v5571 = vpop.f32.mrf.mxu0
      %v5572 = vadd.f32 0.0, %v5571
      %v5573 = vpop.f32.mrf.mxu0
      %v5574 = vpop.f32.mrf.mxu0
      %v5575 = vadd.f32 0.0, %v5574
      %v5576 = vpop.f32.mrf.mxu0
      %5577 = vmatprep.mubr.bf16.mxu0 0
      %5578 = vmatmul.mubr.bf16.gmra.mxu0 %v5475
      %v5579 = vpop.f32.mrf.mxu0
      %v5580 = vadd.f32 0.0, %v5579
      %v5581 = vpop.f32.mrf.mxu0
      %v5582 = vpop.f32.mrf.mxu0
      %v5583 = vadd.f32 0.0, %v5582
      %v5584 = vpop.f32.mrf.mxu0
      %5585 = vmatprep.mubr.bf16.mxu0 0
      %5586 = vmatmul.mubr.bf16.gmra.mxu0 %v5478
      %v5587 = vpop.f32.mrf.mxu0
      %v5588 = vadd.f32 0.0, %v5587
      %v5589 = vpop.f32.mrf.mxu0
      %v5590 = vpop.f32.mrf.mxu0
      %v5591 = vadd.f32 0.0, %v5590
      %v5592 = vpop.f32.mrf.mxu0
      %5593 = vmatprep.mubr.bf16.mxu0 0
      %5594 = vmatmul.mubr.bf16.gmra.mxu0 %v5481
      %v5595 = vpop.f32.mrf.mxu0
      %v5596 = vadd.f32 0.0, %v5595
      %v5597 = vpop.f32.mrf.mxu0
      %v5598 = vpop.f32.mrf.mxu0
      %v5599 = vadd.f32 0.0, %v5598
      %v5600 = vpop.f32.mrf.mxu0
      %5601 = vmatprep.mubr.bf16.mxu0 0
      %5602 = vmatmul.mubr.bf16.gmra.mxu0 %v5484
      %v5603 = vpop.f32.mrf.mxu0
      %v5604 = vadd.f32 0.0, %v5603
      %v5605 = vpop.f32.mrf.mxu0
      %v5606 = vpop.f32.mrf.mxu0
      %v5607 = vadd.f32 0.0, %v5606
      %v5608 = vpop.f32.mrf.mxu0
      %5609 = vmatprep.mubr.bf16.mxu0 0
      %5610 = vmatmul.mubr.bf16.gmra.mxu0 %v5487
      %v5611 = vpop.f32.mrf.mxu0
      %v5612 = vadd.f32 0.0, %v5611
      %v5613 = vpop.f32.mrf.mxu0
      %v5614 = vpop.f32.mrf.mxu0
      %v5615 = vadd.f32 0.0, %v5614
      %v5616 = vpop.f32.mrf.mxu0
      %5617 = vmatprep.mubr.bf16.mxu0 0
      %5618 = vmatmul.mubr.bf16.gmra.mxu0 %v5490
      %v5619 = vpop.f32.mrf.mxu0
      %v5620 = vadd.f32 0.0, %v5619
      %v5621 = vpop.f32.mrf.mxu0
      %v5622 = vpop.f32.mrf.mxu0
      %v5623 = vadd.f32 0.0, %v5622
      %v5624 = vpop.f32.mrf.mxu0
      %5625 = vmatprep.mubr.bf16.mxu0 0
      %5626 = vmatmul.mubr.bf16.gmra.mxu0 %v5493
      %v5627 = vpop.f32.mrf.mxu0
      %v5628 = vadd.f32 0.0, %v5627
      %v5629 = vpop.f32.mrf.mxu0
      %v5630 = vpop.f32.mrf.mxu0
      %v5631 = vadd.f32 0.0, %v5630
      %v5632 = vpop.f32.mrf.mxu0
      %5633 = vmatprep.mubr.bf16.mxu0 0
      %5634 = vmatmul.mubr.bf16.gmra.mxu0 %v5496
      %v5635 = vpop.f32.mrf.mxu0
      %v5636 = vadd.f32 0.0, %v5635
      %v5637 = vpop.f32.mrf.mxu0
      %v5638 = vpop.f32.mrf.mxu0
      %v5639 = vadd.f32 0.0, %v5638
      %v5640 = vpop.f32.mrf.mxu0
      %5641 = vmatprep.mubr.bf16.mxu0 0
      %5642 = vmatmul.mubr.bf16.gmra.mxu0 %v5499
      %v5643 = vpop.f32.mrf.mxu0
      %v5644 = vadd.f32 0.0, %v5643
      %v5645 = vpop.f32.mrf.mxu0
      %v5646 = vpop.f32.mrf.mxu0
      %v5647 = vadd.f32 0.0, %v5646
      %v5648 = vpop.f32.mrf.mxu0
      %5649 = vmatprep.mubr.bf16.mxu0 0
      %5650 = vmatmul.mubr.bf16.gmra.mxu0 %v5502
      %v5651 = vpop.f32.mrf.mxu0
      %v5652 = vadd.f32 0.0, %v5651
      %v5653 = vpop.f32.mrf.mxu0
      %v5654 = vpop.f32.mrf.mxu0
      %v5655 = vadd.f32 0.0, %v5654
      %v5656 = vpop.f32.mrf.mxu0
      %5657 = vmatprep.mubr.bf16.mxu0 0
      %5658 = vmatmul.mubr.bf16.gmra.mxu0 %v5505
      %v5659 = vpop.f32.mrf.mxu0
      %v5660 = vadd.f32 0.0, %v5659
      %v5661 = vpop.f32.mrf.mxu0
      %v5662 = vpop.f32.mrf.mxu0
      %v5663 = vadd.f32 0.0, %v5662
      %v5664 = vpop.f32.mrf.mxu0
      %5665 = vmatprep.mubr.bf16.mxu0 0
      %5666 = vmatmul.mubr.bf16.gmra.mxu0 %v5508
      %v5667 = vpop.f32.mrf.mxu0
      %v5668 = vadd.f32 0.0, %v5667
      %v5669 = vpop.f32.mrf.mxu0
      %v5670 = vpop.f32.mrf.mxu0
      %v5671 = vadd.f32 0.0, %v5670
      %v5672 = vpop.f32.mrf.mxu0
      %5673 = vdwg.mxu0
      %v5674 = vadd.f32 %v5227, %v5548
      %v5675 = vadd.f32 %v5228, %v5551
      %v5676 = vadd.f32 %v5229, %v5556
      %v5677 = vadd.f32 %v5230, %v5559
      %v5678 = vadd.f32 %v5231, %v5564
      %v5679 = vadd.f32 %v5232, %v5567
      %v5680 = vadd.f32 %v5233, %v5572
      %v5681 = vadd.f32 %v5234, %v5575
      %v5682 = vadd.f32 %v5235, %v5580
      %v5683 = vadd.f32 %v5236, %v5583
      %v5684 = vadd.f32 %v5237, %v5588
      %v5685 = vadd.f32 %v5238, %v5591
      %v5686 = vadd.f32 %v5239, %v5596
      %v5687 = vadd.f32 %v5240, %v5599
      %v5688 = vadd.f32 %v5241, %v5604
      %v5689 = vadd.f32 %v5242, %v5607
      %v5690 = vadd.f32 %v5243, %v5612
      %v5691 = vadd.f32 %v5244, %v5615
      %v5692 = vadd.f32 %v5245, %v5620
      %v5693 = vadd.f32 %v5246, %v5623
      %v5694 = vadd.f32 %v5247, %v5628
      %v5695 = vadd.f32 %v5248, %v5631
      %v5696 = vadd.f32 %v5249, %v5636
      %v5697 = vadd.f32 %v5250, %v5639
      %v5698 = vadd.f32 %v5251, %v5644
      %v5699 = vadd.f32 %v5252, %v5647
      %v5700 = vadd.f32 %v5253, %v5652
      %v5701 = vadd.f32 %v5254, %v5655
      %v5702 = vadd.f32 %v5255, %v5660
      %v5703 = vadd.f32 %v5256, %v5663
      %v5704 = vadd.f32 %v5257, %v5668
      %v5705 = vadd.f32 %v5258, %v5671
      %s5706 = scalar_lea.vmem %s6, 8
      %v5707 = vld [vmem:[%s5706] sm:$0x3]
      %v5708 = vpack.c.bf16 %v4211, %v4210
      %v5710 = vsel %vm724, %v5708, 0
      %v5713 = vsel %vm773, %v5707, 0
      %5715 = vmatprep.subr.bf16.mxu0 0
      %5716 = vmatpush1.bf16.msra.mxu0 0
      %5717 = vmatprep.subr.bf16.mxu0 0
      %5718 = vmatpush1.bf16.msra.mxu0 0
      %5719 = vmatprep.subr.bf16.mxu0 0
      %5720 = vmatpush1.bf16.msra.mxu0 0
      %5721 = vmatprep.subr.bf16.mxu0 0
      %5722 = vmatpush1.bf16.msra.mxu0 0
      %5723 = vmatprep.subr.bf16.mxu0 0
      %5724 = vmatpush1.bf16.msra.mxu0 0
      %5725 = vmatprep.subr.bf16.mxu0 0
      %5726 = vmatpush1.bf16.msra.mxu0 0
      %5727 = vmatprep.subr.bf16.mxu0 0
      %5728 = vmatpush1.bf16.msra.mxu0 0
      %5729 = vmatprep.subr.bf16.mxu0 0
      %5730 = vmatpush1.bf16.msra.mxu0 %v5713
      %5731 = vmatprep.subr.bf16.mxu0 0
      %5732 = vmatpush2.bf16.msra.mxu0 0
      %5733 = vmatprep.subr.bf16.mxu0 0
      %5734 = vmatpush2.bf16.msra.mxu0 0
      %5735 = vmatprep.subr.bf16.mxu0 0
      %5736 = vmatpush2.bf16.msra.mxu0 0
      %5737 = vmatprep.subr.bf16.mxu0 0
      %5738 = vmatpush2.bf16.msra.mxu0 0
      %5739 = vmatprep.subr.bf16.mxu0 0
      %5740 = vmatpush2.bf16.msra.mxu0 0
      %5741 = vmatprep.subr.bf16.mxu0 0
      %5742 = vmatpush2.bf16.msra.mxu0 0
      %5743 = vmatprep.subr.bf16.mxu0 0
      %5744 = vmatpush2.bf16.msra.mxu0 0
      %5745 = vmatprep.subr.bf16.mxu0 0
      %5746 = vmatpush2.bf16.msra.mxu0 0
      %5747 = vmatprep.mubr.bf16.mxu0 0
      %5748 = vmatmul.mubr.bf16.gmra.mxu0 %v4277
      %v5749 = vpop.f32.mrf.mxu0
      %v5750 = vadd.f32 0.0, %v5749
      %v5751 = vpop.f32.mrf.mxu0
      %v5752 = vpop.f32.mrf.mxu0
      %v5753 = vadd.f32 0.0, %v5752
      %v5754 = vpop.f32.mrf.mxu0
      %5755 = vmatprep.mubr.bf16.mxu0 0
      %5756 = vmatmul.mubr.bf16.gmra.mxu0 %v4280
      %v5757 = vpop.f32.mrf.mxu0
      %v5758 = vadd.f32 0.0, %v5757
      %v5759 = vpop.f32.mrf.mxu0
      %v5760 = vpop.f32.mrf.mxu0
      %v5761 = vadd.f32 0.0, %v5760
      %v5762 = vpop.f32.mrf.mxu0
      %5763 = vmatprep.mubr.bf16.mxu0 0
      %5764 = vmatmul.mubr.bf16.gmra.mxu0 %v4283
      %v5765 = vpop.f32.mrf.mxu0
      %v5766 = vadd.f32 0.0, %v5765
      %v5767 = vpop.f32.mrf.mxu0
      %v5768 = vpop.f32.mrf.mxu0
      %v5769 = vadd.f32 0.0, %v5768
      %v5770 = vpop.f32.mrf.mxu0
      %5771 = vmatprep.mubr.bf16.mxu0 0
      %5772 = vmatmul.mubr.bf16.gmra.mxu0 %v4286
      %v5773 = vpop.f32.mrf.mxu0
      %v5774 = vadd.f32 0.0, %v5773
      %v5775 = vpop.f32.mrf.mxu0
      %v5776 = vpop.f32.mrf.mxu0
      %v5777 = vadd.f32 0.0, %v5776
      %v5778 = vpop.f32.mrf.mxu0
      %5779 = vmatprep.mubr.bf16.mxu0 0
      %5780 = vmatmul.mubr.bf16.gmra.mxu0 %v4289
      %v5781 = vpop.f32.mrf.mxu0
      %v5782 = vadd.f32 0.0, %v5781
      %v5783 = vpop.f32.mrf.mxu0
      %v5784 = vpop.f32.mrf.mxu0
      %v5785 = vadd.f32 0.0, %v5784
      %v5786 = vpop.f32.mrf.mxu0
      %5787 = vmatprep.mubr.bf16.mxu0 0
      %5788 = vmatmul.mubr.bf16.gmra.mxu0 %v4292
      %v5789 = vpop.f32.mrf.mxu0
      %v5790 = vadd.f32 0.0, %v5789
      %v5791 = vpop.f32.mrf.mxu0
      %v5792 = vpop.f32.mrf.mxu0
      %v5793 = vadd.f32 0.0, %v5792
      %v5794 = vpop.f32.mrf.mxu0
      %5795 = vmatprep.mubr.bf16.mxu0 0
      %5796 = vmatmul.mubr.bf16.gmra.mxu0 %v4295
      %v5797 = vpop.f32.mrf.mxu0
      %v5798 = vadd.f32 0.0, %v5797
      %v5799 = vpop.f32.mrf.mxu0
      %v5800 = vpop.f32.mrf.mxu0
      %v5801 = vadd.f32 0.0, %v5800
      %v5802 = vpop.f32.mrf.mxu0
      %5803 = vmatprep.mubr.bf16.mxu0 0
      %5804 = vmatmul.mubr.bf16.gmra.mxu0 %v4298
      %v5805 = vpop.f32.mrf.mxu0
      %v5806 = vadd.f32 0.0, %v5805
      %v5807 = vpop.f32.mrf.mxu0
      %v5808 = vpop.f32.mrf.mxu0
      %v5809 = vadd.f32 0.0, %v5808
      %v5810 = vpop.f32.mrf.mxu0
      %5811 = vmatprep.mubr.bf16.mxu0 0
      %5812 = vmatmul.mubr.bf16.gmra.mxu0 %v4301
      %v5813 = vpop.f32.mrf.mxu0
      %v5814 = vadd.f32 0.0, %v5813
      %v5815 = vpop.f32.mrf.mxu0
      %v5816 = vpop.f32.mrf.mxu0
      %v5817 = vadd.f32 0.0, %v5816
      %v5818 = vpop.f32.mrf.mxu0
      %5819 = vmatprep.mubr.bf16.mxu0 0
      %5820 = vmatmul.mubr.bf16.gmra.mxu0 %v4304
      %v5821 = vpop.f32.mrf.mxu0
      %v5822 = vadd.f32 0.0, %v5821
      %v5823 = vpop.f32.mrf.mxu0
      %v5824 = vpop.f32.mrf.mxu0
      %v5825 = vadd.f32 0.0, %v5824
      %v5826 = vpop.f32.mrf.mxu0
      %5827 = vmatprep.mubr.bf16.mxu0 0
      %5828 = vmatmul.mubr.bf16.gmra.mxu0 %v4307
      %v5829 = vpop.f32.mrf.mxu0
      %v5830 = vadd.f32 0.0, %v5829
      %v5831 = vpop.f32.mrf.mxu0
      %v5832 = vpop.f32.mrf.mxu0
      %v5833 = vadd.f32 0.0, %v5832
      %v5834 = vpop.f32.mrf.mxu0
      %5835 = vmatprep.mubr.bf16.mxu0 0
      %5836 = vmatmul.mubr.bf16.gmra.mxu0 %v4310
      %v5837 = vpop.f32.mrf.mxu0
      %v5838 = vadd.f32 0.0, %v5837
      %v5839 = vpop.f32.mrf.mxu0
      %v5840 = vpop.f32.mrf.mxu0
      %v5841 = vadd.f32 0.0, %v5840
      %v5842 = vpop.f32.mrf.mxu0
      %5843 = vmatprep.mubr.bf16.mxu0 0
      %5844 = vmatmul.mubr.bf16.gmra.mxu0 %v4313
      %v5845 = vpop.f32.mrf.mxu0
      %v5846 = vadd.f32 0.0, %v5845
      %v5847 = vpop.f32.mrf.mxu0
      %v5848 = vpop.f32.mrf.mxu0
      %v5849 = vadd.f32 0.0, %v5848
      %v5850 = vpop.f32.mrf.mxu0
      %5851 = vmatprep.mubr.bf16.mxu0 0
      %5852 = vmatmul.mubr.bf16.gmra.mxu0 %v4316
      %v5853 = vpop.f32.mrf.mxu0
      %v5854 = vadd.f32 0.0, %v5853
      %v5855 = vpop.f32.mrf.mxu0
      %v5856 = vpop.f32.mrf.mxu0
      %v5857 = vadd.f32 0.0, %v5856
      %v5858 = vpop.f32.mrf.mxu0
      %5859 = vmatprep.mubr.bf16.mxu0 0
      %5860 = vmatmul.mubr.bf16.gmra.mxu0 %v4319
      %v5861 = vpop.f32.mrf.mxu0
      %v5862 = vadd.f32 0.0, %v5861
      %v5863 = vpop.f32.mrf.mxu0
      %v5864 = vpop.f32.mrf.mxu0
      %v5865 = vadd.f32 0.0, %v5864
      %v5866 = vpop.f32.mrf.mxu0
      %5867 = vmatprep.mubr.bf16.mxu0 0
      %5868 = vmatmul.mubr.bf16.gmra.mxu0 %v5710
      %v5869 = vpop.f32.mrf.mxu0
      %v5870 = vadd.f32 0.0, %v5869
      %v5871 = vpop.f32.mrf.mxu0
      %v5872 = vpop.f32.mrf.mxu0
      %v5873 = vadd.f32 0.0, %v5872
      %v5874 = vpop.f32.mrf.mxu0
      %5875 = vdwg.mxu0
      %v5876 = vadd.f32 %v5674, %v5750
      %v5877 = vadd.f32 %v5675, %v5753
      %v5878 = vadd.f32 %v5676, %v5758
      %v5879 = vadd.f32 %v5677, %v5761
      %v5880 = vadd.f32 %v5678, %v5766
      %v5881 = vadd.f32 %v5679, %v5769
      %v5882 = vadd.f32 %v5680, %v5774
      %v5883 = vadd.f32 %v5681, %v5777
      %v5884 = vadd.f32 %v5682, %v5782
      %v5885 = vadd.f32 %v5683, %v5785
      %v5886 = vadd.f32 %v5684, %v5790
      %v5887 = vadd.f32 %v5685, %v5793
      %v5888 = vadd.f32 %v5686, %v5798
      %v5889 = vadd.f32 %v5687, %v5801
      %v5890 = vadd.f32 %v5688, %v5806
      %v5891 = vadd.f32 %v5689, %v5809
      %v5892 = vadd.f32 %v5690, %v5814
      %v5893 = vadd.f32 %v5691, %v5817
      %v5894 = vadd.f32 %v5692, %v5822
      %v5895 = vadd.f32 %v5693, %v5825
      %v5896 = vadd.f32 %v5694, %v5830
      %v5897 = vadd.f32 %v5695, %v5833
      %v5898 = vadd.f32 %v5696, %v5838
      %v5899 = vadd.f32 %v5697, %v5841
      %v5900 = vadd.f32 %v5698, %v5846
      %v5901 = vadd.f32 %v5699, %v5849
      %v5902 = vadd.f32 %v5700, %v5854
      %v5903 = vadd.f32 %v5701, %v5857
      %v5904 = vadd.f32 %v5702, %v5862
      %v5905 = vadd.f32 %v5703, %v5865
      %v5906 = vadd.f32 %v5704, %v5870
      %v5907 = vadd.f32 %v5705, %v5873
      %v5908 = vmul.f32 %v4180, %v1432
      %v5909 = vmul.f32 %v4181, %v1434
      %v5910 = vmul.f32 %v4182, %v1436
      %v5911 = vmul.f32 %v4183, %v1438
      %v5912 = vmul.f32 %v4184, %v1440
      %v5913 = vmul.f32 %v4185, %v1442
      %v5914 = vmul.f32 %v4186, %v1444
      %v5915 = vmul.f32 %v4187, %v1446
      %v5916 = vmul.f32 %v4188, %v1448
      %v5917 = vmul.f32 %v4189, %v1450
      %v5918 = vmul.f32 %v4190, %v1452
      %v5919 = vmul.f32 %v4191, %v1454
      %v5920 = vmul.f32 %v4192, %v1456
      %v5921 = vmul.f32 %v4193, %v1458
      %v5922 = vmul.f32 %v4194, %v1460
      %v5923 = vmul.f32 %v4195, %v1462
      %v5924 = vmul.f32 %v4196, %v1464
      %v5925 = vmul.f32 %v4197, %v1466
      %v5926 = vmul.f32 %v4198, %v1468
      %v5927 = vmul.f32 %v4199, %v1470
      %v5928 = vmul.f32 %v4200, %v1472
      %v5929 = vmul.f32 %v4201, %v1474
      %v5930 = vmul.f32 %v4202, %v1476
      %v5931 = vmul.f32 %v4203, %v1478
      %v5932 = vmul.f32 %v4204, %v1480
      %v5933 = vmul.f32 %v4205, %v1482
      %v5934 = vmul.f32 %v4206, %v1484
      %v5935 = vmul.f32 %v4207, %v1486
      %v5936 = vmul.f32 %v4208, %v1488
      %v5937 = vmul.f32 %v4209, %v1490
      %v5938 = vmul.f32 %v4210, %v1492
      %v5939 = vmul.f32 %v4211, %v1494
      %s5940 = scalar_lea.vmem %s6, 10
      %v5941 = vld [vmem:[%s5940] sm:$0x3]
      %v5942 = vpack.c.bf16 %v5909, %v5908
      %v5943 = vpack.c.bf16 %v5911, %v5910
      %v5944 = vpack.c.bf16 %v5913, %v5912
      %v5945 = vpack.c.bf16 %v5915, %v5914
      %v5946 = vpack.c.bf16 %v5917, %v5916
      %v5947 = vpack.c.bf16 %v5919, %v5918
      %v5948 = vpack.c.bf16 %v5921, %v5920
      %v5949 = vpack.c.bf16 %v5923, %v5922
      %v5950 = vpack.c.bf16 %v5925, %v5924
      %v5951 = vpack.c.bf16 %v5927, %v5926
      %v5952 = vpack.c.bf16 %v5929, %v5928
      %v5953 = vpack.c.bf16 %v5931, %v5930
      %v5954 = vpack.c.bf16 %v5933, %v5932
      %v5955 = vpack.c.bf16 %v5935, %v5934
      %v5956 = vpack.c.bf16 %v5937, %v5936
      %v5957 = vpack.c.bf16 %v5939, %v5938
      %v5959 = vshrl.u32 %v5942, 16
      %v5961 = vshll.u32 %v5942, 16
      %v5963 = vrot.slane %v5961, 1
      %v5964 = vor.u32 %v5959, %v5963
      %v5966 = vshll.u32 %v5943, 16
      %v5968 = vrot.slane %v5966, 1
      %v5969 = vsel %vm1580, %v5964, %v5968
      %v5970 = vshrl.u32 %v5943, 16
      %v5972 = vor.u32 %v5970, %v5968
      %v5974 = vshll.u32 %v5944, 16
      %v5976 = vrot.slane %v5974, 1
      %v5977 = vsel %vm1580, %v5972, %v5976
      %v5978 = vshrl.u32 %v5944, 16
      %v5980 = vor.u32 %v5978, %v5976
      %v5982 = vshll.u32 %v5945, 16
      %v5984 = vrot.slane %v5982, 1
      %v5985 = vsel %vm1580, %v5980, %v5984
      %v5986 = vshrl.u32 %v5945, 16
      %v5988 = vor.u32 %v5986, %v5984
      %v5990 = vshll.u32 %v5946, 16
      %v5992 = vrot.slane %v5990, 1
      %v5993 = vsel %vm1580, %v5988, %v5992
      %v5994 = vshrl.u32 %v5946, 16
      %v5996 = vor.u32 %v5994, %v5992
      %v5998 = vshll.u32 %v5947, 16
      %v6000 = vrot.slane %v5998, 1
      %v6001 = vsel %vm1580, %v5996, %v6000
      %v6002 = vshrl.u32 %v5947, 16
      %v6004 = vor.u32 %v6002, %v6000
      %v6006 = vshll.u32 %v5948, 16
      %v6008 = vrot.slane %v6006, 1
      %v6009 = vsel %vm1580, %v6004, %v6008
      %v6010 = vshrl.u32 %v5948, 16
      %v6012 = vor.u32 %v6010, %v6008
      %v6014 = vshll.u32 %v5949, 16
      %v6016 = vrot.slane %v6014, 1
      %v6017 = vsel %vm1580, %v6012, %v6016
      %v6018 = vshrl.u32 %v5949, 16
      %v6020 = vor.u32 %v6018, %v6016
      %v6022 = vshll.u32 %v5950, 16
      %v6024 = vrot.slane %v6022, 1
      %v6025 = vsel %vm1580, %v6020, %v6024
      %v6026 = vshrl.u32 %v5950, 16
      %v6028 = vor.u32 %v6026, %v6024
      %v6030 = vshll.u32 %v5951, 16
      %v6032 = vrot.slane %v6030, 1
      %v6033 = vsel %vm1580, %v6028, %v6032
      %v6034 = vshrl.u32 %v5951, 16
      %v6036 = vor.u32 %v6034, %v6032
      %v6038 = vshll.u32 %v5952, 16
      %v6040 = vrot.slane %v6038, 1
      %v6041 = vsel %vm1580, %v6036, %v6040
      %v6042 = vshrl.u32 %v5952, 16
      %v6044 = vor.u32 %v6042, %v6040
      %v6046 = vshll.u32 %v5953, 16
      %v6048 = vrot.slane %v6046, 1
      %v6049 = vsel %vm1580, %v6044, %v6048
      %v6050 = vshrl.u32 %v5953, 16
      %v6052 = vor.u32 %v6050, %v6048
      %v6054 = vshll.u32 %v5954, 16
      %v6056 = vrot.slane %v6054, 1
      %v6057 = vsel %vm1580, %v6052, %v6056
      %v6058 = vshrl.u32 %v5954, 16
      %v6060 = vor.u32 %v6058, %v6056
      %v6062 = vshll.u32 %v5955, 16
      %v6064 = vrot.slane %v6062, 1
      %v6065 = vsel %vm1580, %v6060, %v6064
      %v6066 = vshrl.u32 %v5955, 16
      %v6068 = vor.u32 %v6066, %v6064
      %v6070 = vshll.u32 %v5956, 16
      %v6072 = vrot.slane %v6070, 1
      %v6073 = vsel %vm1580, %v6068, %v6072
      %v6074 = vshrl.u32 %v5956, 16
      %v6076 = vor.u32 %v6074, %v6072
      %v6078 = vshll.u32 %v5957, 16
      %v6080 = vrot.slane %v6078, 1
      %v6081 = vsel %vm1580, %v6076, %v6080
      %v6082 = vshrl.u32 %v5957, 16
      %v6084 = vor.u32 %v6082, %v6080
      %v6085 = vsel %vm1580, %v6084, %v2788
      %v6087 = vsel %vm724, %v5969, 0
      %v6090 = vsel %vm724, %v5977, 0
      %v6093 = vsel %vm724, %v5985, 0
      %v6096 = vsel %vm724, %v5993, 0
      %v6099 = vsel %vm724, %v6001, 0
      %v6102 = vsel %vm724, %v6009, 0
      %v6105 = vsel %vm724, %v6017, 0
      %v6108 = vsel %vm724, %v6025, 0
      %v6111 = vsel %vm724, %v6033, 0
      %v6114 = vsel %vm724, %v6041, 0
      %v6117 = vsel %vm724, %v6049, 0
      %v6120 = vsel %vm724, %v6057, 0
      %v6123 = vsel %vm724, %v6065, 0
      %v6126 = vsel %vm724, %v6073, 0
      %v6129 = vsel %vm724, %v6081, 0
      %v6132 = vsel %vm724, %v6085, 0
      %v6135 = vsel %vm773, %v5941, 0
      %6137 = vmatprep.subr.bf16.mxu0 0
      %6138 = vmatpush1.bf16.msra.mxu0 0
      %6139 = vmatprep.subr.bf16.mxu0 0
      %6140 = vmatpush1.bf16.msra.mxu0 0
      %6141 = vmatprep.subr.bf16.mxu0 0
      %6142 = vmatpush1.bf16.msra.mxu0 0
      %6143 = vmatprep.subr.bf16.mxu0 0
      %6144 = vmatpush1.bf16.msra.mxu0 0
      %6145 = vmatprep.subr.bf16.mxu0 0
      %6146 = vmatpush1.bf16.msra.mxu0 0
      %6147 = vmatprep.subr.bf16.mxu0 0
      %6148 = vmatpush1.bf16.msra.mxu0 0
      %6149 = vmatprep.subr.bf16.mxu0 0
      %6150 = vmatpush1.bf16.msra.mxu0 0
      %6151 = vmatprep.subr.bf16.mxu0 0
      %6152 = vmatpush1.bf16.msra.mxu0 %v6135
      %6153 = vmatprep.subr.bf16.mxu0 0
      %6154 = vmatpush2.bf16.msra.mxu0 0
      %6155 = vmatprep.subr.bf16.mxu0 0
      %6156 = vmatpush2.bf16.msra.mxu0 0
      %6157 = vmatprep.subr.bf16.mxu0 0
      %6158 = vmatpush2.bf16.msra.mxu0 0
      %6159 = vmatprep.subr.bf16.mxu0 0
      %6160 = vmatpush2.bf16.msra.mxu0 0
      %6161 = vmatprep.subr.bf16.mxu0 0
      %6162 = vmatpush2.bf16.msra.mxu0 0
      %6163 = vmatprep.subr.bf16.mxu0 0
      %6164 = vmatpush2.bf16.msra.mxu0 0
      %6165 = vmatprep.subr.bf16.mxu0 0
      %6166 = vmatpush2.bf16.msra.mxu0 0
      %6167 = vmatprep.subr.bf16.mxu0 0
      %6168 = vmatpush2.bf16.msra.mxu0 0
      %6169 = vmatprep.mubr.bf16.mxu0 0
      %6170 = vmatmul.mubr.bf16.gmra.mxu0 %v6087
      %v6171 = vpop.f32.mrf.mxu0
      %v6172 = vadd.f32 0.0, %v6171
      %v6173 = vpop.f32.mrf.mxu0
      %v6174 = vpop.f32.mrf.mxu0
      %v6175 = vadd.f32 0.0, %v6174
      %v6176 = vpop.f32.mrf.mxu0
      %6177 = vmatprep.mubr.bf16.mxu0 0
      %6178 = vmatmul.mubr.bf16.gmra.mxu0 %v6090
      %v6179 = vpop.f32.mrf.mxu0
      %v6180 = vadd.f32 0.0, %v6179
      %v6181 = vpop.f32.mrf.mxu0
      %v6182 = vpop.f32.mrf.mxu0
      %v6183 = vadd.f32 0.0, %v6182
      %v6184 = vpop.f32.mrf.mxu0
      %6185 = vmatprep.mubr.bf16.mxu0 0
      %6186 = vmatmul.mubr.bf16.gmra.mxu0 %v6093
      %v6187 = vpop.f32.mrf.mxu0
      %v6188 = vadd.f32 0.0, %v6187
      %v6189 = vpop.f32.mrf.mxu0
      %v6190 = vpop.f32.mrf.mxu0
      %v6191 = vadd.f32 0.0, %v6190
      %v6192 = vpop.f32.mrf.mxu0
      %6193 = vmatprep.mubr.bf16.mxu0 0
      %6194 = vmatmul.mubr.bf16.gmra.mxu0 %v6096
      %v6195 = vpop.f32.mrf.mxu0
      %v6196 = vadd.f32 0.0, %v6195
      %v6197 = vpop.f32.mrf.mxu0
      %v6198 = vpop.f32.mrf.mxu0
      %v6199 = vadd.f32 0.0, %v6198
      %v6200 = vpop.f32.mrf.mxu0
      %6201 = vmatprep.mubr.bf16.mxu0 0
      %6202 = vmatmul.mubr.bf16.gmra.mxu0 %v6099
      %v6203 = vpop.f32.mrf.mxu0
      %v6204 = vadd.f32 0.0, %v6203
      %v6205 = vpop.f32.mrf.mxu0
      %v6206 = vpop.f32.mrf.mxu0
      %v6207 = vadd.f32 0.0, %v6206
      %v6208 = vpop.f32.mrf.mxu0
      %6209 = vmatprep.mubr.bf16.mxu0 0
      %6210 = vmatmul.mubr.bf16.gmra.mxu0 %v6102
      %v6211 = vpop.f32.mrf.mxu0
      %v6212 = vadd.f32 0.0, %v6211
      %v6213 = vpop.f32.mrf.mxu0
      %v6214 = vpop.f32.mrf.mxu0
      %v6215 = vadd.f32 0.0, %v6214
      %v6216 = vpop.f32.mrf.mxu0
      %6217 = vmatprep.mubr.bf16.mxu0 0
      %6218 = vmatmul.mubr.bf16.gmra.mxu0 %v6105
      %v6219 = vpop.f32.mrf.mxu0
      %v6220 = vadd.f32 0.0, %v6219
      %v6221 = vpop.f32.mrf.mxu0
      %v6222 = vpop.f32.mrf.mxu0
      %v6223 = vadd.f32 0.0, %v6222
      %v6224 = vpop.f32.mrf.mxu0
      %6225 = vmatprep.mubr.bf16.mxu0 0
      %6226 = vmatmul.mubr.bf16.gmra.mxu0 %v6108
      %v6227 = vpop.f32.mrf.mxu0
      %v6228 = vadd.f32 0.0, %v6227
      %v6229 = vpop.f32.mrf.mxu0
      %v6230 = vpop.f32.mrf.mxu0
      %v6231 = vadd.f32 0.0, %v6230
      %v6232 = vpop.f32.mrf.mxu0
      %6233 = vmatprep.mubr.bf16.mxu0 0
      %6234 = vmatmul.mubr.bf16.gmra.mxu0 %v6111
      %v6235 = vpop.f32.mrf.mxu0
      %v6236 = vadd.f32 0.0, %v6235
      %v6237 = vpop.f32.mrf.mxu0
      %v6238 = vpop.f32.mrf.mxu0
      %v6239 = vadd.f32 0.0, %v6238
      %v6240 = vpop.f32.mrf.mxu0
      %6241 = vmatprep.mubr.bf16.mxu0 0
      %6242 = vmatmul.mubr.bf16.gmra.mxu0 %v6114
      %v6243 = vpop.f32.mrf.mxu0
      %v6244 = vadd.f32 0.0, %v6243
      %v6245 = vpop.f32.mrf.mxu0
      %v6246 = vpop.f32.mrf.mxu0
      %v6247 = vadd.f32 0.0, %v6246
      %v6248 = vpop.f32.mrf.mxu0
      %6249 = vmatprep.mubr.bf16.mxu0 0
      %6250 = vmatmul.mubr.bf16.gmra.mxu0 %v6117
      %v6251 = vpop.f32.mrf.mxu0
      %v6252 = vadd.f32 0.0, %v6251
      %v6253 = vpop.f32.mrf.mxu0
      %v6254 = vpop.f32.mrf.mxu0
      %v6255 = vadd.f32 0.0, %v6254
      %v6256 = vpop.f32.mrf.mxu0
      %6257 = vmatprep.mubr.bf16.mxu0 0
      %6258 = vmatmul.mubr.bf16.gmra.mxu0 %v6120
      %v6259 = vpop.f32.mrf.mxu0
      %v6260 = vadd.f32 0.0, %v6259
      %v6261 = vpop.f32.mrf.mxu0
      %v6262 = vpop.f32.mrf.mxu0
      %v6263 = vadd.f32 0.0, %v6262
      %v6264 = vpop.f32.mrf.mxu0
      %6265 = vmatprep.mubr.bf16.mxu0 0
      %6266 = vmatmul.mubr.bf16.gmra.mxu0 %v6123
      %v6267 = vpop.f32.mrf.mxu0
      %v6268 = vadd.f32 0.0, %v6267
      %v6269 = vpop.f32.mrf.mxu0
      %v6270 = vpop.f32.mrf.mxu0
      %v6271 = vadd.f32 0.0, %v6270
      %v6272 = vpop.f32.mrf.mxu0
      %6273 = vmatprep.mubr.bf16.mxu0 0
      %6274 = vmatmul.mubr.bf16.gmra.mxu0 %v6126
      %v6275 = vpop.f32.mrf.mxu0
      %v6276 = vadd.f32 0.0, %v6275
      %v6277 = vpop.f32.mrf.mxu0
      %v6278 = vpop.f32.mrf.mxu0
      %v6279 = vadd.f32 0.0, %v6278
      %v6280 = vpop.f32.mrf.mxu0
      %6281 = vmatprep.mubr.bf16.mxu0 0
      %6282 = vmatmul.mubr.bf16.gmra.mxu0 %v6129
      %v6283 = vpop.f32.mrf.mxu0
      %v6284 = vadd.f32 0.0, %v6283
      %v6285 = vpop.f32.mrf.mxu0
      %v6286 = vpop.f32.mrf.mxu0
      %v6287 = vadd.f32 0.0, %v6286
      %v6288 = vpop.f32.mrf.mxu0
      %6289 = vmatprep.mubr.bf16.mxu0 0
      %6290 = vmatmul.mubr.bf16.gmra.mxu0 %v6132
      %v6291 = vpop.f32.mrf.mxu0
      %v6292 = vadd.f32 0.0, %v6291
      %v6293 = vpop.f32.mrf.mxu0
      %v6294 = vpop.f32.mrf.mxu0
      %v6295 = vadd.f32 0.0, %v6294
      %v6296 = vpop.f32.mrf.mxu0
      %6297 = vdwg.mxu0
      %v6298 = vadd.f32 %v5876, %v6172
      %v6299 = vadd.f32 %v5877, %v6175
      %v6300 = vadd.f32 %v5878, %v6180
      %v6301 = vadd.f32 %v5879, %v6183
      %v6302 = vadd.f32 %v5880, %v6188
      %v6303 = vadd.f32 %v5881, %v6191
      %v6304 = vadd.f32 %v5882, %v6196
      %v6305 = vadd.f32 %v5883, %v6199
      %v6306 = vadd.f32 %v5884, %v6204
      %v6307 = vadd.f32 %v5885, %v6207
      %v6308 = vadd.f32 %v5886, %v6212
      %v6309 = vadd.f32 %v5887, %v6215
      %v6310 = vadd.f32 %v5888, %v6220
      %v6311 = vadd.f32 %v5889, %v6223
      %v6312 = vadd.f32 %v5890, %v6228
      %v6313 = vadd.f32 %v5891, %v6231
      %v6314 = vadd.f32 %v5892, %v6236
      %v6315 = vadd.f32 %v5893, %v6239
      %v6316 = vadd.f32 %v5894, %v6244
      %v6317 = vadd.f32 %v5895, %v6247
      %v6318 = vadd.f32 %v5896, %v6252
      %v6319 = vadd.f32 %v5897, %v6255
      %v6320 = vadd.f32 %v5898, %v6260
      %v6321 = vadd.f32 %v5899, %v6263
      %v6322 = vadd.f32 %v5900, %v6268
      %v6323 = vadd.f32 %v5901, %v6271
      %v6324 = vadd.f32 %v5902, %v6276
      %v6325 = vadd.f32 %v5903, %v6279
      %v6326 = vadd.f32 %v5904, %v6284
      %v6327 = vadd.f32 %v5905, %v6287
      %v6328 = vadd.f32 %v5906, %v6292
      %v6329 = vadd.f32 %v5907, %v6295
      %v6330 = vmul.f32 %v4181, %v559
      %v6331 = vmul.f32 %v4182, %v561
      %v6332 = vmul.f32 %v4183, %v563
      %v6333 = vmul.f32 %v4184, %v565
      %v6334 = vmul.f32 %v4185, %v567
      %v6335 = vmul.f32 %v4186, %v569
      %v6336 = vmul.f32 %v4187, %v571
      %v6337 = vmul.f32 %v4188, %v573
      %v6338 = vmul.f32 %v4189, %v575
      %v6339 = vmul.f32 %v4190, %v577
      %v6340 = vmul.f32 %v4191, %v579
      %v6341 = vmul.f32 %v4192, %v581
      %v6342 = vmul.f32 %v4193, %v583
      %v6343 = vmul.f32 %v4194, %v585
      %v6344 = vmul.f32 %v4195, %v587
      %v6345 = vmul.f32 %v4196, %v589
      %v6346 = vmul.f32 %v4197, %v591
      %v6347 = vmul.f32 %v4198, %v593
      %v6348 = vmul.f32 %v4199, %v595
      %v6349 = vmul.f32 %v4200, %v597
      %v6350 = vmul.f32 %v4201, %v599
      %v6351 = vmul.f32 %v4202, %v601
      %v6352 = vmul.f32 %v4203, %v603
      %v6353 = vmul.f32 %v4204, %v605
      %v6354 = vmul.f32 %v4205, %v607
      %v6355 = vmul.f32 %v4206, %v609
      %v6356 = vmul.f32 %v4207, %v611
      %v6357 = vmul.f32 %v4208, %v613
      %v6358 = vmul.f32 %v4209, %v615
      %v6359 = vmul.f32 %v4210, %v617
      %v6360 = vmul.f32 %v4211, %v619
      %s6361 = scalar_lea.vmem %s6, 12
      %v6362 = vld [vmem:[%s6361] sm:$0x3]
      %v6363 = vpack.c.bf16 %v6331, %v6330
      %v6364 = vpack.c.bf16 %v6333, %v6332
      %v6365 = vpack.c.bf16 %v6335, %v6334
      %v6366 = vpack.c.bf16 %v6337, %v6336
      %v6367 = vpack.c.bf16 %v6339, %v6338
      %v6368 = vpack.c.bf16 %v6341, %v6340
      %v6369 = vpack.c.bf16 %v6343, %v6342
      %v6370 = vpack.c.bf16 %v6345, %v6344
      %v6371 = vpack.c.bf16 %v6347, %v6346
      %v6372 = vpack.c.bf16 %v6349, %v6348
      %v6373 = vpack.c.bf16 %v6351, %v6350
      %v6374 = vpack.c.bf16 %v6353, %v6352
      %v6375 = vpack.c.bf16 %v6355, %v6354
      %v6376 = vpack.c.bf16 %v6357, %v6356
      %v6377 = vpack.c.bf16 %v6359, %v6358
      %v6378 = vpack.c.bf16 %v3065, %v6360
      %v6380 = vshrl.u32 %v6363, 16
      %v6382 = vrot.slane %v6380, 3
      %v6383 = vshll.u32 %v6363, 16
      %v6385 = vrot.slane %v6383, 4
      %v6386 = vor.u32 %v6382, %v6385
      %v6388 = vshrl.u32 %v6364, 16
      %v6390 = vrot.slane %v6388, 3
      %v6391 = vshll.u32 %v6364, 16
      %v6393 = vrot.slane %v6391, 4
      %v6394 = vor.u32 %v6390, %v6393
      %v6395 = vsel %vm938, %v6386, %v6394
      %v6397 = vshrl.u32 %v6365, 16
      %v6399 = vrot.slane %v6397, 3
      %v6400 = vshll.u32 %v6365, 16
      %v6402 = vrot.slane %v6400, 4
      %v6403 = vor.u32 %v6399, %v6402
      %v6404 = vsel %vm938, %v6394, %v6403
      %v6406 = vshrl.u32 %v6366, 16
      %v6408 = vrot.slane %v6406, 3
      %v6409 = vshll.u32 %v6366, 16
      %v6411 = vrot.slane %v6409, 4
      %v6412 = vor.u32 %v6408, %v6411
      %v6413 = vsel %vm938, %v6403, %v6412
      %v6415 = vshrl.u32 %v6367, 16
      %v6417 = vrot.slane %v6415, 3
      %v6418 = vshll.u32 %v6367, 16
      %v6420 = vrot.slane %v6418, 4
      %v6421 = vor.u32 %v6417, %v6420
      %v6422 = vsel %vm938, %v6412, %v6421
      %v6424 = vshrl.u32 %v6368, 16
      %v6426 = vrot.slane %v6424, 3
      %v6427 = vshll.u32 %v6368, 16
      %v6429 = vrot.slane %v6427, 4
      %v6430 = vor.u32 %v6426, %v6429
      %v6431 = vsel %vm938, %v6421, %v6430
      %v6433 = vshrl.u32 %v6369, 16
      %v6435 = vrot.slane %v6433, 3
      %v6436 = vshll.u32 %v6369, 16
      %v6438 = vrot.slane %v6436, 4
      %v6439 = vor.u32 %v6435, %v6438
      %v6440 = vsel %vm938, %v6430, %v6439
      %v6442 = vshrl.u32 %v6370, 16
      %v6444 = vrot.slane %v6442, 3
      %v6445 = vshll.u32 %v6370, 16
      %v6447 = vrot.slane %v6445, 4
      %v6448 = vor.u32 %v6444, %v6447
      %v6449 = vsel %vm938, %v6439, %v6448
      %v6451 = vshrl.u32 %v6371, 16
      %v6453 = vrot.slane %v6451, 3
      %v6454 = vshll.u32 %v6371, 16
      %v6456 = vrot.slane %v6454, 4
      %v6457 = vor.u32 %v6453, %v6456
      %v6458 = vsel %vm938, %v6448, %v6457
      %v6460 = vshrl.u32 %v6372, 16
      %v6462 = vrot.slane %v6460, 3
      %v6463 = vshll.u32 %v6372, 16
      %v6465 = vrot.slane %v6463, 4
      %v6466 = vor.u32 %v6462, %v6465
      %v6467 = vsel %vm938, %v6457, %v6466
      %v6469 = vshrl.u32 %v6373, 16
      %v6471 = vrot.slane %v6469, 3
      %v6472 = vshll.u32 %v6373, 16
      %v6474 = vrot.slane %v6472, 4
      %v6475 = vor.u32 %v6471, %v6474
      %v6476 = vsel %vm938, %v6466, %v6475
      %v6478 = vshrl.u32 %v6374, 16
      %v6480 = vrot.slane %v6478, 3
      %v6481 = vshll.u32 %v6374, 16
      %v6483 = vrot.slane %v6481, 4
      %v6484 = vor.u32 %v6480, %v6483
      %v6485 = vsel %vm938, %v6475, %v6484
      %v6487 = vshrl.u32 %v6375, 16
      %v6489 = vrot.slane %v6487, 3
      %v6490 = vshll.u32 %v6375, 16
      %v6492 = vrot.slane %v6490, 4
      %v6493 = vor.u32 %v6489, %v6492
      %v6494 = vsel %vm938, %v6484, %v6493
      %v6496 = vshrl.u32 %v6376, 16
      %v6498 = vrot.slane %v6496, 3
      %v6499 = vshll.u32 %v6376, 16
      %v6501 = vrot.slane %v6499, 4
      %v6502 = vor.u32 %v6498, %v6501
      %v6503 = vsel %vm938, %v6493, %v6502
      %v6505 = vshrl.u32 %v6377, 16
      %v6507 = vrot.slane %v6505, 3
      %v6508 = vshll.u32 %v6377, 16
      %v6510 = vrot.slane %v6508, 4
      %v6511 = vor.u32 %v6507, %v6510
      %v6512 = vsel %vm938, %v6502, %v6511
      %v6514 = vshrl.u32 %v6378, 16
      %v6516 = vrot.slane %v6514, 3
      %v6517 = vshll.u32 %v6378, 16
      %v6519 = vrot.slane %v6517, 4
      %v6520 = vor.u32 %v6516, %v6519
      %v6521 = vsel %vm938, %v6511, %v6520
      %v6522 = vsel %vm938, %v6520, %v3236
      %v6524 = vsel %vm724, %v6395, 0
      %v6527 = vsel %vm724, %v6404, 0
      %v6530 = vsel %vm724, %v6413, 0
      %v6533 = vsel %vm724, %v6422, 0
      %v6536 = vsel %vm724, %v6431, 0
      %v6539 = vsel %vm724, %v6440, 0
      %v6542 = vsel %vm724, %v6449, 0
      %v6545 = vsel %vm724, %v6458, 0
      %v6548 = vsel %vm724, %v6467, 0
      %v6551 = vsel %vm724, %v6476, 0
      %v6554 = vsel %vm724, %v6485, 0
      %v6557 = vsel %vm724, %v6494, 0
      %v6560 = vsel %vm724, %v6503, 0
      %v6563 = vsel %vm724, %v6512, 0
      %v6566 = vsel %vm724, %v6521, 0
      %v6569 = vsel %vm724, %v6522, 0
      %v6572 = vsel %vm773, %v6362, 0
      %6574 = vmatprep.subr.bf16.mxu0 0
      %6575 = vmatpush1.bf16.msra.mxu0 0
      %6576 = vmatprep.subr.bf16.mxu0 0
      %6577 = vmatpush1.bf16.msra.mxu0 0
      %6578 = vmatprep.subr.bf16.mxu0 0
      %6579 = vmatpush1.bf16.msra.mxu0 0
      %6580 = vmatprep.subr.bf16.mxu0 0
      %6581 = vmatpush1.bf16.msra.mxu0 0
      %6582 = vmatprep.subr.bf16.mxu0 0
      %6583 = vmatpush1.bf16.msra.mxu0 0
      %6584 = vmatprep.subr.bf16.mxu0 0
      %6585 = vmatpush1.bf16.msra.mxu0 0
      %6586 = vmatprep.subr.bf16.mxu0 0
      %6587 = vmatpush1.bf16.msra.mxu0 0
      %6588 = vmatprep.subr.bf16.mxu0 0
      %6589 = vmatpush1.bf16.msra.mxu0 %v6572
      %6590 = vmatprep.subr.bf16.mxu0 0
      %6591 = vmatpush2.bf16.msra.mxu0 0
      %6592 = vmatprep.subr.bf16.mxu0 0
      %6593 = vmatpush2.bf16.msra.mxu0 0
      %6594 = vmatprep.subr.bf16.mxu0 0
      %6595 = vmatpush2.bf16.msra.mxu0 0
      %6596 = vmatprep.subr.bf16.mxu0 0
      %6597 = vmatpush2.bf16.msra.mxu0 0
      %6598 = vmatprep.subr.bf16.mxu0 0
      %6599 = vmatpush2.bf16.msra.mxu0 0
      %6600 = vmatprep.subr.bf16.mxu0 0
      %6601 = vmatpush2.bf16.msra.mxu0 0
      %6602 = vmatprep.subr.bf16.mxu0 0
      %6603 = vmatpush2.bf16.msra.mxu0 0
      %6604 = vmatprep.subr.bf16.mxu0 0
      %6605 = vmatpush2.bf16.msra.mxu0 0
      %6606 = vmatprep.mubr.bf16.mxu0 0
      %6607 = vmatmul.mubr.bf16.gmra.mxu0 %v6524
      %v6608 = vpop.f32.mrf.mxu0
      %v6609 = vadd.f32 0.0, %v6608
      %v6610 = vpop.f32.mrf.mxu0
      %v6611 = vpop.f32.mrf.mxu0
      %v6612 = vadd.f32 0.0, %v6611
      %v6613 = vpop.f32.mrf.mxu0
      %6614 = vmatprep.mubr.bf16.mxu0 0
      %6615 = vmatmul.mubr.bf16.gmra.mxu0 %v6527
      %v6616 = vpop.f32.mrf.mxu0
      %v6617 = vadd.f32 0.0, %v6616
      %v6618 = vpop.f32.mrf.mxu0
      %v6619 = vpop.f32.mrf.mxu0
      %v6620 = vadd.f32 0.0, %v6619
      %v6621 = vpop.f32.mrf.mxu0
      %6622 = vmatprep.mubr.bf16.mxu0 0
      %6623 = vmatmul.mubr.bf16.gmra.mxu0 %v6530
      %v6624 = vpop.f32.mrf.mxu0
      %v6625 = vadd.f32 0.0, %v6624
      %v6626 = vpop.f32.mrf.mxu0
      %v6627 = vpop.f32.mrf.mxu0
      %v6628 = vadd.f32 0.0, %v6627
      %v6629 = vpop.f32.mrf.mxu0
      %6630 = vmatprep.mubr.bf16.mxu0 0
      %6631 = vmatmul.mubr.bf16.gmra.mxu0 %v6533
      %v6632 = vpop.f32.mrf.mxu0
      %v6633 = vadd.f32 0.0, %v6632
      %v6634 = vpop.f32.mrf.mxu0
      %v6635 = vpop.f32.mrf.mxu0
      %v6636 = vadd.f32 0.0, %v6635
      %v6637 = vpop.f32.mrf.mxu0
      %6638 = vmatprep.mubr.bf16.mxu0 0
      %6639 = vmatmul.mubr.bf16.gmra.mxu0 %v6536
      %v6640 = vpop.f32.mrf.mxu0
      %v6641 = vadd.f32 0.0, %v6640
      %v6642 = vpop.f32.mrf.mxu0
      %v6643 = vpop.f32.mrf.mxu0
      %v6644 = vadd.f32 0.0, %v6643
      %v6645 = vpop.f32.mrf.mxu0
      %6646 = vmatprep.mubr.bf16.mxu0 0
      %6647 = vmatmul.mubr.bf16.gmra.mxu0 %v6539
      %v6648 = vpop.f32.mrf.mxu0
      %v6649 = vadd.f32 0.0, %v6648
      %v6650 = vpop.f32.mrf.mxu0
      %v6651 = vpop.f32.mrf.mxu0
      %v6652 = vadd.f32 0.0, %v6651
      %v6653 = vpop.f32.mrf.mxu0
      %6654 = vmatprep.mubr.bf16.mxu0 0
      %6655 = vmatmul.mubr.bf16.gmra.mxu0 %v6542
      %v6656 = vpop.f32.mrf.mxu0
      %v6657 = vadd.f32 0.0, %v6656
      %v6658 = vpop.f32.mrf.mxu0
      %v6659 = vpop.f32.mrf.mxu0
      %v6660 = vadd.f32 0.0, %v6659
      %v6661 = vpop.f32.mrf.mxu0
      %6662 = vmatprep.mubr.bf16.mxu0 0
      %6663 = vmatmul.mubr.bf16.gmra.mxu0 %v6545
      %v6664 = vpop.f32.mrf.mxu0
      %v6665 = vadd.f32 0.0, %v6664
      %v6666 = vpop.f32.mrf.mxu0
      %v6667 = vpop.f32.mrf.mxu0
      %v6668 = vadd.f32 0.0, %v6667
      %v6669 = vpop.f32.mrf.mxu0
      %6670 = vmatprep.mubr.bf16.mxu0 0
      %6671 = vmatmul.mubr.bf16.gmra.mxu0 %v6548
      %v6672 = vpop.f32.mrf.mxu0
      %v6673 = vadd.f32 0.0, %v6672
      %v6674 = vpop.f32.mrf.mxu0
      %v6675 = vpop.f32.mrf.mxu0
      %v6676 = vadd.f32 0.0, %v6675
      %v6677 = vpop.f32.mrf.mxu0
      %6678 = vmatprep.mubr.bf16.mxu0 0
      %6679 = vmatmul.mubr.bf16.gmra.mxu0 %v6551
      %v6680 = vpop.f32.mrf.mxu0
      %v6681 = vadd.f32 0.0, %v6680
      %v6682 = vpop.f32.mrf.mxu0
      %v6683 = vpop.f32.mrf.mxu0
      %v6684 = vadd.f32 0.0, %v6683
      %v6685 = vpop.f32.mrf.mxu0
      %6686 = vmatprep.mubr.bf16.mxu0 0
      %6687 = vmatmul.mubr.bf16.gmra.mxu0 %v6554
      %v6688 = vpop.f32.mrf.mxu0
      %v6689 = vadd.f32 0.0, %v6688
      %v6690 = vpop.f32.mrf.mxu0
      %v6691 = vpop.f32.mrf.mxu0
      %v6692 = vadd.f32 0.0, %v6691
      %v6693 = vpop.f32.mrf.mxu0
      %6694 = vmatprep.mubr.bf16.mxu0 0
      %6695 = vmatmul.mubr.bf16.gmra.mxu0 %v6557
      %v6696 = vpop.f32.mrf.mxu0
      %v6697 = vadd.f32 0.0, %v6696
      %v6698 = vpop.f32.mrf.mxu0
      %v6699 = vpop.f32.mrf.mxu0
      %v6700 = vadd.f32 0.0, %v6699
      %v6701 = vpop.f32.mrf.mxu0
      %6702 = vmatprep.mubr.bf16.mxu0 0
      %6703 = vmatmul.mubr.bf16.gmra.mxu0 %v6560
      %v6704 = vpop.f32.mrf.mxu0
      %v6705 = vadd.f32 0.0, %v6704
      %v6706 = vpop.f32.mrf.mxu0
      %v6707 = vpop.f32.mrf.mxu0
      %v6708 = vadd.f32 0.0, %v6707
      %v6709 = vpop.f32.mrf.mxu0
      %6710 = vmatprep.mubr.bf16.mxu0 0
      %6711 = vmatmul.mubr.bf16.gmra.mxu0 %v6563
      %v6712 = vpop.f32.mrf.mxu0
      %v6713 = vadd.f32 0.0, %v6712
      %v6714 = vpop.f32.mrf.mxu0
      %v6715 = vpop.f32.mrf.mxu0
      %v6716 = vadd.f32 0.0, %v6715
      %v6717 = vpop.f32.mrf.mxu0
      %6718 = vmatprep.mubr.bf16.mxu0 0
      %6719 = vmatmul.mubr.bf16.gmra.mxu0 %v6566
      %v6720 = vpop.f32.mrf.mxu0
      %v6721 = vadd.f32 0.0, %v6720
      %v6722 = vpop.f32.mrf.mxu0
      %v6723 = vpop.f32.mrf.mxu0
      %v6724 = vadd.f32 0.0, %v6723
      %v6725 = vpop.f32.mrf.mxu0
      %6726 = vmatprep.mubr.bf16.mxu0 0
      %6727 = vmatmul.mubr.bf16.gmra.mxu0 %v6569
      %v6728 = vpop.f32.mrf.mxu0
      %v6729 = vadd.f32 0.0, %v6728
      %v6730 = vpop.f32.mrf.mxu0
      %v6731 = vpop.f32.mrf.mxu0
      %v6732 = vadd.f32 0.0, %v6731
      %v6733 = vpop.f32.mrf.mxu0
      %6734 = vdwg.mxu0
      %v6735 = vadd.f32 %v6298, %v6609
      %v6736 = vadd.f32 %v6299, %v6612
      %v6737 = vadd.f32 %v6300, %v6617
      %v6738 = vadd.f32 %v6301, %v6620
      %v6739 = vadd.f32 %v6302, %v6625
      %v6740 = vadd.f32 %v6303, %v6628
      %v6741 = vadd.f32 %v6304, %v6633
      %v6742 = vadd.f32 %v6305, %v6636
      %v6743 = vadd.f32 %v6306, %v6641
      %v6744 = vadd.f32 %v6307, %v6644
      %v6745 = vadd.f32 %v6308, %v6649
      %v6746 = vadd.f32 %v6309, %v6652
      %v6747 = vadd.f32 %v6310, %v6657
      %v6748 = vadd.f32 %v6311, %v6660
      %v6749 = vadd.f32 %v6312, %v6665
      %v6750 = vadd.f32 %v6313, %v6668
      %v6751 = vadd.f32 %v6314, %v6673
      %v6752 = vadd.f32 %v6315, %v6676
      %v6753 = vadd.f32 %v6316, %v6681
      %v6754 = vadd.f32 %v6317, %v6684
      %v6755 = vadd.f32 %v6318, %v6689
      %v6756 = vadd.f32 %v6319, %v6692
      %v6757 = vadd.f32 %v6320, %v6697
      %v6758 = vadd.f32 %v6321, %v6700
      %v6759 = vadd.f32 %v6322, %v6705
      %v6760 = vadd.f32 %v6323, %v6708
      %v6761 = vadd.f32 %v6324, %v6713
      %v6762 = vadd.f32 %v6325, %v6716
      %v6763 = vadd.f32 %v6326, %v6721
      %v6764 = vadd.f32 %v6327, %v6724
      %v6765 = vadd.f32 %v6328, %v6729
      %v6766 = vadd.f32 %v6329, %v6732
      %s6767 = scalar_lea.vmem %s6, 14
      %v6768 = vld [vmem:[%s6767] sm:$0x3]
      %v6770 = vsel %vm773, %v6768, 0
      %6772 = vmatprep.subr.bf16.mxu0 0
      %6773 = vmatpush1.bf16.msra.mxu0 0
      %6774 = vmatprep.subr.bf16.mxu0 0
      %6775 = vmatpush1.bf16.msra.mxu0 0
      %6776 = vmatprep.subr.bf16.mxu0 0
      %6777 = vmatpush1.bf16.msra.mxu0 0
      %6778 = vmatprep.subr.bf16.mxu0 0
      %6779 = vmatpush1.bf16.msra.mxu0 0
      %6780 = vmatprep.subr.bf16.mxu0 0
      %6781 = vmatpush1.bf16.msra.mxu0 0
      %6782 = vmatprep.subr.bf16.mxu0 0
      %6783 = vmatpush1.bf16.msra.mxu0 0
      %6784 = vmatprep.subr.bf16.mxu0 0
      %6785 = vmatpush1.bf16.msra.mxu0 0
      %6786 = vmatprep.subr.bf16.mxu0 0
      %6787 = vmatpush1.bf16.msra.mxu0 %v6770
      %6788 = vmatprep.subr.bf16.mxu0 0
      %6789 = vmatpush2.bf16.msra.mxu0 0
      %6790 = vmatprep.subr.bf16.mxu0 0
      %6791 = vmatpush2.bf16.msra.mxu0 0
      %6792 = vmatprep.subr.bf16.mxu0 0
      %6793 = vmatpush2.bf16.msra.mxu0 0
      %6794 = vmatprep.subr.bf16.mxu0 0
      %6795 = vmatpush2.bf16.msra.mxu0 0
      %6796 = vmatprep.subr.bf16.mxu0 0
      %6797 = vmatpush2.bf16.msra.mxu0 0
      %6798 = vmatprep.subr.bf16.mxu0 0
      %6799 = vmatpush2.bf16.msra.mxu0 0
      %6800 = vmatprep.subr.bf16.mxu0 0
      %6801 = vmatpush2.bf16.msra.mxu0 0
      %6802 = vmatprep.subr.bf16.mxu0 0
      %6803 = vmatpush2.bf16.msra.mxu0 0
      %6804 = vmatprep.mubr.bf16.mxu0 0
      %6805 = vmatmul.mubr.bf16.gmra.mxu0 %v4280
      %v6806 = vpop.f32.mrf.mxu0
      %v6807 = vadd.f32 0.0, %v6806
      %v6808 = vpop.f32.mrf.mxu0
      %v6809 = vpop.f32.mrf.mxu0
      %v6810 = vadd.f32 0.0, %v6809
      %v6811 = vpop.f32.mrf.mxu0
      %6812 = vmatprep.mubr.bf16.mxu0 0
      %6813 = vmatmul.mubr.bf16.gmra.mxu0 %v4283
      %v6814 = vpop.f32.mrf.mxu0
      %v6815 = vadd.f32 0.0, %v6814
      %v6816 = vpop.f32.mrf.mxu0
      %v6817 = vpop.f32.mrf.mxu0
      %v6818 = vadd.f32 0.0, %v6817
      %v6819 = vpop.f32.mrf.mxu0
      %6820 = vmatprep.mubr.bf16.mxu0 0
      %6821 = vmatmul.mubr.bf16.gmra.mxu0 %v4286
      %v6822 = vpop.f32.mrf.mxu0
      %v6823 = vadd.f32 0.0, %v6822
      %v6824 = vpop.f32.mrf.mxu0
      %v6825 = vpop.f32.mrf.mxu0
      %v6826 = vadd.f32 0.0, %v6825
      %v6827 = vpop.f32.mrf.mxu0
      %6828 = vmatprep.mubr.bf16.mxu0 0
      %6829 = vmatmul.mubr.bf16.gmra.mxu0 %v4289
      %v6830 = vpop.f32.mrf.mxu0
      %v6831 = vadd.f32 0.0, %v6830
      %v6832 = vpop.f32.mrf.mxu0
      %v6833 = vpop.f32.mrf.mxu0
      %v6834 = vadd.f32 0.0, %v6833
      %v6835 = vpop.f32.mrf.mxu0
      %6836 = vmatprep.mubr.bf16.mxu0 0
      %6837 = vmatmul.mubr.bf16.gmra.mxu0 %v4292
      %v6838 = vpop.f32.mrf.mxu0
      %v6839 = vadd.f32 0.0, %v6838
      %v6840 = vpop.f32.mrf.mxu0
      %v6841 = vpop.f32.mrf.mxu0
      %v6842 = vadd.f32 0.0, %v6841
      %v6843 = vpop.f32.mrf.mxu0
      %6844 = vmatprep.mubr.bf16.mxu0 0
      %6845 = vmatmul.mubr.bf16.gmra.mxu0 %v4295
      %v6846 = vpop.f32.mrf.mxu0
      %v6847 = vadd.f32 0.0, %v6846
      %v6848 = vpop.f32.mrf.mxu0
      %v6849 = vpop.f32.mrf.mxu0
      %v6850 = vadd.f32 0.0, %v6849
      %v6851 = vpop.f32.mrf.mxu0
      %6852 = vmatprep.mubr.bf16.mxu0 0
      %6853 = vmatmul.mubr.bf16.gmra.mxu0 %v4298
      %v6854 = vpop.f32.mrf.mxu0
      %v6855 = vadd.f32 0.0, %v6854
      %v6856 = vpop.f32.mrf.mxu0
      %v6857 = vpop.f32.mrf.mxu0
      %v6858 = vadd.f32 0.0, %v6857
      %v6859 = vpop.f32.mrf.mxu0
      %6860 = vmatprep.mubr.bf16.mxu0 0
      %6861 = vmatmul.mubr.bf16.gmra.mxu0 %v4301
      %v6862 = vpop.f32.mrf.mxu0
      %v6863 = vadd.f32 0.0, %v6862
      %v6864 = vpop.f32.mrf.mxu0
      %v6865 = vpop.f32.mrf.mxu0
      %v6866 = vadd.f32 0.0, %v6865
      %v6867 = vpop.f32.mrf.mxu0
      %6868 = vmatprep.mubr.bf16.mxu0 0
      %6869 = vmatmul.mubr.bf16.gmra.mxu0 %v4304
      %v6870 = vpop.f32.mrf.mxu0
      %v6871 = vadd.f32 0.0, %v6870
      %v6872 = vpop.f32.mrf.mxu0
      %v6873 = vpop.f32.mrf.mxu0
      %v6874 = vadd.f32 0.0, %v6873
      %v6875 = vpop.f32.mrf.mxu0
      %6876 = vmatprep.mubr.bf16.mxu0 0
      %6877 = vmatmul.mubr.bf16.gmra.mxu0 %v4307
      %v6878 = vpop.f32.mrf.mxu0
      %v6879 = vadd.f32 0.0, %v6878
      %v6880 = vpop.f32.mrf.mxu0
      %v6881 = vpop.f32.mrf.mxu0
      %v6882 = vadd.f32 0.0, %v6881
      %v6883 = vpop.f32.mrf.mxu0
      %6884 = vmatprep.mubr.bf16.mxu0 0
      %6885 = vmatmul.mubr.bf16.gmra.mxu0 %v4310
      %v6886 = vpop.f32.mrf.mxu0
      %v6887 = vadd.f32 0.0, %v6886
      %v6888 = vpop.f32.mrf.mxu0
      %v6889 = vpop.f32.mrf.mxu0
      %v6890 = vadd.f32 0.0, %v6889
      %v6891 = vpop.f32.mrf.mxu0
      %6892 = vmatprep.mubr.bf16.mxu0 0
      %6893 = vmatmul.mubr.bf16.gmra.mxu0 %v4313
      %v6894 = vpop.f32.mrf.mxu0
      %v6895 = vadd.f32 0.0, %v6894
      %v6896 = vpop.f32.mrf.mxu0
      %v6897 = vpop.f32.mrf.mxu0
      %v6898 = vadd.f32 0.0, %v6897
      %v6899 = vpop.f32.mrf.mxu0
      %6900 = vmatprep.mubr.bf16.mxu0 0
      %6901 = vmatmul.mubr.bf16.gmra.mxu0 %v4316
      %v6902 = vpop.f32.mrf.mxu0
      %v6903 = vadd.f32 0.0, %v6902
      %v6904 = vpop.f32.mrf.mxu0
      %v6905 = vpop.f32.mrf.mxu0
      %v6906 = vadd.f32 0.0, %v6905
      %v6907 = vpop.f32.mrf.mxu0
      %6908 = vmatprep.mubr.bf16.mxu0 0
      %6909 = vmatmul.mubr.bf16.gmra.mxu0 %v4319
      %v6910 = vpop.f32.mrf.mxu0
      %v6911 = vadd.f32 0.0, %v6910
      %v6912 = vpop.f32.mrf.mxu0
      %v6913 = vpop.f32.mrf.mxu0
      %v6914 = vadd.f32 0.0, %v6913
      %v6915 = vpop.f32.mrf.mxu0
      %6916 = vmatprep.mubr.bf16.mxu0 0
      %6917 = vmatmul.mubr.bf16.gmra.mxu0 %v5710
      %v6918 = vpop.f32.mrf.mxu0
      %v6919 = vadd.f32 0.0, %v6918
      %v6920 = vpop.f32.mrf.mxu0
      %v6921 = vpop.f32.mrf.mxu0
      %v6922 = vadd.f32 0.0, %v6921
      %v6923 = vpop.f32.mrf.mxu0
      %6924 = vmatprep.mubr.bf16.mxu0 0
      %6925 = vmatmul.mubr.bf16.gmra.mxu0 %v726
      %v6926 = vpop.f32.mrf.mxu0
      %v6927 = vadd.f32 0.0, %v6926
      %v6928 = vpop.f32.mrf.mxu0
      %v6929 = vpop.f32.mrf.mxu0
      %v6930 = vadd.f32 0.0, %v6929
      %v6931 = vpop.f32.mrf.mxu0
      %6932 = vdwg.mxu0
      %v6933 = vadd.f32 %v6735, %v6807
      %v6934 = vadd.f32 %v6736, %v6810
      %v6935 = vadd.f32 %v6737, %v6815
      %v6936 = vadd.f32 %v6738, %v6818
      %v6937 = vadd.f32 %v6739, %v6823
      %v6938 = vadd.f32 %v6740, %v6826
      %v6939 = vadd.f32 %v6741, %v6831
      %v6940 = vadd.f32 %v6742, %v6834
      %v6941 = vadd.f32 %v6743, %v6839
      %v6942 = vadd.f32 %v6744, %v6842
      %v6943 = vadd.f32 %v6745, %v6847
      %v6944 = vadd.f32 %v6746, %v6850
      %v6945 = vadd.f32 %v6747, %v6855
      %v6946 = vadd.f32 %v6748, %v6858
      %v6947 = vadd.f32 %v6749, %v6863
      %v6948 = vadd.f32 %v6750, %v6866
      %v6949 = vadd.f32 %v6751, %v6871
      %v6950 = vadd.f32 %v6752, %v6874
      %v6951 = vadd.f32 %v6753, %v6879
      %v6952 = vadd.f32 %v6754, %v6882
      %v6953 = vadd.f32 %v6755, %v6887
      %v6954 = vadd.f32 %v6756, %v6890
      %v6955 = vadd.f32 %v6757, %v6895
      %v6956 = vadd.f32 %v6758, %v6898
      %v6957 = vadd.f32 %v6759, %v6903
      %v6958 = vadd.f32 %v6760, %v6906
      %v6959 = vadd.f32 %v6761, %v6911
      %v6960 = vadd.f32 %v6762, %v6914
      %v6961 = vadd.f32 %v6763, %v6919
      %v6962 = vadd.f32 %v6764, %v6922
      %v6963 = vadd.f32 %v6765, %v6927
      %v6964 = vadd.f32 %v6766, %v6930
      %v6965 = vmul.f32 %v4182, %v1432
      %v6966 = vmul.f32 %v4183, %v1434
      %v6967 = vmul.f32 %v4184, %v1436
      %v6968 = vmul.f32 %v4185, %v1438
      %v6969 = vmul.f32 %v4186, %v1440
      %v6970 = vmul.f32 %v4187, %v1442
      %v6971 = vmul.f32 %v4188, %v1444
      %v6972 = vmul.f32 %v4189, %v1446
      %v6973 = vmul.f32 %v4190, %v1448
      %v6974 = vmul.f32 %v4191, %v1450
      %v6975 = vmul.f32 %v4192, %v1452
      %v6976 = vmul.f32 %v4193, %v1454
      %v6977 = vmul.f32 %v4194, %v1456
      %v6978 = vmul.f32 %v4195, %v1458
      %v6979 = vmul.f32 %v4196, %v1460
      %v6980 = vmul.f32 %v4197, %v1462
      %v6981 = vmul.f32 %v4198, %v1464
      %v6982 = vmul.f32 %v4199, %v1466
      %v6983 = vmul.f32 %v4200, %v1468
      %v6984 = vmul.f32 %v4201, %v1470
      %v6985 = vmul.f32 %v4202, %v1472
      %v6986 = vmul.f32 %v4203, %v1474
      %v6987 = vmul.f32 %v4204, %v1476
      %v6988 = vmul.f32 %v4205, %v1478
      %v6989 = vmul.f32 %v4206, %v1480
      %v6990 = vmul.f32 %v4207, %v1482
      %v6991 = vmul.f32 %v4208, %v1484
      %v6992 = vmul.f32 %v4209, %v1486
      %v6993 = vmul.f32 %v4210, %v1488
      %v6994 = vmul.f32 %v4211, %v1490
      %s6995 = scalar_lea.vmem %s6, 16
      %v6996 = vld [vmem:[%s6995] sm:$0x3]
      %v6997 = vpack.c.bf16 %v6966, %v6965
      %v6998 = vpack.c.bf16 %v6968, %v6967
      %v6999 = vpack.c.bf16 %v6970, %v6969
      %v7000 = vpack.c.bf16 %v6972, %v6971
      %v7001 = vpack.c.bf16 %v6974, %v6973
      %v7002 = vpack.c.bf16 %v6976, %v6975
      %v7003 = vpack.c.bf16 %v6978, %v6977
      %v7004 = vpack.c.bf16 %v6980, %v6979
      %v7005 = vpack.c.bf16 %v6982, %v6981
      %v7006 = vpack.c.bf16 %v6984, %v6983
      %v7007 = vpack.c.bf16 %v6986, %v6985
      %v7008 = vpack.c.bf16 %v6988, %v6987
      %v7009 = vpack.c.bf16 %v6990, %v6989
      %v7010 = vpack.c.bf16 %v6992, %v6991
      %v7011 = vpack.c.bf16 %v6994, %v6993
      %v7013 = vshrl.u32 %v6997, 16
      %v7015 = vshll.u32 %v6997, 16
      %v7017 = vrot.slane %v7015, 1
      %v7018 = vor.u32 %v7013, %v7017
      %v7020 = vshll.u32 %v6998, 16
      %v7022 = vrot.slane %v7020, 1
      %v7023 = vsel %vm1580, %v7018, %v7022
      %v7024 = vshrl.u32 %v6998, 16
      %v7026 = vor.u32 %v7024, %v7022
      %v7028 = vshll.u32 %v6999, 16
      %v7030 = vrot.slane %v7028, 1
      %v7031 = vsel %vm1580, %v7026, %v7030
      %v7032 = vshrl.u32 %v6999, 16
      %v7034 = vor.u32 %v7032, %v7030
      %v7036 = vshll.u32 %v7000, 16
      %v7038 = vrot.slane %v7036, 1
      %v7039 = vsel %vm1580, %v7034, %v7038
      %v7040 = vshrl.u32 %v7000, 16
      %v7042 = vor.u32 %v7040, %v7038
      %v7044 = vshll.u32 %v7001, 16
      %v7046 = vrot.slane %v7044, 1
      %v7047 = vsel %vm1580, %v7042, %v7046
      %v7048 = vshrl.u32 %v7001, 16
      %v7050 = vor.u32 %v7048, %v7046
      %v7052 = vshll.u32 %v7002, 16
      %v7054 = vrot.slane %v7052, 1
      %v7055 = vsel %vm1580, %v7050, %v7054
      %v7056 = vshrl.u32 %v7002, 16
      %v7058 = vor.u32 %v7056, %v7054
      %v7060 = vshll.u32 %v7003, 16
      %v7062 = vrot.slane %v7060, 1
      %v7063 = vsel %vm1580, %v7058, %v7062
      %v7064 = vshrl.u32 %v7003, 16
      %v7066 = vor.u32 %v7064, %v7062
      %v7068 = vshll.u32 %v7004, 16
      %v7070 = vrot.slane %v7068, 1
      %v7071 = vsel %vm1580, %v7066, %v7070
      %v7072 = vshrl.u32 %v7004, 16
      %v7074 = vor.u32 %v7072, %v7070
      %v7076 = vshll.u32 %v7005, 16
      %v7078 = vrot.slane %v7076, 1
      %v7079 = vsel %vm1580, %v7074, %v7078
      %v7080 = vshrl.u32 %v7005, 16
      %v7082 = vor.u32 %v7080, %v7078
      %v7084 = vshll.u32 %v7006, 16
      %v7086 = vrot.slane %v7084, 1
      %v7087 = vsel %vm1580, %v7082, %v7086
      %v7088 = vshrl.u32 %v7006, 16
      %v7090 = vor.u32 %v7088, %v7086
      %v7092 = vshll.u32 %v7007, 16
      %v7094 = vrot.slane %v7092, 1
      %v7095 = vsel %vm1580, %v7090, %v7094
      %v7096 = vshrl.u32 %v7007, 16
      %v7098 = vor.u32 %v7096, %v7094
      %v7100 = vshll.u32 %v7008, 16
      %v7102 = vrot.slane %v7100, 1
      %v7103 = vsel %vm1580, %v7098, %v7102
      %v7104 = vshrl.u32 %v7008, 16
      %v7106 = vor.u32 %v7104, %v7102
      %v7108 = vshll.u32 %v7009, 16
      %v7110 = vrot.slane %v7108, 1
      %v7111 = vsel %vm1580, %v7106, %v7110
      %v7112 = vshrl.u32 %v7009, 16
      %v7114 = vor.u32 %v7112, %v7110
      %v7116 = vshll.u32 %v7010, 16
      %v7118 = vrot.slane %v7116, 1
      %v7119 = vsel %vm1580, %v7114, %v7118
      %v7120 = vshrl.u32 %v7010, 16
      %v7122 = vor.u32 %v7120, %v7118
      %v7124 = vshll.u32 %v7011, 16
      %v7126 = vrot.slane %v7124, 1
      %v7127 = vsel %vm1580, %v7122, %v7126
      %v7128 = vshrl.u32 %v7011, 16
      %v7130 = vor.u32 %v7128, %v7126
      %v7131 = vsel %vm1580, %v7130, %v3852
      %v7133 = vsel %vm724, %v7023, 0
      %v7136 = vsel %vm724, %v7031, 0
      %v7139 = vsel %vm724, %v7039, 0
      %v7142 = vsel %vm724, %v7047, 0
      %v7145 = vsel %vm724, %v7055, 0
      %v7148 = vsel %vm724, %v7063, 0
      %v7151 = vsel %vm724, %v7071, 0
      %v7154 = vsel %vm724, %v7079, 0
      %v7157 = vsel %vm724, %v7087, 0
      %v7160 = vsel %vm724, %v7095, 0
      %v7163 = vsel %vm724, %v7103, 0
      %v7166 = vsel %vm724, %v7111, 0
      %v7169 = vsel %vm724, %v7119, 0
      %v7172 = vsel %vm724, %v7127, 0
      %v7175 = vsel %vm724, %v7131, 0
      %v7178 = vsel %vm773, %v6996, 0
      %7180 = vmatprep.subr.bf16.mxu0 0
      %7181 = vmatpush1.bf16.msra.mxu0 0
      %7182 = vmatprep.subr.bf16.mxu0 0
      %7183 = vmatpush1.bf16.msra.mxu0 0
      %7184 = vmatprep.subr.bf16.mxu0 0
      %7185 = vmatpush1.bf16.msra.mxu0 0
      %7186 = vmatprep.subr.bf16.mxu0 0
      %7187 = vmatpush1.bf16.msra.mxu0 0
      %7188 = vmatprep.subr.bf16.mxu0 0
      %7189 = vmatpush1.bf16.msra.mxu0 0
      %7190 = vmatprep.subr.bf16.mxu0 0
      %7191 = vmatpush1.bf16.msra.mxu0 0
      %7192 = vmatprep.subr.bf16.mxu0 0
      %7193 = vmatpush1.bf16.msra.mxu0 0
      %7194 = vmatprep.subr.bf16.mxu0 0
      %7195 = vmatpush1.bf16.msra.mxu0 %v7178
      %7196 = vmatprep.subr.bf16.mxu0 0
      %7197 = vmatpush2.bf16.msra.mxu0 0
      %7198 = vmatprep.subr.bf16.mxu0 0
      %7199 = vmatpush2.bf16.msra.mxu0 0
      %7200 = vmatprep.subr.bf16.mxu0 0
      %7201 = vmatpush2.bf16.msra.mxu0 0
      %7202 = vmatprep.subr.bf16.mxu0 0
      %7203 = vmatpush2.bf16.msra.mxu0 0
      %7204 = vmatprep.subr.bf16.mxu0 0
      %7205 = vmatpush2.bf16.msra.mxu0 0
      %7206 = vmatprep.subr.bf16.mxu0 0
      %7207 = vmatpush2.bf16.msra.mxu0 0
      %7208 = vmatprep.subr.bf16.mxu0 0
      %7209 = vmatpush2.bf16.msra.mxu0 0
      %7210 = vmatprep.subr.bf16.mxu0 0
      %7211 = vmatpush2.bf16.msra.mxu0 0
      %7212 = vmatprep.mubr.bf16.mxu0 0
      %7213 = vmatmul.mubr.bf16.gmra.mxu0 %v7133
      %v7214 = vpop.f32.mrf.mxu0
      %v7215 = vadd.f32 0.0, %v7214
      %v7216 = vpop.f32.mrf.mxu0
      %v7217 = vpop.f32.mrf.mxu0
      %v7218 = vadd.f32 0.0, %v7217
      %v7219 = vpop.f32.mrf.mxu0
      %7220 = vmatprep.mubr.bf16.mxu0 0
      %7221 = vmatmul.mubr.bf16.gmra.mxu0 %v7136
      %v7222 = vpop.f32.mrf.mxu0
      %v7223 = vadd.f32 0.0, %v7222
      %v7224 = vpop.f32.mrf.mxu0
      %v7225 = vpop.f32.mrf.mxu0
      %v7226 = vadd.f32 0.0, %v7225
      %v7227 = vpop.f32.mrf.mxu0
      %7228 = vmatprep.mubr.bf16.mxu0 0
      %7229 = vmatmul.mubr.bf16.gmra.mxu0 %v7139
      %v7230 = vpop.f32.mrf.mxu0
      %v7231 = vadd.f32 0.0, %v7230
      %v7232 = vpop.f32.mrf.mxu0
      %v7233 = vpop.f32.mrf.mxu0
      %v7234 = vadd.f32 0.0, %v7233
      %v7235 = vpop.f32.mrf.mxu0
      %7236 = vmatprep.mubr.bf16.mxu0 0
      %7237 = vmatmul.mubr.bf16.gmra.mxu0 %v7142
      %v7238 = vpop.f32.mrf.mxu0
      %v7239 = vadd.f32 0.0, %v7238
      %v7240 = vpop.f32.mrf.mxu0
      %v7241 = vpop.f32.mrf.mxu0
      %v7242 = vadd.f32 0.0, %v7241
      %v7243 = vpop.f32.mrf.mxu0
      %7244 = vmatprep.mubr.bf16.mxu0 0
      %7245 = vmatmul.mubr.bf16.gmra.mxu0 %v7145
      %v7246 = vpop.f32.mrf.mxu0
      %v7247 = vadd.f32 0.0, %v7246
      %v7248 = vpop.f32.mrf.mxu0
      %v7249 = vpop.f32.mrf.mxu0
      %v7250 = vadd.f32 0.0, %v7249
      %v7251 = vpop.f32.mrf.mxu0
      %7252 = vmatprep.mubr.bf16.mxu0 0
      %7253 = vmatmul.mubr.bf16.gmra.mxu0 %v7148
      %v7254 = vpop.f32.mrf.mxu0
      %v7255 = vadd.f32 0.0, %v7254
      %v7256 = vpop.f32.mrf.mxu0
      %v7257 = vpop.f32.mrf.mxu0
      %v7258 = vadd.f32 0.0, %v7257
      %v7259 = vpop.f32.mrf.mxu0
      %7260 = vmatprep.mubr.bf16.mxu0 0
      %7261 = vmatmul.mubr.bf16.gmra.mxu0 %v7151
      %v7262 = vpop.f32.mrf.mxu0
      %v7263 = vadd.f32 0.0, %v7262
      %v7264 = vpop.f32.mrf.mxu0
      %v7265 = vpop.f32.mrf.mxu0
      %v7266 = vadd.f32 0.0, %v7265
      %v7267 = vpop.f32.mrf.mxu0
      %7268 = vmatprep.mubr.bf16.mxu0 0
      %7269 = vmatmul.mubr.bf16.gmra.mxu0 %v7154
      %v7270 = vpop.f32.mrf.mxu0
      %v7271 = vadd.f32 0.0, %v7270
      %v7272 = vpop.f32.mrf.mxu0
      %v7273 = vpop.f32.mrf.mxu0
      %v7274 = vadd.f32 0.0, %v7273
      %v7275 = vpop.f32.mrf.mxu0
      %7276 = vmatprep.mubr.bf16.mxu0 0
      %7277 = vmatmul.mubr.bf16.gmra.mxu0 %v7157
      %v7278 = vpop.f32.mrf.mxu0
      %v7279 = vadd.f32 0.0, %v7278
      %v7280 = vpop.f32.mrf.mxu0
      %v7281 = vpop.f32.mrf.mxu0
      %v7282 = vadd.f32 0.0, %v7281
      %v7283 = vpop.f32.mrf.mxu0
      %7284 = vmatprep.mubr.bf16.mxu0 0
      %7285 = vmatmul.mubr.bf16.gmra.mxu0 %v7160
      %v7286 = vpop.f32.mrf.mxu0
      %v7287 = vadd.f32 0.0, %v7286
      %v7288 = vpop.f32.mrf.mxu0
      %v7289 = vpop.f32.mrf.mxu0
      %v7290 = vadd.f32 0.0, %v7289
      %v7291 = vpop.f32.mrf.mxu0
      %7292 = vmatprep.mubr.bf16.mxu0 0
      %7293 = vmatmul.mubr.bf16.gmra.mxu0 %v7163
      %v7294 = vpop.f32.mrf.mxu0
      %v7295 = vadd.f32 0.0, %v7294
      %v7296 = vpop.f32.mrf.mxu0
      %v7297 = vpop.f32.mrf.mxu0
      %v7298 = vadd.f32 0.0, %v7297
      %v7299 = vpop.f32.mrf.mxu0
      %7300 = vmatprep.mubr.bf16.mxu0 0
      %7301 = vmatmul.mubr.bf16.gmra.mxu0 %v7166
      %v7302 = vpop.f32.mrf.mxu0
      %v7303 = vadd.f32 0.0, %v7302
      %v7304 = vpop.f32.mrf.mxu0
      %v7305 = vpop.f32.mrf.mxu0
      %v7306 = vadd.f32 0.0, %v7305
      %v7307 = vpop.f32.mrf.mxu0
      %7308 = vmatprep.mubr.bf16.mxu0 0
      %7309 = vmatmul.mubr.bf16.gmra.mxu0 %v7169
      %v7310 = vpop.f32.mrf.mxu0
      %v7311 = vadd.f32 0.0, %v7310
      %v7312 = vpop.f32.mrf.mxu0
      %v7313 = vpop.f32.mrf.mxu0
      %v7314 = vadd.f32 0.0, %v7313
      %v7315 = vpop.f32.mrf.mxu0
      %7316 = vmatprep.mubr.bf16.mxu0 0
      %7317 = vmatmul.mubr.bf16.gmra.mxu0 %v7172
      %v7318 = vpop.f32.mrf.mxu0
      %v7319 = vadd.f32 0.0, %v7318
      %v7320 = vpop.f32.mrf.mxu0
      %v7321 = vpop.f32.mrf.mxu0
      %v7322 = vadd.f32 0.0, %v7321
      %v7323 = vpop.f32.mrf.mxu0
      %7324 = vmatprep.mubr.bf16.mxu0 0
      %7325 = vmatmul.mubr.bf16.gmra.mxu0 %v7175
      %v7326 = vpop.f32.mrf.mxu0
      %v7327 = vadd.f32 0.0, %v7326
      %v7328 = vpop.f32.mrf.mxu0
      %v7329 = vpop.f32.mrf.mxu0
      %v7330 = vadd.f32 0.0, %v7329
      %v7331 = vpop.f32.mrf.mxu0
      %7332 = vmatprep.mubr.bf16.mxu0 0
      %7333 = vmatmul.mubr.bf16.gmra.mxu0 %v3904
      %v7334 = vpop.f32.mrf.mxu0
      %v7335 = vadd.f32 0.0, %v7334
      %v7336 = vpop.f32.mrf.mxu0
      %v7337 = vpop.f32.mrf.mxu0
      %v7338 = vadd.f32 0.0, %v7337
      %v7339 = vpop.f32.mrf.mxu0
      %7340 = vdwg.mxu0
      %v7341 = vadd.f32 %v6933, %v7215
      %v7342 = vadd.f32 %v6934, %v7218
      %v7343 = vadd.f32 %v6935, %v7223
      %v7344 = vadd.f32 %v6936, %v7226
      %v7345 = vadd.f32 %v6937, %v7231
      %v7346 = vadd.f32 %v6938, %v7234
      %v7347 = vadd.f32 %v6939, %v7239
      %v7348 = vadd.f32 %v6940, %v7242
      %v7349 = vadd.f32 %v6941, %v7247
      %v7350 = vadd.f32 %v6942, %v7250
      %v7351 = vadd.f32 %v6943, %v7255
      %v7352 = vadd.f32 %v6944, %v7258
      %v7353 = vadd.f32 %v6945, %v7263
      %v7354 = vadd.f32 %v6946, %v7266
      %v7355 = vadd.f32 %v6947, %v7271
      %v7356 = vadd.f32 %v6948, %v7274
      %v7357 = vadd.f32 %v6949, %v7279
      %v7358 = vadd.f32 %v6950, %v7282
      %v7359 = vadd.f32 %v6951, %v7287
      %v7360 = vadd.f32 %v6952, %v7290
      %v7361 = vadd.f32 %v6953, %v7295
      %v7362 = vadd.f32 %v6954, %v7298
      %v7363 = vadd.f32 %v6955, %v7303
      %v7364 = vadd.f32 %v6956, %v7306
      %v7365 = vadd.f32 %v6957, %v7311
      %v7366 = vadd.f32 %v6958, %v7314
      %v7367 = vadd.f32 %v6959, %v7319
      %v7368 = vadd.f32 %v6960, %v7322
      %v7369 = vadd.f32 %v6961, %v7327
      %v7370 = vadd.f32 %v6962, %v7330
      %v7371 = vadd.f32 %v6963, %v7335
      %v7372 = vadd.f32 %v6964, %v7338
      %v7373 = vld [vmem:[%s7] sm:$0x1]
      %v7375 = vlaneseq
      %v7376 = vshrl.u32 %v7375, 7
      %v7377 = vsub.s32 0, %v7376
      %v7378 = vrot.slane %v7373, %v7377
      %v7380 = vmul.f32 %v7341, %v7378
      %v7381 = vmul.f32 %v7342, %v7378
      %v7382 = vmul.f32 %v7343, %v7378
      %v7383 = vmul.f32 %v7344, %v7378
      %v7384 = vmul.f32 %v7345, %v7378
      %v7385 = vmul.f32 %v7346, %v7378
      %v7386 = vmul.f32 %v7347, %v7378
      %v7387 = vmul.f32 %v7348, %v7378
      %v7388 = vmul.f32 %v7349, %v7378
      %v7389 = vmul.f32 %v7350, %v7378
      %v7390 = vmul.f32 %v7351, %v7378
      %v7391 = vmul.f32 %v7352, %v7378
      %v7392 = vmul.f32 %v7353, %v7378
      %v7393 = vmul.f32 %v7354, %v7378
      %v7394 = vmul.f32 %v7355, %v7378
      %v7395 = vmul.f32 %v7356, %v7378
      %v7396 = vmul.f32 %v7357, %v7378
      %v7397 = vmul.f32 %v7358, %v7378
      %v7398 = vmul.f32 %v7359, %v7378
      %v7399 = vmul.f32 %v7360, %v7378
      %v7400 = vmul.f32 %v7361, %v7378
      %v7401 = vmul.f32 %v7362, %v7378
      %v7402 = vmul.f32 %v7363, %v7378
      %v7403 = vmul.f32 %v7364, %v7378
      %v7404 = vmul.f32 %v7365, %v7378
      %v7405 = vmul.f32 %v7366, %v7378
      %v7406 = vmul.f32 %v7367, %v7378
      %v7407 = vmul.f32 %v7368, %v7378
      %v7408 = vmul.f32 %v7369, %v7378
      %v7409 = vmul.f32 %v7370, %v7378
      %v7410 = vmul.f32 %v7371, %v7378
      %v7411 = vmul.f32 %v7372, %v7378
      %v7412 = vld [vmem:[%s8] sm:$0x1]
      %v7414 = vlaneseq
      %v7415 = vshrl.u32 %v7414, 7
      %v7416 = vsub.s32 0, %v7415
      %v7417 = vrot.slane %v7412, %v7416
      %v7419 = vadd.f32 %v7380, %v7417
      %v7420 = vadd.f32 %v7381, %v7417
      %v7421 = vadd.f32 %v7382, %v7417
      %v7422 = vadd.f32 %v7383, %v7417
      %v7423 = vadd.f32 %v7384, %v7417
      %v7424 = vadd.f32 %v7385, %v7417
      %v7425 = vadd.f32 %v7386, %v7417
      %v7426 = vadd.f32 %v7387, %v7417
      %v7427 = vadd.f32 %v7388, %v7417
      %v7428 = vadd.f32 %v7389, %v7417
      %v7429 = vadd.f32 %v7390, %v7417
      %v7430 = vadd.f32 %v7391, %v7417
      %v7431 = vadd.f32 %v7392, %v7417
      %v7432 = vadd.f32 %v7393, %v7417
      %v7433 = vadd.f32 %v7394, %v7417
      %v7434 = vadd.f32 %v7395, %v7417
      %v7435 = vadd.f32 %v7396, %v7417
      %v7436 = vadd.f32 %v7397, %v7417
      %v7437 = vadd.f32 %v7398, %v7417
      %v7438 = vadd.f32 %v7399, %v7417
      %v7439 = vadd.f32 %v7400, %v7417
      %v7440 = vadd.f32 %v7401, %v7417
      %v7441 = vadd.f32 %v7402, %v7417
      %v7442 = vadd.f32 %v7403, %v7417
      %v7443 = vadd.f32 %v7404, %v7417
      %v7444 = vadd.f32 %v7405, %v7417
      %v7445 = vadd.f32 %v7406, %v7417
      %v7446 = vadd.f32 %v7407, %v7417
      %v7447 = vadd.f32 %v7408, %v7417
      %v7448 = vadd.f32 %v7409, %v7417
      %v7449 = vadd.f32 %v7410, %v7417
      %v7450 = vadd.f32 %v7411, %v7417
      %v7451 = vadd.f32 %v7419, %v334
      %v7452 = vadd.f32 %v7420, %v335
      %v7453 = vadd.f32 %v7421, %v336
      %v7454 = vadd.f32 %v7422, %v337
      %v7455 = vadd.f32 %v7423, %v338
      %v7456 = vadd.f32 %v7424, %v339
      %v7457 = vadd.f32 %v7425, %v340
      %v7458 = vadd.f32 %v7426, %v341
      %v7459 = vadd.f32 %v7427, %v342
      %v7460 = vadd.f32 %v7428, %v343
      %v7461 = vadd.f32 %v7429, %v344
      %v7462 = vadd.f32 %v7430, %v345
      %v7463 = vadd.f32 %v7431, %v346
      %v7464 = vadd.f32 %v7432, %v347
      %v7465 = vadd.f32 %v7433, %v348
      %v7466 = vadd.f32 %v7434, %v349
      %v7467 = vadd.f32 %v7435, %v350
      %v7468 = vadd.f32 %v7436, %v351
      %v7469 = vadd.f32 %v7437, %v352
      %v7470 = vadd.f32 %v7438, %v353
      %v7471 = vadd.f32 %v7439, %v354
      %v7472 = vadd.f32 %v7440, %v355
      %v7473 = vadd.f32 %v7441, %v356
      %v7474 = vadd.f32 %v7442, %v357
      %v7475 = vadd.f32 %v7443, %v358
      %v7476 = vadd.f32 %v7444, %v359
      %v7477 = vadd.f32 %v7445, %v360
      %v7478 = vadd.f32 %v7446, %v361
      %v7479 = vadd.f32 %v7447, %v362
      %v7480 = vadd.f32 %v7448, %v363
      %v7481 = vadd.f32 %v7449, %v364
      %v7482 = vadd.f32 %v7450, %v365
      %v7483 = vmax.f32 %v7451, 0.0
      %v7484 = vmax.f32 %v7452, 0.0
      %v7485 = vmax.f32 %v7453, 0.0
      %v7486 = vmax.f32 %v7454, 0.0
      %v7487 = vmax.f32 %v7455, 0.0
      %v7488 = vmax.f32 %v7456, 0.0
      %v7489 = vmax.f32 %v7457, 0.0
      %v7490 = vmax.f32 %v7458, 0.0
      %v7491 = vmax.f32 %v7459, 0.0
      %v7492 = vmax.f32 %v7460, 0.0
      %v7493 = vmax.f32 %v7461, 0.0
      %v7494 = vmax.f32 %v7462, 0.0
      %v7495 = vmax.f32 %v7463, 0.0
      %v7496 = vmax.f32 %v7464, 0.0
      %v7497 = vmax.f32 %v7465, 0.0
      %v7498 = vmax.f32 %v7466, 0.0
      %v7499 = vmax.f32 %v7467, 0.0
      %v7500 = vmax.f32 %v7468, 0.0
      %v7501 = vmax.f32 %v7469, 0.0
      %v7502 = vmax.f32 %v7470, 0.0
      %v7503 = vmax.f32 %v7471, 0.0
      %v7504 = vmax.f32 %v7472, 0.0
      %v7505 = vmax.f32 %v7473, 0.0
      %v7506 = vmax.f32 %v7474, 0.0
      %v7507 = vmax.f32 %v7475, 0.0
      %v7508 = vmax.f32 %v7476, 0.0
      %v7509 = vmax.f32 %v7477, 0.0
      %v7510 = vmax.f32 %v7478, 0.0
      %v7511 = vmax.f32 %v7479, 0.0
      %v7512 = vmax.f32 %v7480, 0.0
      %v7513 = vmax.f32 %v7481, 0.0
      %v7514 = vmax.f32 %v7482, 0.0
      %7515 = vst.msk [vmem:[%s332] sm:$0xff] %vm724, %v7483
      %7516 = vst.msk [vmem:[%s332 + $0x8] sm:$0xff] %vm724, %v7484
      %7517 = vst.msk [vmem:[%s332 + $0x10] sm:$0xff] %vm724, %v7485
      %7518 = vst.msk [vmem:[%s332 + $0x18] sm:$0xff] %vm724, %v7486
      %7519 = vst.msk [vmem:[%s332 + $0x20] sm:$0xff] %vm724, %v7487
      %7520 = vst.msk [vmem:[%s332 + $0x28] sm:$0xff] %vm724, %v7488
      %7521 = vst.msk [vmem:[%s332 + $0x30] sm:$0xff] %vm724, %v7489
      %7522 = vst.msk [vmem:[%s332 + $0x38] sm:$0xff] %vm724, %v7490
      %7523 = vst.msk [vmem:[%s332 + $0x40] sm:$0xff] %vm724, %v7491
      %7524 = vst.msk [vmem:[%s332 + $0x48] sm:$0xff] %vm724, %v7492
      %7525 = vst.msk [vmem:[%s332 + $0x50] sm:$0xff] %vm724, %v7493
      %7526 = vst.msk [vmem:[%s332 + $0x58] sm:$0xff] %vm724, %v7494
      %7527 = vst.msk [vmem:[%s332 + $0x60] sm:$0xff] %vm724, %v7495
      %7528 = vst.msk [vmem:[%s332 + $0x68] sm:$0xff] %vm724, %v7496
      %7529 = vst.msk [vmem:[%s332 + $0x70] sm:$0xff] %vm724, %v7497
      %7530 = vst.msk [vmem:[%s332 + $0x78] sm:$0xff] %vm724, %v7498
      %7531 = vst.msk [vmem:[%s332 + $0x80] sm:$0xff] %vm724, %v7499
      %7532 = vst.msk [vmem:[%s332 + $0x88] sm:$0xff] %vm724, %v7500
      %7533 = vst.msk [vmem:[%s332 + $0x90] sm:$0xff] %vm724, %v7501
      %7534 = vst.msk [vmem:[%s332 + $0x98] sm:$0xff] %vm724, %v7502
      %7535 = vst.msk [vmem:[%s332 + $0xa0] sm:$0xff] %vm724, %v7503
      %7536 = vst.msk [vmem:[%s332 + $0xa8] sm:$0xff] %vm724, %v7504
      %7537 = vst.msk [vmem:[%s332 + $0xb0] sm:$0xff] %vm724, %v7505
      %7538 = vst.msk [vmem:[%s332 + $0xb8] sm:$0xff] %vm724, %v7506
      %7539 = vst.msk [vmem:[%s332 + $0xc0] sm:$0xff] %vm724, %v7507
      %7540 = vst.msk [vmem:[%s332 + $0xc8] sm:$0xff] %vm724, %v7508
      %7541 = vst.msk [vmem:[%s332 + $0xd0] sm:$0xff] %vm724, %v7509
      %7542 = vst.msk [vmem:[%s332 + $0xd8] sm:$0xff] %vm724, %v7510
      %7543 = vst.msk [vmem:[%s332 + $0xe0] sm:$0xff] %vm724, %v7511
      %7544 = vst.msk [vmem:[%s332 + $0xe8] sm:$0xff] %vm724, %v7512
      %7545 = vst.msk [vmem:[%s332 + $0xf0] sm:$0xff] %vm724, %v7513
      %7546 = vst.msk [vmem:[%s332 + $0xf8] sm:$0xff] %vm724, %v7514
      %p7547 = scmp.lt.s32.totalorder %s20, 1
      %s7548 = scalar_select %p7547, %s20, 1
      %s7549 = smul.addr %s7548, 32
      %s7550 = smul.addr %s7549, 8
      %s7551 = scalar_lea.vmem %s9, %s7550
      // Predicated region
      $region57: #{basic_block_forward.1} parent=55 // pred_check
        %p7552 = pneg %p232
      $region58: #{basic_block_forward.1} parent=55 // pred_check_branch
        %7554 = sbr.rel (%p7552) target = $region60
      $region59: #{basic_block_forward.1} parent=55 // pred_region
        _
      $region60: #{basic_block_forward.1} parent=55 // pred_fallthru
        _
    $region56: #{basic_block_forward.1} parent=5 // pred_fallthru
      _
    %p7555 = scmp.le.s32.totalorder 2, %s15
    // Predicated region
    $region61: #{basic_block_forward.1} parent=5 // pred_check
      %p7556 = pneg %p7555
    $region62: #{basic_block_forward.1} parent=5 // pred_check_branch
      %7558 = sbr.rel (%p7556) target = $region64
    $region63: #{basic_block_forward.1} parent=5 // pred_region
      %s7559 = ssub.s32 %s15, 2
      // Predicated region
      $region65: #{basic_block_forward.1} parent=63 // pred_check
        %p7560 = pneg %p238
      $region66: #{basic_block_forward.1} parent=63 // pred_check_branch
        %7562 = sbr.rel (%p7560) target = $region68
      $region67: #{basic_block_forward.1} parent=63 // pred_region
        %p7563 = scmp.lt.s32.totalorder %s21, 1
        %s7564 = scalar_select %p7563, %s21, 1
        %s7565 = smul.addr %s7564, 32
        %s7566 = smul.addr %s7565, 8
        %s7567 = scalar_lea.vmem %s9, %s7566
      $region68: #{basic_block_forward.1} parent=63 // pred_fallthru
        _
    $region64: #{basic_block_forward.1} parent=5 // pred_fallthru
      _
  $region6: #{basic_block_forward.1} parent=0 // loop_footer
    %s19 = sadd.s32 1, %s15
  $region7: #{basic_block_forward.1} parent=0 // loop_footer_branch
    %14 = sbr.rel target = $region3
  $region8: #{basic_block_forward.1} parent=0 // loop_exit
    _

</llo_original>
